<compile_context>
chip_gen: v5e
topology: v5e:2x2
jax: 0.10.0
libtpu: 0.0.40
codegen_flags: <defaults>
</compile_context>

<pallas_src>
import math
import jax
import jax.numpy as jnp
from jax import lax
from jax.experimental import pallas as pl
from jax.experimental.pallas import tpu as pltpu

# ----------------------------- small config ---------------------------------
DOC_VOCAB   = 100
EMBED_SIZE  = 32
D_RNN       = 32          # h_dim (== d_mlp, required by the torch code's adds)
D_MLP       = 32
D_FF        = 512         # hard-coded 512 in EncoderLayer(h, 4, 512, dp)
N_HEADS     = 4
BI_HEADS    = 8
GNNL        = 1           # encoder stack depth (args.gnnl)
NUM_IMG     = 8
NUM_SENT    = 8
MAX_CAP_LEN = 8
LSTM_H      = D_RNN // 2
NEG_INF     = -1e9
LN_EPS      = 1e-6        # TODO(synk): Annotated-Transformer LayerNorm eps (nn.LayerNorm default is 1e-5)
OUT_LANES   = 128         # lane-dense packed output row: [loss | pad | im_mean | sen_mean | pad]

N_DATA = 6                # number of non-parameter kernel operands


# --------------------------- pallas plumbing ---------------------------------
def _full_spec(shape):
    nd = len(shape)
    return pl.BlockSpec(shape, lambda *_: (0,) * nd)


# ------------------------ in-kernel math helpers ------------------------------
def _sigmoid(x):
    return 1.0 / (1.0 + jnp.exp(-x))


def _layernorm(x, g, b):
    mu = jnp.mean(x, axis=-1, keepdims=True)
    var = jnp.mean((x - mu) ** 2, axis=-1, keepdims=True)
    return (x - mu) * lax.rsqrt(var + LN_EPS) * g + b


def _softmax_last(x):
    m = jnp.max(x, axis=-1, keepdims=True)
    e = jnp.exp(x - m)
    return e / jnp.sum(e, axis=-1, keepdims=True)


def _mha(x_q, x_kv, w_ref, b_ref, heads, self_attn):
    """Multi-head attention with fused [Wq|Wk|Wv|Wo] weights (D, 4D), bias (1, 4D).
    All attention masks in this model are all-ones, so no masking is applied."""
    D = x_q.shape[-1]
    dk = D // heads
    w = w_ref[...]
    b = b_ref[...]
    scale = 1.0 / math.sqrt(dk)
    if self_attn:
        qkv = jnp.dot(x_q, w[:, :3 * D], preferred_element_type=jnp.float32) + b[:, :3 * D]
        q, k, v = qkv[:, :D], qkv[:, D:2 * D], qkv[:, 2 * D:3 * D]
    else:
        q = jnp.dot(x_q, w[:, :D], preferred_element_type=jnp.float32) + b[:, :D]
        kv = jnp.dot(x_kv, w[:, D:3 * D], preferred_element_type=jnp.float32) + b[:, D:3 * D]
        k, v = kv[:, :D], kv[:, D:2 * D]
    outs = []
    for h in range(heads):                       # static loop; pure lane slices, no relayout
        sl = slice(h * dk, (h + 1) * dk)
        s = lax.dot_general(q[:, sl], k[:, sl], (((1,), (1,)), ((), ())),
                            preferred_element_type=jnp.float32) * scale
        outs.append(jnp.dot(_softmax_last(s), v[:, sl],
                            preferred_element_type=jnp.float32))
    o = jnp.concatenate(outs, axis=-1)
    return jnp.dot(o, w[:, 3 * D:], preferred_element_type=jnp.float32) + b[:, 3 * D:]


def _ffn(x, fp):
    h = jnp.dot(x, fp['w1'][...], preferred_element_type=jnp.float32) + fp['b1'][...]
    h = jnp.maximum(h, 0.0)                      # (8, 512) hidden: 4 vregs, no scratch needed
    return jnp.dot(h, fp['w2'][...], preferred_element_type=jnp.float32) + fp['b2'][...]


# TODO(synk): Encoder/EncoderLayer/Decoder/DecoderLayer definitions were not
# included; the standard pre-norm Annotated-Transformer structure is assumed.
def _encoder(x, p, heads):
    for lp in p['layers']:
        lns = lp['lns'][...]                     # (4, D): [ln1_g, ln1_b, ln2_g, ln2_b]
        y = _layernorm(x, lns[0:1], lns[1:2])
        x = x + _mha(y, y, lp['attn_w'], lp['attn_b'], heads, True)
        y = _layernorm(x, lns[2:3], lns[3:4])
        x = x + _ffn(y, lp['ff'])
    norm = p['norm'][...]                        # (2, D): [g, b]
    return _layernorm(x, norm[0:1], norm[1:2])


def _decoder(x, mem, p, heads):
    for lp in p['layers']:
        lns = lp['lns'][...]                     # (6, D): [ln1_g, ln1_b, ln2_g, ln2_b, ln3_g, ln3_b]
        y = _layernorm(x, lns[0:1], lns[1:2])
        x = x + _mha(y, y, lp['self_w'], lp['self_b'], heads, True)
        y = _layernorm(x, lns[2:3], lns[3:4])
        x = x + _mha(y, mem, lp['src_w'], lp['src_b'], heads, False)
        y = _layernorm(x, lns[4:5], lns[5:6])
        x = x + _ffn(y, lp['ff'])
    norm = p['norm'][...]
    return _layernorm(x, norm[0:1], norm[1:2])


def _bilstm_last_hidden(emb_t, mask_t, lp):
    """emb_t: (T, S, E) time-major caption embeddings; mask_t: (T, S, 1).
    Returns (S, 2*LSTM_H) final hidden states == pack_padded_sequence + LSTM hn (fwd||bwd)."""
    T, S, E = emb_t.shape
    H = LSTM_H
    x2 = emb_t.reshape(T * S, E)
    gi_f = (jnp.dot(x2, lp['w_ih_f'][...], preferred_element_type=jnp.float32)
            + lp['b_f'][...]).reshape(T, S, 4 * H)
    gi_b = (jnp.dot(x2, lp['w_ih_b'][...], preferred_element_type=jnp.float32)
            + lp['b_b'][...]).reshape(T, S, 4 * H)

    def run(gi, w_hh, reverse):
        h = jnp.zeros((S, H), jnp.float32)
        c = jnp.zeros((S, H), jnp.float32)
        steps = range(T - 1, -1, -1) if reverse else range(T)
        for t in steps:                          # static unrolled loop (T == 8); h/c stay in vregs
            g = gi[t] + jnp.dot(h, w_hh, preferred_element_type=jnp.float32)
            i_g = _sigmoid(g[:, 0:H])            # PyTorch gate order: i, f, g, o
            f_g = _sigmoid(g[:, H:2 * H])
            g_g = jnp.tanh(g[:, 2 * H:3 * H])
            o_g = _sigmoid(g[:, 3 * H:4 * H])
            c_new = f_g * c + i_g * g_g
            h_new = o_g * jnp.tanh(c_new)
            m = mask_t[t]                        # (S, 1): packed-sequence semantics
            h = m * h_new + (1.0 - m) * h
            c = m * c_new + (1.0 - m) * c
        return h

    h_f = run(gi_f, lp['w_hh_f'][...], False)
    h_b = run(gi_b, lp['w_hh_b'][...], True)
    return jnp.concatenate([h_f, h_b], axis=-1)


# ------------------------------ fused kernel ----------------------------------
def _make_kernel(treedef, n_params):
    def kernel(*refs):
        (emb_ref, lmask_ref, img_ref, pos_sen_ref, pos_img_ref, masks_ref) = refs[:N_DATA]
        param_refs = refs[N_DATA:N_DATA + n_params]
        out_ref = refs[N_DATA + n_params]
        p = jax.tree_util.tree_unflatten(treedef, param_refs)
        D = D_RNN

        # ---------------- rnn_enc (BiLSTM final hidden per sentence) ----------------
        sentences = _bilstm_last_hidden(emb_ref[...], lmask_ref[...], p['lstm'])   # (Ls, D)
        imags = img_ref[...]                                                        # (Li, D)
        pos_sents = pos_sen_ref[...]
        pos_imgs = pos_img_ref[...]

        w03 = p['lin03_w'][...]          # packed [lin0|lin1|lin2|lin3], (D, 4D)
        b03 = p['lin03_b'][...]          # (1, 4D)

        # linears[3](pos_sents); transformer encoders (masks are all-ones in the torch code)
        pos_sent = jnp.dot(pos_sents, w03[:, 3 * D:4 * D],
                           preferred_element_type=jnp.float32) + b03[:, 3 * D:4 * D]
        parasen = _encoder(sentences + pos_sent, p['encoder'], N_HEADS)             # (Ls, D)
        paraim = _encoder(imags, p['encoder2'], N_HEADS)                            # (Li, D)

        # ---------------- BiAttention + positional attention ----------------
        # TODO(synk): BiAttention source not given; assumed per-head softmaxed
        # image->sentence attention weights, averaged over heads; the torch code
        # then applies an additional explicit F.softmax (reproduced below).
        wb = p['biatten_w'][...]         # packed [Wq|Wk], (D, 2D)
        bb = p['biatten_b'][...]
        q_bi = jnp.dot(paraim, wb[:, :D], preferred_element_type=jnp.float32) + bb[:, :D]
        k_bi = jnp.dot(parasen, wb[:, D:2 * D], preferred_element_type=jnp.float32) + bb[:, D:2 * D]
        dk_bi = D // BI_HEADS
        scale_bi = 1.0 / math.sqrt(dk_bi)
        acc = jnp.zeros((imags.shape[0], sentences.shape[0]), jnp.float32)
        for h in range(BI_HEADS):
            sl = slice(h * dk_bi, (h + 1) * dk_bi)
            s = lax.dot_general(q_bi[:, sl], k_bi[:, sl], (((1,), (1,)), ((), ())),
                                preferred_element_type=jnp.float32) * scale_bi
            acc = acc + _softmax_last(s)
        biatten = _softmax_last(acc / float(BI_HEADS))                              # (Li, Ls)
        pos_proj = jnp.dot(pos_sents, w03[:, 2 * D:3 * D],
                           preferred_element_type=jnp.float32) + b03[:, 2 * D:3 * D]  # linears[2]
        posi_attention = jnp.dot(biatten, pos_proj, preferred_element_type=jnp.float32)  # (Li, D)

        para_memory = paraim + posi_attention
        im_mean = jnp.mean(paraim, axis=0, keepdims=True)                           # (1, D)
        sen_mean = jnp.mean(parasen, axis=0, keepdims=True)
        key = jnp.dot(posi_attention, w03[:, D:2 * D],
                      preferred_element_type=jnp.float32) + b03[:, D:2 * D]         # linears[1]

        # ---------------- decoder + pointer scores ----------------
        dec_out = _decoder(pos_imgs, para_memory, p['decoder'], N_HEADS)            # (Li, D)
        query = jnp.dot(dec_out, w03[:, 0:D],
                        preferred_element_type=jnp.float32) + b03[:, 0:D]           # linears[0]

        N = query.shape[0]
        w4 = p['lin4_w'][...]            # (1, D) row layout of linears[4].weight
        b4 = p['lin4_b'][...]            # (1, 1)
        # sum_e[t, j] = linears[4](relu(query_t + key_j))    (batch dim of size 1 summed out)
        e = jnp.maximum(query[:, None, :] + key[None, :, :], 0.0)                   # (N, N, D)
        sum_e = jnp.sum(e * w4[None], axis=-1) + b4                                 # (N, N)

        # ---------------- losses ----------------
        oh = masks_ref[0]                # one-hot of order
        keep1 = masks_ref[1]             # target & not-yet-pointed (candidate mask per step)
        keep_col = masks_ref[2]          # target mask over candidates (for loss_col path)
        step_m = masks_ref[3]            # valid decoder steps

        # loss1: log-softmax over candidates (last axis), both masks applied,
        # NLL gathered at order[t], summed over valid steps (critic reduction='none').
        x1 = jnp.where(keep1 > 0, sum_e, NEG_INF)
        m1 = jnp.max(x1, axis=-1, keepdims=True)
        logp1 = x1 - (jnp.log(jnp.sum(jnp.exp(x1 - m1), axis=-1, keepdims=True)) + m1)
        nll1 = -(logp1 * oh * step_m)
        loss1 = jnp.sum(jnp.sum(nll1, axis=-1, keepdims=True), axis=0, keepdims=True)   # (1,1)

        # loss_col: log-softmax over decoder steps (axis 0, no transposes), target mask only,
        # mean over valid steps (nn.NLLLoss default reduction).
        x2 = jnp.where(keep_col > 0, sum_e, NEG_INF)
        m2 = jnp.max(x2, axis=0, keepdims=True)
        logp2 = x2 - (jnp.log(jnp.sum(jnp.exp(x2 - m2), axis=0, keepdims=True)) + m2)
        nll2 = -(logp2 * oh * step_m)
        tgt_cnt = jnp.sum(jnp.sum(step_m, axis=-1, keepdims=True),
                          axis=0, keepdims=True) / float(N)
        loss_col = (jnp.sum(jnp.sum(nll2, axis=-1, keepdims=True), axis=0, keepdims=True)
                    / jnp.maximum(tgt_cnt, 1.0))

        total = (loss1 + loss_col) / float(N)                                       # (1, 1)

        # single lane-dense (1, 128) output row: [loss | 0.. | im_mean | sen_mean | 0..]
        pad_a = jnp.zeros((1, D - 1), jnp.float32)
        pad_b = jnp.zeros((1, OUT_LANES - 3 * D), jnp.float32)
        out_ref[...] = jnp.concatenate([total, pad_a, im_mean, sen_mean, pad_b], axis=-1)

    return kernel


# ---------------------------- host-side glue ----------------------------------
def positional_encodings(L, D):
    pos = jnp.arange(L, dtype=jnp.float32)[:, None]
    ch = jnp.arange(D)
    even_ch = jnp.where(ch % 2 == 0, ch, ch - 1).astype(jnp.float32)
    div = jnp.power(10000.0, even_ch / D)
    ang = pos / div[None, :]
    return jnp.where((ch % 2 == 0)[None, :], jnp.sin(ang), jnp.cos(ang)).astype(jnp.float32)


@jax.jit
def _natorder_forward_jit(params, imgfeature, captions, lengths, order, tgt):
    # embedding gather + mask construction (cheap glue; fused into the same jit executable)
    emb = params['embed'][captions].astype(jnp.float32)              # (S, T, E)
    emb_t = jnp.transpose(emb, (1, 0, 2))                            # (T, S, E) time-major
    T = emb_t.shape[0]
    lmask_t = (jnp.arange(T)[:, None] < lengths[None, :]
               ).astype(jnp.float32)[:, :, None]                     # (T, S, 1)

    Li = imgfeature.shape[0]
    Ls = captions.shape[0]                                           # batch == 1 -> maxdoclen == #sentences
    pos_sents = positional_encodings(Ls, D_RNN)
    pos_imgs = positional_encodings(Li, D_RNN)

    N = order.shape[0]
    oh = jax.nn.one_hot(order, N, dtype=jnp.float32)                 # (N, N)
    cum = jnp.cumsum(oh, axis=0)
    pointed = jnp.concatenate([jnp.zeros((1, N), jnp.float32),
                               (cum[:-1] > 0).astype(jnp.float32)], axis=0)
    pmbt = (jnp.arange(N) < tgt).astype(jnp.float32)                 # pointed_mask_by_target
    keep1 = pmbt[None, :] * (1.0 - pointed)                          # both masks (loss1 path)
    keep_col = jnp.broadcast_to(pmbt[None, :], (N, N))               # target mask (loss_col path)
    step_mask = jnp.broadcast_to(pmbt[:, None], (N, N))              # valid decoder steps
    masks = jnp.stack([oh, keep1, keep_col, step_mask], axis=0)      # (4, N, N) packed

    data = [emb_t, lmask_t, imgfeature.astype(jnp.float32), pos_sents, pos_imgs, masks]
    assert len(data) == N_DATA

    kp = {k: v for k, v in params.items() if k != 'embed'}
    flat, treedef = jax.tree_util.tree_flatten(kp)

    out_shape = jax.ShapeDtypeStruct((1, OUT_LANES), jnp.float32)

    operands = data + flat
    packed = pl.pallas_call(
        _make_kernel(treedef, len(flat)),
        out_shape=out_shape,
        grid=(1,),
        in_specs=[_full_spec(a.shape) for a in operands],
        out_specs=_full_spec((1, OUT_LANES)),
        compiler_params=pltpu.CompilerParams(dimension_semantics=("arbitrary",)),
    )(*operands)

    total = packed[0, 0]
    im_mean = packed[:, D_RNN:2 * D_RNN]
    sen_mean = packed[:, 2 * D_RNN:3 * D_RNN]
    return total, im_mean, sen_mean


def natorder_forward(params, imgfeature, captions, lengths, order, tgt_len, doc_num):
    batch_size = len(doc_num)
    assert batch_size == 1  # TODO(synk): fused kernel handles a single document per call.
    tgt = jnp.asarray(tgt_len[0], jnp.int32)
    return _natorder_forward_jit(params, imgfeature, captions, lengths, order, tgt)


# ------------------------------ parameters ------------------------------------
def _dense(key, fan_in, fan_out):
    kw, kb = jax.random.split(key)
    bound = 1.0 / jnp.sqrt(jnp.float32(fan_in))
    w = jax.random.uniform(kw, (fan_in, fan_out), jnp.float32, -bound, bound)
    b = jax.random.uniform(kb, (1, fan_out), jnp.float32, -bound, bound)
    return w, b


def init_params(key):
    it = iter(jax.random.split(key, 256))
    nk = lambda: next(it)

    def attn_packed(d):                               # [Wq|Wk|Wv|Wo] lane-dense packing
        ws, bs = zip(*[_dense(nk(), d, d) for _ in range(4)])
        return jnp.concatenate(ws, axis=1), jnp.concatenate(bs, axis=1)

    def ff(d, dff):
        w1, b1 = _dense(nk(), d, dff)
        w2, b2 = _dense(nk(), dff, d)
        return dict(w1=w1, b1=b1, w2=w2, b2=b2)

    def ln_slab(n, d):                                # n LayerNorm (g, b) pairs stacked on sublanes
        rows = []
        for _ in range(n):
            rows.append(jnp.ones((1, d), jnp.float32))
            rows.append(jnp.zeros((1, d), jnp.float32))
        return jnp.concatenate(rows, axis=0)          # (2n, d)

    def enc_layer(d, dff):
        aw, ab = attn_packed(d)
        return dict(attn_w=aw, attn_b=ab, ff=ff(d, dff), lns=ln_slab(2, d))

    def encoder(d, dff, n):
        return dict(layers=[enc_layer(d, dff) for _ in range(n)], norm=ln_slab(1, d))

    def dec_layer(d, dff):
        sw, sb = attn_packed(d)
        cw, cb = attn_packed(d)
        return dict(self_w=sw, self_b=sb, src_w=cw, src_b=cb, ff=ff(d, dff),
                    lns=ln_slab(3, d))

    def lstm(e, h):
        wi_f, bi_f = _dense(nk(), e, 4 * h); wh_f, bh_f = _dense(nk(), h, 4 * h)
        wi_b, bi_b = _dense(nk(), e, 4 * h); wh_b, bh_b = _dense(nk(), h, 4 * h)
        return dict(w_ih_f=wi_f, w_hh_f=wh_f, b_f=bi_f + bh_f,
                    w_ih_b=wi_b, w_hh_b=wh_b, b_b=bi_b + bh_b)

    # linears[0..3] packed into one lane-dense (32, 128) slab; linears[4] as row vector
    lw, lb = zip(*[_dense(nk(), D_RNN, D_MLP) for _ in range(4)])
    lin03_w = jnp.concatenate(lw, axis=1)            # (32, 128)
    lin03_b = jnp.concatenate(lb, axis=1)            # (1, 128)
    w4, b4 = _dense(nk(), D_MLP, 1)
    lin4_w = w4.reshape(1, D_MLP)                    # (1, 32) row layout
    lin4_b = b4                                      # (1, 1)

    bq_w, bq_b = _dense(nk(), D_RNN, D_RNN)
    bk_w, bk_b = _dense(nk(), D_RNN, D_RNN)

    # TODO(synk): Encoderimage (self.img_enc) is constructed but never used in
    # forward(), so it is omitted here.
    return dict(
        embed=jax.random.normal(nk(), (DOC_VOCAB, EMBED_SIZE), jnp.float32),
        lstm=lstm(EMBED_SIZE, LSTM_H),
        lin03_w=lin03_w, lin03_b=lin03_b,
        lin4_w=lin4_w, lin4_b=lin4_b,
        encoder=encoder(D_RNN, D_FF, GNNL),
        encoder2=encoder(D_RNN, D_FF, GNNL),
        decoder=dict(layers=[dec_layer(D_RNN, D_FF)], norm=ln_slab(1, D_RNN)),
        biatten_w=jnp.concatenate([bq_w, bk_w], axis=1),   # (32, 64)
        biatten_b=jnp.concatenate([bq_b, bk_b], axis=1),   # (1, 64)
    )


# --------------------------------- main ----------------------------------------
if __name__ == "__main__":
    root = jax.random.PRNGKey(0)
    pkey, dkey = jax.random.split(root)
    params = init_params(pkey)

    k1, k2 = jax.random.split(dkey)
    imgfeature = jax.random.normal(k1, (NUM_IMG, D_RNN), jnp.float32)
    captions = jax.random.randint(k2, (NUM_SENT, MAX_CAP_LEN), 1, DOC_VOCAB)
    lengths = jnp.array([8, 7, 6, 8, 5, 8, 4, 8], jnp.int32)
    order = jnp.array([3, 1, 4, 0, 6, 2, 7, 5], jnp.int32)      # permutation of images
    tgt_len = [NUM_IMG]
    doc_num = [NUM_SENT]

    total, im_mean, sen_mean = natorder_forward(
        params, imgfeature, captions, lengths, order, tgt_len, doc_num)
    jax.block_until_ready((total, im_mean, sen_mean))
    assert im_mean.shape == (1, D_RNN) and sen_mean.shape == (1, D_RNN)
    assert total.shape == ()
    assert bool(jnp.isfinite(total))
    print("KERNEL_OK")
</pallas_src>

<mosaic_0001>
module attributes {stable_mosaic.version = 11 : i64} {
  func.func @kernel(%arg0: i32, %arg1: memref<8x8x32xf32, #tpu.memory_space<vmem>>, %arg2: memref<8x8x1xf32, #tpu.memory_space<vmem>>, %arg3: memref<8x32xf32, #tpu.memory_space<vmem>>, %arg4: memref<8x32xf32, #tpu.memory_space<vmem>>, %arg5: memref<8x32xf32, #tpu.memory_space<vmem>>, %arg6: memref<4x8x8xf32, #tpu.memory_space<vmem>>, %arg7: memref<1x64xf32, #tpu.memory_space<vmem>>, %arg8: memref<32x64xf32, #tpu.memory_space<vmem>>, %arg9: memref<1x512xf32, #tpu.memory_space<vmem>>, %arg10: memref<1x32xf32, #tpu.memory_space<vmem>>, %arg11: memref<32x512xf32, #tpu.memory_space<vmem>>, %arg12: memref<512x32xf32, #tpu.memory_space<vmem>>, %arg13: memref<6x32xf32, #tpu.memory_space<vmem>>, %arg14: memref<1x128xf32, #tpu.memory_space<vmem>>, %arg15: memref<32x128xf32, #tpu.memory_space<vmem>>, %arg16: memref<1x128xf32, #tpu.memory_space<vmem>>, %arg17: memref<32x128xf32, #tpu.memory_space<vmem>>, %arg18: memref<2x32xf32, #tpu.memory_space<vmem>>, %arg19: memref<1x128xf32, #tpu.memory_space<vmem>>, %arg20: memref<32x128xf32, #tpu.memory_space<vmem>>, %arg21: memref<1x512xf32, #tpu.memory_space<vmem>>, %arg22: memref<1x32xf32, #tpu.memory_space<vmem>>, %arg23: memref<32x512xf32, #tpu.memory_space<vmem>>, %arg24: memref<512x32xf32, #tpu.memory_space<vmem>>, %arg25: memref<4x32xf32, #tpu.memory_space<vmem>>, %arg26: memref<2x32xf32, #tpu.memory_space<vmem>>, %arg27: memref<1x128xf32, #tpu.memory_space<vmem>>, %arg28: memref<32x128xf32, #tpu.memory_space<vmem>>, %arg29: memref<1x512xf32, #tpu.memory_space<vmem>>, %arg30: memref<1x32xf32, #tpu.memory_space<vmem>>, %arg31: memref<32x512xf32, #tpu.memory_space<vmem>>, %arg32: memref<512x32xf32, #tpu.memory_space<vmem>>, %arg33: memref<4x32xf32, #tpu.memory_space<vmem>>, %arg34: memref<2x32xf32, #tpu.memory_space<vmem>>, %arg35: memref<1x128xf32, #tpu.memory_space<vmem>>, %arg36: memref<32x128xf32, #tpu.memory_space<vmem>>, %arg37: memref<1x1xf32, #tpu.memory_space<vmem>>, %arg38: memref<1x32xf32, #tpu.memory_space<vmem>>, %arg39: memref<1x64xf32, #tpu.memory_space<vmem>>, %arg40: memref<1x64xf32, #tpu.memory_space<vmem>>, %arg41: memref<16x64xf32, #tpu.memory_space<vmem>>, %arg42: memref<16x64xf32, #tpu.memory_space<vmem>>, %arg43: memref<32x64xf32, #tpu.memory_space<vmem>>, %arg44: memref<32x64xf32, #tpu.memory_space<vmem>>, %arg45: memref<1x128xf32, #tpu.memory_space<vmem>>) attributes {dimension_semantics = [#tpu.dimension_semantics<arbitrary>], iteration_bounds = array<i64: 1>, scalar_prefetch = 0 : i64, scratch_operands = 0 : i64, tpu.core_type = #tpu.core_type<tc>, window_params = [{pipeline_mode = #tpu.pipeline_mode<synchronous>, transform_indices = @transform_0, window_bounds = array<i64: 8, 8, 32>}, {pipeline_mode = #tpu.pipeline_mode<synchronous>, transform_indices = @transform_1, window_bounds = array<i64: 8, 8, 1>}, {pipeline_mode = #tpu.pipeline_mode<synchronous>, transform_indices = @transform_2, window_bounds = array<i64: 8, 32>}, {pipeline_mode = #tpu.pipeline_mode<synchronous>, transform_indices = @transform_3, window_bounds = array<i64: 8, 32>}, {pipeline_mode = #tpu.pipeline_mode<synchronous>, transform_indices = @transform_4, window_bounds = array<i64: 8, 32>}, {pipeline_mode = #tpu.pipeline_mode<synchronous>, transform_indices = @transform_5, window_bounds = array<i64: 4, 8, 8>}, {pipeline_mode = #tpu.pipeline_mode<synchronous>, transform_indices = @transform_6, window_bounds = array<i64: 1, 64>}, {pipeline_mode = #tpu.pipeline_mode<synchronous>, transform_indices = @transform_7, window_bounds = array<i64: 32, 64>}, {pipeline_mode = #tpu.pipeline_mode<synchronous>, transform_indices = @transform_8, window_bounds = array<i64: 1, 512>}, {pipeline_mode = #tpu.pipeline_mode<synchronous>, transform_indices = @transform_9, window_bounds = array<i64: 1, 32>}, {pipeline_mode = #tpu.pipeline_mode<synchronous>, transform_indices = @transform_10, window_bounds = array<i64: 32, 512>}, {pipeline_mode = #tpu.pipeline_mode<synchronous>, transform_indices = @transform_11, window_bounds = array<i64: 512, 32>}, {pipeline_mode = #tpu.pipeline_mode<synchronous>, transform_indices = @transform_12, window_bounds = array<i64: 6, 32>}, {pipeline_mode = #tpu.pipeline_mode<synchronous>, transform_indices = @transform_13, window_bounds = array<i64: 1, 128>}, {pipeline_mode = #tpu.pipeline_mode<synchronous>, transform_indices = @transform_14, window_bounds = array<i64: 32, 128>}, {pipeline_mode = #tpu.pipeline_mode<synchronous>, transform_indices = @transform_15, window_bounds = array<i64: 1, 128>}, {pipeline_mode = #tpu.pipeline_mode<synchronous>, transform_indices = @transform_16, window_bounds = array<i64: 32, 128>}, {pipeline_mode = #tpu.pipeline_mode<synchronous>, transform_indices = @transform_17, window_bounds = array<i64: 2, 32>}, {pipeline_mode = #tpu.pipeline_mode<synchronous>, transform_indices = @transform_18, window_bounds = array<i64: 1, 128>}, {pipeline_mode = #tpu.pipeline_mode<synchronous>, transform_indices = @transform_19, window_bounds = array<i64: 32, 128>}, {pipeline_mode = #tpu.pipeline_mode<synchronous>, transform_indices = @transform_20, window_bounds = array<i64: 1, 512>}, {pipeline_mode = #tpu.pipeline_mode<synchronous>, transform_indices = @transform_21, window_bounds = array<i64: 1, 32>}, {pipeline_mode = #tpu.pipeline_mode<synchronous>, transform_indices = @transform_22, window_bounds = array<i64: 32, 512>}, {pipeline_mode = #tpu.pipeline_mode<synchronous>, transform_indices = @transform_23, window_bounds = array<i64: 512, 32>}, {pipeline_mode = #tpu.pipeline_mode<synchronous>, transform_indices = @transform_24, window_bounds = array<i64: 4, 32>}, {pipeline_mode = #tpu.pipeline_mode<synchronous>, transform_indices = @transform_25, window_bounds = array<i64: 2, 32>}, {pipeline_mode = #tpu.pipeline_mode<synchronous>, transform_indices = @transform_26, window_bounds = array<i64: 1, 128>}, {pipeline_mode = #tpu.pipeline_mode<synchronous>, transform_indices = @transform_27, window_bounds = array<i64: 32, 128>}, {pipeline_mode = #tpu.pipeline_mode<synchronous>, transform_indices = @transform_28, window_bounds = array<i64: 1, 512>}, {pipeline_mode = #tpu.pipeline_mode<synchronous>, transform_indices = @transform_29, window_bounds = array<i64: 1, 32>}, {pipeline_mode = #tpu.pipeline_mode<synchronous>, transform_indices = @transform_30, window_bounds = array<i64: 32, 512>}, {pipeline_mode = #tpu.pipeline_mode<synchronous>, transform_indices = @transform_31, window_bounds = array<i64: 512, 32>}, {pipeline_mode = #tpu.pipeline_mode<synchronous>, transform_indices = @transform_32, window_bounds = array<i64: 4, 32>}, {pipeline_mode = #tpu.pipeline_mode<synchronous>, transform_indices = @transform_33, window_bounds = array<i64: 2, 32>}, {pipeline_mode = #tpu.pipeline_mode<synchronous>, transform_indices = @transform_34, window_bounds = array<i64: 1, 128>}, {pipeline_mode = #tpu.pipeline_mode<synchronous>, transform_indices = @transform_35, window_bounds = array<i64: 32, 128>}, {pipeline_mode = #tpu.pipeline_mode<synchronous>, transform_indices = @transform_36, window_bounds = array<i64: 1, 1>}, {pipeline_mode = #tpu.pipeline_mode<synchronous>, transform_indices = @transform_37, window_bounds = array<i64: 1, 32>}, {pipeline_mode = #tpu.pipeline_mode<synchronous>, transform_indices = @transform_38, window_bounds = array<i64: 1, 64>}, {pipeline_mode = #tpu.pipeline_mode<synchronous>, transform_indices = @transform_39, window_bounds = array<i64: 1, 64>}, {pipeline_mode = #tpu.pipeline_mode<synchronous>, transform_indices = @transform_40, window_bounds = array<i64: 16, 64>}, {pipeline_mode = #tpu.pipeline_mode<synchronous>, transform_indices = @transform_41, window_bounds = array<i64: 16, 64>}, {pipeline_mode = #tpu.pipeline_mode<synchronous>, transform_indices = @transform_42, window_bounds = array<i64: 32, 64>}, {pipeline_mode = #tpu.pipeline_mode<synchronous>, transform_indices = @transform_43, window_bounds = array<i64: 32, 64>}, {pipeline_mode = #tpu.pipeline_mode<synchronous>, transform_indices = @transform_44, window_bounds = array<i64: 1, 128>}]} {
    %c0 = arith.constant 0 : index
    %c0_0 = arith.constant 0 : index
    %c0_1 = arith.constant 0 : index
    %0 = vector.load %arg1[%c0, %c0_0, %c0_1] : memref<8x8x32xf32, #tpu.memory_space<vmem>>, vector<8x8x32xf32>
    %c0_2 = arith.constant 0 : index
    %c0_3 = arith.constant 0 : index
    %c0_4 = arith.constant 0 : index
    %1 = vector.load %arg2[%c0_2, %c0_3, %c0_4] : memref<8x8x1xf32, #tpu.memory_space<vmem>>, vector<8x8x1xf32>
    %2 = vector.shape_cast %0 : vector<8x8x32xf32> to vector<64x32xf32>
    %c0_5 = arith.constant 0 : index
    %c0_6 = arith.constant 0 : index
    %3 = vector.load %arg44[%c0_5, %c0_6] : memref<32x64xf32, #tpu.memory_space<vmem>>, vector<32x64xf32>
    %cst = arith.constant dense<0.000000e+00> : vector<64x64xf32>
    %4 = tpu.matmul %2, %3, %cst {dimension_numbers = #tpu.dot_dimension_numbers<[1], [0], [0], [1], [0, 0, 1, 1], [], []>} : vector<64x32xf32>, vector<32x64xf32>, vector<64x64xf32> -> vector<64x64xf32>
    %c0_7 = arith.constant 0 : index
    %c0_8 = arith.constant 0 : index
    %5 = vector.load %arg40[%c0_7, %c0_8] : memref<1x64xf32, #tpu.memory_space<vmem>>, vector<1x64xf32>
    %6 = vector.broadcast %5 : vector<1x64xf32> to vector<64x64xf32>
    %7 = arith.addf %4, %6 : vector<64x64xf32>
    %8 = vector.shape_cast %7 : vector<64x64xf32> to vector<8x8x64xf32>
    %c0_9 = arith.constant 0 : index
    %c0_10 = arith.constant 0 : index
    %9 = vector.load %arg43[%c0_9, %c0_10] : memref<32x64xf32, #tpu.memory_space<vmem>>, vector<32x64xf32>
    %cst_11 = arith.constant dense<0.000000e+00> : vector<64x64xf32>
    %10 = tpu.matmul %2, %9, %cst_11 {dimension_numbers = #tpu.dot_dimension_numbers<[1], [0], [0], [1], [0, 0, 1, 1], [], []>} : vector<64x32xf32>, vector<32x64xf32>, vector<64x64xf32> -> vector<64x64xf32>
    %c0_12 = arith.constant 0 : index
    %c0_13 = arith.constant 0 : index
    %11 = vector.load %arg39[%c0_12, %c0_13] : memref<1x64xf32, #tpu.memory_space<vmem>>, vector<1x64xf32>
    %12 = vector.broadcast %11 : vector<1x64xf32> to vector<64x64xf32>
    %13 = arith.addf %10, %12 : vector<64x64xf32>
    %14 = vector.shape_cast %13 : vector<64x64xf32> to vector<8x8x64xf32>
    %c0_14 = arith.constant 0 : index
    %c0_15 = arith.constant 0 : index
    %15 = vector.load %arg42[%c0_14, %c0_15] : memref<16x64xf32, #tpu.memory_space<vmem>>, vector<16x64xf32>
    %cst_16 = arith.constant 0.000000e+00 : f32
    %16 = vector.broadcast %cst_16 : f32 to vector<8x16xf32>
    %cst_17 = arith.constant 0.000000e+00 : f32
    %17 = vector.broadcast %cst_17 : f32 to vector<8x16xf32>
    %18 = vector.extract_strided_slice %8 {offsets = [0, 0, 0], sizes = [1, 8, 64], strides = [1, 1, 1]} : vector<8x8x64xf32> to vector<1x8x64xf32>
    %19 = vector.shape_cast %18 : vector<1x8x64xf32> to vector<8x64xf32>
    %cst_18 = arith.constant dense<0.000000e+00> : vector<8x64xf32>
    %20 = tpu.matmul %16, %15, %cst_18 {dimension_numbers = #tpu.dot_dimension_numbers<[1], [0], [0], [1], [0, 0, 1, 1], [], []>} : vector<8x16xf32>, vector<16x64xf32>, vector<8x64xf32> -> vector<8x64xf32>
    %21 = arith.addf %19, %20 : vector<8x64xf32>
    %22 = vector.extract_strided_slice %21 {offsets = [0, 0], sizes = [8, 16], strides = [1, 1]} : vector<8x64xf32> to vector<8x16xf32>
    %cst_19 = arith.constant 0.000000e+00 : f32
    %23 = vector.broadcast %cst_19 : f32 to vector<8x16xf32>
    %24 = arith.subf %23, %22 : vector<8x16xf32>
    %25 = math.exp %24 : vector<8x16xf32>
    %cst_20 = arith.constant 1.000000e+00 : f32
    %26 = vector.broadcast %cst_20 : f32 to vector<8x16xf32>
    %27 = arith.addf %26, %25 : vector<8x16xf32>
    %cst_21 = arith.constant 1.000000e+00 : f32
    %28 = vector.broadcast %cst_21 : f32 to vector<8x16xf32>
    %29 = arith.divf %28, %27 : vector<8x16xf32>
    %30 = vector.extract_strided_slice %21 {offsets = [0, 16], sizes = [8, 16], strides = [1, 1]} : vector<8x64xf32> to vector<8x16xf32>
    %cst_22 = arith.constant 0.000000e+00 : f32
    %31 = vector.broadcast %cst_22 : f32 to vector<8x16xf32>
    %32 = arith.subf %31, %30 : vector<8x16xf32>
    %33 = math.exp %32 : vector<8x16xf32>
    %cst_23 = arith.constant 1.000000e+00 : f32
    %34 = vector.broadcast %cst_23 : f32 to vector<8x16xf32>
    %35 = arith.addf %34, %33 : vector<8x16xf32>
    %cst_24 = arith.constant 1.000000e+00 : f32
    %36 = vector.broadcast %cst_24 : f32 to vector<8x16xf32>
    %37 = arith.divf %36, %35 : vector<8x16xf32>
    %38 = vector.extract_strided_slice %21 {offsets = [0, 32], sizes = [8, 16], strides = [1, 1]} : vector<8x64xf32> to vector<8x16xf32>
    %39 = math.tanh %38 : vector<8x16xf32>
    %40 = vector.extract_strided_slice %21 {offsets = [0, 48], sizes = [8, 16], strides = [1, 1]} : vector<8x64xf32> to vector<8x16xf32>
    %cst_25 = arith.constant 0.000000e+00 : f32
    %41 = vector.broadcast %cst_25 : f32 to vector<8x16xf32>
    %42 = arith.subf %41, %40 : vector<8x16xf32>
    %43 = math.exp %42 : vector<8x16xf32>
    %cst_26 = arith.constant 1.000000e+00 : f32
    %44 = vector.broadcast %cst_26 : f32 to vector<8x16xf32>
    %45 = arith.addf %44, %43 : vector<8x16xf32>
    %cst_27 = arith.constant 1.000000e+00 : f32
    %46 = vector.broadcast %cst_27 : f32 to vector<8x16xf32>
    %47 = arith.divf %46, %45 : vector<8x16xf32>
    %48 = arith.mulf %37, %17 : vector<8x16xf32>
    %49 = arith.mulf %29, %39 : vector<8x16xf32>
    %50 = arith.addf %48, %49 : vector<8x16xf32>
    %51 = math.tanh %50 : vector<8x16xf32>
    %52 = arith.mulf %47, %51 : vector<8x16xf32>
    %53 = vector.extract_strided_slice %1 {offsets = [0, 0, 0], sizes = [1, 8, 1], strides = [1, 1, 1]} : vector<8x8x1xf32> to vector<1x8x1xf32>
    %54 = vector.shape_cast %53 : vector<1x8x1xf32> to vector<8x1xf32>
    %55 = vector.broadcast %54 : vector<8x1xf32> to vector<8x16xf32>
    %56 = arith.mulf %55, %52 : vector<8x16xf32>
    %cst_28 = arith.constant 1.000000e+00 : f32
    %57 = vector.broadcast %cst_28 : f32 to vector<8x1xf32>
    %58 = arith.subf %57, %54 : vector<8x1xf32>
    %59 = vector.broadcast %58 : vector<8x1xf32> to vector<8x16xf32>
    %60 = arith.mulf %59, %16 : vector<8x16xf32>
    %61 = arith.addf %56, %60 : vector<8x16xf32>
    %62 = vector.broadcast %54 : vector<8x1xf32> to vector<8x16xf32>
    %63 = arith.mulf %62, %50 : vector<8x16xf32>
    %cst_29 = arith.constant 1.000000e+00 : f32
    %64 = vector.broadcast %cst_29 : f32 to vector<8x1xf32>
    %65 = arith.subf %64, %54 : vector<8x1xf32>
    %66 = vector.broadcast %65 : vector<8x1xf32> to vector<8x16xf32>
    %67 = arith.mulf %66, %17 : vector<8x16xf32>
    %68 = arith.addf %63, %67 : vector<8x16xf32>
    %69 = vector.extract_strided_slice %8 {offsets = [1, 0, 0], sizes = [1, 8, 64], strides = [1, 1, 1]} : vector<8x8x64xf32> to vector<1x8x64xf32>
    %70 = vector.shape_cast %69 : vector<1x8x64xf32> to vector<8x64xf32>
    %cst_30 = arith.constant dense<0.000000e+00> : vector<8x64xf32>
    %71 = tpu.matmul %61, %15, %cst_30 {dimension_numbers = #tpu.dot_dimension_numbers<[1], [0], [0], [1], [0, 0, 1, 1], [], []>} : vector<8x16xf32>, vector<16x64xf32>, vector<8x64xf32> -> vector<8x64xf32>
    %72 = arith.addf %70, %71 : vector<8x64xf32>
    %73 = vector.extract_strided_slice %72 {offsets = [0, 0], sizes = [8, 16], strides = [1, 1]} : vector<8x64xf32> to vector<8x16xf32>
    %cst_31 = arith.constant 0.000000e+00 : f32
    %74 = vector.broadcast %cst_31 : f32 to vector<8x16xf32>
    %75 = arith.subf %74, %73 : vector<8x16xf32>
    %76 = math.exp %75 : vector<8x16xf32>
    %cst_32 = arith.constant 1.000000e+00 : f32
    %77 = vector.broadcast %cst_32 : f32 to vector<8x16xf32>
    %78 = arith.addf %77, %76 : vector<8x16xf32>
    %cst_33 = arith.constant 1.000000e+00 : f32
    %79 = vector.broadcast %cst_33 : f32 to vector<8x16xf32>
    %80 = arith.divf %79, %78 : vector<8x16xf32>
    %81 = vector.extract_strided_slice %72 {offsets = [0, 16], sizes = [8, 16], strides = [1, 1]} : vector<8x64xf32> to vector<8x16xf32>
    %cst_34 = arith.constant 0.000000e+00 : f32
    %82 = vector.broadcast %cst_34 : f32 to vector<8x16xf32>
    %83 = arith.subf %82, %81 : vector<8x16xf32>
    %84 = math.exp %83 : vector<8x16xf32>
    %cst_35 = arith.constant 1.000000e+00 : f32
    %85 = vector.broadcast %cst_35 : f32 to vector<8x16xf32>
    %86 = arith.addf %85, %84 : vector<8x16xf32>
    %cst_36 = arith.constant 1.000000e+00 : f32
    %87 = vector.broadcast %cst_36 : f32 to vector<8x16xf32>
    %88 = arith.divf %87, %86 : vector<8x16xf32>
    %89 = vector.extract_strided_slice %72 {offsets = [0, 32], sizes = [8, 16], strides = [1, 1]} : vector<8x64xf32> to vector<8x16xf32>
    %90 = math.tanh %89 : vector<8x16xf32>
    %91 = vector.extract_strided_slice %72 {offsets = [0, 48], sizes = [8, 16], strides = [1, 1]} : vector<8x64xf32> to vector<8x16xf32>
    %cst_37 = arith.constant 0.000000e+00 : f32
    %92 = vector.broadcast %cst_37 : f32 to vector<8x16xf32>
    %93 = arith.subf %92, %91 : vector<8x16xf32>
    %94 = math.exp %93 : vector<8x16xf32>
    %cst_38 = arith.constant 1.000000e+00 : f32
    %95 = vector.broadcast %cst_38 : f32 to vector<8x16xf32>
    %96 = arith.addf %95, %94 : vector<8x16xf32>
    %cst_39 = arith.constant 1.000000e+00 : f32
    %97 = vector.broadcast %cst_39 : f32 to vector<8x16xf32>
    %98 = arith.divf %97, %96 : vector<8x16xf32>
    %99 = arith.mulf %88, %68 : vector<8x16xf32>
    %100 = arith.mulf %80, %90 : vector<8x16xf32>
    %101 = arith.addf %99, %100 : vector<8x16xf32>
    %102 = math.tanh %101 : vector<8x16xf32>
    %103 = arith.mulf %98, %102 : vector<8x16xf32>
    %104 = vector.extract_strided_slice %1 {offsets = [1, 0, 0], sizes = [1, 8, 1], strides = [1, 1, 1]} : vector<8x8x1xf32> to vector<1x8x1xf32>
    %105 = vector.shape_cast %104 : vector<1x8x1xf32> to vector<8x1xf32>
    %106 = vector.broadcast %105 : vector<8x1xf32> to vector<8x16xf32>
    %107 = arith.mulf %106, %103 : vector<8x16xf32>
    %cst_40 = arith.constant 1.000000e+00 : f32
    %108 = vector.broadcast %cst_40 : f32 to vector<8x1xf32>
    %109 = arith.subf %108, %105 : vector<8x1xf32>
    %110 = vector.broadcast %109 : vector<8x1xf32> to vector<8x16xf32>
    %111 = arith.mulf %110, %61 : vector<8x16xf32>
    %112 = arith.addf %107, %111 : vector<8x16xf32>
    %113 = vector.broadcast %105 : vector<8x1xf32> to vector<8x16xf32>
    %114 = arith.mulf %113, %101 : vector<8x16xf32>
    %cst_41 = arith.constant 1.000000e+00 : f32
    %115 = vector.broadcast %cst_41 : f32 to vector<8x1xf32>
    %116 = arith.subf %115, %105 : vector<8x1xf32>
    %117 = vector.broadcast %116 : vector<8x1xf32> to vector<8x16xf32>
    %118 = arith.mulf %117, %68 : vector<8x16xf32>
    %119 = arith.addf %114, %118 : vector<8x16xf32>
    %120 = vector.extract_strided_slice %8 {offsets = [2, 0, 0], sizes = [1, 8, 64], strides = [1, 1, 1]} : vector<8x8x64xf32> to vector<1x8x64xf32>
    %121 = vector.shape_cast %120 : vector<1x8x64xf32> to vector<8x64xf32>
    %cst_42 = arith.constant dense<0.000000e+00> : vector<8x64xf32>
    %122 = tpu.matmul %112, %15, %cst_42 {dimension_numbers = #tpu.dot_dimension_numbers<[1], [0], [0], [1], [0, 0, 1, 1], [], []>} : vector<8x16xf32>, vector<16x64xf32>, vector<8x64xf32> -> vector<8x64xf32>
    %123 = arith.addf %121, %122 : vector<8x64xf32>
    %124 = vector.extract_strided_slice %123 {offsets = [0, 0], sizes = [8, 16], strides = [1, 1]} : vector<8x64xf32> to vector<8x16xf32>
    %cst_43 = arith.constant 0.000000e+00 : f32
    %125 = vector.broadcast %cst_43 : f32 to vector<8x16xf32>
    %126 = arith.subf %125, %124 : vector<8x16xf32>
    %127 = math.exp %126 : vector<8x16xf32>
    %cst_44 = arith.constant 1.000000e+00 : f32
    %128 = vector.broadcast %cst_44 : f32 to vector<8x16xf32>
    %129 = arith.addf %128, %127 : vector<8x16xf32>
    %cst_45 = arith.constant 1.000000e+00 : f32
    %130 = vector.broadcast %cst_45 : f32 to vector<8x16xf32>
    %131 = arith.divf %130, %129 : vector<8x16xf32>
    %132 = vector.extract_strided_slice %123 {offsets = [0, 16], sizes = [8, 16], strides = [1, 1]} : vector<8x64xf32> to vector<8x16xf32>
    %cst_46 = arith.constant 0.000000e+00 : f32
    %133 = vector.broadcast %cst_46 : f32 to vector<8x16xf32>
    %134 = arith.subf %133, %132 : vector<8x16xf32>
    %135 = math.exp %134 : vector<8x16xf32>
    %cst_47 = arith.constant 1.000000e+00 : f32
    %136 = vector.broadcast %cst_47 : f32 to vector<8x16xf32>
    %137 = arith.addf %136, %135 : vector<8x16xf32>
    %cst_48 = arith.constant 1.000000e+00 : f32
    %138 = vector.broadcast %cst_48 : f32 to vector<8x16xf32>
    %139 = arith.divf %138, %137 : vector<8x16xf32>
    %140 = vector.extract_strided_slice %123 {offsets = [0, 32], sizes = [8, 16], strides = [1, 1]} : vector<8x64xf32> to vector<8x16xf32>
    %141 = math.tanh %140 : vector<8x16xf32>
    %142 = vector.extract_strided_slice %123 {offsets = [0, 48], sizes = [8, 16], strides = [1, 1]} : vector<8x64xf32> to vector<8x16xf32>
    %cst_49 = arith.constant 0.000000e+00 : f32
    %143 = vector.broadcast %cst_49 : f32 to vector<8x16xf32>
    %144 = arith.subf %143, %142 : vector<8x16xf32>
    %145 = math.exp %144 : vector<8x16xf32>
    %cst_50 = arith.constant 1.000000e+00 : f32
    %146 = vector.broadcast %cst_50 : f32 to vector<8x16xf32>
    %147 = arith.addf %146, %145 : vector<8x16xf32>
    %cst_51 = arith.constant 1.000000e+00 : f32
    %148 = vector.broadcast %cst_51 : f32 to vector<8x16xf32>
    %149 = arith.divf %148, %147 : vector<8x16xf32>
    %150 = arith.mulf %139, %119 : vector<8x16xf32>
    %151 = arith.mulf %131, %141 : vector<8x16xf32>
    %152 = arith.addf %150, %151 : vector<8x16xf32>
    %153 = math.tanh %152 : vector<8x16xf32>
    %154 = arith.mulf %149, %153 : vector<8x16xf32>
    %155 = vector.extract_strided_slice %1 {offsets = [2, 0, 0], sizes = [1, 8, 1], strides = [1, 1, 1]} : vector<8x8x1xf32> to vector<1x8x1xf32>
    %156 = vector.shape_cast %155 : vector<1x8x1xf32> to vector<8x1xf32>
    %157 = vector.broadcast %156 : vector<8x1xf32> to vector<8x16xf32>
    %158 = arith.mulf %157, %154 : vector<8x16xf32>
    %cst_52 = arith.constant 1.000000e+00 : f32
    %159 = vector.broadcast %cst_52 : f32 to vector<8x1xf32>
    %160 = arith.subf %159, %156 : vector<8x1xf32>
    %161 = vector.broadcast %160 : vector<8x1xf32> to vector<8x16xf32>
    %162 = arith.mulf %161, %112 : vector<8x16xf32>
    %163 = arith.addf %158, %162 : vector<8x16xf32>
    %164 = vector.broadcast %156 : vector<8x1xf32> to vector<8x16xf32>
    %165 = arith.mulf %164, %152 : vector<8x16xf32>
    %cst_53 = arith.constant 1.000000e+00 : f32
    %166 = vector.broadcast %cst_53 : f32 to vector<8x1xf32>
    %167 = arith.subf %166, %156 : vector<8x1xf32>
    %168 = vector.broadcast %167 : vector<8x1xf32> to vector<8x16xf32>
    %169 = arith.mulf %168, %119 : vector<8x16xf32>
    %170 = arith.addf %165, %169 : vector<8x16xf32>
    %171 = vector.extract_strided_slice %8 {offsets = [3, 0, 0], sizes = [1, 8, 64], strides = [1, 1, 1]} : vector<8x8x64xf32> to vector<1x8x64xf32>
    %172 = vector.shape_cast %171 : vector<1x8x64xf32> to vector<8x64xf32>
    %cst_54 = arith.constant dense<0.000000e+00> : vector<8x64xf32>
    %173 = tpu.matmul %163, %15, %cst_54 {dimension_numbers = #tpu.dot_dimension_numbers<[1], [0], [0], [1], [0, 0, 1, 1], [], []>} : vector<8x16xf32>, vector<16x64xf32>, vector<8x64xf32> -> vector<8x64xf32>
    %174 = arith.addf %172, %173 : vector<8x64xf32>
    %175 = vector.extract_strided_slice %174 {offsets = [0, 0], sizes = [8, 16], strides = [1, 1]} : vector<8x64xf32> to vector<8x16xf32>
    %cst_55 = arith.constant 0.000000e+00 : f32
    %176 = vector.broadcast %cst_55 : f32 to vector<8x16xf32>
    %177 = arith.subf %176, %175 : vector<8x16xf32>
    %178 = math.exp %177 : vector<8x16xf32>
    %cst_56 = arith.constant 1.000000e+00 : f32
    %179 = vector.broadcast %cst_56 : f32 to vector<8x16xf32>
    %180 = arith.addf %179, %178 : vector<8x16xf32>
    %cst_57 = arith.constant 1.000000e+00 : f32
    %181 = vector.broadcast %cst_57 : f32 to vector<8x16xf32>
    %182 = arith.divf %181, %180 : vector<8x16xf32>
    %183 = vector.extract_strided_slice %174 {offsets = [0, 16], sizes = [8, 16], strides = [1, 1]} : vector<8x64xf32> to vector<8x16xf32>
    %cst_58 = arith.constant 0.000000e+00 : f32
    %184 = vector.broadcast %cst_58 : f32 to vector<8x16xf32>
    %185 = arith.subf %184, %183 : vector<8x16xf32>
    %186 = math.exp %185 : vector<8x16xf32>
    %cst_59 = arith.constant 1.000000e+00 : f32
    %187 = vector.broadcast %cst_59 : f32 to vector<8x16xf32>
    %188 = arith.addf %187, %186 : vector<8x16xf32>
    %cst_60 = arith.constant 1.000000e+00 : f32
    %189 = vector.broadcast %cst_60 : f32 to vector<8x16xf32>
    %190 = arith.divf %189, %188 : vector<8x16xf32>
    %191 = vector.extract_strided_slice %174 {offsets = [0, 32], sizes = [8, 16], strides = [1, 1]} : vector<8x64xf32> to vector<8x16xf32>
    %192 = math.tanh %191 : vector<8x16xf32>
    %193 = vector.extract_strided_slice %174 {offsets = [0, 48], sizes = [8, 16], strides = [1, 1]} : vector<8x64xf32> to vector<8x16xf32>
    %cst_61 = arith.constant 0.000000e+00 : f32
    %194 = vector.broadcast %cst_61 : f32 to vector<8x16xf32>
    %195 = arith.subf %194, %193 : vector<8x16xf32>
    %196 = math.exp %195 : vector<8x16xf32>
    %cst_62 = arith.constant 1.000000e+00 : f32
    %197 = vector.broadcast %cst_62 : f32 to vector<8x16xf32>
    %198 = arith.addf %197, %196 : vector<8x16xf32>
    %cst_63 = arith.constant 1.000000e+00 : f32
    %199 = vector.broadcast %cst_63 : f32 to vector<8x16xf32>
    %200 = arith.divf %199, %198 : vector<8x16xf32>
    %201 = arith.mulf %190, %170 : vector<8x16xf32>
    %202 = arith.mulf %182, %192 : vector<8x16xf32>
    %203 = arith.addf %201, %202 : vector<8x16xf32>
    %204 = math.tanh %203 : vector<8x16xf32>
    %205 = arith.mulf %200, %204 : vector<8x16xf32>
    %206 = vector.extract_strided_slice %1 {offsets = [3, 0, 0], sizes = [1, 8, 1], strides = [1, 1, 1]} : vector<8x8x1xf32> to vector<1x8x1xf32>
    %207 = vector.shape_cast %206 : vector<1x8x1xf32> to vector<8x1xf32>
    %208 = vector.broadcast %207 : vector<8x1xf32> to vector<8x16xf32>
    %209 = arith.mulf %208, %205 : vector<8x16xf32>
    %cst_64 = arith.constant 1.000000e+00 : f32
    %210 = vector.broadcast %cst_64 : f32 to vector<8x1xf32>
    %211 = arith.subf %210, %207 : vector<8x1xf32>
    %212 = vector.broadcast %211 : vector<8x1xf32> to vector<8x16xf32>
    %213 = arith.mulf %212, %163 : vector<8x16xf32>
    %214 = arith.addf %209, %213 : vector<8x16xf32>
    %215 = vector.broadcast %207 : vector<8x1xf32> to vector<8x16xf32>
    %216 = arith.mulf %215, %203 : vector<8x16xf32>
    %cst_65 = arith.constant 1.000000e+00 : f32
    %217 = vector.broadcast %cst_65 : f32 to vector<8x1xf32>
    %218 = arith.subf %217, %207 : vector<8x1xf32>
    %219 = vector.broadcast %218 : vector<8x1xf32> to vector<8x16xf32>
    %220 = arith.mulf %219, %170 : vector<8x16xf32>
    %221 = arith.addf %216, %220 : vector<8x16xf32>
    %222 = vector.extract_strided_slice %8 {offsets = [4, 0, 0], sizes = [1, 8, 64], strides = [1, 1, 1]} : vector<8x8x64xf32> to vector<1x8x64xf32>
    %223 = vector.shape_cast %222 : vector<1x8x64xf32> to vector<8x64xf32>
    %cst_66 = arith.constant dense<0.000000e+00> : vector<8x64xf32>
    %224 = tpu.matmul %214, %15, %cst_66 {dimension_numbers = #tpu.dot_dimension_numbers<[1], [0], [0], [1], [0, 0, 1, 1], [], []>} : vector<8x16xf32>, vector<16x64xf32>, vector<8x64xf32> -> vector<8x64xf32>
    %225 = arith.addf %223, %224 : vector<8x64xf32>
    %226 = vector.extract_strided_slice %225 {offsets = [0, 0], sizes = [8, 16], strides = [1, 1]} : vector<8x64xf32> to vector<8x16xf32>
    %cst_67 = arith.constant 0.000000e+00 : f32
    %227 = vector.broadcast %cst_67 : f32 to vector<8x16xf32>
    %228 = arith.subf %227, %226 : vector<8x16xf32>
    %229 = math.exp %228 : vector<8x16xf32>
    %cst_68 = arith.constant 1.000000e+00 : f32
    %230 = vector.broadcast %cst_68 : f32 to vector<8x16xf32>
    %231 = arith.addf %230, %229 : vector<8x16xf32>
    %cst_69 = arith.constant 1.000000e+00 : f32
    %232 = vector.broadcast %cst_69 : f32 to vector<8x16xf32>
    %233 = arith.divf %232, %231 : vector<8x16xf32>
    %234 = vector.extract_strided_slice %225 {offsets = [0, 16], sizes = [8, 16], strides = [1, 1]} : vector<8x64xf32> to vector<8x16xf32>
    %cst_70 = arith.constant 0.000000e+00 : f32
    %235 = vector.broadcast %cst_70 : f32 to vector<8x16xf32>
    %236 = arith.subf %235, %234 : vector<8x16xf32>
    %237 = math.exp %236 : vector<8x16xf32>
    %cst_71 = arith.constant 1.000000e+00 : f32
    %238 = vector.broadcast %cst_71 : f32 to vector<8x16xf32>
    %239 = arith.addf %238, %237 : vector<8x16xf32>
    %cst_72 = arith.constant 1.000000e+00 : f32
    %240 = vector.broadcast %cst_72 : f32 to vector<8x16xf32>
    %241 = arith.divf %240, %239 : vector<8x16xf32>
    %242 = vector.extract_strided_slice %225 {offsets = [0, 32], sizes = [8, 16], strides = [1, 1]} : vector<8x64xf32> to vector<8x16xf32>
    %243 = math.tanh %242 : vector<8x16xf32>
    %244 = vector.extract_strided_slice %225 {offsets = [0, 48], sizes = [8, 16], strides = [1, 1]} : vector<8x64xf32> to vector<8x16xf32>
    %cst_73 = arith.constant 0.000000e+00 : f32
    %245 = vector.broadcast %cst_73 : f32 to vector<8x16xf32>
    %246 = arith.subf %245, %244 : vector<8x16xf32>
    %247 = math.exp %246 : vector<8x16xf32>
    %cst_74 = arith.constant 1.000000e+00 : f32
    %248 = vector.broadcast %cst_74 : f32 to vector<8x16xf32>
    %249 = arith.addf %248, %247 : vector<8x16xf32>
    %cst_75 = arith.constant 1.000000e+00 : f32
    %250 = vector.broadcast %cst_75 : f32 to vector<8x16xf32>
    %251 = arith.divf %250, %249 : vector<8x16xf32>
    %252 = arith.mulf %241, %221 : vector<8x16xf32>
    %253 = arith.mulf %233, %243 : vector<8x16xf32>
    %254 = arith.addf %252, %253 : vector<8x16xf32>
    %255 = math.tanh %254 : vector<8x16xf32>
    %256 = arith.mulf %251, %255 : vector<8x16xf32>
    %257 = vector.extract_strided_slice %1 {offsets = [4, 0, 0], sizes = [1, 8, 1], strides = [1, 1, 1]} : vector<8x8x1xf32> to vector<1x8x1xf32>
    %258 = vector.shape_cast %257 : vector<1x8x1xf32> to vector<8x1xf32>
    %259 = vector.broadcast %258 : vector<8x1xf32> to vector<8x16xf32>
    %260 = arith.mulf %259, %256 : vector<8x16xf32>
    %cst_76 = arith.constant 1.000000e+00 : f32
    %261 = vector.broadcast %cst_76 : f32 to vector<8x1xf32>
    %262 = arith.subf %261, %258 : vector<8x1xf32>
    %263 = vector.broadcast %262 : vector<8x1xf32> to vector<8x16xf32>
    %264 = arith.mulf %263, %214 : vector<8x16xf32>
    %265 = arith.addf %260, %264 : vector<8x16xf32>
    %266 = vector.broadcast %258 : vector<8x1xf32> to vector<8x16xf32>
    %267 = arith.mulf %266, %254 : vector<8x16xf32>
    %cst_77 = arith.constant 1.000000e+00 : f32
    %268 = vector.broadcast %cst_77 : f32 to vector<8x1xf32>
    %269 = arith.subf %268, %258 : vector<8x1xf32>
    %270 = vector.broadcast %269 : vector<8x1xf32> to vector<8x16xf32>
    %271 = arith.mulf %270, %221 : vector<8x16xf32>
    %272 = arith.addf %267, %271 : vector<8x16xf32>
    %273 = vector.extract_strided_slice %8 {offsets = [5, 0, 0], sizes = [1, 8, 64], strides = [1, 1, 1]} : vector<8x8x64xf32> to vector<1x8x64xf32>
    %274 = vector.shape_cast %273 : vector<1x8x64xf32> to vector<8x64xf32>
    %cst_78 = arith.constant dense<0.000000e+00> : vector<8x64xf32>
    %275 = tpu.matmul %265, %15, %cst_78 {dimension_numbers = #tpu.dot_dimension_numbers<[1], [0], [0], [1], [0, 0, 1, 1], [], []>} : vector<8x16xf32>, vector<16x64xf32>, vector<8x64xf32> -> vector<8x64xf32>
    %276 = arith.addf %274, %275 : vector<8x64xf32>
    %277 = vector.extract_strided_slice %276 {offsets = [0, 0], sizes = [8, 16], strides = [1, 1]} : vector<8x64xf32> to vector<8x16xf32>
    %cst_79 = arith.constant 0.000000e+00 : f32
    %278 = vector.broadcast %cst_79 : f32 to vector<8x16xf32>
    %279 = arith.subf %278, %277 : vector<8x16xf32>
    %280 = math.exp %279 : vector<8x16xf32>
    %cst_80 = arith.constant 1.000000e+00 : f32
    %281 = vector.broadcast %cst_80 : f32 to vector<8x16xf32>
    %282 = arith.addf %281, %280 : vector<8x16xf32>
    %cst_81 = arith.constant 1.000000e+00 : f32
    %283 = vector.broadcast %cst_81 : f32 to vector<8x16xf32>
    %284 = arith.divf %283, %282 : vector<8x16xf32>
    %285 = vector.extract_strided_slice %276 {offsets = [0, 16], sizes = [8, 16], strides = [1, 1]} : vector<8x64xf32> to vector<8x16xf32>
    %cst_82 = arith.constant 0.000000e+00 : f32
    %286 = vector.broadcast %cst_82 : f32 to vector<8x16xf32>
    %287 = arith.subf %286, %285 : vector<8x16xf32>
    %288 = math.exp %287 : vector<8x16xf32>
    %cst_83 = arith.constant 1.000000e+00 : f32
    %289 = vector.broadcast %cst_83 : f32 to vector<8x16xf32>
    %290 = arith.addf %289, %288 : vector<8x16xf32>
    %cst_84 = arith.constant 1.000000e+00 : f32
    %291 = vector.broadcast %cst_84 : f32 to vector<8x16xf32>
    %292 = arith.divf %291, %290 : vector<8x16xf32>
    %293 = vector.extract_strided_slice %276 {offsets = [0, 32], sizes = [8, 16], strides = [1, 1]} : vector<8x64xf32> to vector<8x16xf32>
    %294 = math.tanh %293 : vector<8x16xf32>
    %295 = vector.extract_strided_slice %276 {offsets = [0, 48], sizes = [8, 16], strides = [1, 1]} : vector<8x64xf32> to vector<8x16xf32>
    %cst_85 = arith.constant 0.000000e+00 : f32
    %296 = vector.broadcast %cst_85 : f32 to vector<8x16xf32>
    %297 = arith.subf %296, %295 : vector<8x16xf32>
    %298 = math.exp %297 : vector<8x16xf32>
    %cst_86 = arith.constant 1.000000e+00 : f32
    %299 = vector.broadcast %cst_86 : f32 to vector<8x16xf32>
    %300 = arith.addf %299, %298 : vector<8x16xf32>
    %cst_87 = arith.constant 1.000000e+00 : f32
    %301 = vector.broadcast %cst_87 : f32 to vector<8x16xf32>
    %302 = arith.divf %301, %300 : vector<8x16xf32>
    %303 = arith.mulf %292, %272 : vector<8x16xf32>
    %304 = arith.mulf %284, %294 : vector<8x16xf32>
    %305 = arith.addf %303, %304 : vector<8x16xf32>
    %306 = math.tanh %305 : vector<8x16xf32>
    %307 = arith.mulf %302, %306 : vector<8x16xf32>
    %308 = vector.extract_strided_slice %1 {offsets = [5, 0, 0], sizes = [1, 8, 1], strides = [1, 1, 1]} : vector<8x8x1xf32> to vector<1x8x1xf32>
    %309 = vector.shape_cast %308 : vector<1x8x1xf32> to vector<8x1xf32>
    %310 = vector.broadcast %309 : vector<8x1xf32> to vector<8x16xf32>
    %311 = arith.mulf %310, %307 : vector<8x16xf32>
    %cst_88 = arith.constant 1.000000e+00 : f32
    %312 = vector.broadcast %cst_88 : f32 to vector<8x1xf32>
    %313 = arith.subf %312, %309 : vector<8x1xf32>
    %314 = vector.broadcast %313 : vector<8x1xf32> to vector<8x16xf32>
    %315 = arith.mulf %314, %265 : vector<8x16xf32>
    %316 = arith.addf %311, %315 : vector<8x16xf32>
    %317 = vector.broadcast %309 : vector<8x1xf32> to vector<8x16xf32>
    %318 = arith.mulf %317, %305 : vector<8x16xf32>
    %cst_89 = arith.constant 1.000000e+00 : f32
    %319 = vector.broadcast %cst_89 : f32 to vector<8x1xf32>
    %320 = arith.subf %319, %309 : vector<8x1xf32>
    %321 = vector.broadcast %320 : vector<8x1xf32> to vector<8x16xf32>
    %322 = arith.mulf %321, %272 : vector<8x16xf32>
    %323 = arith.addf %318, %322 : vector<8x16xf32>
    %324 = vector.extract_strided_slice %8 {offsets = [6, 0, 0], sizes = [1, 8, 64], strides = [1, 1, 1]} : vector<8x8x64xf32> to vector<1x8x64xf32>
    %325 = vector.shape_cast %324 : vector<1x8x64xf32> to vector<8x64xf32>
    %cst_90 = arith.constant dense<0.000000e+00> : vector<8x64xf32>
    %326 = tpu.matmul %316, %15, %cst_90 {dimension_numbers = #tpu.dot_dimension_numbers<[1], [0], [0], [1], [0, 0, 1, 1], [], []>} : vector<8x16xf32>, vector<16x64xf32>, vector<8x64xf32> -> vector<8x64xf32>
    %327 = arith.addf %325, %326 : vector<8x64xf32>
    %328 = vector.extract_strided_slice %327 {offsets = [0, 0], sizes = [8, 16], strides = [1, 1]} : vector<8x64xf32> to vector<8x16xf32>
    %cst_91 = arith.constant 0.000000e+00 : f32
    %329 = vector.broadcast %cst_91 : f32 to vector<8x16xf32>
    %330 = arith.subf %329, %328 : vector<8x16xf32>
    %331 = math.exp %330 : vector<8x16xf32>
    %cst_92 = arith.constant 1.000000e+00 : f32
    %332 = vector.broadcast %cst_92 : f32 to vector<8x16xf32>
    %333 = arith.addf %332, %331 : vector<8x16xf32>
    %cst_93 = arith.constant 1.000000e+00 : f32
    %334 = vector.broadcast %cst_93 : f32 to vector<8x16xf32>
    %335 = arith.divf %334, %333 : vector<8x16xf32>
    %336 = vector.extract_strided_slice %327 {offsets = [0, 16], sizes = [8, 16], strides = [1, 1]} : vector<8x64xf32> to vector<8x16xf32>
    %cst_94 = arith.constant 0.000000e+00 : f32
    %337 = vector.broadcast %cst_94 : f32 to vector<8x16xf32>
    %338 = arith.subf %337, %336 : vector<8x16xf32>
    %339 = math.exp %338 : vector<8x16xf32>
    %cst_95 = arith.constant 1.000000e+00 : f32
    %340 = vector.broadcast %cst_95 : f32 to vector<8x16xf32>
    %341 = arith.addf %340, %339 : vector<8x16xf32>
    %cst_96 = arith.constant 1.000000e+00 : f32
    %342 = vector.broadcast %cst_96 : f32 to vector<8x16xf32>
    %343 = arith.divf %342, %341 : vector<8x16xf32>
    %344 = vector.extract_strided_slice %327 {offsets = [0, 32], sizes = [8, 16], strides = [1, 1]} : vector<8x64xf32> to vector<8x16xf32>
    %345 = math.tanh %344 : vector<8x16xf32>
    %346 = vector.extract_strided_slice %327 {offsets = [0, 48], sizes = [8, 16], strides = [1, 1]} : vector<8x64xf32> to vector<8x16xf32>
    %cst_97 = arith.constant 0.000000e+00 : f32
    %347 = vector.broadcast %cst_97 : f32 to vector<8x16xf32>
    %348 = arith.subf %347, %346 : vector<8x16xf32>
    %349 = math.exp %348 : vector<8x16xf32>
    %cst_98 = arith.constant 1.000000e+00 : f32
    %350 = vector.broadcast %cst_98 : f32 to vector<8x16xf32>
    %351 = arith.addf %350, %349 : vector<8x16xf32>
    %cst_99 = arith.constant 1.000000e+00 : f32
    %352 = vector.broadcast %cst_99 : f32 to vector<8x16xf32>
    %353 = arith.divf %352, %351 : vector<8x16xf32>
    %354 = arith.mulf %343, %323 : vector<8x16xf32>
    %355 = arith.mulf %335, %345 : vector<8x16xf32>
    %356 = arith.addf %354, %355 : vector<8x16xf32>
    %357 = math.tanh %356 : vector<8x16xf32>
    %358 = arith.mulf %353, %357 : vector<8x16xf32>
    %359 = vector.extract_strided_slice %1 {offsets = [6, 0, 0], sizes = [1, 8, 1], strides = [1, 1, 1]} : vector<8x8x1xf32> to vector<1x8x1xf32>
    %360 = vector.shape_cast %359 : vector<1x8x1xf32> to vector<8x1xf32>
    %361 = vector.broadcast %360 : vector<8x1xf32> to vector<8x16xf32>
    %362 = arith.mulf %361, %358 : vector<8x16xf32>
    %cst_100 = arith.constant 1.000000e+00 : f32
    %363 = vector.broadcast %cst_100 : f32 to vector<8x1xf32>
    %364 = arith.subf %363, %360 : vector<8x1xf32>
    %365 = vector.broadcast %364 : vector<8x1xf32> to vector<8x16xf32>
    %366 = arith.mulf %365, %316 : vector<8x16xf32>
    %367 = arith.addf %362, %366 : vector<8x16xf32>
    %368 = vector.broadcast %360 : vector<8x1xf32> to vector<8x16xf32>
    %369 = arith.mulf %368, %356 : vector<8x16xf32>
    %cst_101 = arith.constant 1.000000e+00 : f32
    %370 = vector.broadcast %cst_101 : f32 to vector<8x1xf32>
    %371 = arith.subf %370, %360 : vector<8x1xf32>
    %372 = vector.broadcast %371 : vector<8x1xf32> to vector<8x16xf32>
    %373 = arith.mulf %372, %323 : vector<8x16xf32>
    %374 = arith.addf %369, %373 : vector<8x16xf32>
    %375 = vector.extract_strided_slice %8 {offsets = [7, 0, 0], sizes = [1, 8, 64], strides = [1, 1, 1]} : vector<8x8x64xf32> to vector<1x8x64xf32>
    %376 = vector.shape_cast %375 : vector<1x8x64xf32> to vector<8x64xf32>
    %cst_102 = arith.constant dense<0.000000e+00> : vector<8x64xf32>
    %377 = tpu.matmul %367, %15, %cst_102 {dimension_numbers = #tpu.dot_dimension_numbers<[1], [0], [0], [1], [0, 0, 1, 1], [], []>} : vector<8x16xf32>, vector<16x64xf32>, vector<8x64xf32> -> vector<8x64xf32>
    %378 = arith.addf %376, %377 : vector<8x64xf32>
    %379 = vector.extract_strided_slice %378 {offsets = [0, 0], sizes = [8, 16], strides = [1, 1]} : vector<8x64xf32> to vector<8x16xf32>
    %cst_103 = arith.constant 0.000000e+00 : f32
    %380 = vector.broadcast %cst_103 : f32 to vector<8x16xf32>
    %381 = arith.subf %380, %379 : vector<8x16xf32>
    %382 = math.exp %381 : vector<8x16xf32>
    %cst_104 = arith.constant 1.000000e+00 : f32
    %383 = vector.broadcast %cst_104 : f32 to vector<8x16xf32>
    %384 = arith.addf %383, %382 : vector<8x16xf32>
    %cst_105 = arith.constant 1.000000e+00 : f32
    %385 = vector.broadcast %cst_105 : f32 to vector<8x16xf32>
    %386 = arith.divf %385, %384 : vector<8x16xf32>
    %387 = vector.extract_strided_slice %378 {offsets = [0, 16], sizes = [8, 16], strides = [1, 1]} : vector<8x64xf32> to vector<8x16xf32>
    %cst_106 = arith.constant 0.000000e+00 : f32
    %388 = vector.broadcast %cst_106 : f32 to vector<8x16xf32>
    %389 = arith.subf %388, %387 : vector<8x16xf32>
    %390 = math.exp %389 : vector<8x16xf32>
    %cst_107 = arith.constant 1.000000e+00 : f32
    %391 = vector.broadcast %cst_107 : f32 to vector<8x16xf32>
    %392 = arith.addf %391, %390 : vector<8x16xf32>
    %cst_108 = arith.constant 1.000000e+00 : f32
    %393 = vector.broadcast %cst_108 : f32 to vector<8x16xf32>
    %394 = arith.divf %393, %392 : vector<8x16xf32>
    %395 = vector.extract_strided_slice %378 {offsets = [0, 32], sizes = [8, 16], strides = [1, 1]} : vector<8x64xf32> to vector<8x16xf32>
    %396 = math.tanh %395 : vector<8x16xf32>
    %397 = vector.extract_strided_slice %378 {offsets = [0, 48], sizes = [8, 16], strides = [1, 1]} : vector<8x64xf32> to vector<8x16xf32>
    %cst_109 = arith.constant 0.000000e+00 : f32
    %398 = vector.broadcast %cst_109 : f32 to vector<8x16xf32>
    %399 = arith.subf %398, %397 : vector<8x16xf32>
    %400 = math.exp %399 : vector<8x16xf32>
    %cst_110 = arith.constant 1.000000e+00 : f32
    %401 = vector.broadcast %cst_110 : f32 to vector<8x16xf32>
    %402 = arith.addf %401, %400 : vector<8x16xf32>
    %cst_111 = arith.constant 1.000000e+00 : f32
    %403 = vector.broadcast %cst_111 : f32 to vector<8x16xf32>
    %404 = arith.divf %403, %402 : vector<8x16xf32>
    %405 = arith.mulf %394, %374 : vector<8x16xf32>
    %406 = arith.mulf %386, %396 : vector<8x16xf32>
    %407 = arith.addf %405, %406 : vector<8x16xf32>
    %408 = math.tanh %407 : vector<8x16xf32>
    %409 = arith.mulf %404, %408 : vector<8x16xf32>
    %410 = vector.extract_strided_slice %1 {offsets = [7, 0, 0], sizes = [1, 8, 1], strides = [1, 1, 1]} : vector<8x8x1xf32> to vector<1x8x1xf32>
    %411 = vector.shape_cast %410 : vector<1x8x1xf32> to vector<8x1xf32>
    %412 = vector.broadcast %411 : vector<8x1xf32> to vector<8x16xf32>
    %413 = arith.mulf %412, %409 : vector<8x16xf32>
    %cst_112 = arith.constant 1.000000e+00 : f32
    %414 = vector.broadcast %cst_112 : f32 to vector<8x1xf32>
    %415 = arith.subf %414, %411 : vector<8x1xf32>
    %416 = vector.broadcast %415 : vector<8x1xf32> to vector<8x16xf32>
    %417 = arith.mulf %416, %367 : vector<8x16xf32>
    %418 = arith.addf %413, %417 : vector<8x16xf32>
    %c0_113 = arith.constant 0 : index
    %c0_114 = arith.constant 0 : index
    %419 = vector.load %arg41[%c0_113, %c0_114] : memref<16x64xf32, #tpu.memory_space<vmem>>, vector<16x64xf32>
    %cst_115 = arith.constant 0.000000e+00 : f32
    %420 = vector.broadcast %cst_115 : f32 to vector<8x16xf32>
    %cst_116 = arith.constant 0.000000e+00 : f32
    %421 = vector.broadcast %cst_116 : f32 to vector<8x16xf32>
    %422 = vector.extract_strided_slice %14 {offsets = [7, 0, 0], sizes = [1, 8, 64], strides = [1, 1, 1]} : vector<8x8x64xf32> to vector<1x8x64xf32>
    %423 = vector.shape_cast %422 : vector<1x8x64xf32> to vector<8x64xf32>
    %cst_117 = arith.constant dense<0.000000e+00> : vector<8x64xf32>
    %424 = tpu.matmul %420, %419, %cst_117 {dimension_numbers = #tpu.dot_dimension_numbers<[1], [0], [0], [1], [0, 0, 1, 1], [], []>} : vector<8x16xf32>, vector<16x64xf32>, vector<8x64xf32> -> vector<8x64xf32>
    %425 = arith.addf %423, %424 : vector<8x64xf32>
    %426 = vector.extract_strided_slice %425 {offsets = [0, 0], sizes = [8, 16], strides = [1, 1]} : vector<8x64xf32> to vector<8x16xf32>
    %cst_118 = arith.constant 0.000000e+00 : f32
    %427 = vector.broadcast %cst_118 : f32 to vector<8x16xf32>
    %428 = arith.subf %427, %426 : vector<8x16xf32>
    %429 = math.exp %428 : vector<8x16xf32>
    %cst_119 = arith.constant 1.000000e+00 : f32
    %430 = vector.broadcast %cst_119 : f32 to vector<8x16xf32>
    %431 = arith.addf %430, %429 : vector<8x16xf32>
    %cst_120 = arith.constant 1.000000e+00 : f32
    %432 = vector.broadcast %cst_120 : f32 to vector<8x16xf32>
    %433 = arith.divf %432, %431 : vector<8x16xf32>
    %434 = vector.extract_strided_slice %425 {offsets = [0, 16], sizes = [8, 16], strides = [1, 1]} : vector<8x64xf32> to vector<8x16xf32>
    %cst_121 = arith.constant 0.000000e+00 : f32
    %435 = vector.broadcast %cst_121 : f32 to vector<8x16xf32>
    %436 = arith.subf %435, %434 : vector<8x16xf32>
    %437 = math.exp %436 : vector<8x16xf32>
    %cst_122 = arith.constant 1.000000e+00 : f32
    %438 = vector.broadcast %cst_122 : f32 to vector<8x16xf32>
    %439 = arith.addf %438, %437 : vector<8x16xf32>
    %cst_123 = arith.constant 1.000000e+00 : f32
    %440 = vector.broadcast %cst_123 : f32 to vector<8x16xf32>
    %441 = arith.divf %440, %439 : vector<8x16xf32>
    %442 = vector.extract_strided_slice %425 {offsets = [0, 32], sizes = [8, 16], strides = [1, 1]} : vector<8x64xf32> to vector<8x16xf32>
    %443 = math.tanh %442 : vector<8x16xf32>
    %444 = vector.extract_strided_slice %425 {offsets = [0, 48], sizes = [8, 16], strides = [1, 1]} : vector<8x64xf32> to vector<8x16xf32>
    %cst_124 = arith.constant 0.000000e+00 : f32
    %445 = vector.broadcast %cst_124 : f32 to vector<8x16xf32>
    %446 = arith.subf %445, %444 : vector<8x16xf32>
    %447 = math.exp %446 : vector<8x16xf32>
    %cst_125 = arith.constant 1.000000e+00 : f32
    %448 = vector.broadcast %cst_125 : f32 to vector<8x16xf32>
    %449 = arith.addf %448, %447 : vector<8x16xf32>
    %cst_126 = arith.constant 1.000000e+00 : f32
    %450 = vector.broadcast %cst_126 : f32 to vector<8x16xf32>
    %451 = arith.divf %450, %449 : vector<8x16xf32>
    %452 = arith.mulf %441, %421 : vector<8x16xf32>
    %453 = arith.mulf %433, %443 : vector<8x16xf32>
    %454 = arith.addf %452, %453 : vector<8x16xf32>
    %455 = math.tanh %454 : vector<8x16xf32>
    %456 = arith.mulf %451, %455 : vector<8x16xf32>
    %457 = vector.extract_strided_slice %1 {offsets = [7, 0, 0], sizes = [1, 8, 1], strides = [1, 1, 1]} : vector<8x8x1xf32> to vector<1x8x1xf32>
    %458 = vector.shape_cast %457 : vector<1x8x1xf32> to vector<8x1xf32>
    %459 = vector.broadcast %458 : vector<8x1xf32> to vector<8x16xf32>
    %460 = arith.mulf %459, %456 : vector<8x16xf32>
    %cst_127 = arith.constant 1.000000e+00 : f32
    %461 = vector.broadcast %cst_127 : f32 to vector<8x1xf32>
    %462 = arith.subf %461, %458 : vector<8x1xf32>
    %463 = vector.broadcast %462 : vector<8x1xf32> to vector<8x16xf32>
    %464 = arith.mulf %463, %420 : vector<8x16xf32>
    %465 = arith.addf %460, %464 : vector<8x16xf32>
    %466 = vector.broadcast %458 : vector<8x1xf32> to vector<8x16xf32>
    %467 = arith.mulf %466, %454 : vector<8x16xf32>
    %cst_128 = arith.constant 1.000000e+00 : f32
    %468 = vector.broadcast %cst_128 : f32 to vector<8x1xf32>
    %469 = arith.subf %468, %458 : vector<8x1xf32>
    %470 = vector.broadcast %469 : vector<8x1xf32> to vector<8x16xf32>
    %471 = arith.mulf %470, %421 : vector<8x16xf32>
    %472 = arith.addf %467, %471 : vector<8x16xf32>
    %473 = vector.extract_strided_slice %14 {offsets = [6, 0, 0], sizes = [1, 8, 64], strides = [1, 1, 1]} : vector<8x8x64xf32> to vector<1x8x64xf32>
    %474 = vector.shape_cast %473 : vector<1x8x64xf32> to vector<8x64xf32>
    %cst_129 = arith.constant dense<0.000000e+00> : vector<8x64xf32>
    %475 = tpu.matmul %465, %419, %cst_129 {dimension_numbers = #tpu.dot_dimension_numbers<[1], [0], [0], [1], [0, 0, 1, 1], [], []>} : vector<8x16xf32>, vector<16x64xf32>, vector<8x64xf32> -> vector<8x64xf32>
    %476 = arith.addf %474, %475 : vector<8x64xf32>
    %477 = vector.extract_strided_slice %476 {offsets = [0, 0], sizes = [8, 16], strides = [1, 1]} : vector<8x64xf32> to vector<8x16xf32>
    %cst_130 = arith.constant 0.000000e+00 : f32
    %478 = vector.broadcast %cst_130 : f32 to vector<8x16xf32>
    %479 = arith.subf %478, %477 : vector<8x16xf32>
    %480 = math.exp %479 : vector<8x16xf32>
    %cst_131 = arith.constant 1.000000e+00 : f32
    %481 = vector.broadcast %cst_131 : f32 to vector<8x16xf32>
    %482 = arith.addf %481, %480 : vector<8x16xf32>
    %cst_132 = arith.constant 1.000000e+00 : f32
    %483 = vector.broadcast %cst_132 : f32 to vector<8x16xf32>
    %484 = arith.divf %483, %482 : vector<8x16xf32>
    %485 = vector.extract_strided_slice %476 {offsets = [0, 16], sizes = [8, 16], strides = [1, 1]} : vector<8x64xf32> to vector<8x16xf32>
    %cst_133 = arith.constant 0.000000e+00 : f32
    %486 = vector.broadcast %cst_133 : f32 to vector<8x16xf32>
    %487 = arith.subf %486, %485 : vector<8x16xf32>
    %488 = math.exp %487 : vector<8x16xf32>
    %cst_134 = arith.constant 1.000000e+00 : f32
    %489 = vector.broadcast %cst_134 : f32 to vector<8x16xf32>
    %490 = arith.addf %489, %488 : vector<8x16xf32>
    %cst_135 = arith.constant 1.000000e+00 : f32
    %491 = vector.broadcast %cst_135 : f32 to vector<8x16xf32>
    %492 = arith.divf %491, %490 : vector<8x16xf32>
    %493 = vector.extract_strided_slice %476 {offsets = [0, 32], sizes = [8, 16], strides = [1, 1]} : vector<8x64xf32> to vector<8x16xf32>
    %494 = math.tanh %493 : vector<8x16xf32>
    %495 = vector.extract_strided_slice %476 {offsets = [0, 48], sizes = [8, 16], strides = [1, 1]} : vector<8x64xf32> to vector<8x16xf32>
    %cst_136 = arith.constant 0.000000e+00 : f32
    %496 = vector.broadcast %cst_136 : f32 to vector<8x16xf32>
    %497 = arith.subf %496, %495 : vector<8x16xf32>
    %498 = math.exp %497 : vector<8x16xf32>
    %cst_137 = arith.constant 1.000000e+00 : f32
    %499 = vector.broadcast %cst_137 : f32 to vector<8x16xf32>
    %500 = arith.addf %499, %498 : vector<8x16xf32>
    %cst_138 = arith.constant 1.000000e+00 : f32
    %501 = vector.broadcast %cst_138 : f32 to vector<8x16xf32>
    %502 = arith.divf %501, %500 : vector<8x16xf32>
    %503 = arith.mulf %492, %472 : vector<8x16xf32>
    %504 = arith.mulf %484, %494 : vector<8x16xf32>
    %505 = arith.addf %503, %504 : vector<8x16xf32>
    %506 = math.tanh %505 : vector<8x16xf32>
    %507 = arith.mulf %502, %506 : vector<8x16xf32>
    %508 = vector.extract_strided_slice %1 {offsets = [6, 0, 0], sizes = [1, 8, 1], strides = [1, 1, 1]} : vector<8x8x1xf32> to vector<1x8x1xf32>
    %509 = vector.shape_cast %508 : vector<1x8x1xf32> to vector<8x1xf32>
    %510 = vector.broadcast %509 : vector<8x1xf32> to vector<8x16xf32>
    %511 = arith.mulf %510, %507 : vector<8x16xf32>
    %cst_139 = arith.constant 1.000000e+00 : f32
    %512 = vector.broadcast %cst_139 : f32 to vector<8x1xf32>
    %513 = arith.subf %512, %509 : vector<8x1xf32>
    %514 = vector.broadcast %513 : vector<8x1xf32> to vector<8x16xf32>
    %515 = arith.mulf %514, %465 : vector<8x16xf32>
    %516 = arith.addf %511, %515 : vector<8x16xf32>
    %517 = vector.broadcast %509 : vector<8x1xf32> to vector<8x16xf32>
    %518 = arith.mulf %517, %505 : vector<8x16xf32>
    %cst_140 = arith.constant 1.000000e+00 : f32
    %519 = vector.broadcast %cst_140 : f32 to vector<8x1xf32>
    %520 = arith.subf %519, %509 : vector<8x1xf32>
    %521 = vector.broadcast %520 : vector<8x1xf32> to vector<8x16xf32>
    %522 = arith.mulf %521, %472 : vector<8x16xf32>
    %523 = arith.addf %518, %522 : vector<8x16xf32>
    %524 = vector.extract_strided_slice %14 {offsets = [5, 0, 0], sizes = [1, 8, 64], strides = [1, 1, 1]} : vector<8x8x64xf32> to vector<1x8x64xf32>
    %525 = vector.shape_cast %524 : vector<1x8x64xf32> to vector<8x64xf32>
    %cst_141 = arith.constant dense<0.000000e+00> : vector<8x64xf32>
    %526 = tpu.matmul %516, %419, %cst_141 {dimension_numbers = #tpu.dot_dimension_numbers<[1], [0], [0], [1], [0, 0, 1, 1], [], []>} : vector<8x16xf32>, vector<16x64xf32>, vector<8x64xf32> -> vector<8x64xf32>
    %527 = arith.addf %525, %526 : vector<8x64xf32>
    %528 = vector.extract_strided_slice %527 {offsets = [0, 0], sizes = [8, 16], strides = [1, 1]} : vector<8x64xf32> to vector<8x16xf32>
    %cst_142 = arith.constant 0.000000e+00 : f32
    %529 = vector.broadcast %cst_142 : f32 to vector<8x16xf32>
    %530 = arith.subf %529, %528 : vector<8x16xf32>
    %531 = math.exp %530 : vector<8x16xf32>
    %cst_143 = arith.constant 1.000000e+00 : f32
    %532 = vector.broadcast %cst_143 : f32 to vector<8x16xf32>
    %533 = arith.addf %532, %531 : vector<8x16xf32>
    %cst_144 = arith.constant 1.000000e+00 : f32
    %534 = vector.broadcast %cst_144 : f32 to vector<8x16xf32>
    %535 = arith.divf %534, %533 : vector<8x16xf32>
    %536 = vector.extract_strided_slice %527 {offsets = [0, 16], sizes = [8, 16], strides = [1, 1]} : vector<8x64xf32> to vector<8x16xf32>
    %cst_145 = arith.constant 0.000000e+00 : f32
    %537 = vector.broadcast %cst_145 : f32 to vector<8x16xf32>
    %538 = arith.subf %537, %536 : vector<8x16xf32>
    %539 = math.exp %538 : vector<8x16xf32>
    %cst_146 = arith.constant 1.000000e+00 : f32
    %540 = vector.broadcast %cst_146 : f32 to vector<8x16xf32>
    %541 = arith.addf %540, %539 : vector<8x16xf32>
    %cst_147 = arith.constant 1.000000e+00 : f32
    %542 = vector.broadcast %cst_147 : f32 to vector<8x16xf32>
    %543 = arith.divf %542, %541 : vector<8x16xf32>
    %544 = vector.extract_strided_slice %527 {offsets = [0, 32], sizes = [8, 16], strides = [1, 1]} : vector<8x64xf32> to vector<8x16xf32>
    %545 = math.tanh %544 : vector<8x16xf32>
    %546 = vector.extract_strided_slice %527 {offsets = [0, 48], sizes = [8, 16], strides = [1, 1]} : vector<8x64xf32> to vector<8x16xf32>
    %cst_148 = arith.constant 0.000000e+00 : f32
    %547 = vector.broadcast %cst_148 : f32 to vector<8x16xf32>
    %548 = arith.subf %547, %546 : vector<8x16xf32>
    %549 = math.exp %548 : vector<8x16xf32>
    %cst_149 = arith.constant 1.000000e+00 : f32
    %550 = vector.broadcast %cst_149 : f32 to vector<8x16xf32>
    %551 = arith.addf %550, %549 : vector<8x16xf32>
    %cst_150 = arith.constant 1.000000e+00 : f32
    %552 = vector.broadcast %cst_150 : f32 to vector<8x16xf32>
    %553 = arith.divf %552, %551 : vector<8x16xf32>
    %554 = arith.mulf %543, %523 : vector<8x16xf32>
    %555 = arith.mulf %535, %545 : vector<8x16xf32>
    %556 = arith.addf %554, %555 : vector<8x16xf32>
    %557 = math.tanh %556 : vector<8x16xf32>
    %558 = arith.mulf %553, %557 : vector<8x16xf32>
    %559 = vector.extract_strided_slice %1 {offsets = [5, 0, 0], sizes = [1, 8, 1], strides = [1, 1, 1]} : vector<8x8x1xf32> to vector<1x8x1xf32>
    %560 = vector.shape_cast %559 : vector<1x8x1xf32> to vector<8x1xf32>
    %561 = vector.broadcast %560 : vector<8x1xf32> to vector<8x16xf32>
    %562 = arith.mulf %561, %558 : vector<8x16xf32>
    %cst_151 = arith.constant 1.000000e+00 : f32
    %563 = vector.broadcast %cst_151 : f32 to vector<8x1xf32>
    %564 = arith.subf %563, %560 : vector<8x1xf32>
    %565 = vector.broadcast %564 : vector<8x1xf32> to vector<8x16xf32>
    %566 = arith.mulf %565, %516 : vector<8x16xf32>
    %567 = arith.addf %562, %566 : vector<8x16xf32>
    %568 = vector.broadcast %560 : vector<8x1xf32> to vector<8x16xf32>
    %569 = arith.mulf %568, %556 : vector<8x16xf32>
    %cst_152 = arith.constant 1.000000e+00 : f32
    %570 = vector.broadcast %cst_152 : f32 to vector<8x1xf32>
    %571 = arith.subf %570, %560 : vector<8x1xf32>
    %572 = vector.broadcast %571 : vector<8x1xf32> to vector<8x16xf32>
    %573 = arith.mulf %572, %523 : vector<8x16xf32>
    %574 = arith.addf %569, %573 : vector<8x16xf32>
    %575 = vector.extract_strided_slice %14 {offsets = [4, 0, 0], sizes = [1, 8, 64], strides = [1, 1, 1]} : vector<8x8x64xf32> to vector<1x8x64xf32>
    %576 = vector.shape_cast %575 : vector<1x8x64xf32> to vector<8x64xf32>
    %cst_153 = arith.constant dense<0.000000e+00> : vector<8x64xf32>
    %577 = tpu.matmul %567, %419, %cst_153 {dimension_numbers = #tpu.dot_dimension_numbers<[1], [0], [0], [1], [0, 0, 1, 1], [], []>} : vector<8x16xf32>, vector<16x64xf32>, vector<8x64xf32> -> vector<8x64xf32>
    %578 = arith.addf %576, %577 : vector<8x64xf32>
    %579 = vector.extract_strided_slice %578 {offsets = [0, 0], sizes = [8, 16], strides = [1, 1]} : vector<8x64xf32> to vector<8x16xf32>
    %cst_154 = arith.constant 0.000000e+00 : f32
    %580 = vector.broadcast %cst_154 : f32 to vector<8x16xf32>
    %581 = arith.subf %580, %579 : vector<8x16xf32>
    %582 = math.exp %581 : vector<8x16xf32>
    %cst_155 = arith.constant 1.000000e+00 : f32
    %583 = vector.broadcast %cst_155 : f32 to vector<8x16xf32>
    %584 = arith.addf %583, %582 : vector<8x16xf32>
    %cst_156 = arith.constant 1.000000e+00 : f32
    %585 = vector.broadcast %cst_156 : f32 to vector<8x16xf32>
    %586 = arith.divf %585, %584 : vector<8x16xf32>
    %587 = vector.extract_strided_slice %578 {offsets = [0, 16], sizes = [8, 16], strides = [1, 1]} : vector<8x64xf32> to vector<8x16xf32>
    %cst_157 = arith.constant 0.000000e+00 : f32
    %588 = vector.broadcast %cst_157 : f32 to vector<8x16xf32>
    %589 = arith.subf %588, %587 : vector<8x16xf32>
    %590 = math.exp %589 : vector<8x16xf32>
    %cst_158 = arith.constant 1.000000e+00 : f32
    %591 = vector.broadcast %cst_158 : f32 to vector<8x16xf32>
    %592 = arith.addf %591, %590 : vector<8x16xf32>
    %cst_159 = arith.constant 1.000000e+00 : f32
    %593 = vector.broadcast %cst_159 : f32 to vector<8x16xf32>
    %594 = arith.divf %593, %592 : vector<8x16xf32>
    %595 = vector.extract_strided_slice %578 {offsets = [0, 32], sizes = [8, 16], strides = [1, 1]} : vector<8x64xf32> to vector<8x16xf32>
    %596 = math.tanh %595 : vector<8x16xf32>
    %597 = vector.extract_strided_slice %578 {offsets = [0, 48], sizes = [8, 16], strides = [1, 1]} : vector<8x64xf32> to vector<8x16xf32>
    %cst_160 = arith.constant 0.000000e+00 : f32
    %598 = vector.broadcast %cst_160 : f32 to vector<8x16xf32>
    %599 = arith.subf %598, %597 : vector<8x16xf32>
    %600 = math.exp %599 : vector<8x16xf32>
    %cst_161 = arith.constant 1.000000e+00 : f32
    %601 = vector.broadcast %cst_161 : f32 to vector<8x16xf32>
    %602 = arith.addf %601, %600 : vector<8x16xf32>
    %cst_162 = arith.constant 1.000000e+00 : f32
    %603 = vector.broadcast %cst_162 : f32 to vector<8x16xf32>
    %604 = arith.divf %603, %602 : vector<8x16xf32>
    %605 = arith.mulf %594, %574 : vector<8x16xf32>
    %606 = arith.mulf %586, %596 : vector<8x16xf32>
    %607 = arith.addf %605, %606 : vector<8x16xf32>
    %608 = math.tanh %607 : vector<8x16xf32>
    %609 = arith.mulf %604, %608 : vector<8x16xf32>
    %610 = vector.extract_strided_slice %1 {offsets = [4, 0, 0], sizes = [1, 8, 1], strides = [1, 1, 1]} : vector<8x8x1xf32> to vector<1x8x1xf32>
    %611 = vector.shape_cast %610 : vector<1x8x1xf32> to vector<8x1xf32>
    %612 = vector.broadcast %611 : vector<8x1xf32> to vector<8x16xf32>
    %613 = arith.mulf %612, %609 : vector<8x16xf32>
    %cst_163 = arith.constant 1.000000e+00 : f32
    %614 = vector.broadcast %cst_163 : f32 to vector<8x1xf32>
    %615 = arith.subf %614, %611 : vector<8x1xf32>
    %616 = vector.broadcast %615 : vector<8x1xf32> to vector<8x16xf32>
    %617 = arith.mulf %616, %567 : vector<8x16xf32>
    %618 = arith.addf %613, %617 : vector<8x16xf32>
    %619 = vector.broadcast %611 : vector<8x1xf32> to vector<8x16xf32>
    %620 = arith.mulf %619, %607 : vector<8x16xf32>
    %cst_164 = arith.constant 1.000000e+00 : f32
    %621 = vector.broadcast %cst_164 : f32 to vector<8x1xf32>
    %622 = arith.subf %621, %611 : vector<8x1xf32>
    %623 = vector.broadcast %622 : vector<8x1xf32> to vector<8x16xf32>
    %624 = arith.mulf %623, %574 : vector<8x16xf32>
    %625 = arith.addf %620, %624 : vector<8x16xf32>
    %626 = vector.extract_strided_slice %14 {offsets = [3, 0, 0], sizes = [1, 8, 64], strides = [1, 1, 1]} : vector<8x8x64xf32> to vector<1x8x64xf32>
    %627 = vector.shape_cast %626 : vector<1x8x64xf32> to vector<8x64xf32>
    %cst_165 = arith.constant dense<0.000000e+00> : vector<8x64xf32>
    %628 = tpu.matmul %618, %419, %cst_165 {dimension_numbers = #tpu.dot_dimension_numbers<[1], [0], [0], [1], [0, 0, 1, 1], [], []>} : vector<8x16xf32>, vector<16x64xf32>, vector<8x64xf32> -> vector<8x64xf32>
    %629 = arith.addf %627, %628 : vector<8x64xf32>
    %630 = vector.extract_strided_slice %629 {offsets = [0, 0], sizes = [8, 16], strides = [1, 1]} : vector<8x64xf32> to vector<8x16xf32>
    %cst_166 = arith.constant 0.000000e+00 : f32
    %631 = vector.broadcast %cst_166 : f32 to vector<8x16xf32>
    %632 = arith.subf %631, %630 : vector<8x16xf32>
    %633 = math.exp %632 : vector<8x16xf32>
    %cst_167 = arith.constant 1.000000e+00 : f32
    %634 = vector.broadcast %cst_167 : f32 to vector<8x16xf32>
    %635 = arith.addf %634, %633 : vector<8x16xf32>
    %cst_168 = arith.constant 1.000000e+00 : f32
    %636 = vector.broadcast %cst_168 : f32 to vector<8x16xf32>
    %637 = arith.divf %636, %635 : vector<8x16xf32>
    %638 = vector.extract_strided_slice %629 {offsets = [0, 16], sizes = [8, 16], strides = [1, 1]} : vector<8x64xf32> to vector<8x16xf32>
    %cst_169 = arith.constant 0.000000e+00 : f32
    %639 = vector.broadcast %cst_169 : f32 to vector<8x16xf32>
    %640 = arith.subf %639, %638 : vector<8x16xf32>
    %641 = math.exp %640 : vector<8x16xf32>
    %cst_170 = arith.constant 1.000000e+00 : f32
    %642 = vector.broadcast %cst_170 : f32 to vector<8x16xf32>
    %643 = arith.addf %642, %641 : vector<8x16xf32>
    %cst_171 = arith.constant 1.000000e+00 : f32
    %644 = vector.broadcast %cst_171 : f32 to vector<8x16xf32>
    %645 = arith.divf %644, %643 : vector<8x16xf32>
    %646 = vector.extract_strided_slice %629 {offsets = [0, 32], sizes = [8, 16], strides = [1, 1]} : vector<8x64xf32> to vector<8x16xf32>
    %647 = math.tanh %646 : vector<8x16xf32>
    %648 = vector.extract_strided_slice %629 {offsets = [0, 48], sizes = [8, 16], strides = [1, 1]} : vector<8x64xf32> to vector<8x16xf32>
    %cst_172 = arith.constant 0.000000e+00 : f32
    %649 = vector.broadcast %cst_172 : f32 to vector<8x16xf32>
    %650 = arith.subf %649, %648 : vector<8x16xf32>
    %651 = math.exp %650 : vector<8x16xf32>
    %cst_173 = arith.constant 1.000000e+00 : f32
    %652 = vector.broadcast %cst_173 : f32 to vector<8x16xf32>
    %653 = arith.addf %652, %651 : vector<8x16xf32>
    %cst_174 = arith.constant 1.000000e+00 : f32
    %654 = vector.broadcast %cst_174 : f32 to vector<8x16xf32>
    %655 = arith.divf %654, %653 : vector<8x16xf32>
    %656 = arith.mulf %645, %625 : vector<8x16xf32>
    %657 = arith.mulf %637, %647 : vector<8x16xf32>
    %658 = arith.addf %656, %657 : vector<8x16xf32>
    %659 = math.tanh %658 : vector<8x16xf32>
    %660 = arith.mulf %655, %659 : vector<8x16xf32>
    %661 = vector.extract_strided_slice %1 {offsets = [3, 0, 0], sizes = [1, 8, 1], strides = [1, 1, 1]} : vector<8x8x1xf32> to vector<1x8x1xf32>
    %662 = vector.shape_cast %661 : vector<1x8x1xf32> to vector<8x1xf32>
    %663 = vector.broadcast %662 : vector<8x1xf32> to vector<8x16xf32>
    %664 = arith.mulf %663, %660 : vector<8x16xf32>
    %cst_175 = arith.constant 1.000000e+00 : f32
    %665 = vector.broadcast %cst_175 : f32 to vector<8x1xf32>
    %666 = arith.subf %665, %662 : vector<8x1xf32>
    %667 = vector.broadcast %666 : vector<8x1xf32> to vector<8x16xf32>
    %668 = arith.mulf %667, %618 : vector<8x16xf32>
    %669 = arith.addf %664, %668 : vector<8x16xf32>
    %670 = vector.broadcast %662 : vector<8x1xf32> to vector<8x16xf32>
    %671 = arith.mulf %670, %658 : vector<8x16xf32>
    %cst_176 = arith.constant 1.000000e+00 : f32
    %672 = vector.broadcast %cst_176 : f32 to vector<8x1xf32>
    %673 = arith.subf %672, %662 : vector<8x1xf32>
    %674 = vector.broadcast %673 : vector<8x1xf32> to vector<8x16xf32>
    %675 = arith.mulf %674, %625 : vector<8x16xf32>
    %676 = arith.addf %671, %675 : vector<8x16xf32>
    %677 = vector.extract_strided_slice %14 {offsets = [2, 0, 0], sizes = [1, 8, 64], strides = [1, 1, 1]} : vector<8x8x64xf32> to vector<1x8x64xf32>
    %678 = vector.shape_cast %677 : vector<1x8x64xf32> to vector<8x64xf32>
    %cst_177 = arith.constant dense<0.000000e+00> : vector<8x64xf32>
    %679 = tpu.matmul %669, %419, %cst_177 {dimension_numbers = #tpu.dot_dimension_numbers<[1], [0], [0], [1], [0, 0, 1, 1], [], []>} : vector<8x16xf32>, vector<16x64xf32>, vector<8x64xf32> -> vector<8x64xf32>
    %680 = arith.addf %678, %679 : vector<8x64xf32>
    %681 = vector.extract_strided_slice %680 {offsets = [0, 0], sizes = [8, 16], strides = [1, 1]} : vector<8x64xf32> to vector<8x16xf32>
    %cst_178 = arith.constant 0.000000e+00 : f32
    %682 = vector.broadcast %cst_178 : f32 to vector<8x16xf32>
    %683 = arith.subf %682, %681 : vector<8x16xf32>
    %684 = math.exp %683 : vector<8x16xf32>
    %cst_179 = arith.constant 1.000000e+00 : f32
    %685 = vector.broadcast %cst_179 : f32 to vector<8x16xf32>
    %686 = arith.addf %685, %684 : vector<8x16xf32>
    %cst_180 = arith.constant 1.000000e+00 : f32
    %687 = vector.broadcast %cst_180 : f32 to vector<8x16xf32>
    %688 = arith.divf %687, %686 : vector<8x16xf32>
    %689 = vector.extract_strided_slice %680 {offsets = [0, 16], sizes = [8, 16], strides = [1, 1]} : vector<8x64xf32> to vector<8x16xf32>
    %cst_181 = arith.constant 0.000000e+00 : f32
    %690 = vector.broadcast %cst_181 : f32 to vector<8x16xf32>
    %691 = arith.subf %690, %689 : vector<8x16xf32>
    %692 = math.exp %691 : vector<8x16xf32>
    %cst_182 = arith.constant 1.000000e+00 : f32
    %693 = vector.broadcast %cst_182 : f32 to vector<8x16xf32>
    %694 = arith.addf %693, %692 : vector<8x16xf32>
    %cst_183 = arith.constant 1.000000e+00 : f32
    %695 = vector.broadcast %cst_183 : f32 to vector<8x16xf32>
    %696 = arith.divf %695, %694 : vector<8x16xf32>
    %697 = vector.extract_strided_slice %680 {offsets = [0, 32], sizes = [8, 16], strides = [1, 1]} : vector<8x64xf32> to vector<8x16xf32>
    %698 = math.tanh %697 : vector<8x16xf32>
    %699 = vector.extract_strided_slice %680 {offsets = [0, 48], sizes = [8, 16], strides = [1, 1]} : vector<8x64xf32> to vector<8x16xf32>
    %cst_184 = arith.constant 0.000000e+00 : f32
    %700 = vector.broadcast %cst_184 : f32 to vector<8x16xf32>
    %701 = arith.subf %700, %699 : vector<8x16xf32>
    %702 = math.exp %701 : vector<8x16xf32>
    %cst_185 = arith.constant 1.000000e+00 : f32
    %703 = vector.broadcast %cst_185 : f32 to vector<8x16xf32>
    %704 = arith.addf %703, %702 : vector<8x16xf32>
    %cst_186 = arith.constant 1.000000e+00 : f32
    %705 = vector.broadcast %cst_186 : f32 to vector<8x16xf32>
    %706 = arith.divf %705, %704 : vector<8x16xf32>
    %707 = arith.mulf %696, %676 : vector<8x16xf32>
    %708 = arith.mulf %688, %698 : vector<8x16xf32>
    %709 = arith.addf %707, %708 : vector<8x16xf32>
    %710 = math.tanh %709 : vector<8x16xf32>
    %711 = arith.mulf %706, %710 : vector<8x16xf32>
    %712 = vector.extract_strided_slice %1 {offsets = [2, 0, 0], sizes = [1, 8, 1], strides = [1, 1, 1]} : vector<8x8x1xf32> to vector<1x8x1xf32>
    %713 = vector.shape_cast %712 : vector<1x8x1xf32> to vector<8x1xf32>
    %714 = vector.broadcast %713 : vector<8x1xf32> to vector<8x16xf32>
    %715 = arith.mulf %714, %711 : vector<8x16xf32>
    %cst_187 = arith.constant 1.000000e+00 : f32
    %716 = vector.broadcast %cst_187 : f32 to vector<8x1xf32>
    %717 = arith.subf %716, %713 : vector<8x1xf32>
    %718 = vector.broadcast %717 : vector<8x1xf32> to vector<8x16xf32>
    %719 = arith.mulf %718, %669 : vector<8x16xf32>
    %720 = arith.addf %715, %719 : vector<8x16xf32>
    %721 = vector.broadcast %713 : vector<8x1xf32> to vector<8x16xf32>
    %722 = arith.mulf %721, %709 : vector<8x16xf32>
    %cst_188 = arith.constant 1.000000e+00 : f32
    %723 = vector.broadcast %cst_188 : f32 to vector<8x1xf32>
    %724 = arith.subf %723, %713 : vector<8x1xf32>
    %725 = vector.broadcast %724 : vector<8x1xf32> to vector<8x16xf32>
    %726 = arith.mulf %725, %676 : vector<8x16xf32>
    %727 = arith.addf %722, %726 : vector<8x16xf32>
    %728 = vector.extract_strided_slice %14 {offsets = [1, 0, 0], sizes = [1, 8, 64], strides = [1, 1, 1]} : vector<8x8x64xf32> to vector<1x8x64xf32>
    %729 = vector.shape_cast %728 : vector<1x8x64xf32> to vector<8x64xf32>
    %cst_189 = arith.constant dense<0.000000e+00> : vector<8x64xf32>
    %730 = tpu.matmul %720, %419, %cst_189 {dimension_numbers = #tpu.dot_dimension_numbers<[1], [0], [0], [1], [0, 0, 1, 1], [], []>} : vector<8x16xf32>, vector<16x64xf32>, vector<8x64xf32> -> vector<8x64xf32>
    %731 = arith.addf %729, %730 : vector<8x64xf32>
    %732 = vector.extract_strided_slice %731 {offsets = [0, 0], sizes = [8, 16], strides = [1, 1]} : vector<8x64xf32> to vector<8x16xf32>
    %cst_190 = arith.constant 0.000000e+00 : f32
    %733 = vector.broadcast %cst_190 : f32 to vector<8x16xf32>
    %734 = arith.subf %733, %732 : vector<8x16xf32>
    %735 = math.exp %734 : vector<8x16xf32>
    %cst_191 = arith.constant 1.000000e+00 : f32
    %736 = vector.broadcast %cst_191 : f32 to vector<8x16xf32>
    %737 = arith.addf %736, %735 : vector<8x16xf32>
    %cst_192 = arith.constant 1.000000e+00 : f32
    %738 = vector.broadcast %cst_192 : f32 to vector<8x16xf32>
    %739 = arith.divf %738, %737 : vector<8x16xf32>
    %740 = vector.extract_strided_slice %731 {offsets = [0, 16], sizes = [8, 16], strides = [1, 1]} : vector<8x64xf32> to vector<8x16xf32>
    %cst_193 = arith.constant 0.000000e+00 : f32
    %741 = vector.broadcast %cst_193 : f32 to vector<8x16xf32>
    %742 = arith.subf %741, %740 : vector<8x16xf32>
    %743 = math.exp %742 : vector<8x16xf32>
    %cst_194 = arith.constant 1.000000e+00 : f32
    %744 = vector.broadcast %cst_194 : f32 to vector<8x16xf32>
    %745 = arith.addf %744, %743 : vector<8x16xf32>
    %cst_195 = arith.constant 1.000000e+00 : f32
    %746 = vector.broadcast %cst_195 : f32 to vector<8x16xf32>
    %747 = arith.divf %746, %745 : vector<8x16xf32>
    %748 = vector.extract_strided_slice %731 {offsets = [0, 32], sizes = [8, 16], strides = [1, 1]} : vector<8x64xf32> to vector<8x16xf32>
    %749 = math.tanh %748 : vector<8x16xf32>
    %750 = vector.extract_strided_slice %731 {offsets = [0, 48], sizes = [8, 16], strides = [1, 1]} : vector<8x64xf32> to vector<8x16xf32>
    %cst_196 = arith.constant 0.000000e+00 : f32
    %751 = vector.broadcast %cst_196 : f32 to vector<8x16xf32>
    %752 = arith.subf %751, %750 : vector<8x16xf32>
    %753 = math.exp %752 : vector<8x16xf32>
    %cst_197 = arith.constant 1.000000e+00 : f32
    %754 = vector.broadcast %cst_197 : f32 to vector<8x16xf32>
    %755 = arith.addf %754, %753 : vector<8x16xf32>
    %cst_198 = arith.constant 1.000000e+00 : f32
    %756 = vector.broadcast %cst_198 : f32 to vector<8x16xf32>
    %757 = arith.divf %756, %755 : vector<8x16xf32>
    %758 = arith.mulf %747, %727 : vector<8x16xf32>
    %759 = arith.mulf %739, %749 : vector<8x16xf32>
    %760 = arith.addf %758, %759 : vector<8x16xf32>
    %761 = math.tanh %760 : vector<8x16xf32>
    %762 = arith.mulf %757, %761 : vector<8x16xf32>
    %763 = vector.extract_strided_slice %1 {offsets = [1, 0, 0], sizes = [1, 8, 1], strides = [1, 1, 1]} : vector<8x8x1xf32> to vector<1x8x1xf32>
    %764 = vector.shape_cast %763 : vector<1x8x1xf32> to vector<8x1xf32>
    %765 = vector.broadcast %764 : vector<8x1xf32> to vector<8x16xf32>
    %766 = arith.mulf %765, %762 : vector<8x16xf32>
    %cst_199 = arith.constant 1.000000e+00 : f32
    %767 = vector.broadcast %cst_199 : f32 to vector<8x1xf32>
    %768 = arith.subf %767, %764 : vector<8x1xf32>
    %769 = vector.broadcast %768 : vector<8x1xf32> to vector<8x16xf32>
    %770 = arith.mulf %769, %720 : vector<8x16xf32>
    %771 = arith.addf %766, %770 : vector<8x16xf32>
    %772 = vector.broadcast %764 : vector<8x1xf32> to vector<8x16xf32>
    %773 = arith.mulf %772, %760 : vector<8x16xf32>
    %cst_200 = arith.constant 1.000000e+00 : f32
    %774 = vector.broadcast %cst_200 : f32 to vector<8x1xf32>
    %775 = arith.subf %774, %764 : vector<8x1xf32>
    %776 = vector.broadcast %775 : vector<8x1xf32> to vector<8x16xf32>
    %777 = arith.mulf %776, %727 : vector<8x16xf32>
    %778 = arith.addf %773, %777 : vector<8x16xf32>
    %779 = vector.extract_strided_slice %14 {offsets = [0, 0, 0], sizes = [1, 8, 64], strides = [1, 1, 1]} : vector<8x8x64xf32> to vector<1x8x64xf32>
    %780 = vector.shape_cast %779 : vector<1x8x64xf32> to vector<8x64xf32>
    %cst_201 = arith.constant dense<0.000000e+00> : vector<8x64xf32>
    %781 = tpu.matmul %771, %419, %cst_201 {dimension_numbers = #tpu.dot_dimension_numbers<[1], [0], [0], [1], [0, 0, 1, 1], [], []>} : vector<8x16xf32>, vector<16x64xf32>, vector<8x64xf32> -> vector<8x64xf32>
    %782 = arith.addf %780, %781 : vector<8x64xf32>
    %783 = vector.extract_strided_slice %782 {offsets = [0, 0], sizes = [8, 16], strides = [1, 1]} : vector<8x64xf32> to vector<8x16xf32>
    %cst_202 = arith.constant 0.000000e+00 : f32
    %784 = vector.broadcast %cst_202 : f32 to vector<8x16xf32>
    %785 = arith.subf %784, %783 : vector<8x16xf32>
    %786 = math.exp %785 : vector<8x16xf32>
    %cst_203 = arith.constant 1.000000e+00 : f32
    %787 = vector.broadcast %cst_203 : f32 to vector<8x16xf32>
    %788 = arith.addf %787, %786 : vector<8x16xf32>
    %cst_204 = arith.constant 1.000000e+00 : f32
    %789 = vector.broadcast %cst_204 : f32 to vector<8x16xf32>
    %790 = arith.divf %789, %788 : vector<8x16xf32>
    %791 = vector.extract_strided_slice %782 {offsets = [0, 16], sizes = [8, 16], strides = [1, 1]} : vector<8x64xf32> to vector<8x16xf32>
    %cst_205 = arith.constant 0.000000e+00 : f32
    %792 = vector.broadcast %cst_205 : f32 to vector<8x16xf32>
    %793 = arith.subf %792, %791 : vector<8x16xf32>
    %794 = math.exp %793 : vector<8x16xf32>
    %cst_206 = arith.constant 1.000000e+00 : f32
    %795 = vector.broadcast %cst_206 : f32 to vector<8x16xf32>
    %796 = arith.addf %795, %794 : vector<8x16xf32>
    %cst_207 = arith.constant 1.000000e+00 : f32
    %797 = vector.broadcast %cst_207 : f32 to vector<8x16xf32>
    %798 = arith.divf %797, %796 : vector<8x16xf32>
    %799 = vector.extract_strided_slice %782 {offsets = [0, 32], sizes = [8, 16], strides = [1, 1]} : vector<8x64xf32> to vector<8x16xf32>
    %800 = math.tanh %799 : vector<8x16xf32>
    %801 = vector.extract_strided_slice %782 {offsets = [0, 48], sizes = [8, 16], strides = [1, 1]} : vector<8x64xf32> to vector<8x16xf32>
    %cst_208 = arith.constant 0.000000e+00 : f32
    %802 = vector.broadcast %cst_208 : f32 to vector<8x16xf32>
    %803 = arith.subf %802, %801 : vector<8x16xf32>
    %804 = math.exp %803 : vector<8x16xf32>
    %cst_209 = arith.constant 1.000000e+00 : f32
    %805 = vector.broadcast %cst_209 : f32 to vector<8x16xf32>
    %806 = arith.addf %805, %804 : vector<8x16xf32>
    %cst_210 = arith.constant 1.000000e+00 : f32
    %807 = vector.broadcast %cst_210 : f32 to vector<8x16xf32>
    %808 = arith.divf %807, %806 : vector<8x16xf32>
    %809 = arith.mulf %798, %778 : vector<8x16xf32>
    %810 = arith.mulf %790, %800 : vector<8x16xf32>
    %811 = arith.addf %809, %810 : vector<8x16xf32>
    %812 = math.tanh %811 : vector<8x16xf32>
    %813 = arith.mulf %808, %812 : vector<8x16xf32>
    %814 = vector.extract_strided_slice %1 {offsets = [0, 0, 0], sizes = [1, 8, 1], strides = [1, 1, 1]} : vector<8x8x1xf32> to vector<1x8x1xf32>
    %815 = vector.shape_cast %814 : vector<1x8x1xf32> to vector<8x1xf32>
    %816 = vector.broadcast %815 : vector<8x1xf32> to vector<8x16xf32>
    %817 = arith.mulf %816, %813 : vector<8x16xf32>
    %cst_211 = arith.constant 1.000000e+00 : f32
    %818 = vector.broadcast %cst_211 : f32 to vector<8x1xf32>
    %819 = arith.subf %818, %815 : vector<8x1xf32>
    %820 = vector.broadcast %819 : vector<8x1xf32> to vector<8x16xf32>
    %821 = arith.mulf %820, %771 : vector<8x16xf32>
    %822 = arith.addf %817, %821 : vector<8x16xf32>
    %823 = tpu.concatenate %418, %822 in 1 : vector<8x16xf32>, vector<8x16xf32> -> vector<8x32xf32>
    %c0_212 = arith.constant 0 : index
    %c0_213 = arith.constant 0 : index
    %824 = vector.load %arg3[%c0_212, %c0_213] : memref<8x32xf32, #tpu.memory_space<vmem>>, vector<8x32xf32>
    %c0_214 = arith.constant 0 : index
    %c0_215 = arith.constant 0 : index
    %825 = vector.load %arg4[%c0_214, %c0_215] : memref<8x32xf32, #tpu.memory_space<vmem>>, vector<8x32xf32>
    %c0_216 = arith.constant 0 : index
    %c0_217 = arith.constant 0 : index
    %826 = vector.load %arg5[%c0_216, %c0_217] : memref<8x32xf32, #tpu.memory_space<vmem>>, vector<8x32xf32>
    %c0_218 = arith.constant 0 : index
    %c0_219 = arith.constant 0 : index
    %827 = vector.load %arg36[%c0_218, %c0_219] : memref<32x128xf32, #tpu.memory_space<vmem>>, vector<32x128xf32>
    %c0_220 = arith.constant 0 : index
    %c0_221 = arith.constant 0 : index
    %828 = vector.load %arg35[%c0_220, %c0_221] : memref<1x128xf32, #tpu.memory_space<vmem>>, vector<1x128xf32>
    %829 = vector.extract_strided_slice %827 {offsets = [0, 96], sizes = [32, 32], strides = [1, 1]} : vector<32x128xf32> to vector<32x32xf32>
    %cst_222 = arith.constant dense<0.000000e+00> : vector<8x32xf32>
    %830 = tpu.matmul %825, %829, %cst_222 {dimension_numbers = #tpu.dot_dimension_numbers<[1], [0], [0], [1], [0, 0, 1, 1], [], []>} : vector<8x32xf32>, vector<32x32xf32>, vector<8x32xf32> -> vector<8x32xf32>
    %831 = vector.extract_strided_slice %828 {offsets = [0, 96], sizes = [1, 32], strides = [1, 1]} : vector<1x128xf32> to vector<1x32xf32>
    %832 = vector.broadcast %831 : vector<1x32xf32> to vector<8x32xf32>
    %833 = arith.addf %830, %832 : vector<8x32xf32>
    %834 = arith.addf %823, %833 : vector<8x32xf32>
    %c0_223 = arith.constant 0 : index
    %c0_224 = arith.constant 0 : index
    %835 = vector.load %arg25[%c0_223, %c0_224] : memref<4x32xf32, #tpu.memory_space<vmem>>, vector<4x32xf32>
    %836 = vector.extract_strided_slice %835 {offsets = [0, 0], sizes = [1, 32], strides = [1, 1]} : vector<4x32xf32> to vector<1x32xf32>
    %837 = vector.extract_strided_slice %835 {offsets = [1, 0], sizes = [1, 32], strides = [1, 1]} : vector<4x32xf32> to vector<1x32xf32>
    %cst_225 = arith.constant dense<0.000000e+00> : vector<8xf32>
    %838 = vector.multi_reduction <add>, %834, %cst_225 [1] : vector<8x32xf32> to vector<8xf32>
    %839 = vector.shape_cast %838 : vector<8xf32> to vector<8x1xf32>
    %cst_226 = arith.constant 3.200000e+01 : f32
    %840 = vector.broadcast %cst_226 : f32 to vector<8x1xf32>
    %841 = arith.divf %839, %840 : vector<8x1xf32>
    %842 = vector.broadcast %841 : vector<8x1xf32> to vector<8x32xf32>
    %843 = arith.subf %834, %842 : vector<8x32xf32>
    %844 = arith.mulf %843, %843 : vector<8x32xf32>
    %cst_227 = arith.constant dense<0.000000e+00> : vector<8xf32>
    %845 = vector.multi_reduction <add>, %844, %cst_227 [1] : vector<8x32xf32> to vector<8xf32>
    %846 = vector.shape_cast %845 : vector<8xf32> to vector<8x1xf32>
    %cst_228 = arith.constant 3.200000e+01 : f32
    %847 = vector.broadcast %cst_228 : f32 to vector<8x1xf32>
    %848 = arith.divf %846, %847 : vector<8x1xf32>
    %849 = vector.broadcast %841 : vector<8x1xf32> to vector<8x32xf32>
    %850 = arith.subf %834, %849 : vector<8x32xf32>
    %cst_229 = arith.constant 9.99999997E-7 : f32
    %851 = vector.broadcast %cst_229 : f32 to vector<8x1xf32>
    %852 = arith.addf %848, %851 : vector<8x1xf32>
    %853 = math.rsqrt %852 : vector<8x1xf32>
    %854 = vector.broadcast %853 : vector<8x1xf32> to vector<8x32xf32>
    %855 = arith.mulf %850, %854 : vector<8x32xf32>
    %856 = vector.broadcast %836 : vector<1x32xf32> to vector<8x32xf32>
    %857 = arith.mulf %855, %856 : vector<8x32xf32>
    %858 = vector.broadcast %837 : vector<1x32xf32> to vector<8x32xf32>
    %859 = arith.addf %857, %858 : vector<8x32xf32>
    %c0_230 = arith.constant 0 : index
    %c0_231 = arith.constant 0 : index
    %860 = vector.load %arg20[%c0_230, %c0_231] : memref<32x128xf32, #tpu.memory_space<vmem>>, vector<32x128xf32>
    %c0_232 = arith.constant 0 : index
    %c0_233 = arith.constant 0 : index
    %861 = vector.load %arg19[%c0_232, %c0_233] : memref<1x128xf32, #tpu.memory_space<vmem>>, vector<1x128xf32>
    %862 = vector.extract_strided_slice %860 {offsets = [0, 0], sizes = [32, 96], strides = [1, 1]} : vector<32x128xf32> to vector<32x96xf32>
    %cst_234 = arith.constant dense<0.000000e+00> : vector<8x96xf32>
    %863 = tpu.matmul %859, %862, %cst_234 {dimension_numbers = #tpu.dot_dimension_numbers<[1], [0], [0], [1], [0, 0, 1, 1], [], []>} : vector<8x32xf32>, vector<32x96xf32>, vector<8x96xf32> -> vector<8x96xf32>
    %864 = vector.extract_strided_slice %861 {offsets = [0, 0], sizes = [1, 96], strides = [1, 1]} : vector<1x128xf32> to vector<1x96xf32>
    %865 = vector.broadcast %864 : vector<1x96xf32> to vector<8x96xf32>
    %866 = arith.addf %863, %865 : vector<8x96xf32>
    %867 = vector.extract_strided_slice %866 {offsets = [0, 0], sizes = [8, 32], strides = [1, 1]} : vector<8x96xf32> to vector<8x32xf32>
    %868 = vector.extract_strided_slice %866 {offsets = [0, 32], sizes = [8, 32], strides = [1, 1]} : vector<8x96xf32> to vector<8x32xf32>
    %869 = vector.extract_strided_slice %866 {offsets = [0, 64], sizes = [8, 32], strides = [1, 1]} : vector<8x96xf32> to vector<8x32xf32>
    %870 = vector.extract_strided_slice %867 {offsets = [0, 0], sizes = [8, 8], strides = [1, 1]} : vector<8x32xf32> to vector<8x8xf32>
    %871 = vector.extract_strided_slice %868 {offsets = [0, 0], sizes = [8, 8], strides = [1, 1]} : vector<8x32xf32> to vector<8x8xf32>
    %cst_235 = arith.constant dense<0.000000e+00> : vector<8x8xf32>
    %872 = tpu.matmul %870, %871, %cst_235 {dimension_numbers = #tpu.dot_dimension_numbers<[1], [1], [0], [0], [0, 0, 1, 0], [], []>} : vector<8x8xf32>, vector<8x8xf32>, vector<8x8xf32> -> vector<8x8xf32>
    %cst_236 = arith.constant 0.353553385 : f32
    %873 = vector.broadcast %cst_236 : f32 to vector<8x8xf32>
    %874 = arith.mulf %872, %873 : vector<8x8xf32>
    %cst_237 = arith.constant dense<0xFF800000> : vector<8xf32>
    %875 = vector.multi_reduction <maximumf>, %874, %cst_237 [1] : vector<8x8xf32> to vector<8xf32>
    %876 = vector.shape_cast %875 : vector<8xf32> to vector<8x1xf32>
    %877 = vector.broadcast %876 : vector<8x1xf32> to vector<8x8xf32>
    %878 = arith.subf %874, %877 : vector<8x8xf32>
    %879 = math.exp %878 : vector<8x8xf32>
    %cst_238 = arith.constant dense<0.000000e+00> : vector<8xf32>
    %880 = vector.multi_reduction <add>, %879, %cst_238 [1] : vector<8x8xf32> to vector<8xf32>
    %881 = vector.shape_cast %880 : vector<8xf32> to vector<8x1xf32>
    %882 = vector.broadcast %881 : vector<8x1xf32> to vector<8x8xf32>
    %883 = arith.divf %879, %882 : vector<8x8xf32>
    %884 = vector.extract_strided_slice %869 {offsets = [0, 0], sizes = [8, 8], strides = [1, 1]} : vector<8x32xf32> to vector<8x8xf32>
    %cst_239 = arith.constant dense<0.000000e+00> : vector<8x8xf32>
    %885 = tpu.matmul %883, %884, %cst_239 {dimension_numbers = #tpu.dot_dimension_numbers<[1], [0], [0], [1], [0, 0, 1, 1], [], []>} : vector<8x8xf32>, vector<8x8xf32>, vector<8x8xf32> -> vector<8x8xf32>
    %886 = vector.extract_strided_slice %867 {offsets = [0, 8], sizes = [8, 8], strides = [1, 1]} : vector<8x32xf32> to vector<8x8xf32>
    %887 = vector.extract_strided_slice %868 {offsets = [0, 8], sizes = [8, 8], strides = [1, 1]} : vector<8x32xf32> to vector<8x8xf32>
    %cst_240 = arith.constant dense<0.000000e+00> : vector<8x8xf32>
    %888 = tpu.matmul %886, %887, %cst_240 {dimension_numbers = #tpu.dot_dimension_numbers<[1], [1], [0], [0], [0, 0, 1, 0], [], []>} : vector<8x8xf32>, vector<8x8xf32>, vector<8x8xf32> -> vector<8x8xf32>
    %cst_241 = arith.constant 0.353553385 : f32
    %889 = vector.broadcast %cst_241 : f32 to vector<8x8xf32>
    %890 = arith.mulf %888, %889 : vector<8x8xf32>
    %cst_242 = arith.constant dense<0xFF800000> : vector<8xf32>
    %891 = vector.multi_reduction <maximumf>, %890, %cst_242 [1] : vector<8x8xf32> to vector<8xf32>
    %892 = vector.shape_cast %891 : vector<8xf32> to vector<8x1xf32>
    %893 = vector.broadcast %892 : vector<8x1xf32> to vector<8x8xf32>
    %894 = arith.subf %890, %893 : vector<8x8xf32>
    %895 = math.exp %894 : vector<8x8xf32>
    %cst_243 = arith.constant dense<0.000000e+00> : vector<8xf32>
    %896 = vector.multi_reduction <add>, %895, %cst_243 [1] : vector<8x8xf32> to vector<8xf32>
    %897 = vector.shape_cast %896 : vector<8xf32> to vector<8x1xf32>
    %898 = vector.broadcast %897 : vector<8x1xf32> to vector<8x8xf32>
    %899 = arith.divf %895, %898 : vector<8x8xf32>
    %900 = vector.extract_strided_slice %869 {offsets = [0, 8], sizes = [8, 8], strides = [1, 1]} : vector<8x32xf32> to vector<8x8xf32>
    %cst_244 = arith.constant dense<0.000000e+00> : vector<8x8xf32>
    %901 = tpu.matmul %899, %900, %cst_244 {dimension_numbers = #tpu.dot_dimension_numbers<[1], [0], [0], [1], [0, 0, 1, 1], [], []>} : vector<8x8xf32>, vector<8x8xf32>, vector<8x8xf32> -> vector<8x8xf32>
    %902 = vector.extract_strided_slice %867 {offsets = [0, 16], sizes = [8, 8], strides = [1, 1]} : vector<8x32xf32> to vector<8x8xf32>
    %903 = vector.extract_strided_slice %868 {offsets = [0, 16], sizes = [8, 8], strides = [1, 1]} : vector<8x32xf32> to vector<8x8xf32>
    %cst_245 = arith.constant dense<0.000000e+00> : vector<8x8xf32>
    %904 = tpu.matmul %902, %903, %cst_245 {dimension_numbers = #tpu.dot_dimension_numbers<[1], [1], [0], [0], [0, 0, 1, 0], [], []>} : vector<8x8xf32>, vector<8x8xf32>, vector<8x8xf32> -> vector<8x8xf32>
    %cst_246 = arith.constant 0.353553385 : f32
    %905 = vector.broadcast %cst_246 : f32 to vector<8x8xf32>
    %906 = arith.mulf %904, %905 : vector<8x8xf32>
    %cst_247 = arith.constant dense<0xFF800000> : vector<8xf32>
    %907 = vector.multi_reduction <maximumf>, %906, %cst_247 [1] : vector<8x8xf32> to vector<8xf32>
    %908 = vector.shape_cast %907 : vector<8xf32> to vector<8x1xf32>
    %909 = vector.broadcast %908 : vector<8x1xf32> to vector<8x8xf32>
    %910 = arith.subf %906, %909 : vector<8x8xf32>
    %911 = math.exp %910 : vector<8x8xf32>
    %cst_248 = arith.constant dense<0.000000e+00> : vector<8xf32>
    %912 = vector.multi_reduction <add>, %911, %cst_248 [1] : vector<8x8xf32> to vector<8xf32>
    %913 = vector.shape_cast %912 : vector<8xf32> to vector<8x1xf32>
    %914 = vector.broadcast %913 : vector<8x1xf32> to vector<8x8xf32>
    %915 = arith.divf %911, %914 : vector<8x8xf32>
    %916 = vector.extract_strided_slice %869 {offsets = [0, 16], sizes = [8, 8], strides = [1, 1]} : vector<8x32xf32> to vector<8x8xf32>
    %cst_249 = arith.constant dense<0.000000e+00> : vector<8x8xf32>
    %917 = tpu.matmul %915, %916, %cst_249 {dimension_numbers = #tpu.dot_dimension_numbers<[1], [0], [0], [1], [0, 0, 1, 1], [], []>} : vector<8x8xf32>, vector<8x8xf32>, vector<8x8xf32> -> vector<8x8xf32>
    %918 = vector.extract_strided_slice %867 {offsets = [0, 24], sizes = [8, 8], strides = [1, 1]} : vector<8x32xf32> to vector<8x8xf32>
    %919 = vector.extract_strided_slice %868 {offsets = [0, 24], sizes = [8, 8], strides = [1, 1]} : vector<8x32xf32> to vector<8x8xf32>
    %cst_250 = arith.constant dense<0.000000e+00> : vector<8x8xf32>
    %920 = tpu.matmul %918, %919, %cst_250 {dimension_numbers = #tpu.dot_dimension_numbers<[1], [1], [0], [0], [0, 0, 1, 0], [], []>} : vector<8x8xf32>, vector<8x8xf32>, vector<8x8xf32> -> vector<8x8xf32>
    %cst_251 = arith.constant 0.353553385 : f32
    %921 = vector.broadcast %cst_251 : f32 to vector<8x8xf32>
    %922 = arith.mulf %920, %921 : vector<8x8xf32>
    %cst_252 = arith.constant dense<0xFF800000> : vector<8xf32>
    %923 = vector.multi_reduction <maximumf>, %922, %cst_252 [1] : vector<8x8xf32> to vector<8xf32>
    %924 = vector.shape_cast %923 : vector<8xf32> to vector<8x1xf32>
    %925 = vector.broadcast %924 : vector<8x1xf32> to vector<8x8xf32>
    %926 = arith.subf %922, %925 : vector<8x8xf32>
    %927 = math.exp %926 : vector<8x8xf32>
    %cst_253 = arith.constant dense<0.000000e+00> : vector<8xf32>
    %928 = vector.multi_reduction <add>, %927, %cst_253 [1] : vector<8x8xf32> to vector<8xf32>
    %929 = vector.shape_cast %928 : vector<8xf32> to vector<8x1xf32>
    %930 = vector.broadcast %929 : vector<8x1xf32> to vector<8x8xf32>
    %931 = arith.divf %927, %930 : vector<8x8xf32>
    %932 = vector.extract_strided_slice %869 {offsets = [0, 24], sizes = [8, 8], strides = [1, 1]} : vector<8x32xf32> to vector<8x8xf32>
    %cst_254 = arith.constant dense<0.000000e+00> : vector<8x8xf32>
    %933 = tpu.matmul %931, %932, %cst_254 {dimension_numbers = #tpu.dot_dimension_numbers<[1], [0], [0], [1], [0, 0, 1, 1], [], []>} : vector<8x8xf32>, vector<8x8xf32>, vector<8x8xf32> -> vector<8x8xf32>
    %934 = tpu.concatenate %885, %901, %917, %933 in 1 : vector<8x8xf32>, vector<8x8xf32>, vector<8x8xf32>, vector<8x8xf32> -> vector<8x32xf32>
    %935 = vector.extract_strided_slice %860 {offsets = [0, 96], sizes = [32, 32], strides = [1, 1]} : vector<32x128xf32> to vector<32x32xf32>
    %cst_255 = arith.constant dense<0.000000e+00> : vector<8x32xf32>
    %936 = tpu.matmul %934, %935, %cst_255 {dimension_numbers = #tpu.dot_dimension_numbers<[1], [0], [0], [1], [0, 0, 1, 1], [], []>} : vector<8x32xf32>, vector<32x32xf32>, vector<8x32xf32> -> vector<8x32xf32>
    %937 = vector.extract_strided_slice %861 {offsets = [0, 96], sizes = [1, 32], strides = [1, 1]} : vector<1x128xf32> to vector<1x32xf32>
    %938 = vector.broadcast %937 : vector<1x32xf32> to vector<8x32xf32>
    %939 = arith.addf %936, %938 : vector<8x32xf32>
    %940 = arith.addf %834, %939 : vector<8x32xf32>
    %941 = vector.extract_strided_slice %835 {offsets = [2, 0], sizes = [1, 32], strides = [1, 1]} : vector<4x32xf32> to vector<1x32xf32>
    %942 = vector.extract_strided_slice %835 {offsets = [3, 0], sizes = [1, 32], strides = [1, 1]} : vector<4x32xf32> to vector<1x32xf32>
    %cst_256 = arith.constant dense<0.000000e+00> : vector<8xf32>
    %943 = vector.multi_reduction <add>, %940, %cst_256 [1] : vector<8x32xf32> to vector<8xf32>
    %944 = vector.shape_cast %943 : vector<8xf32> to vector<8x1xf32>
    %cst_257 = arith.constant 3.200000e+01 : f32
    %945 = vector.broadcast %cst_257 : f32 to vector<8x1xf32>
    %946 = arith.divf %944, %945 : vector<8x1xf32>
    %947 = vector.broadcast %946 : vector<8x1xf32> to vector<8x32xf32>
    %948 = arith.subf %940, %947 : vector<8x32xf32>
    %949 = arith.mulf %948, %948 : vector<8x32xf32>
    %cst_258 = arith.constant dense<0.000000e+00> : vector<8xf32>
    %950 = vector.multi_reduction <add>, %949, %cst_258 [1] : vector<8x32xf32> to vector<8xf32>
    %951 = vector.shape_cast %950 : vector<8xf32> to vector<8x1xf32>
    %cst_259 = arith.constant 3.200000e+01 : f32
    %952 = vector.broadcast %cst_259 : f32 to vector<8x1xf32>
    %953 = arith.divf %951, %952 : vector<8x1xf32>
    %954 = vector.broadcast %946 : vector<8x1xf32> to vector<8x32xf32>
    %955 = arith.subf %940, %954 : vector<8x32xf32>
    %cst_260 = arith.constant 9.99999997E-7 : f32
    %956 = vector.broadcast %cst_260 : f32 to vector<8x1xf32>
    %957 = arith.addf %953, %956 : vector<8x1xf32>
    %958 = math.rsqrt %957 : vector<8x1xf32>
    %959 = vector.broadcast %958 : vector<8x1xf32> to vector<8x32xf32>
    %960 = arith.mulf %955, %959 : vector<8x32xf32>
    %961 = vector.broadcast %941 : vector<1x32xf32> to vector<8x32xf32>
    %962 = arith.mulf %960, %961 : vector<8x32xf32>
    %963 = vector.broadcast %942 : vector<1x32xf32> to vector<8x32xf32>
    %964 = arith.addf %962, %963 : vector<8x32xf32>
    %c0_261 = arith.constant 0 : index
    %c0_262 = arith.constant 0 : index
    %965 = vector.load %arg23[%c0_261, %c0_262] : memref<32x512xf32, #tpu.memory_space<vmem>>, vector<32x512xf32>
    %cst_263 = arith.constant dense<0.000000e+00> : vector<8x512xf32>
    %966 = tpu.matmul %964, %965, %cst_263 {dimension_numbers = #tpu.dot_dimension_numbers<[1], [0], [0], [1], [0, 0, 1, 1], [], []>} : vector<8x32xf32>, vector<32x512xf32>, vector<8x512xf32> -> vector<8x512xf32>
    %c0_264 = arith.constant 0 : index
    %c0_265 = arith.constant 0 : index
    %967 = vector.load %arg21[%c0_264, %c0_265] : memref<1x512xf32, #tpu.memory_space<vmem>>, vector<1x512xf32>
    %968 = vector.broadcast %967 : vector<1x512xf32> to vector<8x512xf32>
    %969 = arith.addf %966, %968 : vector<8x512xf32>
    %cst_266 = arith.constant 0.000000e+00 : f32
    %970 = vector.broadcast %cst_266 : f32 to vector<8x512xf32>
    %971 = arith.maximumf %969, %970 : vector<8x512xf32>
    %c0_267 = arith.constant 0 : index
    %c0_268 = arith.constant 0 : index
    %972 = vector.load %arg24[%c0_267, %c0_268] : memref<512x32xf32, #tpu.memory_space<vmem>>, vector<512x32xf32>
    %cst_269 = arith.constant dense<0.000000e+00> : vector<8x32xf32>
    %973 = tpu.matmul %971, %972, %cst_269 {dimension_numbers = #tpu.dot_dimension_numbers<[1], [0], [0], [1], [0, 0, 1, 1], [], []>} : vector<8x512xf32>, vector<512x32xf32>, vector<8x32xf32> -> vector<8x32xf32>
    %c0_270 = arith.constant 0 : index
    %c0_271 = arith.constant 0 : index
    %974 = vector.load %arg22[%c0_270, %c0_271] : memref<1x32xf32, #tpu.memory_space<vmem>>, vector<1x32xf32>
    %975 = vector.broadcast %974 : vector<1x32xf32> to vector<8x32xf32>
    %976 = arith.addf %973, %975 : vector<8x32xf32>
    %977 = arith.addf %940, %976 : vector<8x32xf32>
    %c0_272 = arith.constant 0 : index
    %c0_273 = arith.constant 0 : index
    %978 = vector.load %arg26[%c0_272, %c0_273] : memref<2x32xf32, #tpu.memory_space<vmem>>, vector<2x32xf32>
    %979 = vector.extract_strided_slice %978 {offsets = [0, 0], sizes = [1, 32], strides = [1, 1]} : vector<2x32xf32> to vector<1x32xf32>
    %980 = vector.extract_strided_slice %978 {offsets = [1, 0], sizes = [1, 32], strides = [1, 1]} : vector<2x32xf32> to vector<1x32xf32>
    %cst_274 = arith.constant dense<0.000000e+00> : vector<8xf32>
    %981 = vector.multi_reduction <add>, %977, %cst_274 [1] : vector<8x32xf32> to vector<8xf32>
    %982 = vector.shape_cast %981 : vector<8xf32> to vector<8x1xf32>
    %cst_275 = arith.constant 3.200000e+01 : f32
    %983 = vector.broadcast %cst_275 : f32 to vector<8x1xf32>
    %984 = arith.divf %982, %983 : vector<8x1xf32>
    %985 = vector.broadcast %984 : vector<8x1xf32> to vector<8x32xf32>
    %986 = arith.subf %977, %985 : vector<8x32xf32>
    %987 = arith.mulf %986, %986 : vector<8x32xf32>
    %cst_276 = arith.constant dense<0.000000e+00> : vector<8xf32>
    %988 = vector.multi_reduction <add>, %987, %cst_276 [1] : vector<8x32xf32> to vector<8xf32>
    %989 = vector.shape_cast %988 : vector<8xf32> to vector<8x1xf32>
    %cst_277 = arith.constant 3.200000e+01 : f32
    %990 = vector.broadcast %cst_277 : f32 to vector<8x1xf32>
    %991 = arith.divf %989, %990 : vector<8x1xf32>
    %992 = vector.broadcast %984 : vector<8x1xf32> to vector<8x32xf32>
    %993 = arith.subf %977, %992 : vector<8x32xf32>
    %cst_278 = arith.constant 9.99999997E-7 : f32
    %994 = vector.broadcast %cst_278 : f32 to vector<8x1xf32>
    %995 = arith.addf %991, %994 : vector<8x1xf32>
    %996 = math.rsqrt %995 : vector<8x1xf32>
    %997 = vector.broadcast %996 : vector<8x1xf32> to vector<8x32xf32>
    %998 = arith.mulf %993, %997 : vector<8x32xf32>
    %999 = vector.broadcast %979 : vector<1x32xf32> to vector<8x32xf32>
    %1000 = arith.mulf %998, %999 : vector<8x32xf32>
    %1001 = vector.broadcast %980 : vector<1x32xf32> to vector<8x32xf32>
    %1002 = arith.addf %1000, %1001 : vector<8x32xf32>
    %c0_279 = arith.constant 0 : index
    %c0_280 = arith.constant 0 : index
    %1003 = vector.load %arg33[%c0_279, %c0_280] : memref<4x32xf32, #tpu.memory_space<vmem>>, vector<4x32xf32>
    %1004 = vector.extract_strided_slice %1003 {offsets = [0, 0], sizes = [1, 32], strides = [1, 1]} : vector<4x32xf32> to vector<1x32xf32>
    %1005 = vector.extract_strided_slice %1003 {offsets = [1, 0], sizes = [1, 32], strides = [1, 1]} : vector<4x32xf32> to vector<1x32xf32>
    %cst_281 = arith.constant dense<0.000000e+00> : vector<8xf32>
    %1006 = vector.multi_reduction <add>, %824, %cst_281 [1] : vector<8x32xf32> to vector<8xf32>
    %1007 = vector.shape_cast %1006 : vector<8xf32> to vector<8x1xf32>
    %cst_282 = arith.constant 3.200000e+01 : f32
    %1008 = vector.broadcast %cst_282 : f32 to vector<8x1xf32>
    %1009 = arith.divf %1007, %1008 : vector<8x1xf32>
    %1010 = vector.broadcast %1009 : vector<8x1xf32> to vector<8x32xf32>
    %1011 = arith.subf %824, %1010 : vector<8x32xf32>
    %1012 = arith.mulf %1011, %1011 : vector<8x32xf32>
    %cst_283 = arith.constant dense<0.000000e+00> : vector<8xf32>
    %1013 = vector.multi_reduction <add>, %1012, %cst_283 [1] : vector<8x32xf32> to vector<8xf32>
    %1014 = vector.shape_cast %1013 : vector<8xf32> to vector<8x1xf32>
    %cst_284 = arith.constant 3.200000e+01 : f32
    %1015 = vector.broadcast %cst_284 : f32 to vector<8x1xf32>
    %1016 = arith.divf %1014, %1015 : vector<8x1xf32>
    %1017 = vector.broadcast %1009 : vector<8x1xf32> to vector<8x32xf32>
    %1018 = arith.subf %824, %1017 : vector<8x32xf32>
    %cst_285 = arith.constant 9.99999997E-7 : f32
    %1019 = vector.broadcast %cst_285 : f32 to vector<8x1xf32>
    %1020 = arith.addf %1016, %1019 : vector<8x1xf32>
    %1021 = math.rsqrt %1020 : vector<8x1xf32>
    %1022 = vector.broadcast %1021 : vector<8x1xf32> to vector<8x32xf32>
    %1023 = arith.mulf %1018, %1022 : vector<8x32xf32>
    %1024 = vector.broadcast %1004 : vector<1x32xf32> to vector<8x32xf32>
    %1025 = arith.mulf %1023, %1024 : vector<8x32xf32>
    %1026 = vector.broadcast %1005 : vector<1x32xf32> to vector<8x32xf32>
    %1027 = arith.addf %1025, %1026 : vector<8x32xf32>
    %c0_286 = arith.constant 0 : index
    %c0_287 = arith.constant 0 : index
    %1028 = vector.load %arg28[%c0_286, %c0_287] : memref<32x128xf32, #tpu.memory_space<vmem>>, vector<32x128xf32>
    %c0_288 = arith.constant 0 : index
    %c0_289 = arith.constant 0 : index
    %1029 = vector.load %arg27[%c0_288, %c0_289] : memref<1x128xf32, #tpu.memory_space<vmem>>, vector<1x128xf32>
    %1030 = vector.extract_strided_slice %1028 {offsets = [0, 0], sizes = [32, 96], strides = [1, 1]} : vector<32x128xf32> to vector<32x96xf32>
    %cst_290 = arith.constant dense<0.000000e+00> : vector<8x96xf32>
    %1031 = tpu.matmul %1027, %1030, %cst_290 {dimension_numbers = #tpu.dot_dimension_numbers<[1], [0], [0], [1], [0, 0, 1, 1], [], []>} : vector<8x32xf32>, vector<32x96xf32>, vector<8x96xf32> -> vector<8x96xf32>
    %1032 = vector.extract_strided_slice %1029 {offsets = [0, 0], sizes = [1, 96], strides = [1, 1]} : vector<1x128xf32> to vector<1x96xf32>
    %1033 = vector.broadcast %1032 : vector<1x96xf32> to vector<8x96xf32>
    %1034 = arith.addf %1031, %1033 : vector<8x96xf32>
    %1035 = vector.extract_strided_slice %1034 {offsets = [0, 0], sizes = [8, 32], strides = [1, 1]} : vector<8x96xf32> to vector<8x32xf32>
    %1036 = vector.extract_strided_slice %1034 {offsets = [0, 32], sizes = [8, 32], strides = [1, 1]} : vector<8x96xf32> to vector<8x32xf32>
    %1037 = vector.extract_strided_slice %1034 {offsets = [0, 64], sizes = [8, 32], strides = [1, 1]} : vector<8x96xf32> to vector<8x32xf32>
    %1038 = vector.extract_strided_slice %1035 {offsets = [0, 0], sizes = [8, 8], strides = [1, 1]} : vector<8x32xf32> to vector<8x8xf32>
    %1039 = vector.extract_strided_slice %1036 {offsets = [0, 0], sizes = [8, 8], strides = [1, 1]} : vector<8x32xf32> to vector<8x8xf32>
    %cst_291 = arith.constant dense<0.000000e+00> : vector<8x8xf32>
    %1040 = tpu.matmul %1038, %1039, %cst_291 {dimension_numbers = #tpu.dot_dimension_numbers<[1], [1], [0], [0], [0, 0, 1, 0], [], []>} : vector<8x8xf32>, vector<8x8xf32>, vector<8x8xf32> -> vector<8x8xf32>
    %cst_292 = arith.constant 0.353553385 : f32
    %1041 = vector.broadcast %cst_292 : f32 to vector<8x8xf32>
    %1042 = arith.mulf %1040, %1041 : vector<8x8xf32>
    %cst_293 = arith.constant dense<0xFF800000> : vector<8xf32>
    %1043 = vector.multi_reduction <maximumf>, %1042, %cst_293 [1] : vector<8x8xf32> to vector<8xf32>
    %1044 = vector.shape_cast %1043 : vector<8xf32> to vector<8x1xf32>
    %1045 = vector.broadcast %1044 : vector<8x1xf32> to vector<8x8xf32>
    %1046 = arith.subf %1042, %1045 : vector<8x8xf32>
    %1047 = math.exp %1046 : vector<8x8xf32>
    %cst_294 = arith.constant dense<0.000000e+00> : vector<8xf32>
    %1048 = vector.multi_reduction <add>, %1047, %cst_294 [1] : vector<8x8xf32> to vector<8xf32>
    %1049 = vector.shape_cast %1048 : vector<8xf32> to vector<8x1xf32>
    %1050 = vector.broadcast %1049 : vector<8x1xf32> to vector<8x8xf32>
    %1051 = arith.divf %1047, %1050 : vector<8x8xf32>
    %1052 = vector.extract_strided_slice %1037 {offsets = [0, 0], sizes = [8, 8], strides = [1, 1]} : vector<8x32xf32> to vector<8x8xf32>
    %cst_295 = arith.constant dense<0.000000e+00> : vector<8x8xf32>
    %1053 = tpu.matmul %1051, %1052, %cst_295 {dimension_numbers = #tpu.dot_dimension_numbers<[1], [0], [0], [1], [0, 0, 1, 1], [], []>} : vector<8x8xf32>, vector<8x8xf32>, vector<8x8xf32> -> vector<8x8xf32>
    %1054 = vector.extract_strided_slice %1035 {offsets = [0, 8], sizes = [8, 8], strides = [1, 1]} : vector<8x32xf32> to vector<8x8xf32>
    %1055 = vector.extract_strided_slice %1036 {offsets = [0, 8], sizes = [8, 8], strides = [1, 1]} : vector<8x32xf32> to vector<8x8xf32>
    %cst_296 = arith.constant dense<0.000000e+00> : vector<8x8xf32>
    %1056 = tpu.matmul %1054, %1055, %cst_296 {dimension_numbers = #tpu.dot_dimension_numbers<[1], [1], [0], [0], [0, 0, 1, 0], [], []>} : vector<8x8xf32>, vector<8x8xf32>, vector<8x8xf32> -> vector<8x8xf32>
    %cst_297 = arith.constant 0.353553385 : f32
    %1057 = vector.broadcast %cst_297 : f32 to vector<8x8xf32>
    %1058 = arith.mulf %1056, %1057 : vector<8x8xf32>
    %cst_298 = arith.constant dense<0xFF800000> : vector<8xf32>
    %1059 = vector.multi_reduction <maximumf>, %1058, %cst_298 [1] : vector<8x8xf32> to vector<8xf32>
    %1060 = vector.shape_cast %1059 : vector<8xf32> to vector<8x1xf32>
    %1061 = vector.broadcast %1060 : vector<8x1xf32> to vector<8x8xf32>
    %1062 = arith.subf %1058, %1061 : vector<8x8xf32>
    %1063 = math.exp %1062 : vector<8x8xf32>
    %cst_299 = arith.constant dense<0.000000e+00> : vector<8xf32>
    %1064 = vector.multi_reduction <add>, %1063, %cst_299 [1] : vector<8x8xf32> to vector<8xf32>
    %1065 = vector.shape_cast %1064 : vector<8xf32> to vector<8x1xf32>
    %1066 = vector.broadcast %1065 : vector<8x1xf32> to vector<8x8xf32>
    %1067 = arith.divf %1063, %1066 : vector<8x8xf32>
    %1068 = vector.extract_strided_slice %1037 {offsets = [0, 8], sizes = [8, 8], strides = [1, 1]} : vector<8x32xf32> to vector<8x8xf32>
    %cst_300 = arith.constant dense<0.000000e+00> : vector<8x8xf32>
    %1069 = tpu.matmul %1067, %1068, %cst_300 {dimension_numbers = #tpu.dot_dimension_numbers<[1], [0], [0], [1], [0, 0, 1, 1], [], []>} : vector<8x8xf32>, vector<8x8xf32>, vector<8x8xf32> -> vector<8x8xf32>
    %1070 = vector.extract_strided_slice %1035 {offsets = [0, 16], sizes = [8, 8], strides = [1, 1]} : vector<8x32xf32> to vector<8x8xf32>
    %1071 = vector.extract_strided_slice %1036 {offsets = [0, 16], sizes = [8, 8], strides = [1, 1]} : vector<8x32xf32> to vector<8x8xf32>
    %cst_301 = arith.constant dense<0.000000e+00> : vector<8x8xf32>
    %1072 = tpu.matmul %1070, %1071, %cst_301 {dimension_numbers = #tpu.dot_dimension_numbers<[1], [1], [0], [0], [0, 0, 1, 0], [], []>} : vector<8x8xf32>, vector<8x8xf32>, vector<8x8xf32> -> vector<8x8xf32>
    %cst_302 = arith.constant 0.353553385 : f32
    %1073 = vector.broadcast %cst_302 : f32 to vector<8x8xf32>
    %1074 = arith.mulf %1072, %1073 : vector<8x8xf32>
    %cst_303 = arith.constant dense<0xFF800000> : vector<8xf32>
    %1075 = vector.multi_reduction <maximumf>, %1074, %cst_303 [1] : vector<8x8xf32> to vector<8xf32>
    %1076 = vector.shape_cast %1075 : vector<8xf32> to vector<8x1xf32>
    %1077 = vector.broadcast %1076 : vector<8x1xf32> to vector<8x8xf32>
    %1078 = arith.subf %1074, %1077 : vector<8x8xf32>
    %1079 = math.exp %1078 : vector<8x8xf32>
    %cst_304 = arith.constant dense<0.000000e+00> : vector<8xf32>
    %1080 = vector.multi_reduction <add>, %1079, %cst_304 [1] : vector<8x8xf32> to vector<8xf32>
    %1081 = vector.shape_cast %1080 : vector<8xf32> to vector<8x1xf32>
    %1082 = vector.broadcast %1081 : vector<8x1xf32> to vector<8x8xf32>
    %1083 = arith.divf %1079, %1082 : vector<8x8xf32>
    %1084 = vector.extract_strided_slice %1037 {offsets = [0, 16], sizes = [8, 8], strides = [1, 1]} : vector<8x32xf32> to vector<8x8xf32>
    %cst_305 = arith.constant dense<0.000000e+00> : vector<8x8xf32>
    %1085 = tpu.matmul %1083, %1084, %cst_305 {dimension_numbers = #tpu.dot_dimension_numbers<[1], [0], [0], [1], [0, 0, 1, 1], [], []>} : vector<8x8xf32>, vector<8x8xf32>, vector<8x8xf32> -> vector<8x8xf32>
    %1086 = vector.extract_strided_slice %1035 {offsets = [0, 24], sizes = [8, 8], strides = [1, 1]} : vector<8x32xf32> to vector<8x8xf32>
    %1087 = vector.extract_strided_slice %1036 {offsets = [0, 24], sizes = [8, 8], strides = [1, 1]} : vector<8x32xf32> to vector<8x8xf32>
    %cst_306 = arith.constant dense<0.000000e+00> : vector<8x8xf32>
    %1088 = tpu.matmul %1086, %1087, %cst_306 {dimension_numbers = #tpu.dot_dimension_numbers<[1], [1], [0], [0], [0, 0, 1, 0], [], []>} : vector<8x8xf32>, vector<8x8xf32>, vector<8x8xf32> -> vector<8x8xf32>
    %cst_307 = arith.constant 0.353553385 : f32
    %1089 = vector.broadcast %cst_307 : f32 to vector<8x8xf32>
    %1090 = arith.mulf %1088, %1089 : vector<8x8xf32>
    %cst_308 = arith.constant dense<0xFF800000> : vector<8xf32>
    %1091 = vector.multi_reduction <maximumf>, %1090, %cst_308 [1] : vector<8x8xf32> to vector<8xf32>
    %1092 = vector.shape_cast %1091 : vector<8xf32> to vector<8x1xf32>
    %1093 = vector.broadcast %1092 : vector<8x1xf32> to vector<8x8xf32>
    %1094 = arith.subf %1090, %1093 : vector<8x8xf32>
    %1095 = math.exp %1094 : vector<8x8xf32>
    %cst_309 = arith.constant dense<0.000000e+00> : vector<8xf32>
    %1096 = vector.multi_reduction <add>, %1095, %cst_309 [1] : vector<8x8xf32> to vector<8xf32>
    %1097 = vector.shape_cast %1096 : vector<8xf32> to vector<8x1xf32>
    %1098 = vector.broadcast %1097 : vector<8x1xf32> to vector<8x8xf32>
    %1099 = arith.divf %1095, %1098 : vector<8x8xf32>
    %1100 = vector.extract_strided_slice %1037 {offsets = [0, 24], sizes = [8, 8], strides = [1, 1]} : vector<8x32xf32> to vector<8x8xf32>
    %cst_310 = arith.constant dense<0.000000e+00> : vector<8x8xf32>
    %1101 = tpu.matmul %1099, %1100, %cst_310 {dimension_numbers = #tpu.dot_dimension_numbers<[1], [0], [0], [1], [0, 0, 1, 1], [], []>} : vector<8x8xf32>, vector<8x8xf32>, vector<8x8xf32> -> vector<8x8xf32>
    %1102 = tpu.concatenate %1053, %1069, %1085, %1101 in 1 : vector<8x8xf32>, vector<8x8xf32>, vector<8x8xf32>, vector<8x8xf32> -> vector<8x32xf32>
    %1103 = vector.extract_strided_slice %1028 {offsets = [0, 96], sizes = [32, 32], strides = [1, 1]} : vector<32x128xf32> to vector<32x32xf32>
    %cst_311 = arith.constant dense<0.000000e+00> : vector<8x32xf32>
    %1104 = tpu.matmul %1102, %1103, %cst_311 {dimension_numbers = #tpu.dot_dimension_numbers<[1], [0], [0], [1], [0, 0, 1, 1], [], []>} : vector<8x32xf32>, vector<32x32xf32>, vector<8x32xf32> -> vector<8x32xf32>
    %1105 = vector.extract_strided_slice %1029 {offsets = [0, 96], sizes = [1, 32], strides = [1, 1]} : vector<1x128xf32> to vector<1x32xf32>
    %1106 = vector.broadcast %1105 : vector<1x32xf32> to vector<8x32xf32>
    %1107 = arith.addf %1104, %1106 : vector<8x32xf32>
    %1108 = arith.addf %824, %1107 : vector<8x32xf32>
    %1109 = vector.extract_strided_slice %1003 {offsets = [2, 0], sizes = [1, 32], strides = [1, 1]} : vector<4x32xf32> to vector<1x32xf32>
    %1110 = vector.extract_strided_slice %1003 {offsets = [3, 0], sizes = [1, 32], strides = [1, 1]} : vector<4x32xf32> to vector<1x32xf32>
    %cst_312 = arith.constant dense<0.000000e+00> : vector<8xf32>
    %1111 = vector.multi_reduction <add>, %1108, %cst_312 [1] : vector<8x32xf32> to vector<8xf32>
    %1112 = vector.shape_cast %1111 : vector<8xf32> to vector<8x1xf32>
    %cst_313 = arith.constant 3.200000e+01 : f32
    %1113 = vector.broadcast %cst_313 : f32 to vector<8x1xf32>
    %1114 = arith.divf %1112, %1113 : vector<8x1xf32>
    %1115 = vector.broadcast %1114 : vector<8x1xf32> to vector<8x32xf32>
    %1116 = arith.subf %1108, %1115 : vector<8x32xf32>
    %1117 = arith.mulf %1116, %1116 : vector<8x32xf32>
    %cst_314 = arith.constant dense<0.000000e+00> : vector<8xf32>
    %1118 = vector.multi_reduction <add>, %1117, %cst_314 [1] : vector<8x32xf32> to vector<8xf32>
    %1119 = vector.shape_cast %1118 : vector<8xf32> to vector<8x1xf32>
    %cst_315 = arith.constant 3.200000e+01 : f32
    %1120 = vector.broadcast %cst_315 : f32 to vector<8x1xf32>
    %1121 = arith.divf %1119, %1120 : vector<8x1xf32>
    %1122 = vector.broadcast %1114 : vector<8x1xf32> to vector<8x32xf32>
    %1123 = arith.subf %1108, %1122 : vector<8x32xf32>
    %cst_316 = arith.constant 9.99999997E-7 : f32
    %1124 = vector.broadcast %cst_316 : f32 to vector<8x1xf32>
    %1125 = arith.addf %1121, %1124 : vector<8x1xf32>
    %1126 = math.rsqrt %1125 : vector<8x1xf32>
    %1127 = vector.broadcast %1126 : vector<8x1xf32> to vector<8x32xf32>
    %1128 = arith.mulf %1123, %1127 : vector<8x32xf32>
    %1129 = vector.broadcast %1109 : vector<1x32xf32> to vector<8x32xf32>
    %1130 = arith.mulf %1128, %1129 : vector<8x32xf32>
    %1131 = vector.broadcast %1110 : vector<1x32xf32> to vector<8x32xf32>
    %1132 = arith.addf %1130, %1131 : vector<8x32xf32>
    %c0_317 = arith.constant 0 : index
    %c0_318 = arith.constant 0 : index
    %1133 = vector.load %arg31[%c0_317, %c0_318] : memref<32x512xf32, #tpu.memory_space<vmem>>, vector<32x512xf32>
    %cst_319 = arith.constant dense<0.000000e+00> : vector<8x512xf32>
    %1134 = tpu.matmul %1132, %1133, %cst_319 {dimension_numbers = #tpu.dot_dimension_numbers<[1], [0], [0], [1], [0, 0, 1, 1], [], []>} : vector<8x32xf32>, vector<32x512xf32>, vector<8x512xf32> -> vector<8x512xf32>
    %c0_320 = arith.constant 0 : index
    %c0_321 = arith.constant 0 : index
    %1135 = vector.load %arg29[%c0_320, %c0_321] : memref<1x512xf32, #tpu.memory_space<vmem>>, vector<1x512xf32>
    %1136 = vector.broadcast %1135 : vector<1x512xf32> to vector<8x512xf32>
    %1137 = arith.addf %1134, %1136 : vector<8x512xf32>
    %cst_322 = arith.constant 0.000000e+00 : f32
    %1138 = vector.broadcast %cst_322 : f32 to vector<8x512xf32>
    %1139 = arith.maximumf %1137, %1138 : vector<8x512xf32>
    %c0_323 = arith.constant 0 : index
    %c0_324 = arith.constant 0 : index
    %1140 = vector.load %arg32[%c0_323, %c0_324] : memref<512x32xf32, #tpu.memory_space<vmem>>, vector<512x32xf32>
    %cst_325 = arith.constant dense<0.000000e+00> : vector<8x32xf32>
    %1141 = tpu.matmul %1139, %1140, %cst_325 {dimension_numbers = #tpu.dot_dimension_numbers<[1], [0], [0], [1], [0, 0, 1, 1], [], []>} : vector<8x512xf32>, vector<512x32xf32>, vector<8x32xf32> -> vector<8x32xf32>
    %c0_326 = arith.constant 0 : index
    %c0_327 = arith.constant 0 : index
    %1142 = vector.load %arg30[%c0_326, %c0_327] : memref<1x32xf32, #tpu.memory_space<vmem>>, vector<1x32xf32>
    %1143 = vector.broadcast %1142 : vector<1x32xf32> to vector<8x32xf32>
    %1144 = arith.addf %1141, %1143 : vector<8x32xf32>
    %1145 = arith.addf %1108, %1144 : vector<8x32xf32>
    %c0_328 = arith.constant 0 : index
    %c0_329 = arith.constant 0 : index
    %1146 = vector.load %arg34[%c0_328, %c0_329] : memref<2x32xf32, #tpu.memory_space<vmem>>, vector<2x32xf32>
    %1147 = vector.extract_strided_slice %1146 {offsets = [0, 0], sizes = [1, 32], strides = [1, 1]} : vector<2x32xf32> to vector<1x32xf32>
    %1148 = vector.extract_strided_slice %1146 {offsets = [1, 0], sizes = [1, 32], strides = [1, 1]} : vector<2x32xf32> to vector<1x32xf32>
    %cst_330 = arith.constant dense<0.000000e+00> : vector<8xf32>
    %1149 = vector.multi_reduction <add>, %1145, %cst_330 [1] : vector<8x32xf32> to vector<8xf32>
    %1150 = vector.shape_cast %1149 : vector<8xf32> to vector<8x1xf32>
    %cst_331 = arith.constant 3.200000e+01 : f32
    %1151 = vector.broadcast %cst_331 : f32 to vector<8x1xf32>
    %1152 = arith.divf %1150, %1151 : vector<8x1xf32>
    %1153 = vector.broadcast %1152 : vector<8x1xf32> to vector<8x32xf32>
    %1154 = arith.subf %1145, %1153 : vector<8x32xf32>
    %1155 = arith.mulf %1154, %1154 : vector<8x32xf32>
    %cst_332 = arith.constant dense<0.000000e+00> : vector<8xf32>
    %1156 = vector.multi_reduction <add>, %1155, %cst_332 [1] : vector<8x32xf32> to vector<8xf32>
    %1157 = vector.shape_cast %1156 : vector<8xf32> to vector<8x1xf32>
    %cst_333 = arith.constant 3.200000e+01 : f32
    %1158 = vector.broadcast %cst_333 : f32 to vector<8x1xf32>
    %1159 = arith.divf %1157, %1158 : vector<8x1xf32>
    %1160 = vector.broadcast %1152 : vector<8x1xf32> to vector<8x32xf32>
    %1161 = arith.subf %1145, %1160 : vector<8x32xf32>
    %cst_334 = arith.constant 9.99999997E-7 : f32
    %1162 = vector.broadcast %cst_334 : f32 to vector<8x1xf32>
    %1163 = arith.addf %1159, %1162 : vector<8x1xf32>
    %1164 = math.rsqrt %1163 : vector<8x1xf32>
    %1165 = vector.broadcast %1164 : vector<8x1xf32> to vector<8x32xf32>
    %1166 = arith.mulf %1161, %1165 : vector<8x32xf32>
    %1167 = vector.broadcast %1147 : vector<1x32xf32> to vector<8x32xf32>
    %1168 = arith.mulf %1166, %1167 : vector<8x32xf32>
    %1169 = vector.broadcast %1148 : vector<1x32xf32> to vector<8x32xf32>
    %1170 = arith.addf %1168, %1169 : vector<8x32xf32>
    %c0_335 = arith.constant 0 : index
    %c0_336 = arith.constant 0 : index
    %1171 = vector.load %arg8[%c0_335, %c0_336] : memref<32x64xf32, #tpu.memory_space<vmem>>, vector<32x64xf32>
    %c0_337 = arith.constant 0 : index
    %c0_338 = arith.constant 0 : index
    %1172 = vector.load %arg7[%c0_337, %c0_338] : memref<1x64xf32, #tpu.memory_space<vmem>>, vector<1x64xf32>
    %1173 = vector.extract_strided_slice %1171 {offsets = [0, 0], sizes = [32, 32], strides = [1, 1]} : vector<32x64xf32> to vector<32x32xf32>
    %cst_339 = arith.constant dense<0.000000e+00> : vector<8x32xf32>
    %1174 = tpu.matmul %1170, %1173, %cst_339 {dimension_numbers = #tpu.dot_dimension_numbers<[1], [0], [0], [1], [0, 0, 1, 1], [], []>} : vector<8x32xf32>, vector<32x32xf32>, vector<8x32xf32> -> vector<8x32xf32>
    %1175 = vector.extract_strided_slice %1172 {offsets = [0, 0], sizes = [1, 32], strides = [1, 1]} : vector<1x64xf32> to vector<1x32xf32>
    %1176 = vector.broadcast %1175 : vector<1x32xf32> to vector<8x32xf32>
    %1177 = arith.addf %1174, %1176 : vector<8x32xf32>
    %1178 = vector.extract_strided_slice %1171 {offsets = [0, 32], sizes = [32, 32], strides = [1, 1]} : vector<32x64xf32> to vector<32x32xf32>
    %cst_340 = arith.constant dense<0.000000e+00> : vector<8x32xf32>
    %1179 = tpu.matmul %1002, %1178, %cst_340 {dimension_numbers = #tpu.dot_dimension_numbers<[1], [0], [0], [1], [0, 0, 1, 1], [], []>} : vector<8x32xf32>, vector<32x32xf32>, vector<8x32xf32> -> vector<8x32xf32>
    %1180 = vector.extract_strided_slice %1172 {offsets = [0, 32], sizes = [1, 32], strides = [1, 1]} : vector<1x64xf32> to vector<1x32xf32>
    %1181 = vector.broadcast %1180 : vector<1x32xf32> to vector<8x32xf32>
    %1182 = arith.addf %1179, %1181 : vector<8x32xf32>
    %cst_341 = arith.constant 0.000000e+00 : f32
    %1183 = vector.broadcast %cst_341 : f32 to vector<8x8xf32>
    %1184 = vector.extract_strided_slice %1177 {offsets = [0, 0], sizes = [8, 4], strides = [1, 1]} : vector<8x32xf32> to vector<8x4xf32>
    %1185 = vector.extract_strided_slice %1182 {offsets = [0, 0], sizes = [8, 4], strides = [1, 1]} : vector<8x32xf32> to vector<8x4xf32>
    %cst_342 = arith.constant dense<0.000000e+00> : vector<8x8xf32>
    %1186 = tpu.matmul %1184, %1185, %cst_342 {dimension_numbers = #tpu.dot_dimension_numbers<[1], [1], [0], [0], [0, 0, 1, 0], [], []>} : vector<8x4xf32>, vector<8x4xf32>, vector<8x8xf32> -> vector<8x8xf32>
    %cst_343 = arith.constant 5.000000e-01 : f32
    %1187 = vector.broadcast %cst_343 : f32 to vector<8x8xf32>
    %1188 = arith.mulf %1186, %1187 : vector<8x8xf32>
    %cst_344 = arith.constant dense<0xFF800000> : vector<8xf32>
    %1189 = vector.multi_reduction <maximumf>, %1188, %cst_344 [1] : vector<8x8xf32> to vector<8xf32>
    %1190 = vector.shape_cast %1189 : vector<8xf32> to vector<8x1xf32>
    %1191 = vector.broadcast %1190 : vector<8x1xf32> to vector<8x8xf32>
    %1192 = arith.subf %1188, %1191 : vector<8x8xf32>
    %1193 = math.exp %1192 : vector<8x8xf32>
    %cst_345 = arith.constant dense<0.000000e+00> : vector<8xf32>
    %1194 = vector.multi_reduction <add>, %1193, %cst_345 [1] : vector<8x8xf32> to vector<8xf32>
    %1195 = vector.shape_cast %1194 : vector<8xf32> to vector<8x1xf32>
    %1196 = vector.broadcast %1195 : vector<8x1xf32> to vector<8x8xf32>
    %1197 = arith.divf %1193, %1196 : vector<8x8xf32>
    %1198 = arith.addf %1183, %1197 : vector<8x8xf32>
    %1199 = vector.extract_strided_slice %1177 {offsets = [0, 4], sizes = [8, 4], strides = [1, 1]} : vector<8x32xf32> to vector<8x4xf32>
    %1200 = vector.extract_strided_slice %1182 {offsets = [0, 4], sizes = [8, 4], strides = [1, 1]} : vector<8x32xf32> to vector<8x4xf32>
    %cst_346 = arith.constant dense<0.000000e+00> : vector<8x8xf32>
    %1201 = tpu.matmul %1199, %1200, %cst_346 {dimension_numbers = #tpu.dot_dimension_numbers<[1], [1], [0], [0], [0, 0, 1, 0], [], []>} : vector<8x4xf32>, vector<8x4xf32>, vector<8x8xf32> -> vector<8x8xf32>
    %cst_347 = arith.constant 5.000000e-01 : f32
    %1202 = vector.broadcast %cst_347 : f32 to vector<8x8xf32>
    %1203 = arith.mulf %1201, %1202 : vector<8x8xf32>
    %cst_348 = arith.constant dense<0xFF800000> : vector<8xf32>
    %1204 = vector.multi_reduction <maximumf>, %1203, %cst_348 [1] : vector<8x8xf32> to vector<8xf32>
    %1205 = vector.shape_cast %1204 : vector<8xf32> to vector<8x1xf32>
    %1206 = vector.broadcast %1205 : vector<8x1xf32> to vector<8x8xf32>
    %1207 = arith.subf %1203, %1206 : vector<8x8xf32>
    %1208 = math.exp %1207 : vector<8x8xf32>
    %cst_349 = arith.constant dense<0.000000e+00> : vector<8xf32>
    %1209 = vector.multi_reduction <add>, %1208, %cst_349 [1] : vector<8x8xf32> to vector<8xf32>
    %1210 = vector.shape_cast %1209 : vector<8xf32> to vector<8x1xf32>
    %1211 = vector.broadcast %1210 : vector<8x1xf32> to vector<8x8xf32>
    %1212 = arith.divf %1208, %1211 : vector<8x8xf32>
    %1213 = arith.addf %1198, %1212 : vector<8x8xf32>
    %1214 = vector.extract_strided_slice %1177 {offsets = [0, 8], sizes = [8, 4], strides = [1, 1]} : vector<8x32xf32> to vector<8x4xf32>
    %1215 = vector.extract_strided_slice %1182 {offsets = [0, 8], sizes = [8, 4], strides = [1, 1]} : vector<8x32xf32> to vector<8x4xf32>
    %cst_350 = arith.constant dense<0.000000e+00> : vector<8x8xf32>
    %1216 = tpu.matmul %1214, %1215, %cst_350 {dimension_numbers = #tpu.dot_dimension_numbers<[1], [1], [0], [0], [0, 0, 1, 0], [], []>} : vector<8x4xf32>, vector<8x4xf32>, vector<8x8xf32> -> vector<8x8xf32>
    %cst_351 = arith.constant 5.000000e-01 : f32
    %1217 = vector.broadcast %cst_351 : f32 to vector<8x8xf32>
    %1218 = arith.mulf %1216, %1217 : vector<8x8xf32>
    %cst_352 = arith.constant dense<0xFF800000> : vector<8xf32>
    %1219 = vector.multi_reduction <maximumf>, %1218, %cst_352 [1] : vector<8x8xf32> to vector<8xf32>
    %1220 = vector.shape_cast %1219 : vector<8xf32> to vector<8x1xf32>
    %1221 = vector.broadcast %1220 : vector<8x1xf32> to vector<8x8xf32>
    %1222 = arith.subf %1218, %1221 : vector<8x8xf32>
    %1223 = math.exp %1222 : vector<8x8xf32>
    %cst_353 = arith.constant dense<0.000000e+00> : vector<8xf32>
    %1224 = vector.multi_reduction <add>, %1223, %cst_353 [1] : vector<8x8xf32> to vector<8xf32>
    %1225 = vector.shape_cast %1224 : vector<8xf32> to vector<8x1xf32>
    %1226 = vector.broadcast %1225 : vector<8x1xf32> to vector<8x8xf32>
    %1227 = arith.divf %1223, %1226 : vector<8x8xf32>
    %1228 = arith.addf %1213, %1227 : vector<8x8xf32>
    %1229 = vector.extract_strided_slice %1177 {offsets = [0, 12], sizes = [8, 4], strides = [1, 1]} : vector<8x32xf32> to vector<8x4xf32>
    %1230 = vector.extract_strided_slice %1182 {offsets = [0, 12], sizes = [8, 4], strides = [1, 1]} : vector<8x32xf32> to vector<8x4xf32>
    %cst_354 = arith.constant dense<0.000000e+00> : vector<8x8xf32>
    %1231 = tpu.matmul %1229, %1230, %cst_354 {dimension_numbers = #tpu.dot_dimension_numbers<[1], [1], [0], [0], [0, 0, 1, 0], [], []>} : vector<8x4xf32>, vector<8x4xf32>, vector<8x8xf32> -> vector<8x8xf32>
    %cst_355 = arith.constant 5.000000e-01 : f32
    %1232 = vector.broadcast %cst_355 : f32 to vector<8x8xf32>
    %1233 = arith.mulf %1231, %1232 : vector<8x8xf32>
    %cst_356 = arith.constant dense<0xFF800000> : vector<8xf32>
    %1234 = vector.multi_reduction <maximumf>, %1233, %cst_356 [1] : vector<8x8xf32> to vector<8xf32>
    %1235 = vector.shape_cast %1234 : vector<8xf32> to vector<8x1xf32>
    %1236 = vector.broadcast %1235 : vector<8x1xf32> to vector<8x8xf32>
    %1237 = arith.subf %1233, %1236 : vector<8x8xf32>
    %1238 = math.exp %1237 : vector<8x8xf32>
    %cst_357 = arith.constant dense<0.000000e+00> : vector<8xf32>
    %1239 = vector.multi_reduction <add>, %1238, %cst_357 [1] : vector<8x8xf32> to vector<8xf32>
    %1240 = vector.shape_cast %1239 : vector<8xf32> to vector<8x1xf32>
    %1241 = vector.broadcast %1240 : vector<8x1xf32> to vector<8x8xf32>
    %1242 = arith.divf %1238, %1241 : vector<8x8xf32>
    %1243 = arith.addf %1228, %1242 : vector<8x8xf32>
    %1244 = vector.extract_strided_slice %1177 {offsets = [0, 16], sizes = [8, 4], strides = [1, 1]} : vector<8x32xf32> to vector<8x4xf32>
    %1245 = vector.extract_strided_slice %1182 {offsets = [0, 16], sizes = [8, 4], strides = [1, 1]} : vector<8x32xf32> to vector<8x4xf32>
    %cst_358 = arith.constant dense<0.000000e+00> : vector<8x8xf32>
    %1246 = tpu.matmul %1244, %1245, %cst_358 {dimension_numbers = #tpu.dot_dimension_numbers<[1], [1], [0], [0], [0, 0, 1, 0], [], []>} : vector<8x4xf32>, vector<8x4xf32>, vector<8x8xf32> -> vector<8x8xf32>
    %cst_359 = arith.constant 5.000000e-01 : f32
    %1247 = vector.broadcast %cst_359 : f32 to vector<8x8xf32>
    %1248 = arith.mulf %1246, %1247 : vector<8x8xf32>
    %cst_360 = arith.constant dense<0xFF800000> : vector<8xf32>
    %1249 = vector.multi_reduction <maximumf>, %1248, %cst_360 [1] : vector<8x8xf32> to vector<8xf32>
    %1250 = vector.shape_cast %1249 : vector<8xf32> to vector<8x1xf32>
    %1251 = vector.broadcast %1250 : vector<8x1xf32> to vector<8x8xf32>
    %1252 = arith.subf %1248, %1251 : vector<8x8xf32>
    %1253 = math.exp %1252 : vector<8x8xf32>
    %cst_361 = arith.constant dense<0.000000e+00> : vector<8xf32>
    %1254 = vector.multi_reduction <add>, %1253, %cst_361 [1] : vector<8x8xf32> to vector<8xf32>
    %1255 = vector.shape_cast %1254 : vector<8xf32> to vector<8x1xf32>
    %1256 = vector.broadcast %1255 : vector<8x1xf32> to vector<8x8xf32>
    %1257 = arith.divf %1253, %1256 : vector<8x8xf32>
    %1258 = arith.addf %1243, %1257 : vector<8x8xf32>
    %1259 = vector.extract_strided_slice %1177 {offsets = [0, 20], sizes = [8, 4], strides = [1, 1]} : vector<8x32xf32> to vector<8x4xf32>
    %1260 = vector.extract_strided_slice %1182 {offsets = [0, 20], sizes = [8, 4], strides = [1, 1]} : vector<8x32xf32> to vector<8x4xf32>
    %cst_362 = arith.constant dense<0.000000e+00> : vector<8x8xf32>
    %1261 = tpu.matmul %1259, %1260, %cst_362 {dimension_numbers = #tpu.dot_dimension_numbers<[1], [1], [0], [0], [0, 0, 1, 0], [], []>} : vector<8x4xf32>, vector<8x4xf32>, vector<8x8xf32> -> vector<8x8xf32>
    %cst_363 = arith.constant 5.000000e-01 : f32
    %1262 = vector.broadcast %cst_363 : f32 to vector<8x8xf32>
    %1263 = arith.mulf %1261, %1262 : vector<8x8xf32>
    %cst_364 = arith.constant dense<0xFF800000> : vector<8xf32>
    %1264 = vector.multi_reduction <maximumf>, %1263, %cst_364 [1] : vector<8x8xf32> to vector<8xf32>
    %1265 = vector.shape_cast %1264 : vector<8xf32> to vector<8x1xf32>
    %1266 = vector.broadcast %1265 : vector<8x1xf32> to vector<8x8xf32>
    %1267 = arith.subf %1263, %1266 : vector<8x8xf32>
    %1268 = math.exp %1267 : vector<8x8xf32>
    %cst_365 = arith.constant dense<0.000000e+00> : vector<8xf32>
    %1269 = vector.multi_reduction <add>, %1268, %cst_365 [1] : vector<8x8xf32> to vector<8xf32>
    %1270 = vector.shape_cast %1269 : vector<8xf32> to vector<8x1xf32>
    %1271 = vector.broadcast %1270 : vector<8x1xf32> to vector<8x8xf32>
    %1272 = arith.divf %1268, %1271 : vector<8x8xf32>
    %1273 = arith.addf %1258, %1272 : vector<8x8xf32>
    %1274 = vector.extract_strided_slice %1177 {offsets = [0, 24], sizes = [8, 4], strides = [1, 1]} : vector<8x32xf32> to vector<8x4xf32>
    %1275 = vector.extract_strided_slice %1182 {offsets = [0, 24], sizes = [8, 4], strides = [1, 1]} : vector<8x32xf32> to vector<8x4xf32>
    %cst_366 = arith.constant dense<0.000000e+00> : vector<8x8xf32>
    %1276 = tpu.matmul %1274, %1275, %cst_366 {dimension_numbers = #tpu.dot_dimension_numbers<[1], [1], [0], [0], [0, 0, 1, 0], [], []>} : vector<8x4xf32>, vector<8x4xf32>, vector<8x8xf32> -> vector<8x8xf32>
    %cst_367 = arith.constant 5.000000e-01 : f32
    %1277 = vector.broadcast %cst_367 : f32 to vector<8x8xf32>
    %1278 = arith.mulf %1276, %1277 : vector<8x8xf32>
    %cst_368 = arith.constant dense<0xFF800000> : vector<8xf32>
    %1279 = vector.multi_reduction <maximumf>, %1278, %cst_368 [1] : vector<8x8xf32> to vector<8xf32>
    %1280 = vector.shape_cast %1279 : vector<8xf32> to vector<8x1xf32>
    %1281 = vector.broadcast %1280 : vector<8x1xf32> to vector<8x8xf32>
    %1282 = arith.subf %1278, %1281 : vector<8x8xf32>
    %1283 = math.exp %1282 : vector<8x8xf32>
    %cst_369 = arith.constant dense<0.000000e+00> : vector<8xf32>
    %1284 = vector.multi_reduction <add>, %1283, %cst_369 [1] : vector<8x8xf32> to vector<8xf32>
    %1285 = vector.shape_cast %1284 : vector<8xf32> to vector<8x1xf32>
    %1286 = vector.broadcast %1285 : vector<8x1xf32> to vector<8x8xf32>
    %1287 = arith.divf %1283, %1286 : vector<8x8xf32>
    %1288 = arith.addf %1273, %1287 : vector<8x8xf32>
    %1289 = vector.extract_strided_slice %1177 {offsets = [0, 28], sizes = [8, 4], strides = [1, 1]} : vector<8x32xf32> to vector<8x4xf32>
    %1290 = vector.extract_strided_slice %1182 {offsets = [0, 28], sizes = [8, 4], strides = [1, 1]} : vector<8x32xf32> to vector<8x4xf32>
    %cst_370 = arith.constant dense<0.000000e+00> : vector<8x8xf32>
    %1291 = tpu.matmul %1289, %1290, %cst_370 {dimension_numbers = #tpu.dot_dimension_numbers<[1], [1], [0], [0], [0, 0, 1, 0], [], []>} : vector<8x4xf32>, vector<8x4xf32>, vector<8x8xf32> -> vector<8x8xf32>
    %cst_371 = arith.constant 5.000000e-01 : f32
    %1292 = vector.broadcast %cst_371 : f32 to vector<8x8xf32>
    %1293 = arith.mulf %1291, %1292 : vector<8x8xf32>
    %cst_372 = arith.constant dense<0xFF800000> : vector<8xf32>
    %1294 = vector.multi_reduction <maximumf>, %1293, %cst_372 [1] : vector<8x8xf32> to vector<8xf32>
    %1295 = vector.shape_cast %1294 : vector<8xf32> to vector<8x1xf32>
    %1296 = vector.broadcast %1295 : vector<8x1xf32> to vector<8x8xf32>
    %1297 = arith.subf %1293, %1296 : vector<8x8xf32>
    %1298 = math.exp %1297 : vector<8x8xf32>
    %cst_373 = arith.constant dense<0.000000e+00> : vector<8xf32>
    %1299 = vector.multi_reduction <add>, %1298, %cst_373 [1] : vector<8x8xf32> to vector<8xf32>
    %1300 = vector.shape_cast %1299 : vector<8xf32> to vector<8x1xf32>
    %1301 = vector.broadcast %1300 : vector<8x1xf32> to vector<8x8xf32>
    %1302 = arith.divf %1298, %1301 : vector<8x8xf32>
    %1303 = arith.addf %1288, %1302 : vector<8x8xf32>
    %cst_374 = arith.constant 8.000000e+00 : f32
    %1304 = vector.broadcast %cst_374 : f32 to vector<8x8xf32>
    %1305 = arith.divf %1303, %1304 : vector<8x8xf32>
    %cst_375 = arith.constant dense<0xFF800000> : vector<8xf32>
    %1306 = vector.multi_reduction <maximumf>, %1305, %cst_375 [1] : vector<8x8xf32> to vector<8xf32>
    %1307 = vector.shape_cast %1306 : vector<8xf32> to vector<8x1xf32>
    %1308 = vector.broadcast %1307 : vector<8x1xf32> to vector<8x8xf32>
    %1309 = arith.subf %1305, %1308 : vector<8x8xf32>
    %1310 = math.exp %1309 : vector<8x8xf32>
    %cst_376 = arith.constant dense<0.000000e+00> : vector<8xf32>
    %1311 = vector.multi_reduction <add>, %1310, %cst_376 [1] : vector<8x8xf32> to vector<8xf32>
    %1312 = vector.shape_cast %1311 : vector<8xf32> to vector<8x1xf32>
    %1313 = vector.broadcast %1312 : vector<8x1xf32> to vector<8x8xf32>
    %1314 = arith.divf %1310, %1313 : vector<8x8xf32>
    %1315 = vector.extract_strided_slice %827 {offsets = [0, 64], sizes = [32, 32], strides = [1, 1]} : vector<32x128xf32> to vector<32x32xf32>
    %cst_377 = arith.constant dense<0.000000e+00> : vector<8x32xf32>
    %1316 = tpu.matmul %825, %1315, %cst_377 {dimension_numbers = #tpu.dot_dimension_numbers<[1], [0], [0], [1], [0, 0, 1, 1], [], []>} : vector<8x32xf32>, vector<32x32xf32>, vector<8x32xf32> -> vector<8x32xf32>
    %1317 = vector.extract_strided_slice %828 {offsets = [0, 64], sizes = [1, 32], strides = [1, 1]} : vector<1x128xf32> to vector<1x32xf32>
    %1318 = vector.broadcast %1317 : vector<1x32xf32> to vector<8x32xf32>
    %1319 = arith.addf %1316, %1318 : vector<8x32xf32>
    %cst_378 = arith.constant dense<0.000000e+00> : vector<8x32xf32>
    %1320 = tpu.matmul %1314, %1319, %cst_378 {dimension_numbers = #tpu.dot_dimension_numbers<[1], [0], [0], [1], [0, 0, 1, 1], [], []>} : vector<8x8xf32>, vector<8x32xf32>, vector<8x32xf32> -> vector<8x32xf32>
    %1321 = arith.addf %1170, %1320 : vector<8x32xf32>
    %cst_379 = arith.constant dense<0.000000e+00> : vector<32xf32>
    %1322 = vector.multi_reduction <add>, %1170, %cst_379 [0] : vector<8x32xf32> to vector<32xf32>
    %1323 = vector.shape_cast %1322 : vector<32xf32> to vector<1x32xf32>
    %cst_380 = arith.constant 8.000000e+00 : f32
    %1324 = vector.broadcast %cst_380 : f32 to vector<1x32xf32>
    %1325 = arith.divf %1323, %1324 : vector<1x32xf32>
    %cst_381 = arith.constant dense<0.000000e+00> : vector<32xf32>
    %1326 = vector.multi_reduction <add>, %1002, %cst_381 [0] : vector<8x32xf32> to vector<32xf32>
    %1327 = vector.shape_cast %1326 : vector<32xf32> to vector<1x32xf32>
    %cst_382 = arith.constant 8.000000e+00 : f32
    %1328 = vector.broadcast %cst_382 : f32 to vector<1x32xf32>
    %1329 = arith.divf %1327, %1328 : vector<1x32xf32>
    %1330 = vector.extract_strided_slice %827 {offsets = [0, 32], sizes = [32, 32], strides = [1, 1]} : vector<32x128xf32> to vector<32x32xf32>
    %cst_383 = arith.constant dense<0.000000e+00> : vector<8x32xf32>
    %1331 = tpu.matmul %1320, %1330, %cst_383 {dimension_numbers = #tpu.dot_dimension_numbers<[1], [0], [0], [1], [0, 0, 1, 1], [], []>} : vector<8x32xf32>, vector<32x32xf32>, vector<8x32xf32> -> vector<8x32xf32>
    %1332 = vector.extract_strided_slice %828 {offsets = [0, 32], sizes = [1, 32], strides = [1, 1]} : vector<1x128xf32> to vector<1x32xf32>
    %1333 = vector.broadcast %1332 : vector<1x32xf32> to vector<8x32xf32>
    %1334 = arith.addf %1331, %1333 : vector<8x32xf32>
    %c0_384 = arith.constant 0 : index
    %c0_385 = arith.constant 0 : index
    %1335 = vector.load %arg13[%c0_384, %c0_385] : memref<6x32xf32, #tpu.memory_space<vmem>>, vector<6x32xf32>
    %1336 = vector.extract_strided_slice %1335 {offsets = [0, 0], sizes = [1, 32], strides = [1, 1]} : vector<6x32xf32> to vector<1x32xf32>
    %1337 = vector.extract_strided_slice %1335 {offsets = [1, 0], sizes = [1, 32], strides = [1, 1]} : vector<6x32xf32> to vector<1x32xf32>
    %cst_386 = arith.constant dense<0.000000e+00> : vector<8xf32>
    %1338 = vector.multi_reduction <add>, %826, %cst_386 [1] : vector<8x32xf32> to vector<8xf32>
    %1339 = vector.shape_cast %1338 : vector<8xf32> to vector<8x1xf32>
    %cst_387 = arith.constant 3.200000e+01 : f32
    %1340 = vector.broadcast %cst_387 : f32 to vector<8x1xf32>
    %1341 = arith.divf %1339, %1340 : vector<8x1xf32>
    %1342 = vector.broadcast %1341 : vector<8x1xf32> to vector<8x32xf32>
    %1343 = arith.subf %826, %1342 : vector<8x32xf32>
    %1344 = arith.mulf %1343, %1343 : vector<8x32xf32>
    %cst_388 = arith.constant dense<0.000000e+00> : vector<8xf32>
    %1345 = vector.multi_reduction <add>, %1344, %cst_388 [1] : vector<8x32xf32> to vector<8xf32>
    %1346 = vector.shape_cast %1345 : vector<8xf32> to vector<8x1xf32>
    %cst_389 = arith.constant 3.200000e+01 : f32
    %1347 = vector.broadcast %cst_389 : f32 to vector<8x1xf32>
    %1348 = arith.divf %1346, %1347 : vector<8x1xf32>
    %1349 = vector.broadcast %1341 : vector<8x1xf32> to vector<8x32xf32>
    %1350 = arith.subf %826, %1349 : vector<8x32xf32>
    %cst_390 = arith.constant 9.99999997E-7 : f32
    %1351 = vector.broadcast %cst_390 : f32 to vector<8x1xf32>
    %1352 = arith.addf %1348, %1351 : vector<8x1xf32>
    %1353 = math.rsqrt %1352 : vector<8x1xf32>
    %1354 = vector.broadcast %1353 : vector<8x1xf32> to vector<8x32xf32>
    %1355 = arith.mulf %1350, %1354 : vector<8x32xf32>
    %1356 = vector.broadcast %1336 : vector<1x32xf32> to vector<8x32xf32>
    %1357 = arith.mulf %1355, %1356 : vector<8x32xf32>
    %1358 = vector.broadcast %1337 : vector<1x32xf32> to vector<8x32xf32>
    %1359 = arith.addf %1357, %1358 : vector<8x32xf32>
    %c0_391 = arith.constant 0 : index
    %c0_392 = arith.constant 0 : index
    %1360 = vector.load %arg15[%c0_391, %c0_392] : memref<32x128xf32, #tpu.memory_space<vmem>>, vector<32x128xf32>
    %c0_393 = arith.constant 0 : index
    %c0_394 = arith.constant 0 : index
    %1361 = vector.load %arg14[%c0_393, %c0_394] : memref<1x128xf32, #tpu.memory_space<vmem>>, vector<1x128xf32>
    %1362 = vector.extract_strided_slice %1360 {offsets = [0, 0], sizes = [32, 96], strides = [1, 1]} : vector<32x128xf32> to vector<32x96xf32>
    %cst_395 = arith.constant dense<0.000000e+00> : vector<8x96xf32>
    %1363 = tpu.matmul %1359, %1362, %cst_395 {dimension_numbers = #tpu.dot_dimension_numbers<[1], [0], [0], [1], [0, 0, 1, 1], [], []>} : vector<8x32xf32>, vector<32x96xf32>, vector<8x96xf32> -> vector<8x96xf32>
    %1364 = vector.extract_strided_slice %1361 {offsets = [0, 0], sizes = [1, 96], strides = [1, 1]} : vector<1x128xf32> to vector<1x96xf32>
    %1365 = vector.broadcast %1364 : vector<1x96xf32> to vector<8x96xf32>
    %1366 = arith.addf %1363, %1365 : vector<8x96xf32>
    %1367 = vector.extract_strided_slice %1366 {offsets = [0, 0], sizes = [8, 32], strides = [1, 1]} : vector<8x96xf32> to vector<8x32xf32>
    %1368 = vector.extract_strided_slice %1366 {offsets = [0, 32], sizes = [8, 32], strides = [1, 1]} : vector<8x96xf32> to vector<8x32xf32>
    %1369 = vector.extract_strided_slice %1366 {offsets = [0, 64], sizes = [8, 32], strides = [1, 1]} : vector<8x96xf32> to vector<8x32xf32>
    %1370 = vector.extract_strided_slice %1367 {offsets = [0, 0], sizes = [8, 8], strides = [1, 1]} : vector<8x32xf32> to vector<8x8xf32>
    %1371 = vector.extract_strided_slice %1368 {offsets = [0, 0], sizes = [8, 8], strides = [1, 1]} : vector<8x32xf32> to vector<8x8xf32>
    %cst_396 = arith.constant dense<0.000000e+00> : vector<8x8xf32>
    %1372 = tpu.matmul %1370, %1371, %cst_396 {dimension_numbers = #tpu.dot_dimension_numbers<[1], [1], [0], [0], [0, 0, 1, 0], [], []>} : vector<8x8xf32>, vector<8x8xf32>, vector<8x8xf32> -> vector<8x8xf32>
    %cst_397 = arith.constant 0.353553385 : f32
    %1373 = vector.broadcast %cst_397 : f32 to vector<8x8xf32>
    %1374 = arith.mulf %1372, %1373 : vector<8x8xf32>
    %cst_398 = arith.constant dense<0xFF800000> : vector<8xf32>
    %1375 = vector.multi_reduction <maximumf>, %1374, %cst_398 [1] : vector<8x8xf32> to vector<8xf32>
    %1376 = vector.shape_cast %1375 : vector<8xf32> to vector<8x1xf32>
    %1377 = vector.broadcast %1376 : vector<8x1xf32> to vector<8x8xf32>
    %1378 = arith.subf %1374, %1377 : vector<8x8xf32>
    %1379 = math.exp %1378 : vector<8x8xf32>
    %cst_399 = arith.constant dense<0.000000e+00> : vector<8xf32>
    %1380 = vector.multi_reduction <add>, %1379, %cst_399 [1] : vector<8x8xf32> to vector<8xf32>
    %1381 = vector.shape_cast %1380 : vector<8xf32> to vector<8x1xf32>
    %1382 = vector.broadcast %1381 : vector<8x1xf32> to vector<8x8xf32>
    %1383 = arith.divf %1379, %1382 : vector<8x8xf32>
    %1384 = vector.extract_strided_slice %1369 {offsets = [0, 0], sizes = [8, 8], strides = [1, 1]} : vector<8x32xf32> to vector<8x8xf32>
    %cst_400 = arith.constant dense<0.000000e+00> : vector<8x8xf32>
    %1385 = tpu.matmul %1383, %1384, %cst_400 {dimension_numbers = #tpu.dot_dimension_numbers<[1], [0], [0], [1], [0, 0, 1, 1], [], []>} : vector<8x8xf32>, vector<8x8xf32>, vector<8x8xf32> -> vector<8x8xf32>
    %1386 = vector.extract_strided_slice %1367 {offsets = [0, 8], sizes = [8, 8], strides = [1, 1]} : vector<8x32xf32> to vector<8x8xf32>
    %1387 = vector.extract_strided_slice %1368 {offsets = [0, 8], sizes = [8, 8], strides = [1, 1]} : vector<8x32xf32> to vector<8x8xf32>
    %cst_401 = arith.constant dense<0.000000e+00> : vector<8x8xf32>
    %1388 = tpu.matmul %1386, %1387, %cst_401 {dimension_numbers = #tpu.dot_dimension_numbers<[1], [1], [0], [0], [0, 0, 1, 0], [], []>} : vector<8x8xf32>, vector<8x8xf32>, vector<8x8xf32> -> vector<8x8xf32>
    %cst_402 = arith.constant 0.353553385 : f32
    %1389 = vector.broadcast %cst_402 : f32 to vector<8x8xf32>
    %1390 = arith.mulf %1388, %1389 : vector<8x8xf32>
    %cst_403 = arith.constant dense<0xFF800000> : vector<8xf32>
    %1391 = vector.multi_reduction <maximumf>, %1390, %cst_403 [1] : vector<8x8xf32> to vector<8xf32>
    %1392 = vector.shape_cast %1391 : vector<8xf32> to vector<8x1xf32>
    %1393 = vector.broadcast %1392 : vector<8x1xf32> to vector<8x8xf32>
    %1394 = arith.subf %1390, %1393 : vector<8x8xf32>
    %1395 = math.exp %1394 : vector<8x8xf32>
    %cst_404 = arith.constant dense<0.000000e+00> : vector<8xf32>
    %1396 = vector.multi_reduction <add>, %1395, %cst_404 [1] : vector<8x8xf32> to vector<8xf32>
    %1397 = vector.shape_cast %1396 : vector<8xf32> to vector<8x1xf32>
    %1398 = vector.broadcast %1397 : vector<8x1xf32> to vector<8x8xf32>
    %1399 = arith.divf %1395, %1398 : vector<8x8xf32>
    %1400 = vector.extract_strided_slice %1369 {offsets = [0, 8], sizes = [8, 8], strides = [1, 1]} : vector<8x32xf32> to vector<8x8xf32>
    %cst_405 = arith.constant dense<0.000000e+00> : vector<8x8xf32>
    %1401 = tpu.matmul %1399, %1400, %cst_405 {dimension_numbers = #tpu.dot_dimension_numbers<[1], [0], [0], [1], [0, 0, 1, 1], [], []>} : vector<8x8xf32>, vector<8x8xf32>, vector<8x8xf32> -> vector<8x8xf32>
    %1402 = vector.extract_strided_slice %1367 {offsets = [0, 16], sizes = [8, 8], strides = [1, 1]} : vector<8x32xf32> to vector<8x8xf32>
    %1403 = vector.extract_strided_slice %1368 {offsets = [0, 16], sizes = [8, 8], strides = [1, 1]} : vector<8x32xf32> to vector<8x8xf32>
    %cst_406 = arith.constant dense<0.000000e+00> : vector<8x8xf32>
    %1404 = tpu.matmul %1402, %1403, %cst_406 {dimension_numbers = #tpu.dot_dimension_numbers<[1], [1], [0], [0], [0, 0, 1, 0], [], []>} : vector<8x8xf32>, vector<8x8xf32>, vector<8x8xf32> -> vector<8x8xf32>
    %cst_407 = arith.constant 0.353553385 : f32
    %1405 = vector.broadcast %cst_407 : f32 to vector<8x8xf32>
    %1406 = arith.mulf %1404, %1405 : vector<8x8xf32>
    %cst_408 = arith.constant dense<0xFF800000> : vector<8xf32>
    %1407 = vector.multi_reduction <maximumf>, %1406, %cst_408 [1] : vector<8x8xf32> to vector<8xf32>
    %1408 = vector.shape_cast %1407 : vector<8xf32> to vector<8x1xf32>
    %1409 = vector.broadcast %1408 : vector<8x1xf32> to vector<8x8xf32>
    %1410 = arith.subf %1406, %1409 : vector<8x8xf32>
    %1411 = math.exp %1410 : vector<8x8xf32>
    %cst_409 = arith.constant dense<0.000000e+00> : vector<8xf32>
    %1412 = vector.multi_reduction <add>, %1411, %cst_409 [1] : vector<8x8xf32> to vector<8xf32>
    %1413 = vector.shape_cast %1412 : vector<8xf32> to vector<8x1xf32>
    %1414 = vector.broadcast %1413 : vector<8x1xf32> to vector<8x8xf32>
    %1415 = arith.divf %1411, %1414 : vector<8x8xf32>
    %1416 = vector.extract_strided_slice %1369 {offsets = [0, 16], sizes = [8, 8], strides = [1, 1]} : vector<8x32xf32> to vector<8x8xf32>
    %cst_410 = arith.constant dense<0.000000e+00> : vector<8x8xf32>
    %1417 = tpu.matmul %1415, %1416, %cst_410 {dimension_numbers = #tpu.dot_dimension_numbers<[1], [0], [0], [1], [0, 0, 1, 1], [], []>} : vector<8x8xf32>, vector<8x8xf32>, vector<8x8xf32> -> vector<8x8xf32>
    %1418 = vector.extract_strided_slice %1367 {offsets = [0, 24], sizes = [8, 8], strides = [1, 1]} : vector<8x32xf32> to vector<8x8xf32>
    %1419 = vector.extract_strided_slice %1368 {offsets = [0, 24], sizes = [8, 8], strides = [1, 1]} : vector<8x32xf32> to vector<8x8xf32>
    %cst_411 = arith.constant dense<0.000000e+00> : vector<8x8xf32>
    %1420 = tpu.matmul %1418, %1419, %cst_411 {dimension_numbers = #tpu.dot_dimension_numbers<[1], [1], [0], [0], [0, 0, 1, 0], [], []>} : vector<8x8xf32>, vector<8x8xf32>, vector<8x8xf32> -> vector<8x8xf32>
    %cst_412 = arith.constant 0.353553385 : f32
    %1421 = vector.broadcast %cst_412 : f32 to vector<8x8xf32>
    %1422 = arith.mulf %1420, %1421 : vector<8x8xf32>
    %cst_413 = arith.constant dense<0xFF800000> : vector<8xf32>
    %1423 = vector.multi_reduction <maximumf>, %1422, %cst_413 [1] : vector<8x8xf32> to vector<8xf32>
    %1424 = vector.shape_cast %1423 : vector<8xf32> to vector<8x1xf32>
    %1425 = vector.broadcast %1424 : vector<8x1xf32> to vector<8x8xf32>
    %1426 = arith.subf %1422, %1425 : vector<8x8xf32>
    %1427 = math.exp %1426 : vector<8x8xf32>
    %cst_414 = arith.constant dense<0.000000e+00> : vector<8xf32>
    %1428 = vector.multi_reduction <add>, %1427, %cst_414 [1] : vector<8x8xf32> to vector<8xf32>
    %1429 = vector.shape_cast %1428 : vector<8xf32> to vector<8x1xf32>
    %1430 = vector.broadcast %1429 : vector<8x1xf32> to vector<8x8xf32>
    %1431 = arith.divf %1427, %1430 : vector<8x8xf32>
    %1432 = vector.extract_strided_slice %1369 {offsets = [0, 24], sizes = [8, 8], strides = [1, 1]} : vector<8x32xf32> to vector<8x8xf32>
    %cst_415 = arith.constant dense<0.000000e+00> : vector<8x8xf32>
    %1433 = tpu.matmul %1431, %1432, %cst_415 {dimension_numbers = #tpu.dot_dimension_numbers<[1], [0], [0], [1], [0, 0, 1, 1], [], []>} : vector<8x8xf32>, vector<8x8xf32>, vector<8x8xf32> -> vector<8x8xf32>
    %1434 = tpu.concatenate %1385, %1401, %1417, %1433 in 1 : vector<8x8xf32>, vector<8x8xf32>, vector<8x8xf32>, vector<8x8xf32> -> vector<8x32xf32>
    %1435 = vector.extract_strided_slice %1360 {offsets = [0, 96], sizes = [32, 32], strides = [1, 1]} : vector<32x128xf32> to vector<32x32xf32>
    %cst_416 = arith.constant dense<0.000000e+00> : vector<8x32xf32>
    %1436 = tpu.matmul %1434, %1435, %cst_416 {dimension_numbers = #tpu.dot_dimension_numbers<[1], [0], [0], [1], [0, 0, 1, 1], [], []>} : vector<8x32xf32>, vector<32x32xf32>, vector<8x32xf32> -> vector<8x32xf32>
    %1437 = vector.extract_strided_slice %1361 {offsets = [0, 96], sizes = [1, 32], strides = [1, 1]} : vector<1x128xf32> to vector<1x32xf32>
    %1438 = vector.broadcast %1437 : vector<1x32xf32> to vector<8x32xf32>
    %1439 = arith.addf %1436, %1438 : vector<8x32xf32>
    %1440 = arith.addf %826, %1439 : vector<8x32xf32>
    %1441 = vector.extract_strided_slice %1335 {offsets = [2, 0], sizes = [1, 32], strides = [1, 1]} : vector<6x32xf32> to vector<1x32xf32>
    %1442 = vector.extract_strided_slice %1335 {offsets = [3, 0], sizes = [1, 32], strides = [1, 1]} : vector<6x32xf32> to vector<1x32xf32>
    %cst_417 = arith.constant dense<0.000000e+00> : vector<8xf32>
    %1443 = vector.multi_reduction <add>, %1440, %cst_417 [1] : vector<8x32xf32> to vector<8xf32>
    %1444 = vector.shape_cast %1443 : vector<8xf32> to vector<8x1xf32>
    %cst_418 = arith.constant 3.200000e+01 : f32
    %1445 = vector.broadcast %cst_418 : f32 to vector<8x1xf32>
    %1446 = arith.divf %1444, %1445 : vector<8x1xf32>
    %1447 = vector.broadcast %1446 : vector<8x1xf32> to vector<8x32xf32>
    %1448 = arith.subf %1440, %1447 : vector<8x32xf32>
    %1449 = arith.mulf %1448, %1448 : vector<8x32xf32>
    %cst_419 = arith.constant dense<0.000000e+00> : vector<8xf32>
    %1450 = vector.multi_reduction <add>, %1449, %cst_419 [1] : vector<8x32xf32> to vector<8xf32>
    %1451 = vector.shape_cast %1450 : vector<8xf32> to vector<8x1xf32>
    %cst_420 = arith.constant 3.200000e+01 : f32
    %1452 = vector.broadcast %cst_420 : f32 to vector<8x1xf32>
    %1453 = arith.divf %1451, %1452 : vector<8x1xf32>
    %1454 = vector.broadcast %1446 : vector<8x1xf32> to vector<8x32xf32>
    %1455 = arith.subf %1440, %1454 : vector<8x32xf32>
    %cst_421 = arith.constant 9.99999997E-7 : f32
    %1456 = vector.broadcast %cst_421 : f32 to vector<8x1xf32>
    %1457 = arith.addf %1453, %1456 : vector<8x1xf32>
    %1458 = math.rsqrt %1457 : vector<8x1xf32>
    %1459 = vector.broadcast %1458 : vector<8x1xf32> to vector<8x32xf32>
    %1460 = arith.mulf %1455, %1459 : vector<8x32xf32>
    %1461 = vector.broadcast %1441 : vector<1x32xf32> to vector<8x32xf32>
    %1462 = arith.mulf %1460, %1461 : vector<8x32xf32>
    %1463 = vector.broadcast %1442 : vector<1x32xf32> to vector<8x32xf32>
    %1464 = arith.addf %1462, %1463 : vector<8x32xf32>
    %c0_422 = arith.constant 0 : index
    %c0_423 = arith.constant 0 : index
    %1465 = vector.load %arg17[%c0_422, %c0_423] : memref<32x128xf32, #tpu.memory_space<vmem>>, vector<32x128xf32>
    %c0_424 = arith.constant 0 : index
    %c0_425 = arith.constant 0 : index
    %1466 = vector.load %arg16[%c0_424, %c0_425] : memref<1x128xf32, #tpu.memory_space<vmem>>, vector<1x128xf32>
    %1467 = vector.extract_strided_slice %1465 {offsets = [0, 0], sizes = [32, 32], strides = [1, 1]} : vector<32x128xf32> to vector<32x32xf32>
    %cst_426 = arith.constant dense<0.000000e+00> : vector<8x32xf32>
    %1468 = tpu.matmul %1464, %1467, %cst_426 {dimension_numbers = #tpu.dot_dimension_numbers<[1], [0], [0], [1], [0, 0, 1, 1], [], []>} : vector<8x32xf32>, vector<32x32xf32>, vector<8x32xf32> -> vector<8x32xf32>
    %1469 = vector.extract_strided_slice %1466 {offsets = [0, 0], sizes = [1, 32], strides = [1, 1]} : vector<1x128xf32> to vector<1x32xf32>
    %1470 = vector.broadcast %1469 : vector<1x32xf32> to vector<8x32xf32>
    %1471 = arith.addf %1468, %1470 : vector<8x32xf32>
    %1472 = vector.extract_strided_slice %1465 {offsets = [0, 32], sizes = [32, 64], strides = [1, 1]} : vector<32x128xf32> to vector<32x64xf32>
    %cst_427 = arith.constant dense<0.000000e+00> : vector<8x64xf32>
    %1473 = tpu.matmul %1321, %1472, %cst_427 {dimension_numbers = #tpu.dot_dimension_numbers<[1], [0], [0], [1], [0, 0, 1, 1], [], []>} : vector<8x32xf32>, vector<32x64xf32>, vector<8x64xf32> -> vector<8x64xf32>
    %1474 = vector.extract_strided_slice %1466 {offsets = [0, 32], sizes = [1, 64], strides = [1, 1]} : vector<1x128xf32> to vector<1x64xf32>
    %1475 = vector.broadcast %1474 : vector<1x64xf32> to vector<8x64xf32>
    %1476 = arith.addf %1473, %1475 : vector<8x64xf32>
    %1477 = vector.extract_strided_slice %1476 {offsets = [0, 0], sizes = [8, 32], strides = [1, 1]} : vector<8x64xf32> to vector<8x32xf32>
    %1478 = vector.extract_strided_slice %1476 {offsets = [0, 32], sizes = [8, 32], strides = [1, 1]} : vector<8x64xf32> to vector<8x32xf32>
    %1479 = vector.extract_strided_slice %1471 {offsets = [0, 0], sizes = [8, 8], strides = [1, 1]} : vector<8x32xf32> to vector<8x8xf32>
    %1480 = vector.extract_strided_slice %1477 {offsets = [0, 0], sizes = [8, 8], strides = [1, 1]} : vector<8x32xf32> to vector<8x8xf32>
    %cst_428 = arith.constant dense<0.000000e+00> : vector<8x8xf32>
    %1481 = tpu.matmul %1479, %1480, %cst_428 {dimension_numbers = #tpu.dot_dimension_numbers<[1], [1], [0], [0], [0, 0, 1, 0], [], []>} : vector<8x8xf32>, vector<8x8xf32>, vector<8x8xf32> -> vector<8x8xf32>
    %cst_429 = arith.constant 0.353553385 : f32
    %1482 = vector.broadcast %cst_429 : f32 to vector<8x8xf32>
    %1483 = arith.mulf %1481, %1482 : vector<8x8xf32>
    %cst_430 = arith.constant dense<0xFF800000> : vector<8xf32>
    %1484 = vector.multi_reduction <maximumf>, %1483, %cst_430 [1] : vector<8x8xf32> to vector<8xf32>
    %1485 = vector.shape_cast %1484 : vector<8xf32> to vector<8x1xf32>
    %1486 = vector.broadcast %1485 : vector<8x1xf32> to vector<8x8xf32>
    %1487 = arith.subf %1483, %1486 : vector<8x8xf32>
    %1488 = math.exp %1487 : vector<8x8xf32>
    %cst_431 = arith.constant dense<0.000000e+00> : vector<8xf32>
    %1489 = vector.multi_reduction <add>, %1488, %cst_431 [1] : vector<8x8xf32> to vector<8xf32>
    %1490 = vector.shape_cast %1489 : vector<8xf32> to vector<8x1xf32>
    %1491 = vector.broadcast %1490 : vector<8x1xf32> to vector<8x8xf32>
    %1492 = arith.divf %1488, %1491 : vector<8x8xf32>
    %1493 = vector.extract_strided_slice %1478 {offsets = [0, 0], sizes = [8, 8], strides = [1, 1]} : vector<8x32xf32> to vector<8x8xf32>
    %cst_432 = arith.constant dense<0.000000e+00> : vector<8x8xf32>
    %1494 = tpu.matmul %1492, %1493, %cst_432 {dimension_numbers = #tpu.dot_dimension_numbers<[1], [0], [0], [1], [0, 0, 1, 1], [], []>} : vector<8x8xf32>, vector<8x8xf32>, vector<8x8xf32> -> vector<8x8xf32>
    %1495 = vector.extract_strided_slice %1471 {offsets = [0, 8], sizes = [8, 8], strides = [1, 1]} : vector<8x32xf32> to vector<8x8xf32>
    %1496 = vector.extract_strided_slice %1477 {offsets = [0, 8], sizes = [8, 8], strides = [1, 1]} : vector<8x32xf32> to vector<8x8xf32>
    %cst_433 = arith.constant dense<0.000000e+00> : vector<8x8xf32>
    %1497 = tpu.matmul %1495, %1496, %cst_433 {dimension_numbers = #tpu.dot_dimension_numbers<[1], [1], [0], [0], [0, 0, 1, 0], [], []>} : vector<8x8xf32>, vector<8x8xf32>, vector<8x8xf32> -> vector<8x8xf32>
    %cst_434 = arith.constant 0.353553385 : f32
    %1498 = vector.broadcast %cst_434 : f32 to vector<8x8xf32>
    %1499 = arith.mulf %1497, %1498 : vector<8x8xf32>
    %cst_435 = arith.constant dense<0xFF800000> : vector<8xf32>
    %1500 = vector.multi_reduction <maximumf>, %1499, %cst_435 [1] : vector<8x8xf32> to vector<8xf32>
    %1501 = vector.shape_cast %1500 : vector<8xf32> to vector<8x1xf32>
    %1502 = vector.broadcast %1501 : vector<8x1xf32> to vector<8x8xf32>
    %1503 = arith.subf %1499, %1502 : vector<8x8xf32>
    %1504 = math.exp %1503 : vector<8x8xf32>
    %cst_436 = arith.constant dense<0.000000e+00> : vector<8xf32>
    %1505 = vector.multi_reduction <add>, %1504, %cst_436 [1] : vector<8x8xf32> to vector<8xf32>
    %1506 = vector.shape_cast %1505 : vector<8xf32> to vector<8x1xf32>
    %1507 = vector.broadcast %1506 : vector<8x1xf32> to vector<8x8xf32>
    %1508 = arith.divf %1504, %1507 : vector<8x8xf32>
    %1509 = vector.extract_strided_slice %1478 {offsets = [0, 8], sizes = [8, 8], strides = [1, 1]} : vector<8x32xf32> to vector<8x8xf32>
    %cst_437 = arith.constant dense<0.000000e+00> : vector<8x8xf32>
    %1510 = tpu.matmul %1508, %1509, %cst_437 {dimension_numbers = #tpu.dot_dimension_numbers<[1], [0], [0], [1], [0, 0, 1, 1], [], []>} : vector<8x8xf32>, vector<8x8xf32>, vector<8x8xf32> -> vector<8x8xf32>
    %1511 = vector.extract_strided_slice %1471 {offsets = [0, 16], sizes = [8, 8], strides = [1, 1]} : vector<8x32xf32> to vector<8x8xf32>
    %1512 = vector.extract_strided_slice %1477 {offsets = [0, 16], sizes = [8, 8], strides = [1, 1]} : vector<8x32xf32> to vector<8x8xf32>
    %cst_438 = arith.constant dense<0.000000e+00> : vector<8x8xf32>
    %1513 = tpu.matmul %1511, %1512, %cst_438 {dimension_numbers = #tpu.dot_dimension_numbers<[1], [1], [0], [0], [0, 0, 1, 0], [], []>} : vector<8x8xf32>, vector<8x8xf32>, vector<8x8xf32> -> vector<8x8xf32>
    %cst_439 = arith.constant 0.353553385 : f32
    %1514 = vector.broadcast %cst_439 : f32 to vector<8x8xf32>
    %1515 = arith.mulf %1513, %1514 : vector<8x8xf32>
    %cst_440 = arith.constant dense<0xFF800000> : vector<8xf32>
    %1516 = vector.multi_reduction <maximumf>, %1515, %cst_440 [1] : vector<8x8xf32> to vector<8xf32>
    %1517 = vector.shape_cast %1516 : vector<8xf32> to vector<8x1xf32>
    %1518 = vector.broadcast %1517 : vector<8x1xf32> to vector<8x8xf32>
    %1519 = arith.subf %1515, %1518 : vector<8x8xf32>
    %1520 = math.exp %1519 : vector<8x8xf32>
    %cst_441 = arith.constant dense<0.000000e+00> : vector<8xf32>
    %1521 = vector.multi_reduction <add>, %1520, %cst_441 [1] : vector<8x8xf32> to vector<8xf32>
    %1522 = vector.shape_cast %1521 : vector<8xf32> to vector<8x1xf32>
    %1523 = vector.broadcast %1522 : vector<8x1xf32> to vector<8x8xf32>
    %1524 = arith.divf %1520, %1523 : vector<8x8xf32>
    %1525 = vector.extract_strided_slice %1478 {offsets = [0, 16], sizes = [8, 8], strides = [1, 1]} : vector<8x32xf32> to vector<8x8xf32>
    %cst_442 = arith.constant dense<0.000000e+00> : vector<8x8xf32>
    %1526 = tpu.matmul %1524, %1525, %cst_442 {dimension_numbers = #tpu.dot_dimension_numbers<[1], [0], [0], [1], [0, 0, 1, 1], [], []>} : vector<8x8xf32>, vector<8x8xf32>, vector<8x8xf32> -> vector<8x8xf32>
    %1527 = vector.extract_strided_slice %1471 {offsets = [0, 24], sizes = [8, 8], strides = [1, 1]} : vector<8x32xf32> to vector<8x8xf32>
    %1528 = vector.extract_strided_slice %1477 {offsets = [0, 24], sizes = [8, 8], strides = [1, 1]} : vector<8x32xf32> to vector<8x8xf32>
    %cst_443 = arith.constant dense<0.000000e+00> : vector<8x8xf32>
    %1529 = tpu.matmul %1527, %1528, %cst_443 {dimension_numbers = #tpu.dot_dimension_numbers<[1], [1], [0], [0], [0, 0, 1, 0], [], []>} : vector<8x8xf32>, vector<8x8xf32>, vector<8x8xf32> -> vector<8x8xf32>
    %cst_444 = arith.constant 0.353553385 : f32
    %1530 = vector.broadcast %cst_444 : f32 to vector<8x8xf32>
    %1531 = arith.mulf %1529, %1530 : vector<8x8xf32>
    %cst_445 = arith.constant dense<0xFF800000> : vector<8xf32>
    %1532 = vector.multi_reduction <maximumf>, %1531, %cst_445 [1] : vector<8x8xf32> to vector<8xf32>
    %1533 = vector.shape_cast %1532 : vector<8xf32> to vector<8x1xf32>
    %1534 = vector.broadcast %1533 : vector<8x1xf32> to vector<8x8xf32>
    %1535 = arith.subf %1531, %1534 : vector<8x8xf32>
    %1536 = math.exp %1535 : vector<8x8xf32>
    %cst_446 = arith.constant dense<0.000000e+00> : vector<8xf32>
    %1537 = vector.multi_reduction <add>, %1536, %cst_446 [1] : vector<8x8xf32> to vector<8xf32>
    %1538 = vector.shape_cast %1537 : vector<8xf32> to vector<8x1xf32>
    %1539 = vector.broadcast %1538 : vector<8x1xf32> to vector<8x8xf32>
    %1540 = arith.divf %1536, %1539 : vector<8x8xf32>
    %1541 = vector.extract_strided_slice %1478 {offsets = [0, 24], sizes = [8, 8], strides = [1, 1]} : vector<8x32xf32> to vector<8x8xf32>
    %cst_447 = arith.constant dense<0.000000e+00> : vector<8x8xf32>
    %1542 = tpu.matmul %1540, %1541, %cst_447 {dimension_numbers = #tpu.dot_dimension_numbers<[1], [0], [0], [1], [0, 0, 1, 1], [], []>} : vector<8x8xf32>, vector<8x8xf32>, vector<8x8xf32> -> vector<8x8xf32>
    %1543 = tpu.concatenate %1494, %1510, %1526, %1542 in 1 : vector<8x8xf32>, vector<8x8xf32>, vector<8x8xf32>, vector<8x8xf32> -> vector<8x32xf32>
    %1544 = vector.extract_strided_slice %1465 {offsets = [0, 96], sizes = [32, 32], strides = [1, 1]} : vector<32x128xf32> to vector<32x32xf32>
    %cst_448 = arith.constant dense<0.000000e+00> : vector<8x32xf32>
    %1545 = tpu.matmul %1543, %1544, %cst_448 {dimension_numbers = #tpu.dot_dimension_numbers<[1], [0], [0], [1], [0, 0, 1, 1], [], []>} : vector<8x32xf32>, vector<32x32xf32>, vector<8x32xf32> -> vector<8x32xf32>
    %1546 = vector.extract_strided_slice %1466 {offsets = [0, 96], sizes = [1, 32], strides = [1, 1]} : vector<1x128xf32> to vector<1x32xf32>
    %1547 = vector.broadcast %1546 : vector<1x32xf32> to vector<8x32xf32>
    %1548 = arith.addf %1545, %1547 : vector<8x32xf32>
    %1549 = arith.addf %1440, %1548 : vector<8x32xf32>
    %1550 = vector.extract_strided_slice %1335 {offsets = [4, 0], sizes = [1, 32], strides = [1, 1]} : vector<6x32xf32> to vector<1x32xf32>
    %1551 = vector.extract_strided_slice %1335 {offsets = [5, 0], sizes = [1, 32], strides = [1, 1]} : vector<6x32xf32> to vector<1x32xf32>
    %cst_449 = arith.constant dense<0.000000e+00> : vector<8xf32>
    %1552 = vector.multi_reduction <add>, %1549, %cst_449 [1] : vector<8x32xf32> to vector<8xf32>
    %1553 = vector.shape_cast %1552 : vector<8xf32> to vector<8x1xf32>
    %cst_450 = arith.constant 3.200000e+01 : f32
    %1554 = vector.broadcast %cst_450 : f32 to vector<8x1xf32>
    %1555 = arith.divf %1553, %1554 : vector<8x1xf32>
    %1556 = vector.broadcast %1555 : vector<8x1xf32> to vector<8x32xf32>
    %1557 = arith.subf %1549, %1556 : vector<8x32xf32>
    %1558 = arith.mulf %1557, %1557 : vector<8x32xf32>
    %cst_451 = arith.constant dense<0.000000e+00> : vector<8xf32>
    %1559 = vector.multi_reduction <add>, %1558, %cst_451 [1] : vector<8x32xf32> to vector<8xf32>
    %1560 = vector.shape_cast %1559 : vector<8xf32> to vector<8x1xf32>
    %cst_452 = arith.constant 3.200000e+01 : f32
    %1561 = vector.broadcast %cst_452 : f32 to vector<8x1xf32>
    %1562 = arith.divf %1560, %1561 : vector<8x1xf32>
    %1563 = vector.broadcast %1555 : vector<8x1xf32> to vector<8x32xf32>
    %1564 = arith.subf %1549, %1563 : vector<8x32xf32>
    %cst_453 = arith.constant 9.99999997E-7 : f32
    %1565 = vector.broadcast %cst_453 : f32 to vector<8x1xf32>
    %1566 = arith.addf %1562, %1565 : vector<8x1xf32>
    %1567 = math.rsqrt %1566 : vector<8x1xf32>
    %1568 = vector.broadcast %1567 : vector<8x1xf32> to vector<8x32xf32>
    %1569 = arith.mulf %1564, %1568 : vector<8x32xf32>
    %1570 = vector.broadcast %1550 : vector<1x32xf32> to vector<8x32xf32>
    %1571 = arith.mulf %1569, %1570 : vector<8x32xf32>
    %1572 = vector.broadcast %1551 : vector<1x32xf32> to vector<8x32xf32>
    %1573 = arith.addf %1571, %1572 : vector<8x32xf32>
    %c0_454 = arith.constant 0 : index
    %c0_455 = arith.constant 0 : index
    %1574 = vector.load %arg11[%c0_454, %c0_455] : memref<32x512xf32, #tpu.memory_space<vmem>>, vector<32x512xf32>
    %cst_456 = arith.constant dense<0.000000e+00> : vector<8x512xf32>
    %1575 = tpu.matmul %1573, %1574, %cst_456 {dimension_numbers = #tpu.dot_dimension_numbers<[1], [0], [0], [1], [0, 0, 1, 1], [], []>} : vector<8x32xf32>, vector<32x512xf32>, vector<8x512xf32> -> vector<8x512xf32>
    %c0_457 = arith.constant 0 : index
    %c0_458 = arith.constant 0 : index
    %1576 = vector.load %arg9[%c0_457, %c0_458] : memref<1x512xf32, #tpu.memory_space<vmem>>, vector<1x512xf32>
    %1577 = vector.broadcast %1576 : vector<1x512xf32> to vector<8x512xf32>
    %1578 = arith.addf %1575, %1577 : vector<8x512xf32>
    %cst_459 = arith.constant 0.000000e+00 : f32
    %1579 = vector.broadcast %cst_459 : f32 to vector<8x512xf32>
    %1580 = arith.maximumf %1578, %1579 : vector<8x512xf32>
    %c0_460 = arith.constant 0 : index
    %c0_461 = arith.constant 0 : index
    %1581 = vector.load %arg12[%c0_460, %c0_461] : memref<512x32xf32, #tpu.memory_space<vmem>>, vector<512x32xf32>
    %cst_462 = arith.constant dense<0.000000e+00> : vector<8x32xf32>
    %1582 = tpu.matmul %1580, %1581, %cst_462 {dimension_numbers = #tpu.dot_dimension_numbers<[1], [0], [0], [1], [0, 0, 1, 1], [], []>} : vector<8x512xf32>, vector<512x32xf32>, vector<8x32xf32> -> vector<8x32xf32>
    %c0_463 = arith.constant 0 : index
    %c0_464 = arith.constant 0 : index
    %1583 = vector.load %arg10[%c0_463, %c0_464] : memref<1x32xf32, #tpu.memory_space<vmem>>, vector<1x32xf32>
    %1584 = vector.broadcast %1583 : vector<1x32xf32> to vector<8x32xf32>
    %1585 = arith.addf %1582, %1584 : vector<8x32xf32>
    %1586 = arith.addf %1549, %1585 : vector<8x32xf32>
    %c0_465 = arith.constant 0 : index
    %c0_466 = arith.constant 0 : index
    %1587 = vector.load %arg18[%c0_465, %c0_466] : memref<2x32xf32, #tpu.memory_space<vmem>>, vector<2x32xf32>
    %1588 = vector.extract_strided_slice %1587 {offsets = [0, 0], sizes = [1, 32], strides = [1, 1]} : vector<2x32xf32> to vector<1x32xf32>
    %1589 = vector.extract_strided_slice %1587 {offsets = [1, 0], sizes = [1, 32], strides = [1, 1]} : vector<2x32xf32> to vector<1x32xf32>
    %cst_467 = arith.constant dense<0.000000e+00> : vector<8xf32>
    %1590 = vector.multi_reduction <add>, %1586, %cst_467 [1] : vector<8x32xf32> to vector<8xf32>
    %1591 = vector.shape_cast %1590 : vector<8xf32> to vector<8x1xf32>
    %cst_468 = arith.constant 3.200000e+01 : f32
    %1592 = vector.broadcast %cst_468 : f32 to vector<8x1xf32>
    %1593 = arith.divf %1591, %1592 : vector<8x1xf32>
    %1594 = vector.broadcast %1593 : vector<8x1xf32> to vector<8x32xf32>
    %1595 = arith.subf %1586, %1594 : vector<8x32xf32>
    %1596 = arith.mulf %1595, %1595 : vector<8x32xf32>
    %cst_469 = arith.constant dense<0.000000e+00> : vector<8xf32>
    %1597 = vector.multi_reduction <add>, %1596, %cst_469 [1] : vector<8x32xf32> to vector<8xf32>
    %1598 = vector.shape_cast %1597 : vector<8xf32> to vector<8x1xf32>
    %cst_470 = arith.constant 3.200000e+01 : f32
    %1599 = vector.broadcast %cst_470 : f32 to vector<8x1xf32>
    %1600 = arith.divf %1598, %1599 : vector<8x1xf32>
    %1601 = vector.broadcast %1593 : vector<8x1xf32> to vector<8x32xf32>
    %1602 = arith.subf %1586, %1601 : vector<8x32xf32>
    %cst_471 = arith.constant 9.99999997E-7 : f32
    %1603 = vector.broadcast %cst_471 : f32 to vector<8x1xf32>
    %1604 = arith.addf %1600, %1603 : vector<8x1xf32>
    %1605 = math.rsqrt %1604 : vector<8x1xf32>
    %1606 = vector.broadcast %1605 : vector<8x1xf32> to vector<8x32xf32>
    %1607 = arith.mulf %1602, %1606 : vector<8x32xf32>
    %1608 = vector.broadcast %1588 : vector<1x32xf32> to vector<8x32xf32>
    %1609 = arith.mulf %1607, %1608 : vector<8x32xf32>
    %1610 = vector.broadcast %1589 : vector<1x32xf32> to vector<8x32xf32>
    %1611 = arith.addf %1609, %1610 : vector<8x32xf32>
    %1612 = vector.extract_strided_slice %827 {offsets = [0, 0], sizes = [32, 32], strides = [1, 1]} : vector<32x128xf32> to vector<32x32xf32>
    %cst_472 = arith.constant dense<0.000000e+00> : vector<8x32xf32>
    %1613 = tpu.matmul %1611, %1612, %cst_472 {dimension_numbers = #tpu.dot_dimension_numbers<[1], [0], [0], [1], [0, 0, 1, 1], [], []>} : vector<8x32xf32>, vector<32x32xf32>, vector<8x32xf32> -> vector<8x32xf32>
    %1614 = vector.extract_strided_slice %828 {offsets = [0, 0], sizes = [1, 32], strides = [1, 1]} : vector<1x128xf32> to vector<1x32xf32>
    %1615 = vector.broadcast %1614 : vector<1x32xf32> to vector<8x32xf32>
    %1616 = arith.addf %1613, %1615 : vector<8x32xf32>
    %c0_473 = arith.constant 0 : index
    %c0_474 = arith.constant 0 : index
    %1617 = vector.load %arg38[%c0_473, %c0_474] : memref<1x32xf32, #tpu.memory_space<vmem>>, vector<1x32xf32>
    %c0_475 = arith.constant 0 : index
    %c0_476 = arith.constant 0 : index
    %1618 = vector.load %arg37[%c0_475, %c0_476] : memref<1x1xf32, #tpu.memory_space<vmem>>, vector<1x1xf32>
    %1619 = vector.shape_cast %1616 : vector<8x32xf32> to vector<8x1x32xf32>
    %1620 = vector.shape_cast %1334 : vector<8x32xf32> to vector<1x8x32xf32>
    %1621 = vector.broadcast %1619 : vector<8x1x32xf32> to vector<8x8x32xf32>
    %1622 = vector.broadcast %1620 : vector<1x8x32xf32> to vector<8x8x32xf32>
    %1623 = arith.addf %1621, %1622 : vector<8x8x32xf32>
    %cst_477 = arith.constant 0.000000e+00 : f32
    %1624 = vector.broadcast %cst_477 : f32 to vector<8x8x32xf32>
    %1625 = arith.maximumf %1623, %1624 : vector<8x8x32xf32>
    %1626 = vector.shape_cast %1617 : vector<1x32xf32> to vector<1x1x32xf32>
    %1627 = vector.broadcast %1626 : vector<1x1x32xf32> to vector<8x8x32xf32>
    %1628 = arith.mulf %1625, %1627 : vector<8x8x32xf32>
    %cst_478 = arith.constant dense<0.000000e+00> : vector<8x8xf32>
    %1629 = vector.multi_reduction <add>, %1628, %cst_478 [2] : vector<8x8x32xf32> to vector<8x8xf32>
    %1630 = vector.broadcast %1618 : vector<1x1xf32> to vector<8x8xf32>
    %1631 = arith.addf %1629, %1630 : vector<8x8xf32>
    %c0_479 = arith.constant 0 : index
    %c0_480 = arith.constant 0 : index
    %c0_481 = arith.constant 0 : index
    %1632 = vector.load %arg6[%c0_479, %c0_480, %c0_481] : memref<4x8x8xf32, #tpu.memory_space<vmem>>, vector<1x8x8xf32>
    %1633 = vector.shape_cast %1632 : vector<1x8x8xf32> to vector<8x8xf32>
    %c1 = arith.constant 1 : index
    %c0_482 = arith.constant 0 : index
    %c0_483 = arith.constant 0 : index
    %1634 = vector.load %arg6[%c1, %c0_482, %c0_483] : memref<4x8x8xf32, #tpu.memory_space<vmem>>, vector<1x8x8xf32>
    %1635 = vector.shape_cast %1634 : vector<1x8x8xf32> to vector<8x8xf32>
    %c2 = arith.constant 2 : index
    %c0_484 = arith.constant 0 : index
    %c0_485 = arith.constant 0 : index
    %1636 = vector.load %arg6[%c2, %c0_484, %c0_485] : memref<4x8x8xf32, #tpu.memory_space<vmem>>, vector<1x8x8xf32>
    %1637 = vector.shape_cast %1636 : vector<1x8x8xf32> to vector<8x8xf32>
    %c3 = arith.constant 3 : index
    %c0_486 = arith.constant 0 : index
    %c0_487 = arith.constant 0 : index
    %1638 = vector.load %arg6[%c3, %c0_486, %c0_487] : memref<4x8x8xf32, #tpu.memory_space<vmem>>, vector<1x8x8xf32>
    %1639 = vector.shape_cast %1638 : vector<1x8x8xf32> to vector<8x8xf32>
    %cst_488 = arith.constant 0.000000e+00 : f32
    %1640 = vector.broadcast %cst_488 : f32 to vector<8x8xf32>
    %1641 = arith.cmpf ogt, %1635, %1640 : vector<8x8xf32>
    %cst_489 = arith.constant -1.000000e+09 : f32
    %1642 = vector.broadcast %cst_489 : f32 to vector<8x8xf32>
    %1643 = arith.select %1641, %1631, %1642 : vector<8x8xi1>, vector<8x8xf32>
    %cst_490 = arith.constant dense<0xFF800000> : vector<8xf32>
    %1644 = vector.multi_reduction <maximumf>, %1643, %cst_490 [1] : vector<8x8xf32> to vector<8xf32>
    %1645 = vector.shape_cast %1644 : vector<8xf32> to vector<8x1xf32>
    %1646 = vector.broadcast %1645 : vector<8x1xf32> to vector<8x8xf32>
    %1647 = arith.subf %1643, %1646 : vector<8x8xf32>
    %1648 = math.exp %1647 : vector<8x8xf32>
    %cst_491 = arith.constant dense<0.000000e+00> : vector<8xf32>
    %1649 = vector.multi_reduction <add>, %1648, %cst_491 [1] : vector<8x8xf32> to vector<8xf32>
    %1650 = vector.shape_cast %1649 : vector<8xf32> to vector<8x1xf32>
    %1651 = math.log %1650 : vector<8x1xf32>
    %1652 = arith.addf %1651, %1645 : vector<8x1xf32>
    %1653 = vector.broadcast %1652 : vector<8x1xf32> to vector<8x8xf32>
    %1654 = arith.subf %1643, %1653 : vector<8x8xf32>
    %1655 = arith.mulf %1654, %1633 : vector<8x8xf32>
    %1656 = arith.mulf %1655, %1639 : vector<8x8xf32>
    %cst_492 = arith.constant 0.000000e+00 : f32
    %1657 = vector.broadcast %cst_492 : f32 to vector<8x8xf32>
    %1658 = arith.subf %1657, %1656 : vector<8x8xf32>
    %cst_493 = arith.constant dense<0.000000e+00> : vector<8xf32>
    %1659 = vector.multi_reduction <add>, %1658, %cst_493 [1] : vector<8x8xf32> to vector<8xf32>
    %1660 = vector.shape_cast %1659 : vector<8xf32> to vector<8x1xf32>
    %cst_494 = arith.constant dense<0.000000e+00> : vector<1xf32>
    %1661 = vector.multi_reduction <add>, %1660, %cst_494 [0] : vector<8x1xf32> to vector<1xf32>
    %1662 = vector.shape_cast %1661 : vector<1xf32> to vector<1x1xf32>
    %cst_495 = arith.constant 0.000000e+00 : f32
    %1663 = vector.broadcast %cst_495 : f32 to vector<8x8xf32>
    %1664 = arith.cmpf ogt, %1637, %1663 : vector<8x8xf32>
    %cst_496 = arith.constant -1.000000e+09 : f32
    %1665 = vector.broadcast %cst_496 : f32 to vector<8x8xf32>
    %1666 = arith.select %1664, %1631, %1665 : vector<8x8xi1>, vector<8x8xf32>
    %cst_497 = arith.constant dense<0xFF800000> : vector<8xf32>
    %1667 = vector.multi_reduction <maximumf>, %1666, %cst_497 [0] : vector<8x8xf32> to vector<8xf32>
    %1668 = vector.shape_cast %1667 : vector<8xf32> to vector<1x8xf32>
    %1669 = vector.broadcast %1668 : vector<1x8xf32> to vector<8x8xf32>
    %1670 = arith.subf %1666, %1669 : vector<8x8xf32>
    %1671 = math.exp %1670 : vector<8x8xf32>
    %cst_498 = arith.constant dense<0.000000e+00> : vector<8xf32>
    %1672 = vector.multi_reduction <add>, %1671, %cst_498 [0] : vector<8x8xf32> to vector<8xf32>
    %1673 = vector.shape_cast %1672 : vector<8xf32> to vector<1x8xf32>
    %1674 = math.log %1673 : vector<1x8xf32>
    %1675 = arith.addf %1674, %1668 : vector<1x8xf32>
    %1676 = vector.broadcast %1675 : vector<1x8xf32> to vector<8x8xf32>
    %1677 = arith.subf %1666, %1676 : vector<8x8xf32>
    %1678 = arith.mulf %1677, %1633 : vector<8x8xf32>
    %1679 = arith.mulf %1678, %1639 : vector<8x8xf32>
    %cst_499 = arith.constant 0.000000e+00 : f32
    %1680 = vector.broadcast %cst_499 : f32 to vector<8x8xf32>
    %1681 = arith.subf %1680, %1679 : vector<8x8xf32>
    %cst_500 = arith.constant dense<0.000000e+00> : vector<8xf32>
    %1682 = vector.multi_reduction <add>, %1639, %cst_500 [1] : vector<8x8xf32> to vector<8xf32>
    %1683 = vector.shape_cast %1682 : vector<8xf32> to vector<8x1xf32>
    %cst_501 = arith.constant dense<0.000000e+00> : vector<1xf32>
    %1684 = vector.multi_reduction <add>, %1683, %cst_501 [0] : vector<8x1xf32> to vector<1xf32>
    %1685 = vector.shape_cast %1684 : vector<1xf32> to vector<1x1xf32>
    %cst_502 = arith.constant 8.000000e+00 : f32
    %1686 = vector.broadcast %cst_502 : f32 to vector<1x1xf32>
    %1687 = arith.divf %1685, %1686 : vector<1x1xf32>
    %cst_503 = arith.constant dense<0.000000e+00> : vector<8xf32>
    %1688 = vector.multi_reduction <add>, %1681, %cst_503 [1] : vector<8x8xf32> to vector<8xf32>
    %1689 = vector.shape_cast %1688 : vector<8xf32> to vector<8x1xf32>
    %cst_504 = arith.constant dense<0.000000e+00> : vector<1xf32>
    %1690 = vector.multi_reduction <add>, %1689, %cst_504 [0] : vector<8x1xf32> to vector<1xf32>
    %1691 = vector.shape_cast %1690 : vector<1xf32> to vector<1x1xf32>
    %cst_505 = arith.constant 1.000000e+00 : f32
    %1692 = vector.broadcast %cst_505 : f32 to vector<1x1xf32>
    %1693 = arith.maximumf %1687, %1692 : vector<1x1xf32>
    %1694 = arith.divf %1691, %1693 : vector<1x1xf32>
    %1695 = arith.addf %1662, %1694 : vector<1x1xf32>
    %cst_506 = arith.constant 8.000000e+00 : f32
    %1696 = vector.broadcast %cst_506 : f32 to vector<1x1xf32>
    %1697 = arith.divf %1695, %1696 : vector<1x1xf32>
    %cst_507 = arith.constant 0.000000e+00 : f32
    %1698 = vector.broadcast %cst_507 : f32 to vector<1x31xf32>
    %cst_508 = arith.constant 0.000000e+00 : f32
    %1699 = vector.broadcast %cst_508 : f32 to vector<1x32xf32>
    %1700 = tpu.concatenate %1697, %1698, %1325, %1329, %1699 in 1 : vector<1x1xf32>, vector<1x31xf32>, vector<1x32xf32>, vector<1x32xf32>, vector<1x32xf32> -> vector<1x128xf32>
    %c0_509 = arith.constant 0 : index
    %c0_510 = arith.constant 0 : index
    %1701 = vector.load %arg45[%c0_509, %c0_510] : memref<1x128xf32, #tpu.memory_space<vmem>>, vector<1x128xf32>
    tpu.vector_store %arg45[%c0_509, %c0_510], %1700 {strides = array<i32>} : memref<1x128xf32, #tpu.memory_space<vmem>>, vector<1x128xf32>,
    return
  }
  func.func @transform_0(%arg0: i32) -> (i32, i32, i32) {
    %c0_i32 = arith.constant 0 : i32
    %c0_i32_0 = arith.constant 0 : i32
    %c0_i32_1 = arith.constant 0 : i32
    %c0_i32_2 = arith.constant 0 : i32
    return %c0_i32, %c0_i32_0, %c0_i32_1 : i32, i32, i32
  }
  func.func @transform_1(%arg0: i32) -> (i32, i32, i32) {
    %c0_i32 = arith.constant 0 : i32
    %c0_i32_0 = arith.constant 0 : i32
    %c0_i32_1 = arith.constant 0 : i32
    %c0_i32_2 = arith.constant 0 : i32
    return %c0_i32, %c0_i32_0, %c0_i32_1 : i32, i32, i32
  }
  func.func @transform_2(%arg0: i32) -> (i32, i32) {
    %c0_i32 = arith.constant 0 : i32
    %c0_i32_0 = arith.constant 0 : i32
    %c0_i32_1 = arith.constant 0 : i32
    return %c0_i32, %c0_i32_0 : i32, i32
  }
  func.func @transform_3(%arg0: i32) -> (i32, i32) {
    %c0_i32 = arith.constant 0 : i32
    %c0_i32_0 = arith.constant 0 : i32
    %c0_i32_1 = arith.constant 0 : i32
    return %c0_i32, %c0_i32_0 : i32, i32
  }
  func.func @transform_4(%arg0: i32) -> (i32, i32) {
    %c0_i32 = arith.constant 0 : i32
    %c0_i32_0 = arith.constant 0 : i32
    %c0_i32_1 = arith.constant 0 : i32
    return %c0_i32, %c0_i32_0 : i32, i32
  }
  func.func @transform_5(%arg0: i32) -> (i32, i32, i32) {
    %c0_i32 = arith.constant 0 : i32
    %c0_i32_0 = arith.constant 0 : i32
    %c0_i32_1 = arith.constant 0 : i32
    %c0_i32_2 = arith.constant 0 : i32
    return %c0_i32, %c0_i32_0, %c0_i32_1 : i32, i32, i32
  }
  func.func @transform_6(%arg0: i32) -> (i32, i32) {
    %c0_i32 = arith.constant 0 : i32
    %c0_i32_0 = arith.constant 0 : i32
    %c0_i32_1 = arith.constant 0 : i32
    return %c0_i32, %c0_i32_0 : i32, i32
  }
  func.func @transform_7(%arg0: i32) -> (i32, i32) {
    %c0_i32 = arith.constant 0 : i32
    %c0_i32_0 = arith.constant 0 : i32
    %c0_i32_1 = arith.constant 0 : i32
    return %c0_i32, %c0_i32_0 : i32, i32
  }
  func.func @transform_8(%arg0: i32) -> (i32, i32) {
    %c0_i32 = arith.constant 0 : i32
    %c0_i32_0 = arith.constant 0 : i32
    %c0_i32_1 = arith.constant 0 : i32
    return %c0_i32, %c0_i32_0 : i32, i32
  }
  func.func @transform_9(%arg0: i32) -> (i32, i32) {
    %c0_i32 = arith.constant 0 : i32
    %c0_i32_0 = arith.constant 0 : i32
    %c0_i32_1 = arith.constant 0 : i32
    return %c0_i32, %c0_i32_0 : i32, i32
  }
  func.func @transform_10(%arg0: i32) -> (i32, i32) {
    %c0_i32 = arith.constant 0 : i32
    %c0_i32_0 = arith.constant 0 : i32
    %c0_i32_1 = arith.constant 0 : i32
    return %c0_i32, %c0_i32_0 : i32, i32
  }
  func.func @transform_11(%arg0: i32) -> (i32, i32) {
    %c0_i32 = arith.constant 0 : i32
    %c0_i32_0 = arith.constant 0 : i32
    %c0_i32_1 = arith.constant 0 : i32
    return %c0_i32, %c0_i32_0 : i32, i32
  }
  func.func @transform_12(%arg0: i32) -> (i32, i32) {
    %c0_i32 = arith.constant 0 : i32
    %c0_i32_0 = arith.constant 0 : i32
    %c0_i32_1 = arith.constant 0 : i32
    return %c0_i32, %c0_i32_0 : i32, i32
  }
  func.func @transform_13(%arg0: i32) -> (i32, i32) {
    %c0_i32 = arith.constant 0 : i32
    %c0_i32_0 = arith.constant 0 : i32
    %c0_i32_1 = arith.constant 0 : i32
    return %c0_i32, %c0_i32_0 : i32, i32
  }
  func.func @transform_14(%arg0: i32) -> (i32, i32) {
    %c0_i32 = arith.constant 0 : i32
    %c0_i32_0 = arith.constant 0 : i32
    %c0_i32_1 = arith.constant 0 : i32
    return %c0_i32, %c0_i32_0 : i32, i32
  }
  func.func @transform_15(%arg0: i32) -> (i32, i32) {
    %c0_i32 = arith.constant 0 : i32
    %c0_i32_0 = arith.constant 0 : i32
    %c0_i32_1 = arith.constant 0 : i32
    return %c0_i32, %c0_i32_0 : i32, i32
  }
  func.func @transform_16(%arg0: i32) -> (i32, i32) {
    %c0_i32 = arith.constant 0 : i32
    %c0_i32_0 = arith.constant 0 : i32
    %c0_i32_1 = arith.constant 0 : i32
    return %c0_i32, %c0_i32_0 : i32, i32
  }
  func.func @transform_17(%arg0: i32) -> (i32, i32) {
    %c0_i32 = arith.constant 0 : i32
    %c0_i32_0 = arith.constant 0 : i32
    %c0_i32_1 = arith.constant 0 : i32
    return %c0_i32, %c0_i32_0 : i32, i32
  }
  func.func @transform_18(%arg0: i32) -> (i32, i32) {
    %c0_i32 = arith.constant 0 : i32
    %c0_i32_0 = arith.constant 0 : i32
    %c0_i32_1 = arith.constant 0 : i32
    return %c0_i32, %c0_i32_0 : i32, i32
  }
  func.func @transform_19(%arg0: i32) -> (i32, i32) {
    %c0_i32 = arith.constant 0 : i32
    %c0_i32_0 = arith.constant 0 : i32
    %c0_i32_1 = arith.constant 0 : i32
    return %c0_i32, %c0_i32_0 : i32, i32
  }
  func.func @transform_20(%arg0: i32) -> (i32, i32) {
    %c0_i32 = arith.constant 0 : i32
    %c0_i32_0 = arith.constant 0 : i32
    %c0_i32_1 = arith.constant 0 : i32
    return %c0_i32, %c0_i32_0 : i32, i32
  }
  func.func @transform_21(%arg0: i32) -> (i32, i32) {
    %c0_i32 = arith.constant 0 : i32
    %c0_i32_0 = arith.constant 0 : i32
    %c0_i32_1 = arith.constant 0 : i32
    return %c0_i32, %c0_i32_0 : i32, i32
  }
  func.func @transform_22(%arg0: i32) -> (i32, i32) {
    %c0_i32 = arith.constant 0 : i32
    %c0_i32_0 = arith.constant 0 : i32
    %c0_i32_1 = arith.constant 0 : i32
    return %c0_i32, %c0_i32_0 : i32, i32
  }
  func.func @transform_23(%arg0: i32) -> (i32, i32) {
    %c0_i32 = arith.constant 0 : i32
    %c0_i32_0 = arith.constant 0 : i32
    %c0_i32_1 = arith.constant 0 : i32
    return %c0_i32, %c0_i32_0 : i32, i32
  }
  func.func @transform_24(%arg0: i32) -> (i32, i32) {
    %c0_i32 = arith.constant 0 : i32
    %c0_i32_0 = arith.constant 0 : i32
    %c0_i32_1 = arith.constant 0 : i32
    return %c0_i32, %c0_i32_0 : i32, i32
  }
  func.func @transform_25(%arg0: i32) -> (i32, i32) {
    %c0_i32 = arith.constant 0 : i32
    %c0_i32_0 = arith.constant 0 : i32
    %c0_i32_1 = arith.constant 0 : i32
    return %c0_i32, %c0_i32_0 : i32, i32
  }
  func.func @transform_26(%arg0: i32) -> (i32, i32) {
    %c0_i32 = arith.constant 0 : i32
    %c0_i32_0 = arith.constant 0 : i32
    %c0_i32_1 = arith.constant 0 : i32
    return %c0_i32, %c0_i32_0 : i32, i32
  }
  func.func @transform_27(%arg0: i32) -> (i32, i32) {
    %c0_i32 = arith.constant 0 : i32
    %c0_i32_0 = arith.constant 0 : i32
    %c0_i32_1 = arith.constant 0 : i32
    return %c0_i32, %c0_i32_0 : i32, i32
  }
  func.func @transform_28(%arg0: i32) -> (i32, i32) {
    %c0_i32 = arith.constant 0 : i32
    %c0_i32_0 = arith.constant 0 : i32
    %c0_i32_1 = arith.constant 0 : i32
    return %c0_i32, %c0_i32_0 : i32, i32
  }
  func.func @transform_29(%arg0: i32) -> (i32, i32) {
    %c0_i32 = arith.constant 0 : i32
    %c0_i32_0 = arith.constant 0 : i32
    %c0_i32_1 = arith.constant 0 : i32
    return %c0_i32, %c0_i32_0 : i32, i32
  }
  func.func @transform_30(%arg0: i32) -> (i32, i32) {
    %c0_i32 = arith.constant 0 : i32
    %c0_i32_0 = arith.constant 0 : i32
    %c0_i32_1 = arith.constant 0 : i32
    return %c0_i32, %c0_i32_0 : i32, i32
  }
  func.func @transform_31(%arg0: i32) -> (i32, i32) {
    %c0_i32 = arith.constant 0 : i32
    %c0_i32_0 = arith.constant 0 : i32
    %c0_i32_1 = arith.constant 0 : i32
    return %c0_i32, %c0_i32_0 : i32, i32
  }
  func.func @transform_32(%arg0: i32) -> (i32, i32) {
    %c0_i32 = arith.constant 0 : i32
    %c0_i32_0 = arith.constant 0 : i32
    %c0_i32_1 = arith.constant 0 : i32
    return %c0_i32, %c0_i32_0 : i32, i32
  }
  func.func @transform_33(%arg0: i32) -> (i32, i32) {
    %c0_i32 = arith.constant 0 : i32
    %c0_i32_0 = arith.constant 0 : i32
    %c0_i32_1 = arith.constant 0 : i32
    return %c0_i32, %c0_i32_0 : i32, i32
  }
  func.func @transform_34(%arg0: i32) -> (i32, i32) {
    %c0_i32 = arith.constant 0 : i32
    %c0_i32_0 = arith.constant 0 : i32
    %c0_i32_1 = arith.constant 0 : i32
    return %c0_i32, %c0_i32_0 : i32, i32
  }
  func.func @transform_35(%arg0: i32) -> (i32, i32) {
    %c0_i32 = arith.constant 0 : i32
    %c0_i32_0 = arith.constant 0 : i32
    %c0_i32_1 = arith.constant 0 : i32
    return %c0_i32, %c0_i32_0 : i32, i32
  }
  func.func @transform_36(%arg0: i32) -> (i32, i32) {
    %c0_i32 = arith.constant 0 : i32
    %c0_i32_0 = arith.constant 0 : i32
    %c0_i32_1 = arith.constant 0 : i32
    return %c0_i32, %c0_i32_0 : i32, i32
  }
  func.func @transform_37(%arg0: i32) -> (i32, i32) {
    %c0_i32 = arith.constant 0 : i32
    %c0_i32_0 = arith.constant 0 : i32
    %c0_i32_1 = arith.constant 0 : i32
    return %c0_i32, %c0_i32_0 : i32, i32
  }
  func.func @transform_38(%arg0: i32) -> (i32, i32) {
    %c0_i32 = arith.constant 0 : i32
    %c0_i32_0 = arith.constant 0 : i32
    %c0_i32_1 = arith.constant 0 : i32
    return %c0_i32, %c0_i32_0 : i32, i32
  }
  func.func @transform_39(%arg0: i32) -> (i32, i32) {
    %c0_i32 = arith.constant 0 : i32
    %c0_i32_0 = arith.constant 0 : i32
    %c0_i32_1 = arith.constant 0 : i32
    return %c0_i32, %c0_i32_0 : i32, i32
  }
  func.func @transform_40(%arg0: i32) -> (i32, i32) {
    %c0_i32 = arith.constant 0 : i32
    %c0_i32_0 = arith.constant 0 : i32
    %c0_i32_1 = arith.constant 0 : i32
    return %c0_i32, %c0_i32_0 : i32, i32
  }
  func.func @transform_41(%arg0: i32) -> (i32, i32) {
    %c0_i32 = arith.constant 0 : i32
    %c0_i32_0 = arith.constant 0 : i32
    %c0_i32_1 = arith.constant 0 : i32
    return %c0_i32, %c0_i32_0 : i32, i32
  }
  func.func @transform_42(%arg0: i32) -> (i32, i32) {
    %c0_i32 = arith.constant 0 : i32
    %c0_i32_0 = arith.constant 0 : i32
    %c0_i32_1 = arith.constant 0 : i32
    return %c0_i32, %c0_i32_0 : i32, i32
  }
  func.func @transform_43(%arg0: i32) -> (i32, i32) {
    %c0_i32 = arith.constant 0 : i32
    %c0_i32_0 = arith.constant 0 : i32
    %c0_i32_1 = arith.constant 0 : i32
    return %c0_i32, %c0_i32_0 : i32, i32
  }
  func.func @transform_44(%arg0: i32) -> (i32, i32) {
    %c0_i32 = arith.constant 0 : i32
    %c0_i32_0 = arith.constant 0 : i32
    %c0_i32_1 = arith.constant 0 : i32
    return %c0_i32, %c0_i32_0 : i32, i32
  }
}

</mosaic_0001>

<llo_original>
// kernel: _natorder_forward_jit.1
$region0: #{_natorder_forward_jit.1}
  #allocation0 [shape = 'u32[]', space=smem, size = 0x4, offset = 0x4, fixed_abs, tag = 'smem constant byte address 0x4 - core index']
  #allocation1 [shape = 'u32[72,128]{1,0:T(1,128)}', space=vmem, size = 0x9000, scoped, tag = 'internal scratch']
  #allocation2 [shape = 'f32[1,1]{1,0:T(1,128)S(1)}', space=vmem, size = 0x200, scoped, tag = 'scoped memory for _natorder_forward_jit.1']
  %s0 = inlined_call_operand.smem [shape: u32[45], index: -1, kind: input, shape index: {}]
  %s1 = sld [smem:[%s0]]
  %s2 = scalar_lea.smem %s0, 1
  %s3 = sld [smem:[%s2]]
  %s4 = scalar_lea.smem %s0, 2
  %s5 = sld [smem:[%s4]]
  %s6 = scalar_lea.smem %s0, 3
  %s7 = sld [smem:[%s6]]
  %s8 = scalar_lea.smem %s0, 4
  %s9 = sld [smem:[%s8]]
  %s10 = scalar_lea.smem %s0, 5
  %s11 = sld [smem:[%s10]]
  %s12 = scalar_lea.smem %s0, 6
  %s13 = sld [smem:[%s12]]
  %s14 = scalar_lea.smem %s0, 7
  %s15 = sld [smem:[%s14]]
  %s16 = scalar_lea.smem %s0, 8
  %s17 = sld [smem:[%s16]]
  %s18 = scalar_lea.smem %s0, 9
  %s19 = sld [smem:[%s18]]
  %s20 = scalar_lea.smem %s0, 10
  %s21 = sld [smem:[%s20]]
  %s22 = scalar_lea.smem %s0, 11
  %s23 = sld [smem:[%s22]]
  %s24 = scalar_lea.smem %s0, 12
  %s25 = sld [smem:[%s24]]
  %s26 = scalar_lea.smem %s0, 13
  %s27 = sld [smem:[%s26]]
  %s28 = scalar_lea.smem %s0, 14
  %s29 = sld [smem:[%s28]]
  %s30 = scalar_lea.smem %s0, 15
  %s31 = sld [smem:[%s30]]
  %s32 = scalar_lea.smem %s0, 16
  %s33 = sld [smem:[%s32]]
  %s34 = scalar_lea.smem %s0, 17
  %s35 = sld [smem:[%s34]]
  %s36 = scalar_lea.smem %s0, 18
  %s37 = sld [smem:[%s36]]
  %s38 = scalar_lea.smem %s0, 19
  %s39 = sld [smem:[%s38]]
  %s40 = scalar_lea.smem %s0, 20
  %s41 = sld [smem:[%s40]]
  %s42 = scalar_lea.smem %s0, 21
  %s43 = sld [smem:[%s42]]
  %s44 = scalar_lea.smem %s0, 22
  %s45 = sld [smem:[%s44]]
  %s46 = scalar_lea.smem %s0, 23
  %s47 = sld [smem:[%s46]]
  %s48 = scalar_lea.smem %s0, 24
  %s49 = sld [smem:[%s48]]
  %s50 = scalar_lea.smem %s0, 25
  %s51 = sld [smem:[%s50]]
  %s52 = scalar_lea.smem %s0, 26
  %s53 = sld [smem:[%s52]]
  %s54 = scalar_lea.smem %s0, 27
  %s55 = sld [smem:[%s54]]
  %s56 = scalar_lea.smem %s0, 28
  %s57 = sld [smem:[%s56]]
  %s58 = scalar_lea.smem %s0, 29
  %s59 = sld [smem:[%s58]]
  %s60 = scalar_lea.smem %s0, 30
  %s61 = sld [smem:[%s60]]
  %s62 = scalar_lea.smem %s0, 31
  %s63 = sld [smem:[%s62]]
  %s64 = scalar_lea.smem %s0, 32
  %s65 = sld [smem:[%s64]]
  %s66 = scalar_lea.smem %s0, 33
  %s67 = sld [smem:[%s66]]
  %s68 = scalar_lea.smem %s0, 34
  %s69 = sld [smem:[%s68]]
  %s70 = scalar_lea.smem %s0, 35
  %s71 = sld [smem:[%s70]]
  %s72 = scalar_lea.smem %s0, 36
  %s73 = sld [smem:[%s72]]
  %s74 = scalar_lea.smem %s0, 37
  %s75 = sld [smem:[%s74]]
  %s76 = scalar_lea.smem %s0, 38
  %s77 = sld [smem:[%s76]]
  %s78 = scalar_lea.smem %s0, 39
  %s79 = sld [smem:[%s78]]
  %s80 = scalar_lea.smem %s0, 40
  %s81 = sld [smem:[%s80]]
  %s82 = scalar_lea.smem %s0, 41
  %s83 = sld [smem:[%s82]]
  %s84 = scalar_lea.smem %s0, 42
  %s85 = sld [smem:[%s84]]
  %s86 = scalar_lea.smem %s0, 43
  %s87 = sld [smem:[%s86]]
  %s88 = scalar_lea.smem %s0, 44
  %s89 = sld [smem:[%s88]]
  %s90 = sld [smem:[#allocation0]]
  $region186: #{_natorder_forward_jit.1} parent=0
    _
  %s92 = ssub.s32 1, %s90
  %s93 = scalar_select 0, %s92, %s90
  %v94 = vstv %s73
  %95 = vst [vmem:[#allocation2] sm:$0x1] %v94
  // Predicated region
  $region2: #{_natorder_forward_jit.1} parent=0 // pred_check
    _
  $region3: #{_natorder_forward_jit.1} parent=0 // pred_check_branch
    %97 = sbr.rel (0) target = $region5
  $region4: #{_natorder_forward_jit.1} parent=0 // pred_region
    _
  $region5: #{_natorder_forward_jit.1} parent=0 // pred_fallthru
    _
  // Predicated region
  $region6: #{_natorder_forward_jit.1} parent=0 // pred_check
    _
  $region7: #{_natorder_forward_jit.1} parent=0 // pred_check_branch
    %99 = sbr.rel (0) target = $region9
  $region8: #{_natorder_forward_jit.1} parent=0 // pred_region
    _
  $region9: #{_natorder_forward_jit.1} parent=0 // pred_fallthru
    _
  // Predicated region
  $region10: #{_natorder_forward_jit.1} parent=0 // pred_check
    _
  $region11: #{_natorder_forward_jit.1} parent=0 // pred_check_branch
    %101 = sbr.rel (0) target = $region13
  $region12: #{_natorder_forward_jit.1} parent=0 // pred_region
    _
  $region13: #{_natorder_forward_jit.1} parent=0 // pred_fallthru
    _
  // Predicated region
  $region14: #{_natorder_forward_jit.1} parent=0 // pred_check
    _
  $region15: #{_natorder_forward_jit.1} parent=0 // pred_check_branch
    %103 = sbr.rel (0) target = $region17
  $region16: #{_natorder_forward_jit.1} parent=0 // pred_region
    _
  $region17: #{_natorder_forward_jit.1} parent=0 // pred_fallthru
    _
  // Predicated region
  $region18: #{_natorder_forward_jit.1} parent=0 // pred_check
    _
  $region19: #{_natorder_forward_jit.1} parent=0 // pred_check_branch
    %105 = sbr.rel (0) target = $region21
  $region20: #{_natorder_forward_jit.1} parent=0 // pred_region
    _
  $region21: #{_natorder_forward_jit.1} parent=0 // pred_fallthru
    _
  // Predicated region
  $region22: #{_natorder_forward_jit.1} parent=0 // pred_check
    _
  $region23: #{_natorder_forward_jit.1} parent=0 // pred_check_branch
    %107 = sbr.rel (0) target = $region25
  $region24: #{_natorder_forward_jit.1} parent=0 // pred_region
    _
  $region25: #{_natorder_forward_jit.1} parent=0 // pred_fallthru
    _
  // Predicated region
  $region26: #{_natorder_forward_jit.1} parent=0 // pred_check
    _
  $region27: #{_natorder_forward_jit.1} parent=0 // pred_check_branch
    %109 = sbr.rel (0) target = $region29
  $region28: #{_natorder_forward_jit.1} parent=0 // pred_region
    _
  $region29: #{_natorder_forward_jit.1} parent=0 // pred_fallthru
    _
  // Predicated region
  $region30: #{_natorder_forward_jit.1} parent=0 // pred_check
    _
  $region31: #{_natorder_forward_jit.1} parent=0 // pred_check_branch
    %111 = sbr.rel (0) target = $region33
  $region32: #{_natorder_forward_jit.1} parent=0 // pred_region
    _
  $region33: #{_natorder_forward_jit.1} parent=0 // pred_fallthru
    _
  // Predicated region
  $region34: #{_natorder_forward_jit.1} parent=0 // pred_check
    _
  $region35: #{_natorder_forward_jit.1} parent=0 // pred_check_branch
    %113 = sbr.rel (0) target = $region37
  $region36: #{_natorder_forward_jit.1} parent=0 // pred_region
    _
  $region37: #{_natorder_forward_jit.1} parent=0 // pred_fallthru
    _
  // Predicated region
  $region38: #{_natorder_forward_jit.1} parent=0 // pred_check
    _
  $region39: #{_natorder_forward_jit.1} parent=0 // pred_check_branch
    %115 = sbr.rel (0) target = $region41
  $region40: #{_natorder_forward_jit.1} parent=0 // pred_region
    _
  $region41: #{_natorder_forward_jit.1} parent=0 // pred_fallthru
    _
  // Predicated region
  $region42: #{_natorder_forward_jit.1} parent=0 // pred_check
    _
  $region43: #{_natorder_forward_jit.1} parent=0 // pred_check_branch
    %117 = sbr.rel (0) target = $region45
  $region44: #{_natorder_forward_jit.1} parent=0 // pred_region
    _
  $region45: #{_natorder_forward_jit.1} parent=0 // pred_fallthru
    _
  // Predicated region
  $region46: #{_natorder_forward_jit.1} parent=0 // pred_check
    _
  $region47: #{_natorder_forward_jit.1} parent=0 // pred_check_branch
    %119 = sbr.rel (0) target = $region49
  $region48: #{_natorder_forward_jit.1} parent=0 // pred_region
    _
  $region49: #{_natorder_forward_jit.1} parent=0 // pred_fallthru
    _
  // Predicated region
  $region50: #{_natorder_forward_jit.1} parent=0 // pred_check
    _
  $region51: #{_natorder_forward_jit.1} parent=0 // pred_check_branch
    %121 = sbr.rel (0) target = $region53
  $region52: #{_natorder_forward_jit.1} parent=0 // pred_region
    _
  $region53: #{_natorder_forward_jit.1} parent=0 // pred_fallthru
    _
  // Predicated region
  $region54: #{_natorder_forward_jit.1} parent=0 // pred_check
    _
  $region55: #{_natorder_forward_jit.1} parent=0 // pred_check_branch
    %123 = sbr.rel (0) target = $region57
  $region56: #{_natorder_forward_jit.1} parent=0 // pred_region
    _
  $region57: #{_natorder_forward_jit.1} parent=0 // pred_fallthru
    _
  // Predicated region
  $region58: #{_natorder_forward_jit.1} parent=0 // pred_check
    _
  $region59: #{_natorder_forward_jit.1} parent=0 // pred_check_branch
    %125 = sbr.rel (0) target = $region61
  $region60: #{_natorder_forward_jit.1} parent=0 // pred_region
    _
  $region61: #{_natorder_forward_jit.1} parent=0 // pred_fallthru
    _
  // Predicated region
  $region62: #{_natorder_forward_jit.1} parent=0 // pred_check
    _
  $region63: #{_natorder_forward_jit.1} parent=0 // pred_check_branch
    %127 = sbr.rel (0) target = $region65
  $region64: #{_natorder_forward_jit.1} parent=0 // pred_region
    _
  $region65: #{_natorder_forward_jit.1} parent=0 // pred_fallthru
    _
  // Predicated region
  $region66: #{_natorder_forward_jit.1} parent=0 // pred_check
    _
  $region67: #{_natorder_forward_jit.1} parent=0 // pred_check_branch
    %129 = sbr.rel (0) target = $region69
  $region68: #{_natorder_forward_jit.1} parent=0 // pred_region
    _
  $region69: #{_natorder_forward_jit.1} parent=0 // pred_fallthru
    _
  // Predicated region
  $region70: #{_natorder_forward_jit.1} parent=0 // pred_check
    _
  $region71: #{_natorder_forward_jit.1} parent=0 // pred_check_branch
    %131 = sbr.rel (0) target = $region73
  $region72: #{_natorder_forward_jit.1} parent=0 // pred_region
    _
  $region73: #{_natorder_forward_jit.1} parent=0 // pred_fallthru
    _
  // Predicated region
  $region74: #{_natorder_forward_jit.1} parent=0 // pred_check
    _
  $region75: #{_natorder_forward_jit.1} parent=0 // pred_check_branch
    %133 = sbr.rel (0) target = $region77
  $region76: #{_natorder_forward_jit.1} parent=0 // pred_region
    _
  $region77: #{_natorder_forward_jit.1} parent=0 // pred_fallthru
    _
  // Predicated region
  $region78: #{_natorder_forward_jit.1} parent=0 // pred_check
    _
  $region79: #{_natorder_forward_jit.1} parent=0 // pred_check_branch
    %135 = sbr.rel (0) target = $region81
  $region80: #{_natorder_forward_jit.1} parent=0 // pred_region
    _
  $region81: #{_natorder_forward_jit.1} parent=0 // pred_fallthru
    _
  // Predicated region
  $region82: #{_natorder_forward_jit.1} parent=0 // pred_check
    _
  $region83: #{_natorder_forward_jit.1} parent=0 // pred_check_branch
    %137 = sbr.rel (0) target = $region85
  $region84: #{_natorder_forward_jit.1} parent=0 // pred_region
    _
  $region85: #{_natorder_forward_jit.1} parent=0 // pred_fallthru
    _
  // Predicated region
  $region86: #{_natorder_forward_jit.1} parent=0 // pred_check
    _
  $region87: #{_natorder_forward_jit.1} parent=0 // pred_check_branch
    %139 = sbr.rel (0) target = $region89
  $region88: #{_natorder_forward_jit.1} parent=0 // pred_region
    _
  $region89: #{_natorder_forward_jit.1} parent=0 // pred_fallthru
    _
  // Predicated region
  $region90: #{_natorder_forward_jit.1} parent=0 // pred_check
    _
  $region91: #{_natorder_forward_jit.1} parent=0 // pred_check_branch
    %141 = sbr.rel (0) target = $region93
  $region92: #{_natorder_forward_jit.1} parent=0 // pred_region
    _
  $region93: #{_natorder_forward_jit.1} parent=0 // pred_fallthru
    _
  // Predicated region
  $region94: #{_natorder_forward_jit.1} parent=0 // pred_check
    _
  $region95: #{_natorder_forward_jit.1} parent=0 // pred_check_branch
    %143 = sbr.rel (0) target = $region97
  $region96: #{_natorder_forward_jit.1} parent=0 // pred_region
    _
  $region97: #{_natorder_forward_jit.1} parent=0 // pred_fallthru
    _
  // Predicated region
  $region98: #{_natorder_forward_jit.1} parent=0 // pred_check
    _
  $region99: #{_natorder_forward_jit.1} parent=0 // pred_check_branch
    %145 = sbr.rel (0) target = $region101
  $region100: #{_natorder_forward_jit.1} parent=0 // pred_region
    _
  $region101: #{_natorder_forward_jit.1} parent=0 // pred_fallthru
    _
  // Predicated region
  $region102: #{_natorder_forward_jit.1} parent=0 // pred_check
    _
  $region103: #{_natorder_forward_jit.1} parent=0 // pred_check_branch
    %147 = sbr.rel (0) target = $region105
  $region104: #{_natorder_forward_jit.1} parent=0 // pred_region
    _
  $region105: #{_natorder_forward_jit.1} parent=0 // pred_fallthru
    _
  // Predicated region
  $region106: #{_natorder_forward_jit.1} parent=0 // pred_check
    _
  $region107: #{_natorder_forward_jit.1} parent=0 // pred_check_branch
    %149 = sbr.rel (0) target = $region109
  $region108: #{_natorder_forward_jit.1} parent=0 // pred_region
    _
  $region109: #{_natorder_forward_jit.1} parent=0 // pred_fallthru
    _
  // Predicated region
  $region110: #{_natorder_forward_jit.1} parent=0 // pred_check
    _
  $region111: #{_natorder_forward_jit.1} parent=0 // pred_check_branch
    %151 = sbr.rel (0) target = $region113
  $region112: #{_natorder_forward_jit.1} parent=0 // pred_region
    _
  $region113: #{_natorder_forward_jit.1} parent=0 // pred_fallthru
    _
  // Predicated region
  $region114: #{_natorder_forward_jit.1} parent=0 // pred_check
    _
  $region115: #{_natorder_forward_jit.1} parent=0 // pred_check_branch
    %153 = sbr.rel (0) target = $region117
  $region116: #{_natorder_forward_jit.1} parent=0 // pred_region
    _
  $region117: #{_natorder_forward_jit.1} parent=0 // pred_fallthru
    _
  // Predicated region
  $region118: #{_natorder_forward_jit.1} parent=0 // pred_check
    _
  $region119: #{_natorder_forward_jit.1} parent=0 // pred_check_branch
    %155 = sbr.rel (0) target = $region121
  $region120: #{_natorder_forward_jit.1} parent=0 // pred_region
    _
  $region121: #{_natorder_forward_jit.1} parent=0 // pred_fallthru
    _
  // Predicated region
  $region122: #{_natorder_forward_jit.1} parent=0 // pred_check
    _
  $region123: #{_natorder_forward_jit.1} parent=0 // pred_check_branch
    %157 = sbr.rel (0) target = $region125
  $region124: #{_natorder_forward_jit.1} parent=0 // pred_region
    _
  $region125: #{_natorder_forward_jit.1} parent=0 // pred_fallthru
    _
  // Predicated region
  $region126: #{_natorder_forward_jit.1} parent=0 // pred_check
    _
  $region127: #{_natorder_forward_jit.1} parent=0 // pred_check_branch
    %159 = sbr.rel (0) target = $region129
  $region128: #{_natorder_forward_jit.1} parent=0 // pred_region
    _
  $region129: #{_natorder_forward_jit.1} parent=0 // pred_fallthru
    _
  // Predicated region
  $region130: #{_natorder_forward_jit.1} parent=0 // pred_check
    _
  $region131: #{_natorder_forward_jit.1} parent=0 // pred_check_branch
    %161 = sbr.rel (0) target = $region133
  $region132: #{_natorder_forward_jit.1} parent=0 // pred_region
    _
  $region133: #{_natorder_forward_jit.1} parent=0 // pred_fallthru
    _
  // Predicated region
  $region134: #{_natorder_forward_jit.1} parent=0 // pred_check
    _
  $region135: #{_natorder_forward_jit.1} parent=0 // pred_check_branch
    %163 = sbr.rel (0) target = $region137
  $region136: #{_natorder_forward_jit.1} parent=0 // pred_region
    _
  $region137: #{_natorder_forward_jit.1} parent=0 // pred_fallthru
    _
  // Predicated region
  $region138: #{_natorder_forward_jit.1} parent=0 // pred_check
    _
  $region139: #{_natorder_forward_jit.1} parent=0 // pred_check_branch
    %165 = sbr.rel (0) target = $region141
  $region140: #{_natorder_forward_jit.1} parent=0 // pred_region
    _
  $region141: #{_natorder_forward_jit.1} parent=0 // pred_fallthru
    _
  // Predicated region
  $region142: #{_natorder_forward_jit.1} parent=0 // pred_check
    _
  $region143: #{_natorder_forward_jit.1} parent=0 // pred_check_branch
    %167 = sbr.rel (0) target = $region145
  $region144: #{_natorder_forward_jit.1} parent=0 // pred_region
    _
  $region145: #{_natorder_forward_jit.1} parent=0 // pred_fallthru
    _
  // Predicated region
  $region146: #{_natorder_forward_jit.1} parent=0 // pred_check
    _
  $region147: #{_natorder_forward_jit.1} parent=0 // pred_check_branch
    %169 = sbr.rel (0) target = $region149
  $region148: #{_natorder_forward_jit.1} parent=0 // pred_region
    _
  $region149: #{_natorder_forward_jit.1} parent=0 // pred_fallthru
    _
  // Predicated region
  $region150: #{_natorder_forward_jit.1} parent=0 // pred_check
    _
  $region151: #{_natorder_forward_jit.1} parent=0 // pred_check_branch
    %171 = sbr.rel (0) target = $region153
  $region152: #{_natorder_forward_jit.1} parent=0 // pred_region
    _
  $region153: #{_natorder_forward_jit.1} parent=0 // pred_fallthru
    _
  // Predicated region
  $region154: #{_natorder_forward_jit.1} parent=0 // pred_check
    _
  $region155: #{_natorder_forward_jit.1} parent=0 // pred_check_branch
    %173 = sbr.rel (0) target = $region157
  $region156: #{_natorder_forward_jit.1} parent=0 // pred_region
    _
  $region157: #{_natorder_forward_jit.1} parent=0 // pred_fallthru
    _
  // Predicated region
  $region158: #{_natorder_forward_jit.1} parent=0 // pred_check
    _
  $region159: #{_natorder_forward_jit.1} parent=0 // pred_check_branch
    %175 = sbr.rel (0) target = $region161
  $region160: #{_natorder_forward_jit.1} parent=0 // pred_region
    _
  $region161: #{_natorder_forward_jit.1} parent=0 // pred_fallthru
    _
  // Predicated region
  $region162: #{_natorder_forward_jit.1} parent=0 // pred_check
    _
  $region163: #{_natorder_forward_jit.1} parent=0 // pred_check_branch
    %177 = sbr.rel (0) target = $region165
  $region164: #{_natorder_forward_jit.1} parent=0 // pred_region
    _
  $region165: #{_natorder_forward_jit.1} parent=0 // pred_fallthru
    _
  // Predicated region
  $region166: #{_natorder_forward_jit.1} parent=0 // pred_check
    _
  $region167: #{_natorder_forward_jit.1} parent=0 // pred_check_branch
    %179 = sbr.rel (0) target = $region169
  $region168: #{_natorder_forward_jit.1} parent=0 // pred_region
    _
  $region169: #{_natorder_forward_jit.1} parent=0 // pred_fallthru
    _
  // Predicated region
  $region170: #{_natorder_forward_jit.1} parent=0 // pred_check
    _
  $region171: #{_natorder_forward_jit.1} parent=0 // pred_check_branch
    %181 = sbr.rel (0) target = $region173
  $region172: #{_natorder_forward_jit.1} parent=0 // pred_region
    _
  $region173: #{_natorder_forward_jit.1} parent=0 // pred_fallthru
    _
  // Predicated region
  $region174: #{_natorder_forward_jit.1} parent=0 // pred_check
    _
  $region175: #{_natorder_forward_jit.1} parent=0 // pred_check_branch
    %183 = sbr.rel (0) target = $region177
  $region176: #{_natorder_forward_jit.1} parent=0 // pred_region
    _
  $region177: #{_natorder_forward_jit.1} parent=0 // pred_fallthru
    _
  %v184 = vld [vmem:[%s1] sm:$0xff]
  %v185 = vld [vmem:[%s1 + $0x8] sm:$0xff]
  %v186 = vld [vmem:[%s1 + $0x10] sm:$0xff]
  %v187 = vld [vmem:[%s1 + $0x18] sm:$0xff]
  %v188 = vld [vmem:[%s1 + $0x20] sm:$0xff]
  %v189 = vld [vmem:[%s1 + $0x28] sm:$0xff]
  %v190 = vld [vmem:[%s1 + $0x30] sm:$0xff]
  %v191 = vld [vmem:[%s1 + $0x38] sm:$0xff]
  %v192 = vld [vmem:[%s3] sm:$0xff]
  %v193 = vld [vmem:[%s3 + $0x8] sm:$0xff]
  %v194 = vld [vmem:[%s3 + $0x10] sm:$0xff]
  %v195 = vld [vmem:[%s3 + $0x18] sm:$0xff]
  %v196 = vld [vmem:[%s3 + $0x20] sm:$0xff]
  %v197 = vld [vmem:[%s3 + $0x28] sm:$0xff]
  %v198 = vld [vmem:[%s3 + $0x30] sm:$0xff]
  %v199 = vld [vmem:[%s3 + $0x38] sm:$0xff]
  %v200 = vld [vmem:[%s87] sm:$0xff]
  %v201 = vld [vmem:[%s87 + $0x8] sm:$0xff]
  %v202 = vld [vmem:[%s87 + $0x10] sm:$0xff]
  %v203 = vld [vmem:[%s87 + $0x18] sm:$0xff]
  %v204 = vld [vmem:[%s79] sm:$0x1]
  %v206 = vperm.slane %v204, 0
  %vm208 = vcmask 261120
  %v210 = vsel %vm208, %v184, 0
  %v213 = vsel %vm208, %v185, 0
  %v216 = vsel %vm208, %v186, 0
  %v219 = vsel %vm208, %v187, 0
  %v222 = vsel %vm208, %v188, 0
  %v225 = vsel %vm208, %v189, 0
  %v228 = vsel %vm208, %v190, 0
  %v231 = vsel %vm208, %v191, 0
  %233 = vmatpush.msra.mxu0 0.0
  %234 = vmatpush.msra.mxu0 0.0
  %235 = vmatpush.msra.mxu0 0.0
  %236 = vmatpush.msra.mxu0 0.0
  %237 = vmatpush.msra.mxu0 0.0
  %238 = vmatpush.msra.mxu0 0.0
  %239 = vmatpush.msra.mxu0 0.0
  %240 = vmatpush.msra.mxu0 0.0
  %241 = vmatpush.msra.mxu0 0.0
  %242 = vmatpush.msra.mxu0 0.0
  %243 = vmatpush.msra.mxu0 0.0
  %244 = vmatpush.msra.mxu0 0.0
  %245 = vmatpush.msra.mxu0 %v203
  %246 = vmatpush.msra.mxu0 %v202
  %247 = vmatpush.msra.mxu0 %v201
  %248 = vmatpush.msra.mxu0 %v200
  %249 = vmatmul.f32.gmra.mxu0 %v210
  %v250 = vpop.f32.mrf.mxu0
  %v251 = vadd.f32 %v206, %v250
  %252 = vmatmul.f32.gmra.mxu0 %v213
  %v253 = vpop.f32.mrf.mxu0
  %v254 = vadd.f32 %v206, %v253
  %255 = vmatmul.f32.gmra.mxu0 %v216
  %v256 = vpop.f32.mrf.mxu0
  %v257 = vadd.f32 %v206, %v256
  %258 = vmatmul.f32.gmra.mxu0 %v219
  %v259 = vpop.f32.mrf.mxu0
  %v260 = vadd.f32 %v206, %v259
  %261 = vmatmul.f32.gmra.mxu0 %v222
  %v262 = vpop.f32.mrf.mxu0
  %v263 = vadd.f32 %v206, %v262
  %264 = vmatmul.f32.gmra.mxu0 %v225
  %v265 = vpop.f32.mrf.mxu0
  %v266 = vadd.f32 %v206, %v265
  %267 = vmatmul.f32.gmra.mxu0 %v228
  %v268 = vpop.f32.mrf.mxu0
  %v269 = vadd.f32 %v206, %v268
  %270 = vmatmul.f32.gmra.mxu0 %v231
  %v271 = vpop.f32.mrf.mxu0
  %v272 = vadd.f32 %v206, %v271
  %273 = vdwg.mxu0
  %v274 = vld [vmem:[%s85] sm:$0xff]
  %v275 = vld [vmem:[%s85 + $0x8] sm:$0xff]
  %v276 = vld [vmem:[%s85 + $0x10] sm:$0xff]
  %v277 = vld [vmem:[%s85 + $0x18] sm:$0xff]
  %v278 = vld [vmem:[%s77] sm:$0x1]
  %v280 = vperm.slane %v278, 0
  %282 = vmatpush.msra.mxu0 0.0
  %283 = vmatpush.msra.mxu0 0.0
  %284 = vmatpush.msra.mxu0 0.0
  %285 = vmatpush.msra.mxu0 0.0
  %286 = vmatpush.msra.mxu0 0.0
  %287 = vmatpush.msra.mxu0 0.0
  %288 = vmatpush.msra.mxu0 0.0
  %289 = vmatpush.msra.mxu0 0.0
  %290 = vmatpush.msra.mxu0 0.0
  %291 = vmatpush.msra.mxu0 0.0
  %292 = vmatpush.msra.mxu0 0.0
  %293 = vmatpush.msra.mxu0 0.0
  %294 = vmatpush.msra.mxu0 %v277
  %295 = vmatpush.msra.mxu0 %v276
  %296 = vmatpush.msra.mxu0 %v275
  %297 = vmatpush.msra.mxu0 %v274
  %298 = vmatmul.f32.gmra.mxu0 %v210
  %v299 = vpop.f32.mrf.mxu0
  %v300 = vadd.f32 %v280, %v299
  %301 = vmatmul.f32.gmra.mxu0 %v213
  %v302 = vpop.f32.mrf.mxu0
  %v303 = vadd.f32 %v280, %v302
  %304 = vmatmul.f32.gmra.mxu0 %v216
  %v305 = vpop.f32.mrf.mxu0
  %v306 = vadd.f32 %v280, %v305
  %307 = vmatmul.f32.gmra.mxu0 %v219
  %v308 = vpop.f32.mrf.mxu0
  %v309 = vadd.f32 %v280, %v308
  %310 = vmatmul.f32.gmra.mxu0 %v222
  %v311 = vpop.f32.mrf.mxu0
  %v312 = vadd.f32 %v280, %v311
  %313 = vmatmul.f32.gmra.mxu0 %v225
  %v314 = vpop.f32.mrf.mxu0
  %v315 = vadd.f32 %v280, %v314
  %316 = vmatmul.f32.gmra.mxu0 %v228
  %v317 = vpop.f32.mrf.mxu0
  %v318 = vadd.f32 %v280, %v317
  %319 = vmatmul.f32.gmra.mxu0 %v231
  %v320 = vpop.f32.mrf.mxu0
  %v321 = vadd.f32 %v280, %v320
  %322 = vdwg.mxu0
  %v323 = vld [vmem:[%s83] sm:$0xff]
  %v324 = vld [vmem:[%s83 + $0x8] sm:$0xff]
  %vm325 = vcmask 130048
  %v327 = vsel %vm325, 0.0, 0
  %329 = vmatpush.msra.mxu0 0.0
  %330 = vmatpush.msra.mxu0 0.0
  %331 = vmatpush.msra.mxu0 0.0
  %332 = vmatpush.msra.mxu0 0.0
  %333 = vmatpush.msra.mxu0 0.0
  %334 = vmatpush.msra.mxu0 0.0
  %335 = vmatpush.msra.mxu0 0.0
  %336 = vmatpush.msra.mxu0 0.0
  %337 = vmatpush.msra.mxu0 0.0
  %338 = vmatpush.msra.mxu0 0.0
  %339 = vmatpush.msra.mxu0 0.0
  %340 = vmatpush.msra.mxu0 0.0
  %341 = vmatpush.msra.mxu0 0.0
  %342 = vmatpush.msra.mxu0 0.0
  %343 = vmatpush.msra.mxu0 %v324
  %344 = vmatpush.msra.mxu0 %v323
  %345 = vmatmul.f32.gmra.mxu0 %v327
  %v346 = vpop.f32.mrf.mxu0
  %v347 = vadd.f32 0.0, %v346
  %348 = vdwg.mxu0
  %v349 = vadd.f32 %v251, %v347
  %v350 = vsub.f32 0.0, %v349
  %v351 = vmul.f32 %v350, 1.442695
  %v352 = vpow.pop %v351
  %v353 = vadd.f32 %v352, 1.0
  %v354 = vrcp.pop %v353
  %v355 = vmul.f32 %v353, %v354
  %v356 = vsub.f32 1.0, %v355
  %v357 = vmul.f32 %v354, %v356
  %v358 = vadd.f32 %v354, %v357
  %vm359 = vweird.f32 %v353
  %vm360 = vweird.f32 %v354
  %vm361 = vmor %vm359, %vm360
  %v362 = vsel %vm361, %v354, %v358
  %v363 = vand.u32 2147483647, %v353
  %vm364 = vcmp.eq.f32.partialorder %v363, 8.507059e+37
  %v365 = vand.u32 %v353, 2147483648
  %v366 = vor.u32 1.1754944e-38, %v365
  %v367 = vsel %vm364, %v366, %v362
  %v368 = vmul.f32 1.0, %v367
  %v369 = vtanh.pop %v349
  %v370 = vmul.f32 %v368, 0.0
  %372 = vrot.lane.b32.xlu0 %v369, 96
  %v373 = vpop.permute.xlu0 %372
  %v375 = vmul.f32 %v368, %v373
  %377 = vrot.lane.b32.xlu0 %v375, 16
  %v378 = vpop.permute.xlu0 %377
  %v380 = vadd.f32 %v370, %v378
  %v381 = vtanh.pop %v380
  %383 = vrot.lane.b32.xlu0 %v381, 32
  %v384 = vpop.permute.xlu0 %383
  %v386 = vmul.f32 %v368, %v384
  %388 = vset.pattern.permute.xlu0 0
  %389 = vperm.xlu0 %388, %v192
  %v390 = vpop.permute.xlu0 %389
  %v392 = vmul.f32 %v390, %v386
  %v393 = vsub.f32 1.0, %v192
  %395 = vset.pattern.permute.xlu0 0
  %396 = vperm.xlu0 %395, %v393
  %v397 = vpop.permute.xlu0 %396
  %v399 = vmul.f32 %v397, 0.0
  %v400 = vadd.f32 %v392, %v399
  %v401 = vmul.f32 %v390, %v380
  %v402 = vadd.f32 %v401, %v399
  %404 = vrot.lane.b32.xlu0 %v400, 80
  %v405 = vpop.permute.xlu0 %404
  %v406 = vsel %vm325, %v405, 0
  %408 = vmatpush.msra.mxu0 0.0
  %409 = vmatpush.msra.mxu0 0.0
  %410 = vmatpush.msra.mxu0 0.0
  %411 = vmatpush.msra.mxu0 0.0
  %412 = vmatpush.msra.mxu0 0.0
  %413 = vmatpush.msra.mxu0 0.0
  %414 = vmatpush.msra.mxu0 0.0
  %415 = vmatpush.msra.mxu0 0.0
  %416 = vmatpush.msra.mxu0 0.0
  %417 = vmatpush.msra.mxu0 0.0
  %418 = vmatpush.msra.mxu0 0.0
  %419 = vmatpush.msra.mxu0 0.0
  %420 = vmatpush.msra.mxu0 0.0
  %421 = vmatpush.msra.mxu0 0.0
  %422 = vmatpush.msra.mxu0 %v324
  %423 = vmatpush.msra.mxu0 %v323
  %424 = vmatmul.f32.gmra.mxu0 %v406
  %v425 = vpop.f32.mrf.mxu0
  %v426 = vadd.f32 0.0, %v425
  %427 = vdwg.mxu0
  %v428 = vadd.f32 %v254, %v426
  %v429 = vsub.f32 0.0, %v428
  %v430 = vmul.f32 %v429, 1.442695
  %v431 = vpow.pop %v430
  %v432 = vadd.f32 %v431, 1.0
  %v433 = vrcp.pop %v432
  %v434 = vmul.f32 %v432, %v433
  %v435 = vsub.f32 1.0, %v434
  %v436 = vmul.f32 %v433, %v435
  %v437 = vadd.f32 %v433, %v436
  %vm438 = vweird.f32 %v432
  %vm439 = vweird.f32 %v433
  %vm440 = vmor %vm438, %vm439
  %v441 = vsel %vm440, %v433, %v437
  %v442 = vand.u32 2147483647, %v432
  %vm443 = vcmp.eq.f32.partialorder %v442, 8.507059e+37
  %v444 = vand.u32 %v432, 2147483648
  %v445 = vor.u32 1.1754944e-38, %v444
  %v446 = vsel %vm443, %v445, %v441
  %v447 = vmul.f32 1.0, %v446
  %v448 = vtanh.pop %v428
  %v449 = vmul.f32 %v447, %v402
  %451 = vrot.lane.b32.xlu0 %v448, 96
  %v452 = vpop.permute.xlu0 %451
  %v454 = vmul.f32 %v447, %v452
  %456 = vrot.lane.b32.xlu0 %v454, 16
  %v457 = vpop.permute.xlu0 %456
  %v459 = vadd.f32 %v449, %v457
  %v460 = vtanh.pop %v459
  %462 = vrot.lane.b32.xlu0 %v460, 32
  %v463 = vpop.permute.xlu0 %462
  %v465 = vmul.f32 %v447, %v463
  %467 = vset.pattern.permute.xlu0 0
  %468 = vperm.xlu0 %467, %v193
  %v469 = vpop.permute.xlu0 %468
  %v471 = vmul.f32 %v469, %v465
  %v472 = vsub.f32 1.0, %v193
  %474 = vset.pattern.permute.xlu0 0
  %475 = vperm.xlu0 %474, %v472
  %v476 = vpop.permute.xlu0 %475
  %v478 = vmul.f32 %v476, %v400
  %v479 = vadd.f32 %v471, %v478
  %v480 = vmul.f32 %v469, %v459
  %v481 = vmul.f32 %v476, %v402
  %v482 = vadd.f32 %v480, %v481
  %484 = vrot.lane.b32.xlu0 %v479, 80
  %v485 = vpop.permute.xlu0 %484
  %v486 = vsel %vm325, %v485, 0
  %488 = vmatpush.msra.mxu0 0.0
  %489 = vmatpush.msra.mxu0 0.0
  %490 = vmatpush.msra.mxu0 0.0
  %491 = vmatpush.msra.mxu0 0.0
  %492 = vmatpush.msra.mxu0 0.0
  %493 = vmatpush.msra.mxu0 0.0
  %494 = vmatpush.msra.mxu0 0.0
  %495 = vmatpush.msra.mxu0 0.0
  %496 = vmatpush.msra.mxu0 0.0
  %497 = vmatpush.msra.mxu0 0.0
  %498 = vmatpush.msra.mxu0 0.0
  %499 = vmatpush.msra.mxu0 0.0
  %500 = vmatpush.msra.mxu0 0.0
  %501 = vmatpush.msra.mxu0 0.0
  %502 = vmatpush.msra.mxu0 %v324
  %503 = vmatpush.msra.mxu0 %v323
  %504 = vmatmul.f32.gmra.mxu0 %v486
  %v505 = vpop.f32.mrf.mxu0
  %v506 = vadd.f32 0.0, %v505
  %507 = vdwg.mxu0
  %v508 = vadd.f32 %v257, %v506
  %v509 = vsub.f32 0.0, %v508
  %v510 = vmul.f32 %v509, 1.442695
  %v511 = vpow.pop %v510
  %v512 = vadd.f32 %v511, 1.0
  %v513 = vrcp.pop %v512
  %v514 = vmul.f32 %v512, %v513
  %v515 = vsub.f32 1.0, %v514
  %v516 = vmul.f32 %v513, %v515
  %v517 = vadd.f32 %v513, %v516
  %vm518 = vweird.f32 %v512
  %vm519 = vweird.f32 %v513
  %vm520 = vmor %vm518, %vm519
  %v521 = vsel %vm520, %v513, %v517
  %v522 = vand.u32 2147483647, %v512
  %vm523 = vcmp.eq.f32.partialorder %v522, 8.507059e+37
  %v524 = vand.u32 %v512, 2147483648
  %v525 = vor.u32 1.1754944e-38, %v524
  %v526 = vsel %vm523, %v525, %v521
  %v527 = vmul.f32 1.0, %v526
  %v528 = vtanh.pop %v508
  %v529 = vmul.f32 %v527, %v482
  %531 = vrot.lane.b32.xlu0 %v528, 96
  %v532 = vpop.permute.xlu0 %531
  %v534 = vmul.f32 %v527, %v532
  %536 = vrot.lane.b32.xlu0 %v534, 16
  %v537 = vpop.permute.xlu0 %536
  %v539 = vadd.f32 %v529, %v537
  %v540 = vtanh.pop %v539
  %542 = vrot.lane.b32.xlu0 %v540, 32
  %v543 = vpop.permute.xlu0 %542
  %v545 = vmul.f32 %v527, %v543
  %547 = vset.pattern.permute.xlu0 0
  %548 = vperm.xlu0 %547, %v194
  %v549 = vpop.permute.xlu0 %548
  %v551 = vmul.f32 %v549, %v545
  %v552 = vsub.f32 1.0, %v194
  %554 = vset.pattern.permute.xlu0 0
  %555 = vperm.xlu0 %554, %v552
  %v556 = vpop.permute.xlu0 %555
  %v558 = vmul.f32 %v556, %v479
  %v559 = vadd.f32 %v551, %v558
  %v560 = vmul.f32 %v549, %v539
  %v561 = vmul.f32 %v556, %v482
  %v562 = vadd.f32 %v560, %v561
  %564 = vrot.lane.b32.xlu0 %v559, 80
  %v565 = vpop.permute.xlu0 %564
  %v566 = vsel %vm325, %v565, 0
  %568 = vmatpush.msra.mxu0 0.0
  %569 = vmatpush.msra.mxu0 0.0
  %570 = vmatpush.msra.mxu0 0.0
  %571 = vmatpush.msra.mxu0 0.0
  %572 = vmatpush.msra.mxu0 0.0
  %573 = vmatpush.msra.mxu0 0.0
  %574 = vmatpush.msra.mxu0 0.0
  %575 = vmatpush.msra.mxu0 0.0
  %576 = vmatpush.msra.mxu0 0.0
  %577 = vmatpush.msra.mxu0 0.0
  %578 = vmatpush.msra.mxu0 0.0
  %579 = vmatpush.msra.mxu0 0.0
  %580 = vmatpush.msra.mxu0 0.0
  %581 = vmatpush.msra.mxu0 0.0
  %582 = vmatpush.msra.mxu0 %v324
  %583 = vmatpush.msra.mxu0 %v323
  %584 = vmatmul.f32.gmra.mxu0 %v566
  %v585 = vpop.f32.mrf.mxu0
  %v586 = vadd.f32 0.0, %v585
  %587 = vdwg.mxu0
  %v588 = vadd.f32 %v260, %v586
  %v589 = vsub.f32 0.0, %v588
  %v590 = vmul.f32 %v589, 1.442695
  %v591 = vpow.pop %v590
  %v592 = vadd.f32 %v591, 1.0
  %v593 = vrcp.pop %v592
  %v594 = vmul.f32 %v592, %v593
  %v595 = vsub.f32 1.0, %v594
  %v596 = vmul.f32 %v593, %v595
  %v597 = vadd.f32 %v593, %v596
  %vm598 = vweird.f32 %v592
  %vm599 = vweird.f32 %v593
  %vm600 = vmor %vm598, %vm599
  %v601 = vsel %vm600, %v593, %v597
  %v602 = vand.u32 2147483647, %v592
  %vm603 = vcmp.eq.f32.partialorder %v602, 8.507059e+37
  %v604 = vand.u32 %v592, 2147483648
  %v605 = vor.u32 1.1754944e-38, %v604
  %v606 = vsel %vm603, %v605, %v601
  %v607 = vmul.f32 1.0, %v606
  %v608 = vtanh.pop %v588
  %v609 = vmul.f32 %v607, %v562
  %611 = vrot.lane.b32.xlu0 %v608, 96
  %v612 = vpop.permute.xlu0 %611
  %v614 = vmul.f32 %v607, %v612
  %616 = vrot.lane.b32.xlu0 %v614, 16
  %v617 = vpop.permute.xlu0 %616
  %v619 = vadd.f32 %v609, %v617
  %v620 = vtanh.pop %v619
  %622 = vrot.lane.b32.xlu0 %v620, 32
  %v623 = vpop.permute.xlu0 %622
  %v625 = vmul.f32 %v607, %v623
  %627 = vset.pattern.permute.xlu0 0
  %628 = vperm.xlu0 %627, %v195
  %v629 = vpop.permute.xlu0 %628
  %v631 = vmul.f32 %v629, %v625
  %v632 = vsub.f32 1.0, %v195
  %634 = vset.pattern.permute.xlu0 0
  %635 = vperm.xlu0 %634, %v632
  %v636 = vpop.permute.xlu0 %635
  %v638 = vmul.f32 %v636, %v559
  %v639 = vadd.f32 %v631, %v638
  %v640 = vmul.f32 %v629, %v619
  %v641 = vmul.f32 %v636, %v562
  %v642 = vadd.f32 %v640, %v641
  %644 = vrot.lane.b32.xlu0 %v639, 80
  %v645 = vpop.permute.xlu0 %644
  %v646 = vsel %vm325, %v645, 0
  %648 = vmatpush.msra.mxu0 0.0
  %649 = vmatpush.msra.mxu0 0.0
  %650 = vmatpush.msra.mxu0 0.0
  %651 = vmatpush.msra.mxu0 0.0
  %652 = vmatpush.msra.mxu0 0.0
  %653 = vmatpush.msra.mxu0 0.0
  %654 = vmatpush.msra.mxu0 0.0
  %655 = vmatpush.msra.mxu0 0.0
  %656 = vmatpush.msra.mxu0 0.0
  %657 = vmatpush.msra.mxu0 0.0
  %658 = vmatpush.msra.mxu0 0.0
  %659 = vmatpush.msra.mxu0 0.0
  %660 = vmatpush.msra.mxu0 0.0
  %661 = vmatpush.msra.mxu0 0.0
  %662 = vmatpush.msra.mxu0 %v324
  %663 = vmatpush.msra.mxu0 %v323
  %664 = vmatmul.f32.gmra.mxu0 %v646
  %v665 = vpop.f32.mrf.mxu0
  %v666 = vadd.f32 0.0, %v665
  %667 = vdwg.mxu0
  %v668 = vadd.f32 %v263, %v666
  %v669 = vsub.f32 0.0, %v668
  %v670 = vmul.f32 %v669, 1.442695
  %v671 = vpow.pop %v670
  %v672 = vadd.f32 %v671, 1.0
  %v673 = vrcp.pop %v672
  %v674 = vmul.f32 %v672, %v673
  %v675 = vsub.f32 1.0, %v674
  %v676 = vmul.f32 %v673, %v675
  %v677 = vadd.f32 %v673, %v676
  %vm678 = vweird.f32 %v672
  %vm679 = vweird.f32 %v673
  %vm680 = vmor %vm678, %vm679
  %v681 = vsel %vm680, %v673, %v677
  %v682 = vand.u32 2147483647, %v672
  %vm683 = vcmp.eq.f32.partialorder %v682, 8.507059e+37
  %v684 = vand.u32 %v672, 2147483648
  %v685 = vor.u32 1.1754944e-38, %v684
  %v686 = vsel %vm683, %v685, %v681
  %v687 = vmul.f32 1.0, %v686
  %v688 = vtanh.pop %v668
  %v689 = vmul.f32 %v687, %v642
  %691 = vrot.lane.b32.xlu0 %v688, 96
  %v692 = vpop.permute.xlu0 %691
  %v694 = vmul.f32 %v687, %v692
  %696 = vrot.lane.b32.xlu0 %v694, 16
  %v697 = vpop.permute.xlu0 %696
  %v699 = vadd.f32 %v689, %v697
  %v700 = vtanh.pop %v699
  %702 = vrot.lane.b32.xlu0 %v700, 32
  %v703 = vpop.permute.xlu0 %702
  %v705 = vmul.f32 %v687, %v703
  %707 = vset.pattern.permute.xlu0 0
  %708 = vperm.xlu0 %707, %v196
  %v709 = vpop.permute.xlu0 %708
  %v711 = vmul.f32 %v709, %v705
  %v712 = vsub.f32 1.0, %v196
  %714 = vset.pattern.permute.xlu0 0
  %715 = vperm.xlu0 %714, %v712
  %v716 = vpop.permute.xlu0 %715
  %v718 = vmul.f32 %v716, %v639
  %v719 = vadd.f32 %v711, %v718
  %v720 = vmul.f32 %v709, %v699
  %v721 = vmul.f32 %v716, %v642
  %v722 = vadd.f32 %v720, %v721
  %724 = vrot.lane.b32.xlu0 %v719, 80
  %v725 = vpop.permute.xlu0 %724
  %v726 = vsel %vm325, %v725, 0
  %728 = vmatpush.msra.mxu0 0.0
  %729 = vmatpush.msra.mxu0 0.0
  %730 = vmatpush.msra.mxu0 0.0
  %731 = vmatpush.msra.mxu0 0.0
  %732 = vmatpush.msra.mxu0 0.0
  %733 = vmatpush.msra.mxu0 0.0
  %734 = vmatpush.msra.mxu0 0.0
  %735 = vmatpush.msra.mxu0 0.0
  %736 = vmatpush.msra.mxu0 0.0
  %737 = vmatpush.msra.mxu0 0.0
  %738 = vmatpush.msra.mxu0 0.0
  %739 = vmatpush.msra.mxu0 0.0
  %740 = vmatpush.msra.mxu0 0.0
  %741 = vmatpush.msra.mxu0 0.0
  %742 = vmatpush.msra.mxu0 %v324
  %743 = vmatpush.msra.mxu0 %v323
  %744 = vmatmul.f32.gmra.mxu0 %v726
  %v745 = vpop.f32.mrf.mxu0
  %v746 = vadd.f32 0.0, %v745
  %747 = vdwg.mxu0
  %v748 = vadd.f32 %v266, %v746
  %v749 = vsub.f32 0.0, %v748
  %v750 = vmul.f32 %v749, 1.442695
  %v751 = vpow.pop %v750
  %v752 = vadd.f32 %v751, 1.0
  %v753 = vrcp.pop %v752
  %v754 = vmul.f32 %v752, %v753
  %v755 = vsub.f32 1.0, %v754
  %v756 = vmul.f32 %v753, %v755
  %v757 = vadd.f32 %v753, %v756
  %vm758 = vweird.f32 %v752
  %vm759 = vweird.f32 %v753
  %vm760 = vmor %vm758, %vm759
  %v761 = vsel %vm760, %v753, %v757
  %v762 = vand.u32 2147483647, %v752
  %vm763 = vcmp.eq.f32.partialorder %v762, 8.507059e+37
  %v764 = vand.u32 %v752, 2147483648
  %v765 = vor.u32 1.1754944e-38, %v764
  %v766 = vsel %vm763, %v765, %v761
  %v767 = vmul.f32 1.0, %v766
  %v768 = vtanh.pop %v748
  %v769 = vmul.f32 %v767, %v722
  %771 = vrot.lane.b32.xlu0 %v768, 96
  %v772 = vpop.permute.xlu0 %771
  %v774 = vmul.f32 %v767, %v772
  %776 = vrot.lane.b32.xlu0 %v774, 16
  %v777 = vpop.permute.xlu0 %776
  %v779 = vadd.f32 %v769, %v777
  %v780 = vtanh.pop %v779
  %782 = vrot.lane.b32.xlu0 %v780, 32
  %v783 = vpop.permute.xlu0 %782
  %v785 = vmul.f32 %v767, %v783
  %787 = vset.pattern.permute.xlu0 0
  %788 = vperm.xlu0 %787, %v197
  %v789 = vpop.permute.xlu0 %788
  %v791 = vmul.f32 %v789, %v785
  %v792 = vsub.f32 1.0, %v197
  %794 = vset.pattern.permute.xlu0 0
  %795 = vperm.xlu0 %794, %v792
  %v796 = vpop.permute.xlu0 %795
  %v798 = vmul.f32 %v796, %v719
  %v799 = vadd.f32 %v791, %v798
  %v800 = vmul.f32 %v789, %v779
  %v801 = vmul.f32 %v796, %v722
  %v802 = vadd.f32 %v800, %v801
  %804 = vrot.lane.b32.xlu0 %v799, 80
  %v805 = vpop.permute.xlu0 %804
  %v806 = vsel %vm325, %v805, 0
  %808 = vmatpush.msra.mxu0 0.0
  %809 = vmatpush.msra.mxu0 0.0
  %810 = vmatpush.msra.mxu0 0.0
  %811 = vmatpush.msra.mxu0 0.0
  %812 = vmatpush.msra.mxu0 0.0
  %813 = vmatpush.msra.mxu0 0.0
  %814 = vmatpush.msra.mxu0 0.0
  %815 = vmatpush.msra.mxu0 0.0
  %816 = vmatpush.msra.mxu0 0.0
  %817 = vmatpush.msra.mxu0 0.0
  %818 = vmatpush.msra.mxu0 0.0
  %819 = vmatpush.msra.mxu0 0.0
  %820 = vmatpush.msra.mxu0 0.0
  %821 = vmatpush.msra.mxu0 0.0
  %822 = vmatpush.msra.mxu0 %v324
  %823 = vmatpush.msra.mxu0 %v323
  %824 = vmatmul.f32.gmra.mxu0 %v806
  %v825 = vpop.f32.mrf.mxu0
  %v826 = vadd.f32 0.0, %v825
  %827 = vdwg.mxu0
  %v828 = vadd.f32 %v269, %v826
  %v829 = vsub.f32 0.0, %v828
  %v830 = vmul.f32 %v829, 1.442695
  %v831 = vpow.pop %v830
  %v832 = vadd.f32 %v831, 1.0
  %v833 = vrcp.pop %v832
  %v834 = vmul.f32 %v832, %v833
  %v835 = vsub.f32 1.0, %v834
  %v836 = vmul.f32 %v833, %v835
  %v837 = vadd.f32 %v833, %v836
  %vm838 = vweird.f32 %v832
  %vm839 = vweird.f32 %v833
  %vm840 = vmor %vm838, %vm839
  %v841 = vsel %vm840, %v833, %v837
  %v842 = vand.u32 2147483647, %v832
  %vm843 = vcmp.eq.f32.partialorder %v842, 8.507059e+37
  %v844 = vand.u32 %v832, 2147483648
  %v845 = vor.u32 1.1754944e-38, %v844
  %v846 = vsel %vm843, %v845, %v841
  %v847 = vmul.f32 1.0, %v846
  %v848 = vtanh.pop %v828
  %v849 = vmul.f32 %v847, %v802
  %851 = vrot.lane.b32.xlu0 %v848, 96
  %v852 = vpop.permute.xlu0 %851
  %v854 = vmul.f32 %v847, %v852
  %856 = vrot.lane.b32.xlu0 %v854, 16
  %v857 = vpop.permute.xlu0 %856
  %v859 = vadd.f32 %v849, %v857
  %v860 = vtanh.pop %v859
  %862 = vrot.lane.b32.xlu0 %v860, 32
  %v863 = vpop.permute.xlu0 %862
  %v865 = vmul.f32 %v847, %v863
  %867 = vset.pattern.permute.xlu0 0
  %868 = vperm.xlu0 %867, %v198
  %v869 = vpop.permute.xlu0 %868
  %v871 = vmul.f32 %v869, %v865
  %v872 = vsub.f32 1.0, %v198
  %874 = vset.pattern.permute.xlu0 0
  %875 = vperm.xlu0 %874, %v872
  %v876 = vpop.permute.xlu0 %875
  %v878 = vmul.f32 %v876, %v799
  %v879 = vadd.f32 %v871, %v878
  %v880 = vmul.f32 %v869, %v859
  %v881 = vmul.f32 %v876, %v802
  %v882 = vadd.f32 %v880, %v881
  %884 = vrot.lane.b32.xlu0 %v879, 80
  %v885 = vpop.permute.xlu0 %884
  %v886 = vsel %vm325, %v885, 0
  %888 = vmatpush.msra.mxu0 0.0
  %889 = vmatpush.msra.mxu0 0.0
  %890 = vmatpush.msra.mxu0 0.0
  %891 = vmatpush.msra.mxu0 0.0
  %892 = vmatpush.msra.mxu0 0.0
  %893 = vmatpush.msra.mxu0 0.0
  %894 = vmatpush.msra.mxu0 0.0
  %895 = vmatpush.msra.mxu0 0.0
  %896 = vmatpush.msra.mxu0 0.0
  %897 = vmatpush.msra.mxu0 0.0
  %898 = vmatpush.msra.mxu0 0.0
  %899 = vmatpush.msra.mxu0 0.0
  %900 = vmatpush.msra.mxu0 0.0
  %901 = vmatpush.msra.mxu0 0.0
  %902 = vmatpush.msra.mxu0 %v324
  %903 = vmatpush.msra.mxu0 %v323
  %904 = vmatmul.f32.gmra.mxu0 %v886
  %v905 = vpop.f32.mrf.mxu0
  %v906 = vadd.f32 0.0, %v905
  %907 = vdwg.mxu0
  %v908 = vadd.f32 %v272, %v906
  %v909 = vsub.f32 0.0, %v908
  %v910 = vmul.f32 %v909, 1.442695
  %v911 = vpow.pop %v910
  %v912 = vadd.f32 %v911, 1.0
  %v913 = vrcp.pop %v912
  %v914 = vmul.f32 %v912, %v913
  %v915 = vsub.f32 1.0, %v914
  %v916 = vmul.f32 %v913, %v915
  %v917 = vadd.f32 %v913, %v916
  %vm918 = vweird.f32 %v912
  %vm919 = vweird.f32 %v913
  %vm920 = vmor %vm918, %vm919
  %v921 = vsel %vm920, %v913, %v917
  %v922 = vand.u32 2147483647, %v912
  %vm923 = vcmp.eq.f32.partialorder %v922, 8.507059e+37
  %v924 = vand.u32 %v912, 2147483648
  %v925 = vor.u32 1.1754944e-38, %v924
  %v926 = vsel %vm923, %v925, %v921
  %v927 = vmul.f32 1.0, %v926
  %v928 = vtanh.pop %v908
  %v929 = vmul.f32 %v927, %v882
  %931 = vrot.lane.b32.xlu0 %v928, 96
  %v932 = vpop.permute.xlu0 %931
  %v934 = vmul.f32 %v927, %v932
  %936 = vrot.lane.b32.xlu0 %v934, 16
  %v937 = vpop.permute.xlu0 %936
  %v939 = vadd.f32 %v929, %v937
  %v940 = vtanh.pop %v939
  %942 = vrot.lane.b32.xlu0 %v940, 32
  %v943 = vpop.permute.xlu0 %942
  %v945 = vmul.f32 %v927, %v943
  %947 = vset.pattern.permute.xlu0 0
  %948 = vperm.xlu0 %947, %v199
  %v949 = vpop.permute.xlu0 %948
  %v951 = vmul.f32 %v949, %v945
  %v952 = vsub.f32 1.0, %v199
  %954 = vset.pattern.permute.xlu0 0
  %955 = vperm.xlu0 %954, %v952
  %v956 = vpop.permute.xlu0 %955
  %v958 = vmul.f32 %v956, %v879
  %v959 = vadd.f32 %v951, %v958
  %v960 = vld [vmem:[%s81] sm:$0xff]
  %v961 = vld [vmem:[%s81 + $0x8] sm:$0xff]
  %962 = vmatpush.msra.mxu0 0.0
  %963 = vmatpush.msra.mxu0 0.0
  %964 = vmatpush.msra.mxu0 0.0
  %965 = vmatpush.msra.mxu0 0.0
  %966 = vmatpush.msra.mxu0 0.0
  %967 = vmatpush.msra.mxu0 0.0
  %968 = vmatpush.msra.mxu0 0.0
  %969 = vmatpush.msra.mxu0 0.0
  %970 = vmatpush.msra.mxu0 0.0
  %971 = vmatpush.msra.mxu0 0.0
  %972 = vmatpush.msra.mxu0 0.0
  %973 = vmatpush.msra.mxu0 0.0
  %974 = vmatpush.msra.mxu0 0.0
  %975 = vmatpush.msra.mxu0 0.0
  %976 = vmatpush.msra.mxu0 %v961
  %977 = vmatpush.msra.mxu0 %v960
  %978 = vmatmul.f32.gmra.mxu0 %v327
  %v979 = vpop.f32.mrf.mxu0
  %v980 = vadd.f32 0.0, %v979
  %981 = vdwg.mxu0
  %v982 = vadd.f32 %v321, %v980
  %v983 = vsub.f32 0.0, %v982
  %v984 = vmul.f32 %v983, 1.442695
  %v985 = vpow.pop %v984
  %v986 = vadd.f32 %v985, 1.0
  %v987 = vrcp.pop %v986
  %v988 = vmul.f32 %v986, %v987
  %v989 = vsub.f32 1.0, %v988
  %v990 = vmul.f32 %v987, %v989
  %v991 = vadd.f32 %v987, %v990
  %vm992 = vweird.f32 %v986
  %vm993 = vweird.f32 %v987
  %vm994 = vmor %vm992, %vm993
  %v995 = vsel %vm994, %v987, %v991
  %v996 = vand.u32 2147483647, %v986
  %vm997 = vcmp.eq.f32.partialorder %v996, 8.507059e+37
  %v998 = vand.u32 %v986, 2147483648
  %v999 = vor.u32 1.1754944e-38, %v998
  %v1000 = vsel %vm997, %v999, %v995
  %v1001 = vmul.f32 1.0, %v1000
  %v1002 = vtanh.pop %v982
  %v1003 = vmul.f32 %v1001, 0.0
  %1005 = vrot.lane.b32.xlu0 %v1002, 96
  %v1006 = vpop.permute.xlu0 %1005
  %v1008 = vmul.f32 %v1001, %v1006
  %1010 = vrot.lane.b32.xlu0 %v1008, 16
  %v1011 = vpop.permute.xlu0 %1010
  %v1013 = vadd.f32 %v1003, %v1011
  %v1014 = vtanh.pop %v1013
  %1016 = vrot.lane.b32.xlu0 %v1014, 32
  %v1017 = vpop.permute.xlu0 %1016
  %v1019 = vmul.f32 %v1001, %v1017
  %v1020 = vmul.f32 %v949, %v1019
  %v1021 = vmul.f32 %v956, 0.0
  %v1022 = vadd.f32 %v1020, %v1021
  %v1023 = vmul.f32 %v949, %v1013
  %v1024 = vadd.f32 %v1023, %v1021
  %1026 = vrot.lane.b32.xlu0 %v1022, 80
  %v1027 = vpop.permute.xlu0 %1026
  %v1028 = vsel %vm325, %v1027, 0
  %1030 = vmatpush.msra.mxu0 0.0
  %1031 = vmatpush.msra.mxu0 0.0
  %1032 = vmatpush.msra.mxu0 0.0
  %1033 = vmatpush.msra.mxu0 0.0
  %1034 = vmatpush.msra.mxu0 0.0
  %1035 = vmatpush.msra.mxu0 0.0
  %1036 = vmatpush.msra.mxu0 0.0
  %1037 = vmatpush.msra.mxu0 0.0
  %1038 = vmatpush.msra.mxu0 0.0
  %1039 = vmatpush.msra.mxu0 0.0
  %1040 = vmatpush.msra.mxu0 0.0
  %1041 = vmatpush.msra.mxu0 0.0
  %1042 = vmatpush.msra.mxu0 0.0
  %1043 = vmatpush.msra.mxu0 0.0
  %1044 = vmatpush.msra.mxu0 %v961
  %1045 = vmatpush.msra.mxu0 %v960
  %1046 = vmatmul.f32.gmra.mxu0 %v1028
  %v1047 = vpop.f32.mrf.mxu0
  %v1048 = vadd.f32 0.0, %v1047
  %1049 = vdwg.mxu0
  %v1050 = vadd.f32 %v318, %v1048
  %v1051 = vsub.f32 0.0, %v1050
  %v1052 = vmul.f32 %v1051, 1.442695
  %v1053 = vpow.pop %v1052
  %v1054 = vadd.f32 %v1053, 1.0
  %v1055 = vrcp.pop %v1054
  %v1056 = vmul.f32 %v1054, %v1055
  %v1057 = vsub.f32 1.0, %v1056
  %v1058 = vmul.f32 %v1055, %v1057
  %v1059 = vadd.f32 %v1055, %v1058
  %vm1060 = vweird.f32 %v1054
  %vm1061 = vweird.f32 %v1055
  %vm1062 = vmor %vm1060, %vm1061
  %v1063 = vsel %vm1062, %v1055, %v1059
  %v1064 = vand.u32 2147483647, %v1054
  %vm1065 = vcmp.eq.f32.partialorder %v1064, 8.507059e+37
  %v1066 = vand.u32 %v1054, 2147483648
  %v1067 = vor.u32 1.1754944e-38, %v1066
  %v1068 = vsel %vm1065, %v1067, %v1063
  %v1069 = vmul.f32 1.0, %v1068
  %v1070 = vtanh.pop %v1050
  %v1071 = vmul.f32 %v1069, %v1024
  %1073 = vrot.lane.b32.xlu0 %v1070, 96
  %v1074 = vpop.permute.xlu0 %1073
  %v1076 = vmul.f32 %v1069, %v1074
  %1078 = vrot.lane.b32.xlu0 %v1076, 16
  %v1079 = vpop.permute.xlu0 %1078
  %v1081 = vadd.f32 %v1071, %v1079
  %v1082 = vtanh.pop %v1081
  %1084 = vrot.lane.b32.xlu0 %v1082, 32
  %v1085 = vpop.permute.xlu0 %1084
  %v1087 = vmul.f32 %v1069, %v1085
  %v1088 = vmul.f32 %v869, %v1087
  %v1089 = vmul.f32 %v876, %v1022
  %v1090 = vadd.f32 %v1088, %v1089
  %v1091 = vmul.f32 %v869, %v1081
  %v1092 = vmul.f32 %v876, %v1024
  %v1093 = vadd.f32 %v1091, %v1092
  %1095 = vrot.lane.b32.xlu0 %v1090, 80
  %v1096 = vpop.permute.xlu0 %1095
  %v1097 = vsel %vm325, %v1096, 0
  %1099 = vmatpush.msra.mxu0 0.0
  %1100 = vmatpush.msra.mxu0 0.0
  %1101 = vmatpush.msra.mxu0 0.0
  %1102 = vmatpush.msra.mxu0 0.0
  %1103 = vmatpush.msra.mxu0 0.0
  %1104 = vmatpush.msra.mxu0 0.0
  %1105 = vmatpush.msra.mxu0 0.0
  %1106 = vmatpush.msra.mxu0 0.0
  %1107 = vmatpush.msra.mxu0 0.0
  %1108 = vmatpush.msra.mxu0 0.0
  %1109 = vmatpush.msra.mxu0 0.0
  %1110 = vmatpush.msra.mxu0 0.0
  %1111 = vmatpush.msra.mxu0 0.0
  %1112 = vmatpush.msra.mxu0 0.0
  %1113 = vmatpush.msra.mxu0 %v961
  %1114 = vmatpush.msra.mxu0 %v960
  %1115 = vmatmul.f32.gmra.mxu0 %v1097
  %v1116 = vpop.f32.mrf.mxu0
  %v1117 = vadd.f32 0.0, %v1116
  %1118 = vdwg.mxu0
  %v1119 = vadd.f32 %v315, %v1117
  %v1120 = vsub.f32 0.0, %v1119
  %v1121 = vmul.f32 %v1120, 1.442695
  %v1122 = vpow.pop %v1121
  %v1123 = vadd.f32 %v1122, 1.0
  %v1124 = vrcp.pop %v1123
  %v1125 = vmul.f32 %v1123, %v1124
  %v1126 = vsub.f32 1.0, %v1125
  %v1127 = vmul.f32 %v1124, %v1126
  %v1128 = vadd.f32 %v1124, %v1127
  %vm1129 = vweird.f32 %v1123
  %vm1130 = vweird.f32 %v1124
  %vm1131 = vmor %vm1129, %vm1130
  %v1132 = vsel %vm1131, %v1124, %v1128
  %v1133 = vand.u32 2147483647, %v1123
  %vm1134 = vcmp.eq.f32.partialorder %v1133, 8.507059e+37
  %v1135 = vand.u32 %v1123, 2147483648
  %v1136 = vor.u32 1.1754944e-38, %v1135
  %v1137 = vsel %vm1134, %v1136, %v1132
  %v1138 = vmul.f32 1.0, %v1137
  %v1139 = vtanh.pop %v1119
  %v1140 = vmul.f32 %v1138, %v1093
  %1142 = vrot.lane.b32.xlu0 %v1139, 96
  %v1143 = vpop.permute.xlu0 %1142
  %v1145 = vmul.f32 %v1138, %v1143
  %1147 = vrot.lane.b32.xlu0 %v1145, 16
  %v1148 = vpop.permute.xlu0 %1147
  %v1150 = vadd.f32 %v1140, %v1148
  %v1151 = vtanh.pop %v1150
  %1153 = vrot.lane.b32.xlu0 %v1151, 32
  %v1154 = vpop.permute.xlu0 %1153
  %v1156 = vmul.f32 %v1138, %v1154
  %v1157 = vmul.f32 %v789, %v1156
  %v1158 = vmul.f32 %v796, %v1090
  %v1159 = vadd.f32 %v1157, %v1158
  %v1160 = vmul.f32 %v789, %v1150
  %v1161 = vmul.f32 %v796, %v1093
  %v1162 = vadd.f32 %v1160, %v1161
  %1164 = vrot.lane.b32.xlu0 %v1159, 80
  %v1165 = vpop.permute.xlu0 %1164
  %v1166 = vsel %vm325, %v1165, 0
  %1168 = vmatpush.msra.mxu0 0.0
  %1169 = vmatpush.msra.mxu0 0.0
  %1170 = vmatpush.msra.mxu0 0.0
  %1171 = vmatpush.msra.mxu0 0.0
  %1172 = vmatpush.msra.mxu0 0.0
  %1173 = vmatpush.msra.mxu0 0.0
  %1174 = vmatpush.msra.mxu0 0.0
  %1175 = vmatpush.msra.mxu0 0.0
  %1176 = vmatpush.msra.mxu0 0.0
  %1177 = vmatpush.msra.mxu0 0.0
  %1178 = vmatpush.msra.mxu0 0.0
  %1179 = vmatpush.msra.mxu0 0.0
  %1180 = vmatpush.msra.mxu0 0.0
  %1181 = vmatpush.msra.mxu0 0.0
  %1182 = vmatpush.msra.mxu0 %v961
  %1183 = vmatpush.msra.mxu0 %v960
  %1184 = vmatmul.f32.gmra.mxu0 %v1166
  %v1185 = vpop.f32.mrf.mxu0
  %v1186 = vadd.f32 0.0, %v1185
  %1187 = vdwg.mxu0
  %v1188 = vadd.f32 %v312, %v1186
  %v1189 = vsub.f32 0.0, %v1188
  %v1190 = vmul.f32 %v1189, 1.442695
  %v1191 = vpow.pop %v1190
  %v1192 = vadd.f32 %v1191, 1.0
  %v1193 = vrcp.pop %v1192
  %v1194 = vmul.f32 %v1192, %v1193
  %v1195 = vsub.f32 1.0, %v1194
  %v1196 = vmul.f32 %v1193, %v1195
  %v1197 = vadd.f32 %v1193, %v1196
  %vm1198 = vweird.f32 %v1192
  %vm1199 = vweird.f32 %v1193
  %vm1200 = vmor %vm1198, %vm1199
  %v1201 = vsel %vm1200, %v1193, %v1197
  %v1202 = vand.u32 2147483647, %v1192
  %vm1203 = vcmp.eq.f32.partialorder %v1202, 8.507059e+37
  %v1204 = vand.u32 %v1192, 2147483648
  %v1205 = vor.u32 1.1754944e-38, %v1204
  %v1206 = vsel %vm1203, %v1205, %v1201
  %v1207 = vmul.f32 1.0, %v1206
  %v1208 = vtanh.pop %v1188
  %v1209 = vmul.f32 %v1207, %v1162
  %1211 = vrot.lane.b32.xlu0 %v1208, 96
  %v1212 = vpop.permute.xlu0 %1211
  %v1214 = vmul.f32 %v1207, %v1212
  %1216 = vrot.lane.b32.xlu0 %v1214, 16
  %v1217 = vpop.permute.xlu0 %1216
  %v1219 = vadd.f32 %v1209, %v1217
  %v1220 = vtanh.pop %v1219
  %1222 = vrot.lane.b32.xlu0 %v1220, 32
  %v1223 = vpop.permute.xlu0 %1222
  %v1225 = vmul.f32 %v1207, %v1223
  %v1226 = vmul.f32 %v709, %v1225
  %v1227 = vmul.f32 %v716, %v1159
  %v1228 = vadd.f32 %v1226, %v1227
  %v1229 = vmul.f32 %v709, %v1219
  %v1230 = vmul.f32 %v716, %v1162
  %v1231 = vadd.f32 %v1229, %v1230
  %1233 = vrot.lane.b32.xlu0 %v1228, 80
  %v1234 = vpop.permute.xlu0 %1233
  %v1235 = vsel %vm325, %v1234, 0
  %1237 = vmatpush.msra.mxu0 0.0
  %1238 = vmatpush.msra.mxu0 0.0
  %1239 = vmatpush.msra.mxu0 0.0
  %1240 = vmatpush.msra.mxu0 0.0
  %1241 = vmatpush.msra.mxu0 0.0
  %1242 = vmatpush.msra.mxu0 0.0
  %1243 = vmatpush.msra.mxu0 0.0
  %1244 = vmatpush.msra.mxu0 0.0
  %1245 = vmatpush.msra.mxu0 0.0
  %1246 = vmatpush.msra.mxu0 0.0
  %1247 = vmatpush.msra.mxu0 0.0
  %1248 = vmatpush.msra.mxu0 0.0
  %1249 = vmatpush.msra.mxu0 0.0
  %1250 = vmatpush.msra.mxu0 0.0
  %1251 = vmatpush.msra.mxu0 %v961
  %1252 = vmatpush.msra.mxu0 %v960
  %1253 = vmatmul.f32.gmra.mxu0 %v1235
  %v1254 = vpop.f32.mrf.mxu0
  %v1255 = vadd.f32 0.0, %v1254
  %1256 = vdwg.mxu0
  %v1257 = vadd.f32 %v309, %v1255
  %v1258 = vsub.f32 0.0, %v1257
  %v1259 = vmul.f32 %v1258, 1.442695
  %v1260 = vpow.pop %v1259
  %v1261 = vadd.f32 %v1260, 1.0
  %v1262 = vrcp.pop %v1261
  %v1263 = vmul.f32 %v1261, %v1262
  %v1264 = vsub.f32 1.0, %v1263
  %v1265 = vmul.f32 %v1262, %v1264
  %v1266 = vadd.f32 %v1262, %v1265
  %vm1267 = vweird.f32 %v1261
  %vm1268 = vweird.f32 %v1262
  %vm1269 = vmor %vm1267, %vm1268
  %v1270 = vsel %vm1269, %v1262, %v1266
  %v1271 = vand.u32 2147483647, %v1261
  %vm1272 = vcmp.eq.f32.partialorder %v1271, 8.507059e+37
  %v1273 = vand.u32 %v1261, 2147483648
  %v1274 = vor.u32 1.1754944e-38, %v1273
  %v1275 = vsel %vm1272, %v1274, %v1270
  %v1276 = vmul.f32 1.0, %v1275
  %v1277 = vtanh.pop %v1257
  %v1278 = vmul.f32 %v1276, %v1231
  %1280 = vrot.lane.b32.xlu0 %v1277, 96
  %v1281 = vpop.permute.xlu0 %1280
  %v1283 = vmul.f32 %v1276, %v1281
  %1285 = vrot.lane.b32.xlu0 %v1283, 16
  %v1286 = vpop.permute.xlu0 %1285
  %v1288 = vadd.f32 %v1278, %v1286
  %v1289 = vtanh.pop %v1288
  %1291 = vrot.lane.b32.xlu0 %v1289, 32
  %v1292 = vpop.permute.xlu0 %1291
  %v1294 = vmul.f32 %v1276, %v1292
  %v1295 = vmul.f32 %v629, %v1294
  %v1296 = vmul.f32 %v636, %v1228
  %v1297 = vadd.f32 %v1295, %v1296
  %v1298 = vmul.f32 %v629, %v1288
  %v1299 = vmul.f32 %v636, %v1231
  %v1300 = vadd.f32 %v1298, %v1299
  %1302 = vrot.lane.b32.xlu0 %v1297, 80
  %v1303 = vpop.permute.xlu0 %1302
  %v1304 = vsel %vm325, %v1303, 0
  %1306 = vmatpush.msra.mxu0 0.0
  %1307 = vmatpush.msra.mxu0 0.0
  %1308 = vmatpush.msra.mxu0 0.0
  %1309 = vmatpush.msra.mxu0 0.0
  %1310 = vmatpush.msra.mxu0 0.0
  %1311 = vmatpush.msra.mxu0 0.0
  %1312 = vmatpush.msra.mxu0 0.0
  %1313 = vmatpush.msra.mxu0 0.0
  %1314 = vmatpush.msra.mxu0 0.0
  %1315 = vmatpush.msra.mxu0 0.0
  %1316 = vmatpush.msra.mxu0 0.0
  %1317 = vmatpush.msra.mxu0 0.0
  %1318 = vmatpush.msra.mxu0 0.0
  %1319 = vmatpush.msra.mxu0 0.0
  %1320 = vmatpush.msra.mxu0 %v961
  %1321 = vmatpush.msra.mxu0 %v960
  %1322 = vmatmul.f32.gmra.mxu0 %v1304
  %v1323 = vpop.f32.mrf.mxu0
  %v1324 = vadd.f32 0.0, %v1323
  %1325 = vdwg.mxu0
  %v1326 = vadd.f32 %v306, %v1324
  %v1327 = vsub.f32 0.0, %v1326
  %v1328 = vmul.f32 %v1327, 1.442695
  %v1329 = vpow.pop %v1328
  %v1330 = vadd.f32 %v1329, 1.0
  %v1331 = vrcp.pop %v1330
  %v1332 = vmul.f32 %v1330, %v1331
  %v1333 = vsub.f32 1.0, %v1332
  %v1334 = vmul.f32 %v1331, %v1333
  %v1335 = vadd.f32 %v1331, %v1334
  %vm1336 = vweird.f32 %v1330
  %vm1337 = vweird.f32 %v1331
  %vm1338 = vmor %vm1336, %vm1337
  %v1339 = vsel %vm1338, %v1331, %v1335
  %v1340 = vand.u32 2147483647, %v1330
  %vm1341 = vcmp.eq.f32.partialorder %v1340, 8.507059e+37
  %v1342 = vand.u32 %v1330, 2147483648
  %v1343 = vor.u32 1.1754944e-38, %v1342
  %v1344 = vsel %vm1341, %v1343, %v1339
  %v1345 = vmul.f32 1.0, %v1344
  %v1346 = vtanh.pop %v1326
  %v1347 = vmul.f32 %v1345, %v1300
  %1349 = vrot.lane.b32.xlu0 %v1346, 96
  %v1350 = vpop.permute.xlu0 %1349
  %v1352 = vmul.f32 %v1345, %v1350
  %1354 = vrot.lane.b32.xlu0 %v1352, 16
  %v1355 = vpop.permute.xlu0 %1354
  %v1357 = vadd.f32 %v1347, %v1355
  %v1358 = vtanh.pop %v1357
  %1360 = vrot.lane.b32.xlu0 %v1358, 32
  %v1361 = vpop.permute.xlu0 %1360
  %v1363 = vmul.f32 %v1345, %v1361
  %v1364 = vmul.f32 %v549, %v1363
  %v1365 = vmul.f32 %v556, %v1297
  %v1366 = vadd.f32 %v1364, %v1365
  %v1367 = vmul.f32 %v549, %v1357
  %v1368 = vmul.f32 %v556, %v1300
  %v1369 = vadd.f32 %v1367, %v1368
  %1371 = vrot.lane.b32.xlu0 %v1366, 80
  %v1372 = vpop.permute.xlu0 %1371
  %v1373 = vsel %vm325, %v1372, 0
  %1375 = vmatpush.msra.mxu0 0.0
  %1376 = vmatpush.msra.mxu0 0.0
  %1377 = vmatpush.msra.mxu0 0.0
  %1378 = vmatpush.msra.mxu0 0.0
  %1379 = vmatpush.msra.mxu0 0.0
  %1380 = vmatpush.msra.mxu0 0.0
  %1381 = vmatpush.msra.mxu0 0.0
  %1382 = vmatpush.msra.mxu0 0.0
  %1383 = vmatpush.msra.mxu0 0.0
  %1384 = vmatpush.msra.mxu0 0.0
  %1385 = vmatpush.msra.mxu0 0.0
  %1386 = vmatpush.msra.mxu0 0.0
  %1387 = vmatpush.msra.mxu0 0.0
  %1388 = vmatpush.msra.mxu0 0.0
  %1389 = vmatpush.msra.mxu0 %v961
  %1390 = vmatpush.msra.mxu0 %v960
  %1391 = vmatmul.f32.gmra.mxu0 %v1373
  %v1392 = vpop.f32.mrf.mxu0
  %v1393 = vadd.f32 0.0, %v1392
  %1394 = vdwg.mxu0
  %v1395 = vadd.f32 %v303, %v1393
  %v1396 = vsub.f32 0.0, %v1395
  %v1397 = vmul.f32 %v1396, 1.442695
  %v1398 = vpow.pop %v1397
  %v1399 = vadd.f32 %v1398, 1.0
  %v1400 = vrcp.pop %v1399
  %v1401 = vmul.f32 %v1399, %v1400
  %v1402 = vsub.f32 1.0, %v1401
  %v1403 = vmul.f32 %v1400, %v1402
  %v1404 = vadd.f32 %v1400, %v1403
  %vm1405 = vweird.f32 %v1399
  %vm1406 = vweird.f32 %v1400
  %vm1407 = vmor %vm1405, %vm1406
  %v1408 = vsel %vm1407, %v1400, %v1404
  %v1409 = vand.u32 2147483647, %v1399
  %vm1410 = vcmp.eq.f32.partialorder %v1409, 8.507059e+37
  %v1411 = vand.u32 %v1399, 2147483648
  %v1412 = vor.u32 1.1754944e-38, %v1411
  %v1413 = vsel %vm1410, %v1412, %v1408
  %v1414 = vmul.f32 1.0, %v1413
  %v1415 = vtanh.pop %v1395
  %v1416 = vmul.f32 %v1414, %v1369
  %1418 = vrot.lane.b32.xlu0 %v1415, 96
  %v1419 = vpop.permute.xlu0 %1418
  %v1421 = vmul.f32 %v1414, %v1419
  %1423 = vrot.lane.b32.xlu0 %v1421, 16
  %v1424 = vpop.permute.xlu0 %1423
  %v1426 = vadd.f32 %v1416, %v1424
  %v1427 = vtanh.pop %v1426
  %1429 = vrot.lane.b32.xlu0 %v1427, 32
  %v1430 = vpop.permute.xlu0 %1429
  %v1432 = vmul.f32 %v1414, %v1430
  %v1433 = vmul.f32 %v469, %v1432
  %v1434 = vmul.f32 %v476, %v1366
  %v1435 = vadd.f32 %v1433, %v1434
  %v1436 = vmul.f32 %v469, %v1426
  %v1437 = vmul.f32 %v476, %v1369
  %v1438 = vadd.f32 %v1436, %v1437
  %1440 = vrot.lane.b32.xlu0 %v1435, 80
  %v1441 = vpop.permute.xlu0 %1440
  %v1442 = vsel %vm325, %v1441, 0
  %1444 = vmatpush.msra.mxu0 0.0
  %1445 = vmatpush.msra.mxu0 0.0
  %1446 = vmatpush.msra.mxu0 0.0
  %1447 = vmatpush.msra.mxu0 0.0
  %1448 = vmatpush.msra.mxu0 0.0
  %1449 = vmatpush.msra.mxu0 0.0
  %1450 = vmatpush.msra.mxu0 0.0
  %1451 = vmatpush.msra.mxu0 0.0
  %1452 = vmatpush.msra.mxu0 0.0
  %1453 = vmatpush.msra.mxu0 0.0
  %1454 = vmatpush.msra.mxu0 0.0
  %1455 = vmatpush.msra.mxu0 0.0
  %1456 = vmatpush.msra.mxu0 0.0
  %1457 = vmatpush.msra.mxu0 0.0
  %1458 = vmatpush.msra.mxu0 %v961
  %1459 = vmatpush.msra.mxu0 %v960
  %1460 = vmatmul.f32.gmra.mxu0 %v1442
  %v1461 = vpop.f32.mrf.mxu0
  %v1462 = vadd.f32 0.0, %v1461
  %1463 = vdwg.mxu0
  %v1464 = vadd.f32 %v300, %v1462
  %v1465 = vsub.f32 0.0, %v1464
  %v1466 = vmul.f32 %v1465, 1.442695
  %v1467 = vpow.pop %v1466
  %v1468 = vadd.f32 %v1467, 1.0
  %v1469 = vrcp.pop %v1468
  %v1470 = vmul.f32 %v1468, %v1469
  %v1471 = vsub.f32 1.0, %v1470
  %v1472 = vmul.f32 %v1469, %v1471
  %v1473 = vadd.f32 %v1469, %v1472
  %vm1474 = vweird.f32 %v1468
  %vm1475 = vweird.f32 %v1469
  %vm1476 = vmor %vm1474, %vm1475
  %v1477 = vsel %vm1476, %v1469, %v1473
  %v1478 = vand.u32 2147483647, %v1468
  %vm1479 = vcmp.eq.f32.partialorder %v1478, 8.507059e+37
  %v1480 = vand.u32 %v1468, 2147483648
  %v1481 = vor.u32 1.1754944e-38, %v1480
  %v1482 = vsel %vm1479, %v1481, %v1477
  %v1483 = vmul.f32 1.0, %v1482
  %v1484 = vtanh.pop %v1464
  %v1485 = vmul.f32 %v1483, %v1438
  %1487 = vrot.lane.b32.xlu0 %v1484, 96
  %v1488 = vpop.permute.xlu0 %1487
  %v1490 = vmul.f32 %v1483, %v1488
  %1492 = vrot.lane.b32.xlu0 %v1490, 16
  %v1493 = vpop.permute.xlu0 %1492
  %v1495 = vadd.f32 %v1485, %v1493
  %v1496 = vtanh.pop %v1495
  %1498 = vrot.lane.b32.xlu0 %v1496, 32
  %v1499 = vpop.permute.xlu0 %1498
  %v1501 = vmul.f32 %v1483, %v1499
  %v1502 = vmul.f32 %v390, %v1501
  %v1503 = vmul.f32 %v397, %v1435
  %v1504 = vadd.f32 %v1502, %v1503
  %1506 = vrot.lane.b32.xlu0 %v959, 80
  %v1507 = vpop.permute.xlu0 %1506
  %1510 = vrot.lane.b32.xlu0 %v1504, 96
  %v1511 = vpop.permute.xlu0 %1510
  %v1513 = vsel %vm325, %v1507, %v1511
  %v1514 = vld [vmem:[%s5] sm:$0xff]
  %v1515 = vld [vmem:[%s7] sm:$0xff]
  %v1516 = vld [vmem:[%s9] sm:$0xff]
  %v1517 = vld [vmem:[%s71] sm:$0xff]
  %v1518 = vld [vmem:[%s71 + $0x8] sm:$0xff]
  %v1519 = vld [vmem:[%s71 + $0x10] sm:$0xff]
  %v1520 = vld [vmem:[%s71 + $0x18] sm:$0xff]
  %v1521 = vld [vmem:[%s69] sm:$0x1]
  %v1523 = vperm.slane %v1521, 0
  %1528 = vrot.lane.b32.xlu0 %v1517, 32
  %v1529 = vpop.permute.xlu0 %1528
  %1530 = vrot.lane.b32.xlu0 %v1518, 32
  %v1531 = vpop.permute.xlu0 %1530
  %1532 = vrot.lane.b32.xlu0 %v1519, 32
  %v1533 = vpop.permute.xlu0 %1532
  %1534 = vrot.lane.b32.xlu0 %v1520, 32
  %v1535 = vpop.permute.xlu0 %1534
  %1540 = vrot.lane.b32.xlu0 %v1523, 32
  %v1541 = vpop.permute.xlu0 %1540
  %v1544 = vsel %vm208, %v1515, 0
  %1546 = vmatpush.msra.mxu0 0.0
  %1547 = vmatpush.msra.mxu0 0.0
  %1548 = vmatpush.msra.mxu0 0.0
  %1549 = vmatpush.msra.mxu0 0.0
  %1550 = vmatpush.msra.mxu0 0.0
  %1551 = vmatpush.msra.mxu0 0.0
  %1552 = vmatpush.msra.mxu0 0.0
  %1553 = vmatpush.msra.mxu0 0.0
  %1554 = vmatpush.msra.mxu0 0.0
  %1555 = vmatpush.msra.mxu0 0.0
  %1556 = vmatpush.msra.mxu0 0.0
  %1557 = vmatpush.msra.mxu0 0.0
  %1558 = vmatpush.msra.mxu0 %v1535
  %1559 = vmatpush.msra.mxu0 %v1533
  %1560 = vmatpush.msra.mxu0 %v1531
  %1561 = vmatpush.msra.mxu0 %v1529
  %1562 = vmatmul.f32.gmra.mxu0 %v1544
  %v1563 = vpop.f32.mrf.mxu0
  %v1564 = vadd.f32 %v1541, %v1563
  %1565 = vdwg.mxu0
  %v1566 = vadd.f32 %v1513, %v1564
  %v1567 = vld [vmem:[%s49] sm:$0xf]
  %v1568 = vsel %vm208, %v1566, 0.0
  %1569 = vadd.xlane.f32.xlu0 %v1568
  %v1570 = vpop.xlane.xlu0 %1569
  %v1571 = vrcp.pop 32.0
  %v1572 = vmul.f32 32.0, %v1571
  %v1573 = vsub.f32 1.0, %v1572
  %v1574 = vmul.f32 %v1571, %v1573
  %v1575 = vadd.f32 %v1571, %v1574
  %vm1576 = vweird.f32 %v1571
  %v1577 = vsel %vm1576, %v1571, %v1575
  %v1578 = vmul.f32 %v1570, %v1577
  %v1579 = vsub.f32 %v1566, %v1578
  %v1580 = vmul.f32 %v1579, %v1579
  %v1581 = vsel %vm208, %v1580, 0.0
  %1582 = vadd.xlane.f32.xlu0 %v1581
  %v1583 = vpop.xlane.xlu0 %1582
  %v1584 = vmul.f32 %v1583, %v1577
  %v1585 = vadd.f32 %v1584, 1e-06
  %v1586 = vrsqrt.pop %v1585
  %v1587 = vmul.f32 %v1586, %v1585
  %v1588 = vmul.f32 %v1587, %v1586
  %v1589 = vmul.f32 0.5, %v1588
  %v1590 = vsub.f32 1.5, %v1589
  %v1591 = vmul.f32 %v1586, %v1590
  %vm1592 = vweird.f32 %v1585
  %vm1593 = vweird.f32 %v1586
  %vm1594 = vmor %vm1592, %vm1593
  %v1595 = vsel %vm1594, %v1586, %v1591
  %v1596 = vmul.f32 %v1579, %v1595
  %v1597 = vperm.slane %v1567, 0
  %v1598 = vmul.f32 %v1596, %v1597
  %v1599 = vperm.slane %v1567, 1
  %v1600 = vadd.f32 %v1598, %v1599
  %v1601 = vld [vmem:[%s39] sm:$0xff]
  %v1602 = vld [vmem:[%s39 + $0x8] sm:$0xff]
  %v1603 = vld [vmem:[%s39 + $0x10] sm:$0xff]
  %v1604 = vld [vmem:[%s39 + $0x18] sm:$0xff]
  %v1605 = vld [vmem:[%s37] sm:$0x1]
  %v1607 = vperm.slane %v1605, 0
  %v1610 = vsel %vm208, %v1600, 0
  %1612 = vmatpush.msra.mxu0 0.0
  %1613 = vmatpush.msra.mxu0 0.0
  %1614 = vmatpush.msra.mxu0 0.0
  %1615 = vmatpush.msra.mxu0 0.0
  %1616 = vmatpush.msra.mxu0 0.0
  %1617 = vmatpush.msra.mxu0 0.0
  %1618 = vmatpush.msra.mxu0 0.0
  %1619 = vmatpush.msra.mxu0 0.0
  %1620 = vmatpush.msra.mxu0 0.0
  %1621 = vmatpush.msra.mxu0 0.0
  %1622 = vmatpush.msra.mxu0 0.0
  %1623 = vmatpush.msra.mxu0 0.0
  %1624 = vmatpush.msra.mxu0 %v1604
  %1625 = vmatpush.msra.mxu0 %v1603
  %1626 = vmatpush.msra.mxu0 %v1602
  %1627 = vmatpush.msra.mxu0 %v1601
  %1628 = vmatmul.f32.gmra.mxu0 %v1610
  %v1629 = vpop.f32.mrf.mxu0
  %v1630 = vadd.f32 %v1607, %v1629
  %1631 = vdwg.mxu0
  %1633 = vrot.lane.b32.xlu0 %v1630, 96
  %v1634 = vpop.permute.xlu0 %1633
  %vm1635 = vcmask 64512
  %v1636 = vsel %vm1635, %v1630, 0
  %v1638 = vsel %vm1635, %v1634, 0
  %1640 = vmatpush.xpose.msra.mxu0 0.0
  %1641 = vmatpush.xpose.msra.mxu0 0.0
  %1642 = vmatpush.xpose.msra.mxu0 0.0
  %1643 = vmatpush.xpose.msra.mxu0 0.0
  %1644 = vmatpush.xpose.msra.mxu0 0.0
  %1645 = vmatpush.xpose.msra.mxu0 0.0
  %1646 = vmatpush.xpose.msra.mxu0 0.0
  %1647 = vmatpush.xpose.msra.mxu0 0.0
  %1648 = vmatpush.xpose.msra.mxu0 0.0
  %1649 = vmatpush.xpose.msra.mxu0 0.0
  %1650 = vmatpush.xpose.msra.mxu0 0.0
  %1651 = vmatpush.xpose.msra.mxu0 0.0
  %1652 = vmatpush.xpose.msra.mxu0 0.0
  %1653 = vmatpush.xpose.msra.mxu0 0.0
  %1654 = vmatpush.xpose.msra.mxu0 0.0
  %1655 = vmatpush.xpose.msra.mxu0 %v1638
  %1656 = vmatmul.f32.gmra.mxu0 %v1636
  %v1657 = vpop.f32.mrf.mxu0
  %v1658 = vadd.f32 0.0, %v1657
  %1659 = vdwg.mxu0
  %v1660 = vmul.f32 %v1658, 0.35355338
  %v1661 = vsel %vm1635, %v1660, -inf
  %1662 = vmax.xlane.f32.xlu0 %v1661
  %v1663 = vpop.xlane.xlu0 %1662
  %v1664 = vsub.f32 %v1660, %v1663
  %v1665 = vmul.f32 %v1664, 1.442695
  %v1666 = vpow.pop %v1665
  %v1667 = vsel %vm1635, %v1666, 0.0
  %1668 = vadd.xlane.f32.xlu0 %v1667
  %v1669 = vpop.xlane.xlu0 %1668
  %v1670 = vrcp.pop %v1669
  %v1671 = vmul.f32 %v1669, %v1670
  %v1672 = vsub.f32 1.0, %v1671
  %v1673 = vmul.f32 %v1670, %v1672
  %v1674 = vadd.f32 %v1670, %v1673
  %vm1675 = vweird.f32 %v1669
  %vm1676 = vweird.f32 %v1670
  %vm1677 = vmor %vm1675, %vm1676
  %v1678 = vsel %vm1677, %v1670, %v1674
  %v1679 = vand.u32 2147483647, %v1669
  %vm1680 = vcmp.eq.f32.partialorder %v1679, 8.507059e+37
  %v1681 = vand.u32 %v1669, 2147483648
  %v1682 = vor.u32 1.1754944e-38, %v1681
  %v1683 = vsel %vm1680, %v1682, %v1678
  %v1684 = vmul.f32 %v1666, %v1683
  %1685 = vrot.lane.b32.xlu0 %v1630, 64
  %v1686 = vpop.permute.xlu0 %1685
  %v1689 = vsel %vm1635, %v1684, 0
  %1691 = vmatpush.msra.mxu0 0.0
  %1692 = vmatpush.msra.mxu0 0.0
  %1693 = vmatpush.msra.mxu0 0.0
  %1694 = vmatpush.msra.mxu0 0.0
  %1695 = vmatpush.msra.mxu0 0.0
  %1696 = vmatpush.msra.mxu0 0.0
  %1697 = vmatpush.msra.mxu0 0.0
  %1698 = vmatpush.msra.mxu0 0.0
  %1699 = vmatpush.msra.mxu0 0.0
  %1700 = vmatpush.msra.mxu0 0.0
  %1701 = vmatpush.msra.mxu0 0.0
  %1702 = vmatpush.msra.mxu0 0.0
  %1703 = vmatpush.msra.mxu0 0.0
  %1704 = vmatpush.msra.mxu0 0.0
  %1705 = vmatpush.msra.mxu0 0.0
  %1706 = vmatpush.msra.mxu0 %v1686
  %1707 = vmatmul.f32.gmra.mxu0 %v1689
  %v1708 = vpop.f32.mrf.mxu0
  %v1709 = vadd.f32 0.0, %v1708
  %1710 = vdwg.mxu0
  %1711 = vrot.lane.b32.xlu0 %v1630, 120
  %v1712 = vpop.permute.xlu0 %1711
  %1713 = vrot.lane.b32.xlu0 %v1630, 88
  %v1714 = vpop.permute.xlu0 %1713
  %v1715 = vsel %vm1635, %v1712, 0
  %v1717 = vsel %vm1635, %v1714, 0
  %1719 = vmatpush.xpose.msra.mxu0 0.0
  %1720 = vmatpush.xpose.msra.mxu0 0.0
  %1721 = vmatpush.xpose.msra.mxu0 0.0
  %1722 = vmatpush.xpose.msra.mxu0 0.0
  %1723 = vmatpush.xpose.msra.mxu0 0.0
  %1724 = vmatpush.xpose.msra.mxu0 0.0
  %1725 = vmatpush.xpose.msra.mxu0 0.0
  %1726 = vmatpush.xpose.msra.mxu0 0.0
  %1727 = vmatpush.xpose.msra.mxu0 0.0
  %1728 = vmatpush.xpose.msra.mxu0 0.0
  %1729 = vmatpush.xpose.msra.mxu0 0.0
  %1730 = vmatpush.xpose.msra.mxu0 0.0
  %1731 = vmatpush.xpose.msra.mxu0 0.0
  %1732 = vmatpush.xpose.msra.mxu0 0.0
  %1733 = vmatpush.xpose.msra.mxu0 0.0
  %1734 = vmatpush.xpose.msra.mxu0 %v1717
  %1735 = vmatmul.f32.gmra.mxu0 %v1715
  %v1736 = vpop.f32.mrf.mxu0
  %v1737 = vadd.f32 0.0, %v1736
  %1738 = vdwg.mxu0
  %v1739 = vmul.f32 %v1737, 0.35355338
  %v1740 = vsel %vm1635, %v1739, -inf
  %1741 = vmax.xlane.f32.xlu0 %v1740
  %v1742 = vpop.xlane.xlu0 %1741
  %v1743 = vsub.f32 %v1739, %v1742
  %v1744 = vmul.f32 %v1743, 1.442695
  %v1745 = vpow.pop %v1744
  %v1746 = vsel %vm1635, %v1745, 0.0
  %1747 = vadd.xlane.f32.xlu0 %v1746
  %v1748 = vpop.xlane.xlu0 %1747
  %v1749 = vrcp.pop %v1748
  %v1750 = vmul.f32 %v1748, %v1749
  %v1751 = vsub.f32 1.0, %v1750
  %v1752 = vmul.f32 %v1749, %v1751
  %v1753 = vadd.f32 %v1749, %v1752
  %vm1754 = vweird.f32 %v1748
  %vm1755 = vweird.f32 %v1749
  %vm1756 = vmor %vm1754, %vm1755
  %v1757 = vsel %vm1756, %v1749, %v1753
  %v1758 = vand.u32 2147483647, %v1748
  %vm1759 = vcmp.eq.f32.partialorder %v1758, 8.507059e+37
  %v1760 = vand.u32 %v1748, 2147483648
  %v1761 = vor.u32 1.1754944e-38, %v1760
  %v1762 = vsel %vm1759, %v1761, %v1757
  %v1763 = vmul.f32 %v1745, %v1762
  %1764 = vrot.lane.b32.xlu0 %v1630, 56
  %v1765 = vpop.permute.xlu0 %1764
  %v1768 = vsel %vm1635, %v1763, 0
  %1770 = vmatpush.msra.mxu0 0.0
  %1771 = vmatpush.msra.mxu0 0.0
  %1772 = vmatpush.msra.mxu0 0.0
  %1773 = vmatpush.msra.mxu0 0.0
  %1774 = vmatpush.msra.mxu0 0.0
  %1775 = vmatpush.msra.mxu0 0.0
  %1776 = vmatpush.msra.mxu0 0.0
  %1777 = vmatpush.msra.mxu0 0.0
  %1778 = vmatpush.msra.mxu0 0.0
  %1779 = vmatpush.msra.mxu0 0.0
  %1780 = vmatpush.msra.mxu0 0.0
  %1781 = vmatpush.msra.mxu0 0.0
  %1782 = vmatpush.msra.mxu0 0.0
  %1783 = vmatpush.msra.mxu0 0.0
  %1784 = vmatpush.msra.mxu0 0.0
  %1785 = vmatpush.msra.mxu0 %v1765
  %1786 = vmatmul.f32.gmra.mxu0 %v1768
  %v1787 = vpop.f32.mrf.mxu0
  %v1788 = vadd.f32 0.0, %v1787
  %1789 = vdwg.mxu0
  %1790 = vrot.lane.b32.xlu0 %v1630, 112
  %v1791 = vpop.permute.xlu0 %1790
  %1792 = vrot.lane.b32.xlu0 %v1630, 80
  %v1793 = vpop.permute.xlu0 %1792
  %v1794 = vsel %vm1635, %v1791, 0
  %v1796 = vsel %vm1635, %v1793, 0
  %1798 = vmatpush.xpose.msra.mxu0 0.0
  %1799 = vmatpush.xpose.msra.mxu0 0.0
  %1800 = vmatpush.xpose.msra.mxu0 0.0
  %1801 = vmatpush.xpose.msra.mxu0 0.0
  %1802 = vmatpush.xpose.msra.mxu0 0.0
  %1803 = vmatpush.xpose.msra.mxu0 0.0
  %1804 = vmatpush.xpose.msra.mxu0 0.0
  %1805 = vmatpush.xpose.msra.mxu0 0.0
  %1806 = vmatpush.xpose.msra.mxu0 0.0
  %1807 = vmatpush.xpose.msra.mxu0 0.0
  %1808 = vmatpush.xpose.msra.mxu0 0.0
  %1809 = vmatpush.xpose.msra.mxu0 0.0
  %1810 = vmatpush.xpose.msra.mxu0 0.0
  %1811 = vmatpush.xpose.msra.mxu0 0.0
  %1812 = vmatpush.xpose.msra.mxu0 0.0
  %1813 = vmatpush.xpose.msra.mxu0 %v1796
  %1814 = vmatmul.f32.gmra.mxu0 %v1794
  %v1815 = vpop.f32.mrf.mxu0
  %v1816 = vadd.f32 0.0, %v1815
  %1817 = vdwg.mxu0
  %v1818 = vmul.f32 %v1816, 0.35355338
  %v1819 = vsel %vm1635, %v1818, -inf
  %1820 = vmax.xlane.f32.xlu0 %v1819
  %v1821 = vpop.xlane.xlu0 %1820
  %v1822 = vsub.f32 %v1818, %v1821
  %v1823 = vmul.f32 %v1822, 1.442695
  %v1824 = vpow.pop %v1823
  %v1825 = vsel %vm1635, %v1824, 0.0
  %1826 = vadd.xlane.f32.xlu0 %v1825
  %v1827 = vpop.xlane.xlu0 %1826
  %v1828 = vrcp.pop %v1827
  %v1829 = vmul.f32 %v1827, %v1828
  %v1830 = vsub.f32 1.0, %v1829
  %v1831 = vmul.f32 %v1828, %v1830
  %v1832 = vadd.f32 %v1828, %v1831
  %vm1833 = vweird.f32 %v1827
  %vm1834 = vweird.f32 %v1828
  %vm1835 = vmor %vm1833, %vm1834
  %v1836 = vsel %vm1835, %v1828, %v1832
  %v1837 = vand.u32 2147483647, %v1827
  %vm1838 = vcmp.eq.f32.partialorder %v1837, 8.507059e+37
  %v1839 = vand.u32 %v1827, 2147483648
  %v1840 = vor.u32 1.1754944e-38, %v1839
  %v1841 = vsel %vm1838, %v1840, %v1836
  %v1842 = vmul.f32 %v1824, %v1841
  %1843 = vrot.lane.b32.xlu0 %v1630, 48
  %v1844 = vpop.permute.xlu0 %1843
  %v1847 = vsel %vm1635, %v1842, 0
  %1849 = vmatpush.msra.mxu0 0.0
  %1850 = vmatpush.msra.mxu0 0.0
  %1851 = vmatpush.msra.mxu0 0.0
  %1852 = vmatpush.msra.mxu0 0.0
  %1853 = vmatpush.msra.mxu0 0.0
  %1854 = vmatpush.msra.mxu0 0.0
  %1855 = vmatpush.msra.mxu0 0.0
  %1856 = vmatpush.msra.mxu0 0.0
  %1857 = vmatpush.msra.mxu0 0.0
  %1858 = vmatpush.msra.mxu0 0.0
  %1859 = vmatpush.msra.mxu0 0.0
  %1860 = vmatpush.msra.mxu0 0.0
  %1861 = vmatpush.msra.mxu0 0.0
  %1862 = vmatpush.msra.mxu0 0.0
  %1863 = vmatpush.msra.mxu0 0.0
  %1864 = vmatpush.msra.mxu0 %v1844
  %1865 = vmatmul.f32.gmra.mxu0 %v1847
  %v1866 = vpop.f32.mrf.mxu0
  %v1867 = vadd.f32 0.0, %v1866
  %1868 = vdwg.mxu0
  %1869 = vrot.lane.b32.xlu0 %v1630, 104
  %v1870 = vpop.permute.xlu0 %1869
  %1871 = vrot.lane.b32.xlu0 %v1630, 72
  %v1872 = vpop.permute.xlu0 %1871
  %v1873 = vsel %vm1635, %v1870, 0
  %v1875 = vsel %vm1635, %v1872, 0
  %1877 = vmatpush.xpose.msra.mxu0 0.0
  %1878 = vmatpush.xpose.msra.mxu0 0.0
  %1879 = vmatpush.xpose.msra.mxu0 0.0
  %1880 = vmatpush.xpose.msra.mxu0 0.0
  %1881 = vmatpush.xpose.msra.mxu0 0.0
  %1882 = vmatpush.xpose.msra.mxu0 0.0
  %1883 = vmatpush.xpose.msra.mxu0 0.0
  %1884 = vmatpush.xpose.msra.mxu0 0.0
  %1885 = vmatpush.xpose.msra.mxu0 0.0
  %1886 = vmatpush.xpose.msra.mxu0 0.0
  %1887 = vmatpush.xpose.msra.mxu0 0.0
  %1888 = vmatpush.xpose.msra.mxu0 0.0
  %1889 = vmatpush.xpose.msra.mxu0 0.0
  %1890 = vmatpush.xpose.msra.mxu0 0.0
  %1891 = vmatpush.xpose.msra.mxu0 0.0
  %1892 = vmatpush.xpose.msra.mxu0 %v1875
  %1893 = vmatmul.f32.gmra.mxu0 %v1873
  %v1894 = vpop.f32.mrf.mxu0
  %v1895 = vadd.f32 0.0, %v1894
  %1896 = vdwg.mxu0
  %v1897 = vmul.f32 %v1895, 0.35355338
  %v1898 = vsel %vm1635, %v1897, -inf
  %1899 = vmax.xlane.f32.xlu0 %v1898
  %v1900 = vpop.xlane.xlu0 %1899
  %v1901 = vsub.f32 %v1897, %v1900
  %v1902 = vmul.f32 %v1901, 1.442695
  %v1903 = vpow.pop %v1902
  %v1904 = vsel %vm1635, %v1903, 0.0
  %1905 = vadd.xlane.f32.xlu0 %v1904
  %v1906 = vpop.xlane.xlu0 %1905
  %v1907 = vrcp.pop %v1906
  %v1908 = vmul.f32 %v1906, %v1907
  %v1909 = vsub.f32 1.0, %v1908
  %v1910 = vmul.f32 %v1907, %v1909
  %v1911 = vadd.f32 %v1907, %v1910
  %vm1912 = vweird.f32 %v1906
  %vm1913 = vweird.f32 %v1907
  %vm1914 = vmor %vm1912, %vm1913
  %v1915 = vsel %vm1914, %v1907, %v1911
  %v1916 = vand.u32 2147483647, %v1906
  %vm1917 = vcmp.eq.f32.partialorder %v1916, 8.507059e+37
  %v1918 = vand.u32 %v1906, 2147483648
  %v1919 = vor.u32 1.1754944e-38, %v1918
  %v1920 = vsel %vm1917, %v1919, %v1915
  %v1921 = vmul.f32 %v1903, %v1920
  %1922 = vrot.lane.b32.xlu0 %v1630, 40
  %v1923 = vpop.permute.xlu0 %1922
  %v1926 = vsel %vm1635, %v1921, 0
  %1928 = vmatpush.msra.mxu0 0.0
  %1929 = vmatpush.msra.mxu0 0.0
  %1930 = vmatpush.msra.mxu0 0.0
  %1931 = vmatpush.msra.mxu0 0.0
  %1932 = vmatpush.msra.mxu0 0.0
  %1933 = vmatpush.msra.mxu0 0.0
  %1934 = vmatpush.msra.mxu0 0.0
  %1935 = vmatpush.msra.mxu0 0.0
  %1936 = vmatpush.msra.mxu0 0.0
  %1937 = vmatpush.msra.mxu0 0.0
  %1938 = vmatpush.msra.mxu0 0.0
  %1939 = vmatpush.msra.mxu0 0.0
  %1940 = vmatpush.msra.mxu0 0.0
  %1941 = vmatpush.msra.mxu0 0.0
  %1942 = vmatpush.msra.mxu0 0.0
  %1943 = vmatpush.msra.mxu0 %v1923
  %1944 = vmatmul.f32.gmra.mxu0 %v1926
  %v1945 = vpop.f32.mrf.mxu0
  %v1946 = vadd.f32 0.0, %v1945
  %1947 = vdwg.mxu0
  %1949 = vrot.lane.b32.xlu0 %v1788, 8
  %v1950 = vpop.permute.xlu0 %1949
  %1953 = vrot.lane.b32.xlu0 %v1867, 16
  %v1954 = vpop.permute.xlu0 %1953
  %1957 = vrot.lane.b32.xlu0 %v1946, 24
  %v1958 = vpop.permute.xlu0 %1957
  %v1960 = vsel %vm1635, %v1709, %v1950
  %v1961 = vsel %vm325, %v1960, %v1954
  %vm1962 = vcmask 195584
  %v1963 = vsel %vm1962, %v1961, %v1958
  %1968 = vrot.lane.b32.xlu0 %v1601, 32
  %v1969 = vpop.permute.xlu0 %1968
  %1970 = vrot.lane.b32.xlu0 %v1602, 32
  %v1971 = vpop.permute.xlu0 %1970
  %1972 = vrot.lane.b32.xlu0 %v1603, 32
  %v1973 = vpop.permute.xlu0 %1972
  %1974 = vrot.lane.b32.xlu0 %v1604, 32
  %v1975 = vpop.permute.xlu0 %1974
  %1980 = vrot.lane.b32.xlu0 %v1607, 32
  %v1981 = vpop.permute.xlu0 %1980
  %v1984 = vsel %vm208, %v1963, 0
  %1986 = vmatpush.msra.mxu0 0.0
  %1987 = vmatpush.msra.mxu0 0.0
  %1988 = vmatpush.msra.mxu0 0.0
  %1989 = vmatpush.msra.mxu0 0.0
  %1990 = vmatpush.msra.mxu0 0.0
  %1991 = vmatpush.msra.mxu0 0.0
  %1992 = vmatpush.msra.mxu0 0.0
  %1993 = vmatpush.msra.mxu0 0.0
  %1994 = vmatpush.msra.mxu0 0.0
  %1995 = vmatpush.msra.mxu0 0.0
  %1996 = vmatpush.msra.mxu0 0.0
  %1997 = vmatpush.msra.mxu0 0.0
  %1998 = vmatpush.msra.mxu0 %v1975
  %1999 = vmatpush.msra.mxu0 %v1973
  %2000 = vmatpush.msra.mxu0 %v1971
  %2001 = vmatpush.msra.mxu0 %v1969
  %2002 = vmatmul.f32.gmra.mxu0 %v1984
  %v2003 = vpop.f32.mrf.mxu0
  %v2004 = vadd.f32 %v1981, %v2003
  %2005 = vdwg.mxu0
  %v2006 = vadd.f32 %v1566, %v2004
  %v2007 = vsel %vm208, %v2006, 0.0
  %2008 = vadd.xlane.f32.xlu0 %v2007
  %v2009 = vpop.xlane.xlu0 %2008
  %v2010 = vmul.f32 %v2009, %v1577
  %v2011 = vsub.f32 %v2006, %v2010
  %v2012 = vmul.f32 %v2011, %v2011
  %v2013 = vsel %vm208, %v2012, 0.0
  %2014 = vadd.xlane.f32.xlu0 %v2013
  %v2015 = vpop.xlane.xlu0 %2014
  %v2016 = vmul.f32 %v2015, %v1577
  %v2017 = vadd.f32 %v2016, 1e-06
  %v2018 = vrsqrt.pop %v2017
  %v2019 = vmul.f32 %v2018, %v2017
  %v2020 = vmul.f32 %v2019, %v2018
  %v2021 = vmul.f32 0.5, %v2020
  %v2022 = vsub.f32 1.5, %v2021
  %v2023 = vmul.f32 %v2018, %v2022
  %vm2024 = vweird.f32 %v2017
  %vm2025 = vweird.f32 %v2018
  %vm2026 = vmor %vm2024, %vm2025
  %v2027 = vsel %vm2026, %v2018, %v2023
  %v2028 = vmul.f32 %v2011, %v2027
  %v2029 = vperm.slane %v1567, 2
  %v2030 = vmul.f32 %v2028, %v2029
  %v2031 = vperm.slane %v1567, 3
  %v2032 = vadd.f32 %v2030, %v2031
  %v2033 = vld [vmem:[%s45] sm:$0xff]
  %v2034 = vld [vmem:[%s45 + $0x8] sm:$0xff]
  %v2035 = vld [vmem:[%s45 + $0x10] sm:$0xff]
  %v2036 = vld [vmem:[%s45 + $0x18] sm:$0xff]
  %v2037 = vld [vmem:[%s45 + $0x20] sm:$0xff]
  %v2038 = vld [vmem:[%s45 + $0x28] sm:$0xff]
  %v2039 = vld [vmem:[%s45 + $0x30] sm:$0xff]
  %v2040 = vld [vmem:[%s45 + $0x38] sm:$0xff]
  %v2041 = vld [vmem:[%s45 + $0x40] sm:$0xff]
  %v2042 = vld [vmem:[%s45 + $0x48] sm:$0xff]
  %v2043 = vld [vmem:[%s45 + $0x50] sm:$0xff]
  %v2044 = vld [vmem:[%s45 + $0x58] sm:$0xff]
  %v2045 = vld [vmem:[%s45 + $0x60] sm:$0xff]
  %v2046 = vld [vmem:[%s45 + $0x68] sm:$0xff]
  %v2047 = vld [vmem:[%s45 + $0x70] sm:$0xff]
  %v2048 = vld [vmem:[%s45 + $0x78] sm:$0xff]
  %v2049 = vld [vmem:[%s41] sm:$0xf]
  %v2051 = vperm.slane %v2049, 0
  %v2052 = vperm.slane %v2049, 1
  %v2053 = vperm.slane %v2049, 2
  %v2054 = vperm.slane %v2049, 3
  %v2060 = vsel %vm208, %v2032, 0
  %2062 = vmatpush.msra.mxu0 0.0
  %2063 = vmatpush.msra.mxu0 0.0
  %2064 = vmatpush.msra.mxu0 0.0
  %2065 = vmatpush.msra.mxu0 0.0
  %2066 = vmatpush.msra.mxu0 0.0
  %2067 = vmatpush.msra.mxu0 0.0
  %2068 = vmatpush.msra.mxu0 0.0
  %2069 = vmatpush.msra.mxu0 0.0
  %2070 = vmatpush.msra.mxu0 0.0
  %2071 = vmatpush.msra.mxu0 0.0
  %2072 = vmatpush.msra.mxu0 0.0
  %2073 = vmatpush.msra.mxu0 0.0
  %2074 = vmatpush.msra.mxu0 %v2045
  %2075 = vmatpush.msra.mxu0 %v2041
  %2076 = vmatpush.msra.mxu0 %v2037
  %2077 = vmatpush.msra.mxu0 %v2033
  %2078 = vmatmul.f32.gmra.mxu0 %v2060
  %v2079 = vpop.f32.mrf.mxu0
  %v2080 = vadd.f32 %v2051, %v2079
  %2081 = vdwg.mxu0
  %2082 = vmatpush.msra.mxu0 0.0
  %2083 = vmatpush.msra.mxu0 0.0
  %2084 = vmatpush.msra.mxu0 0.0
  %2085 = vmatpush.msra.mxu0 0.0
  %2086 = vmatpush.msra.mxu0 0.0
  %2087 = vmatpush.msra.mxu0 0.0
  %2088 = vmatpush.msra.mxu0 0.0
  %2089 = vmatpush.msra.mxu0 0.0
  %2090 = vmatpush.msra.mxu0 0.0
  %2091 = vmatpush.msra.mxu0 0.0
  %2092 = vmatpush.msra.mxu0 0.0
  %2093 = vmatpush.msra.mxu0 0.0
  %2094 = vmatpush.msra.mxu0 %v2046
  %2095 = vmatpush.msra.mxu0 %v2042
  %2096 = vmatpush.msra.mxu0 %v2038
  %2097 = vmatpush.msra.mxu0 %v2034
  %2098 = vmatmul.f32.gmra.mxu0 %v2060
  %v2099 = vpop.f32.mrf.mxu0
  %v2100 = vadd.f32 %v2052, %v2099
  %2101 = vdwg.mxu0
  %2102 = vmatpush.msra.mxu0 0.0
  %2103 = vmatpush.msra.mxu0 0.0
  %2104 = vmatpush.msra.mxu0 0.0
  %2105 = vmatpush.msra.mxu0 0.0
  %2106 = vmatpush.msra.mxu0 0.0
  %2107 = vmatpush.msra.mxu0 0.0
  %2108 = vmatpush.msra.mxu0 0.0
  %2109 = vmatpush.msra.mxu0 0.0
  %2110 = vmatpush.msra.mxu0 0.0
  %2111 = vmatpush.msra.mxu0 0.0
  %2112 = vmatpush.msra.mxu0 0.0
  %2113 = vmatpush.msra.mxu0 0.0
  %2114 = vmatpush.msra.mxu0 %v2047
  %2115 = vmatpush.msra.mxu0 %v2043
  %2116 = vmatpush.msra.mxu0 %v2039
  %2117 = vmatpush.msra.mxu0 %v2035
  %2118 = vmatmul.f32.gmra.mxu0 %v2060
  %v2119 = vpop.f32.mrf.mxu0
  %v2120 = vadd.f32 %v2053, %v2119
  %2121 = vdwg.mxu0
  %2122 = vmatpush.msra.mxu0 0.0
  %2123 = vmatpush.msra.mxu0 0.0
  %2124 = vmatpush.msra.mxu0 0.0
  %2125 = vmatpush.msra.mxu0 0.0
  %2126 = vmatpush.msra.mxu0 0.0
  %2127 = vmatpush.msra.mxu0 0.0
  %2128 = vmatpush.msra.mxu0 0.0
  %2129 = vmatpush.msra.mxu0 0.0
  %2130 = vmatpush.msra.mxu0 0.0
  %2131 = vmatpush.msra.mxu0 0.0
  %2132 = vmatpush.msra.mxu0 0.0
  %2133 = vmatpush.msra.mxu0 0.0
  %2134 = vmatpush.msra.mxu0 %v2048
  %2135 = vmatpush.msra.mxu0 %v2044
  %2136 = vmatpush.msra.mxu0 %v2040
  %2137 = vmatpush.msra.mxu0 %v2036
  %2138 = vmatmul.f32.gmra.mxu0 %v2060
  %v2139 = vpop.f32.mrf.mxu0
  %v2140 = vadd.f32 %v2054, %v2139
  %2141 = vdwg.mxu0
  %v2142 = vmax.f32 %v2080, 0.0
  %v2143 = vmax.f32 %v2100, 0.0
  %v2144 = vmax.f32 %v2120, 0.0
  %v2145 = vmax.f32 %v2140, 0.0
  %v2146 = vld [vmem:[%s47] sm:$0xff]
  %v2147 = vld [vmem:[%s47 + $0x8] sm:$0xff]
  %v2148 = vld [vmem:[%s47 + $0x10] sm:$0xff]
  %v2149 = vld [vmem:[%s47 + $0x18] sm:$0xff]
  %v2150 = vld [vmem:[%s47 + $0x20] sm:$0xff]
  %v2151 = vld [vmem:[%s47 + $0x28] sm:$0xff]
  %v2152 = vld [vmem:[%s47 + $0x30] sm:$0xff]
  %v2153 = vld [vmem:[%s47 + $0x38] sm:$0xff]
  %v2154 = vld [vmem:[%s47 + $0x40] sm:$0xff]
  %v2155 = vld [vmem:[%s47 + $0x48] sm:$0xff]
  %v2156 = vld [vmem:[%s47 + $0x50] sm:$0xff]
  %v2157 = vld [vmem:[%s47 + $0x58] sm:$0xff]
  %v2158 = vld [vmem:[%s47 + $0x60] sm:$0xff]
  %v2159 = vld [vmem:[%s47 + $0x68] sm:$0xff]
  %v2160 = vld [vmem:[%s47 + $0x70] sm:$0xff]
  %v2161 = vld [vmem:[%s47 + $0x78] sm:$0xff]
  %v2162 = vld [vmem:[%s47 + $0x80] sm:$0xff]
  %v2163 = vld [vmem:[%s47 + $0x88] sm:$0xff]
  %v2164 = vld [vmem:[%s47 + $0x90] sm:$0xff]
  %v2165 = vld [vmem:[%s47 + $0x98] sm:$0xff]
  %v2166 = vld [vmem:[%s47 + $0xa0] sm:$0xff]
  %v2167 = vld [vmem:[%s47 + $0xa8] sm:$0xff]
  %v2168 = vld [vmem:[%s47 + $0xb0] sm:$0xff]
  %v2169 = vld [vmem:[%s47 + $0xb8] sm:$0xff]
  %v2170 = vld [vmem:[%s47 + $0xc0] sm:$0xff]
  %v2171 = vld [vmem:[%s47 + $0xc8] sm:$0xff]
  %v2172 = vld [vmem:[%s47 + $0xd0] sm:$0xff]
  %v2173 = vld [vmem:[%s47 + $0xd8] sm:$0xff]
  %v2174 = vld [vmem:[%s47 + $0xe0] sm:$0xff]
  %v2175 = vld [vmem:[%s47 + $0xe8] sm:$0xff]
  %v2176 = vld [vmem:[%s47 + $0xf0] sm:$0xff]
  %v2177 = vld [vmem:[%s47 + $0xf8] sm:$0xff]
  %v2178 = vld [vmem:[%s47 + $0x100] sm:$0xff]
  %v2179 = vld [vmem:[%s47 + $0x108] sm:$0xff]
  %v2180 = vld [vmem:[%s47 + $0x110] sm:$0xff]
  %v2181 = vld [vmem:[%s47 + $0x118] sm:$0xff]
  %v2182 = vld [vmem:[%s47 + $0x120] sm:$0xff]
  %v2183 = vld [vmem:[%s47 + $0x128] sm:$0xff]
  %v2184 = vld [vmem:[%s47 + $0x130] sm:$0xff]
  %v2185 = vld [vmem:[%s47 + $0x138] sm:$0xff]
  %v2186 = vld [vmem:[%s47 + $0x140] sm:$0xff]
  %v2187 = vld [vmem:[%s47 + $0x148] sm:$0xff]
  %v2188 = vld [vmem:[%s47 + $0x150] sm:$0xff]
  %v2189 = vld [vmem:[%s47 + $0x158] sm:$0xff]
  %v2190 = vld [vmem:[%s47 + $0x160] sm:$0xff]
  %v2191 = vld [vmem:[%s47 + $0x168] sm:$0xff]
  %v2192 = vld [vmem:[%s47 + $0x170] sm:$0xff]
  %v2193 = vld [vmem:[%s47 + $0x178] sm:$0xff]
  %v2194 = vld [vmem:[%s47 + $0x180] sm:$0xff]
  %v2195 = vld [vmem:[%s47 + $0x188] sm:$0xff]
  %v2196 = vld [vmem:[%s47 + $0x190] sm:$0xff]
  %v2197 = vld [vmem:[%s47 + $0x198] sm:$0xff]
  %v2198 = vld [vmem:[%s47 + $0x1a0] sm:$0xff]
  %v2199 = vld [vmem:[%s47 + $0x1a8] sm:$0xff]
  %v2200 = vld [vmem:[%s47 + $0x1b0] sm:$0xff]
  %v2201 = vld [vmem:[%s47 + $0x1b8] sm:$0xff]
  %v2202 = vld [vmem:[%s47 + $0x1c0] sm:$0xff]
  %v2203 = vld [vmem:[%s47 + $0x1c8] sm:$0xff]
  %v2204 = vld [vmem:[%s47 + $0x1d0] sm:$0xff]
  %v2205 = vld [vmem:[%s47 + $0x1d8] sm:$0xff]
  %v2206 = vld [vmem:[%s47 + $0x1e0] sm:$0xff]
  %v2207 = vld [vmem:[%s47 + $0x1e8] sm:$0xff]
  %v2208 = vld [vmem:[%s47 + $0x1f0] sm:$0xff]
  %v2209 = vld [vmem:[%s47 + $0x1f8] sm:$0xff]
  %v2210 = vld [vmem:[%s43] sm:$0x1]
  %v2212 = vperm.slane %v2210, 0
  %2214 = vmatpush.msra.mxu0 %v2161
  %2215 = vmatpush.msra.mxu0 %v2160
  %2216 = vmatpush.msra.mxu0 %v2159
  %2217 = vmatpush.msra.mxu0 %v2158
  %2218 = vmatpush.msra.mxu0 %v2157
  %2219 = vmatpush.msra.mxu0 %v2156
  %2220 = vmatpush.msra.mxu0 %v2155
  %2221 = vmatpush.msra.mxu0 %v2154
  %2222 = vmatpush.msra.mxu0 %v2153
  %2223 = vmatpush.msra.mxu0 %v2152
  %2224 = vmatpush.msra.mxu0 %v2151
  %2225 = vmatpush.msra.mxu0 %v2150
  %2226 = vmatpush.msra.mxu0 %v2149
  %2227 = vmatpush.msra.mxu0 %v2148
  %2228 = vmatpush.msra.mxu0 %v2147
  %2229 = vmatpush.msra.mxu0 %v2146
  %2230 = vmatmul.f32.gmra.mxu0 %v2142
  %v2231 = vpop.f32.mrf.mxu0
  %v2232 = vadd.f32 %v2212, %v2231
  %2233 = vdwg.mxu0
  %2234 = vmatpush.msra.mxu0 %v2177
  %2235 = vmatpush.msra.mxu0 %v2176
  %2236 = vmatpush.msra.mxu0 %v2175
  %2237 = vmatpush.msra.mxu0 %v2174
  %2238 = vmatpush.msra.mxu0 %v2173
  %2239 = vmatpush.msra.mxu0 %v2172
  %2240 = vmatpush.msra.mxu0 %v2171
  %2241 = vmatpush.msra.mxu0 %v2170
  %2242 = vmatpush.msra.mxu0 %v2169
  %2243 = vmatpush.msra.mxu0 %v2168
  %2244 = vmatpush.msra.mxu0 %v2167
  %2245 = vmatpush.msra.mxu0 %v2166
  %2246 = vmatpush.msra.mxu0 %v2165
  %2247 = vmatpush.msra.mxu0 %v2164
  %2248 = vmatpush.msra.mxu0 %v2163
  %2249 = vmatpush.msra.mxu0 %v2162
  %2250 = vmatmul.f32.gmra.mxu0 %v2143
  %v2251 = vpop.f32.mrf.mxu0
  %v2252 = vadd.f32 %v2232, %v2251
  %2253 = vdwg.mxu0
  %2254 = vmatpush.msra.mxu0 %v2193
  %2255 = vmatpush.msra.mxu0 %v2192
  %2256 = vmatpush.msra.mxu0 %v2191
  %2257 = vmatpush.msra.mxu0 %v2190
  %2258 = vmatpush.msra.mxu0 %v2189
  %2259 = vmatpush.msra.mxu0 %v2188
  %2260 = vmatpush.msra.mxu0 %v2187
  %2261 = vmatpush.msra.mxu0 %v2186
  %2262 = vmatpush.msra.mxu0 %v2185
  %2263 = vmatpush.msra.mxu0 %v2184
  %2264 = vmatpush.msra.mxu0 %v2183
  %2265 = vmatpush.msra.mxu0 %v2182
  %2266 = vmatpush.msra.mxu0 %v2181
  %2267 = vmatpush.msra.mxu0 %v2180
  %2268 = vmatpush.msra.mxu0 %v2179
  %2269 = vmatpush.msra.mxu0 %v2178
  %2270 = vmatmul.f32.gmra.mxu0 %v2144
  %v2271 = vpop.f32.mrf.mxu0
  %v2272 = vadd.f32 %v2252, %v2271
  %2273 = vdwg.mxu0
  %2274 = vmatpush.msra.mxu0 %v2209
  %2275 = vmatpush.msra.mxu0 %v2208
  %2276 = vmatpush.msra.mxu0 %v2207
  %2277 = vmatpush.msra.mxu0 %v2206
  %2278 = vmatpush.msra.mxu0 %v2205
  %2279 = vmatpush.msra.mxu0 %v2204
  %2280 = vmatpush.msra.mxu0 %v2203
  %2281 = vmatpush.msra.mxu0 %v2202
  %2282 = vmatpush.msra.mxu0 %v2201
  %2283 = vmatpush.msra.mxu0 %v2200
  %2284 = vmatpush.msra.mxu0 %v2199
  %2285 = vmatpush.msra.mxu0 %v2198
  %2286 = vmatpush.msra.mxu0 %v2197
  %2287 = vmatpush.msra.mxu0 %v2196
  %2288 = vmatpush.msra.mxu0 %v2195
  %2289 = vmatpush.msra.mxu0 %v2194
  %2290 = vmatmul.f32.gmra.mxu0 %v2145
  %v2291 = vpop.f32.mrf.mxu0
  %v2292 = vadd.f32 %v2272, %v2291
  %2293 = vdwg.mxu0
  %v2294 = vadd.f32 %v2006, %v2292
  %v2295 = vld [vmem:[%s51] sm:$0x3]
  %v2296 = vsel %vm208, %v2294, 0.0
  %2297 = vadd.xlane.f32.xlu0 %v2296
  %v2298 = vpop.xlane.xlu0 %2297
  %v2299 = vmul.f32 %v2298, %v1577
  %v2300 = vsub.f32 %v2294, %v2299
  %v2301 = vmul.f32 %v2300, %v2300
  %v2302 = vsel %vm208, %v2301, 0.0
  %2303 = vadd.xlane.f32.xlu0 %v2302
  %v2304 = vpop.xlane.xlu0 %2303
  %v2305 = vmul.f32 %v2304, %v1577
  %v2306 = vadd.f32 %v2305, 1e-06
  %v2307 = vrsqrt.pop %v2306
  %v2308 = vmul.f32 %v2307, %v2306
  %v2309 = vmul.f32 %v2308, %v2307
  %v2310 = vmul.f32 0.5, %v2309
  %v2311 = vsub.f32 1.5, %v2310
  %v2312 = vmul.f32 %v2307, %v2311
  %vm2313 = vweird.f32 %v2306
  %vm2314 = vweird.f32 %v2307
  %vm2315 = vmor %vm2313, %vm2314
  %v2316 = vsel %vm2315, %v2307, %v2312
  %v2317 = vmul.f32 %v2300, %v2316
  %v2318 = vperm.slane %v2295, 0
  %v2319 = vmul.f32 %v2317, %v2318
  %v2320 = vperm.slane %v2295, 1
  %v2321 = vadd.f32 %v2319, %v2320
  %v2322 = vld [vmem:[%s65] sm:$0xf]
  %v2323 = vsel %vm208, %v1514, 0.0
  %2324 = vadd.xlane.f32.xlu0 %v2323
  %v2325 = vpop.xlane.xlu0 %2324
  %v2326 = vmul.f32 %v2325, %v1577
  %v2327 = vsub.f32 %v1514, %v2326
  %v2328 = vmul.f32 %v2327, %v2327
  %v2329 = vsel %vm208, %v2328, 0.0
  %2330 = vadd.xlane.f32.xlu0 %v2329
  %v2331 = vpop.xlane.xlu0 %2330
  %v2332 = vmul.f32 %v2331, %v1577
  %v2333 = vadd.f32 %v2332, 1e-06
  %v2334 = vrsqrt.pop %v2333
  %v2335 = vmul.f32 %v2334, %v2333
  %v2336 = vmul.f32 %v2335, %v2334
  %v2337 = vmul.f32 0.5, %v2336
  %v2338 = vsub.f32 1.5, %v2337
  %v2339 = vmul.f32 %v2334, %v2338
  %vm2340 = vweird.f32 %v2333
  %vm2341 = vweird.f32 %v2334
  %vm2342 = vmor %vm2340, %vm2341
  %v2343 = vsel %vm2342, %v2334, %v2339
  %v2344 = vmul.f32 %v2327, %v2343
  %v2345 = vperm.slane %v2322, 0
  %v2346 = vmul.f32 %v2344, %v2345
  %v2347 = vperm.slane %v2322, 1
  %v2348 = vadd.f32 %v2346, %v2347
  %v2349 = vld [vmem:[%s55] sm:$0xff]
  %v2350 = vld [vmem:[%s55 + $0x8] sm:$0xff]
  %v2351 = vld [vmem:[%s55 + $0x10] sm:$0xff]
  %v2352 = vld [vmem:[%s55 + $0x18] sm:$0xff]
  %v2353 = vld [vmem:[%s53] sm:$0x1]
  %v2355 = vperm.slane %v2353, 0
  %v2358 = vsel %vm208, %v2348, 0
  %2360 = vmatpush.msra.mxu0 0.0
  %2361 = vmatpush.msra.mxu0 0.0
  %2362 = vmatpush.msra.mxu0 0.0
  %2363 = vmatpush.msra.mxu0 0.0
  %2364 = vmatpush.msra.mxu0 0.0
  %2365 = vmatpush.msra.mxu0 0.0
  %2366 = vmatpush.msra.mxu0 0.0
  %2367 = vmatpush.msra.mxu0 0.0
  %2368 = vmatpush.msra.mxu0 0.0
  %2369 = vmatpush.msra.mxu0 0.0
  %2370 = vmatpush.msra.mxu0 0.0
  %2371 = vmatpush.msra.mxu0 0.0
  %2372 = vmatpush.msra.mxu0 %v2352
  %2373 = vmatpush.msra.mxu0 %v2351
  %2374 = vmatpush.msra.mxu0 %v2350
  %2375 = vmatpush.msra.mxu0 %v2349
  %2376 = vmatmul.f32.gmra.mxu0 %v2358
  %v2377 = vpop.f32.mrf.mxu0
  %v2378 = vadd.f32 %v2355, %v2377
  %2379 = vdwg.mxu0
  %2381 = vrot.lane.b32.xlu0 %v2378, 96
  %v2382 = vpop.permute.xlu0 %2381
  %v2383 = vsel %vm1635, %v2378, 0
  %v2385 = vsel %vm1635, %v2382, 0
  %2387 = vmatpush.xpose.msra.mxu0 0.0
  %2388 = vmatpush.xpose.msra.mxu0 0.0
  %2389 = vmatpush.xpose.msra.mxu0 0.0
  %2390 = vmatpush.xpose.msra.mxu0 0.0
  %2391 = vmatpush.xpose.msra.mxu0 0.0
  %2392 = vmatpush.xpose.msra.mxu0 0.0
  %2393 = vmatpush.xpose.msra.mxu0 0.0
  %2394 = vmatpush.xpose.msra.mxu0 0.0
  %2395 = vmatpush.xpose.msra.mxu0 0.0
  %2396 = vmatpush.xpose.msra.mxu0 0.0
  %2397 = vmatpush.xpose.msra.mxu0 0.0
  %2398 = vmatpush.xpose.msra.mxu0 0.0
  %2399 = vmatpush.xpose.msra.mxu0 0.0
  %2400 = vmatpush.xpose.msra.mxu0 0.0
  %2401 = vmatpush.xpose.msra.mxu0 0.0
  %2402 = vmatpush.xpose.msra.mxu0 %v2385
  %2403 = vmatmul.f32.gmra.mxu0 %v2383
  %v2404 = vpop.f32.mrf.mxu0
  %v2405 = vadd.f32 0.0, %v2404
  %2406 = vdwg.mxu0
  %v2407 = vmul.f32 %v2405, 0.35355338
  %v2408 = vsel %vm1635, %v2407, -inf
  %2409 = vmax.xlane.f32.xlu0 %v2408
  %v2410 = vpop.xlane.xlu0 %2409
  %v2411 = vsub.f32 %v2407, %v2410
  %v2412 = vmul.f32 %v2411, 1.442695
  %v2413 = vpow.pop %v2412
  %v2414 = vsel %vm1635, %v2413, 0.0
  %2415 = vadd.xlane.f32.xlu0 %v2414
  %v2416 = vpop.xlane.xlu0 %2415
  %v2417 = vrcp.pop %v2416
  %v2418 = vmul.f32 %v2416, %v2417
  %v2419 = vsub.f32 1.0, %v2418
  %v2420 = vmul.f32 %v2417, %v2419
  %v2421 = vadd.f32 %v2417, %v2420
  %vm2422 = vweird.f32 %v2416
  %vm2423 = vweird.f32 %v2417
  %vm2424 = vmor %vm2422, %vm2423
  %v2425 = vsel %vm2424, %v2417, %v2421
  %v2426 = vand.u32 2147483647, %v2416
  %vm2427 = vcmp.eq.f32.partialorder %v2426, 8.507059e+37
  %v2428 = vand.u32 %v2416, 2147483648
  %v2429 = vor.u32 1.1754944e-38, %v2428
  %v2430 = vsel %vm2427, %v2429, %v2425
  %v2431 = vmul.f32 %v2413, %v2430
  %2432 = vrot.lane.b32.xlu0 %v2378, 64
  %v2433 = vpop.permute.xlu0 %2432
  %v2436 = vsel %vm1635, %v2431, 0
  %2438 = vmatpush.msra.mxu0 0.0
  %2439 = vmatpush.msra.mxu0 0.0
  %2440 = vmatpush.msra.mxu0 0.0
  %2441 = vmatpush.msra.mxu0 0.0
  %2442 = vmatpush.msra.mxu0 0.0
  %2443 = vmatpush.msra.mxu0 0.0
  %2444 = vmatpush.msra.mxu0 0.0
  %2445 = vmatpush.msra.mxu0 0.0
  %2446 = vmatpush.msra.mxu0 0.0
  %2447 = vmatpush.msra.mxu0 0.0
  %2448 = vmatpush.msra.mxu0 0.0
  %2449 = vmatpush.msra.mxu0 0.0
  %2450 = vmatpush.msra.mxu0 0.0
  %2451 = vmatpush.msra.mxu0 0.0
  %2452 = vmatpush.msra.mxu0 0.0
  %2453 = vmatpush.msra.mxu0 %v2433
  %2454 = vmatmul.f32.gmra.mxu0 %v2436
  %v2455 = vpop.f32.mrf.mxu0
  %v2456 = vadd.f32 0.0, %v2455
  %2457 = vdwg.mxu0
  %2458 = vrot.lane.b32.xlu0 %v2378, 120
  %v2459 = vpop.permute.xlu0 %2458
  %2460 = vrot.lane.b32.xlu0 %v2378, 88
  %v2461 = vpop.permute.xlu0 %2460
  %v2462 = vsel %vm1635, %v2459, 0
  %v2464 = vsel %vm1635, %v2461, 0
  %2466 = vmatpush.xpose.msra.mxu0 0.0
  %2467 = vmatpush.xpose.msra.mxu0 0.0
  %2468 = vmatpush.xpose.msra.mxu0 0.0
  %2469 = vmatpush.xpose.msra.mxu0 0.0
  %2470 = vmatpush.xpose.msra.mxu0 0.0
  %2471 = vmatpush.xpose.msra.mxu0 0.0
  %2472 = vmatpush.xpose.msra.mxu0 0.0
  %2473 = vmatpush.xpose.msra.mxu0 0.0
  %2474 = vmatpush.xpose.msra.mxu0 0.0
  %2475 = vmatpush.xpose.msra.mxu0 0.0
  %2476 = vmatpush.xpose.msra.mxu0 0.0
  %2477 = vmatpush.xpose.msra.mxu0 0.0
  %2478 = vmatpush.xpose.msra.mxu0 0.0
  %2479 = vmatpush.xpose.msra.mxu0 0.0
  %2480 = vmatpush.xpose.msra.mxu0 0.0
  %2481 = vmatpush.xpose.msra.mxu0 %v2464
  %2482 = vmatmul.f32.gmra.mxu0 %v2462
  %v2483 = vpop.f32.mrf.mxu0
  %v2484 = vadd.f32 0.0, %v2483
  %2485 = vdwg.mxu0
  %v2486 = vmul.f32 %v2484, 0.35355338
  %v2487 = vsel %vm1635, %v2486, -inf
  %2488 = vmax.xlane.f32.xlu0 %v2487
  %v2489 = vpop.xlane.xlu0 %2488
  %v2490 = vsub.f32 %v2486, %v2489
  %v2491 = vmul.f32 %v2490, 1.442695
  %v2492 = vpow.pop %v2491
  %v2493 = vsel %vm1635, %v2492, 0.0
  %2494 = vadd.xlane.f32.xlu0 %v2493
  %v2495 = vpop.xlane.xlu0 %2494
  %v2496 = vrcp.pop %v2495
  %v2497 = vmul.f32 %v2495, %v2496
  %v2498 = vsub.f32 1.0, %v2497
  %v2499 = vmul.f32 %v2496, %v2498
  %v2500 = vadd.f32 %v2496, %v2499
  %vm2501 = vweird.f32 %v2495
  %vm2502 = vweird.f32 %v2496
  %vm2503 = vmor %vm2501, %vm2502
  %v2504 = vsel %vm2503, %v2496, %v2500
  %v2505 = vand.u32 2147483647, %v2495
  %vm2506 = vcmp.eq.f32.partialorder %v2505, 8.507059e+37
  %v2507 = vand.u32 %v2495, 2147483648
  %v2508 = vor.u32 1.1754944e-38, %v2507
  %v2509 = vsel %vm2506, %v2508, %v2504
  %v2510 = vmul.f32 %v2492, %v2509
  %2511 = vrot.lane.b32.xlu0 %v2378, 56
  %v2512 = vpop.permute.xlu0 %2511
  %v2515 = vsel %vm1635, %v2510, 0
  %2517 = vmatpush.msra.mxu0 0.0
  %2518 = vmatpush.msra.mxu0 0.0
  %2519 = vmatpush.msra.mxu0 0.0
  %2520 = vmatpush.msra.mxu0 0.0
  %2521 = vmatpush.msra.mxu0 0.0
  %2522 = vmatpush.msra.mxu0 0.0
  %2523 = vmatpush.msra.mxu0 0.0
  %2524 = vmatpush.msra.mxu0 0.0
  %2525 = vmatpush.msra.mxu0 0.0
  %2526 = vmatpush.msra.mxu0 0.0
  %2527 = vmatpush.msra.mxu0 0.0
  %2528 = vmatpush.msra.mxu0 0.0
  %2529 = vmatpush.msra.mxu0 0.0
  %2530 = vmatpush.msra.mxu0 0.0
  %2531 = vmatpush.msra.mxu0 0.0
  %2532 = vmatpush.msra.mxu0 %v2512
  %2533 = vmatmul.f32.gmra.mxu0 %v2515
  %v2534 = vpop.f32.mrf.mxu0
  %v2535 = vadd.f32 0.0, %v2534
  %2536 = vdwg.mxu0
  %2537 = vrot.lane.b32.xlu0 %v2378, 112
  %v2538 = vpop.permute.xlu0 %2537
  %2539 = vrot.lane.b32.xlu0 %v2378, 80
  %v2540 = vpop.permute.xlu0 %2539
  %v2541 = vsel %vm1635, %v2538, 0
  %v2543 = vsel %vm1635, %v2540, 0
  %2545 = vmatpush.xpose.msra.mxu0 0.0
  %2546 = vmatpush.xpose.msra.mxu0 0.0
  %2547 = vmatpush.xpose.msra.mxu0 0.0
  %2548 = vmatpush.xpose.msra.mxu0 0.0
  %2549 = vmatpush.xpose.msra.mxu0 0.0
  %2550 = vmatpush.xpose.msra.mxu0 0.0
  %2551 = vmatpush.xpose.msra.mxu0 0.0
  %2552 = vmatpush.xpose.msra.mxu0 0.0
  %2553 = vmatpush.xpose.msra.mxu0 0.0
  %2554 = vmatpush.xpose.msra.mxu0 0.0
  %2555 = vmatpush.xpose.msra.mxu0 0.0
  %2556 = vmatpush.xpose.msra.mxu0 0.0
  %2557 = vmatpush.xpose.msra.mxu0 0.0
  %2558 = vmatpush.xpose.msra.mxu0 0.0
  %2559 = vmatpush.xpose.msra.mxu0 0.0
  %2560 = vmatpush.xpose.msra.mxu0 %v2543
  %2561 = vmatmul.f32.gmra.mxu0 %v2541
  %v2562 = vpop.f32.mrf.mxu0
  %v2563 = vadd.f32 0.0, %v2562
  %2564 = vdwg.mxu0
  %v2565 = vmul.f32 %v2563, 0.35355338
  %v2566 = vsel %vm1635, %v2565, -inf
  %2567 = vmax.xlane.f32.xlu0 %v2566
  %v2568 = vpop.xlane.xlu0 %2567
  %v2569 = vsub.f32 %v2565, %v2568
  %v2570 = vmul.f32 %v2569, 1.442695
  %v2571 = vpow.pop %v2570
  %v2572 = vsel %vm1635, %v2571, 0.0
  %2573 = vadd.xlane.f32.xlu0 %v2572
  %v2574 = vpop.xlane.xlu0 %2573
  %v2575 = vrcp.pop %v2574
  %v2576 = vmul.f32 %v2574, %v2575
  %v2577 = vsub.f32 1.0, %v2576
  %v2578 = vmul.f32 %v2575, %v2577
  %v2579 = vadd.f32 %v2575, %v2578
  %vm2580 = vweird.f32 %v2574
  %vm2581 = vweird.f32 %v2575
  %vm2582 = vmor %vm2580, %vm2581
  %v2583 = vsel %vm2582, %v2575, %v2579
  %v2584 = vand.u32 2147483647, %v2574
  %vm2585 = vcmp.eq.f32.partialorder %v2584, 8.507059e+37
  %v2586 = vand.u32 %v2574, 2147483648
  %v2587 = vor.u32 1.1754944e-38, %v2586
  %v2588 = vsel %vm2585, %v2587, %v2583
  %v2589 = vmul.f32 %v2571, %v2588
  %2590 = vrot.lane.b32.xlu0 %v2378, 48
  %v2591 = vpop.permute.xlu0 %2590
  %v2594 = vsel %vm1635, %v2589, 0
  %2596 = vmatpush.msra.mxu0 0.0
  %2597 = vmatpush.msra.mxu0 0.0
  %2598 = vmatpush.msra.mxu0 0.0
  %2599 = vmatpush.msra.mxu0 0.0
  %2600 = vmatpush.msra.mxu0 0.0
  %2601 = vmatpush.msra.mxu0 0.0
  %2602 = vmatpush.msra.mxu0 0.0
  %2603 = vmatpush.msra.mxu0 0.0
  %2604 = vmatpush.msra.mxu0 0.0
  %2605 = vmatpush.msra.mxu0 0.0
  %2606 = vmatpush.msra.mxu0 0.0
  %2607 = vmatpush.msra.mxu0 0.0
  %2608 = vmatpush.msra.mxu0 0.0
  %2609 = vmatpush.msra.mxu0 0.0
  %2610 = vmatpush.msra.mxu0 0.0
  %2611 = vmatpush.msra.mxu0 %v2591
  %2612 = vmatmul.f32.gmra.mxu0 %v2594
  %v2613 = vpop.f32.mrf.mxu0
  %v2614 = vadd.f32 0.0, %v2613
  %2615 = vdwg.mxu0
  %2616 = vrot.lane.b32.xlu0 %v2378, 104
  %v2617 = vpop.permute.xlu0 %2616
  %2618 = vrot.lane.b32.xlu0 %v2378, 72
  %v2619 = vpop.permute.xlu0 %2618
  %v2620 = vsel %vm1635, %v2617, 0
  %v2622 = vsel %vm1635, %v2619, 0
  %2624 = vmatpush.xpose.msra.mxu0 0.0
  %2625 = vmatpush.xpose.msra.mxu0 0.0
  %2626 = vmatpush.xpose.msra.mxu0 0.0
  %2627 = vmatpush.xpose.msra.mxu0 0.0
  %2628 = vmatpush.xpose.msra.mxu0 0.0
  %2629 = vmatpush.xpose.msra.mxu0 0.0
  %2630 = vmatpush.xpose.msra.mxu0 0.0
  %2631 = vmatpush.xpose.msra.mxu0 0.0
  %2632 = vmatpush.xpose.msra.mxu0 0.0
  %2633 = vmatpush.xpose.msra.mxu0 0.0
  %2634 = vmatpush.xpose.msra.mxu0 0.0
  %2635 = vmatpush.xpose.msra.mxu0 0.0
  %2636 = vmatpush.xpose.msra.mxu0 0.0
  %2637 = vmatpush.xpose.msra.mxu0 0.0
  %2638 = vmatpush.xpose.msra.mxu0 0.0
  %2639 = vmatpush.xpose.msra.mxu0 %v2622
  %2640 = vmatmul.f32.gmra.mxu0 %v2620
  %v2641 = vpop.f32.mrf.mxu0
  %v2642 = vadd.f32 0.0, %v2641
  %2643 = vdwg.mxu0
  %v2644 = vmul.f32 %v2642, 0.35355338
  %v2645 = vsel %vm1635, %v2644, -inf
  %2646 = vmax.xlane.f32.xlu0 %v2645
  %v2647 = vpop.xlane.xlu0 %2646
  %v2648 = vsub.f32 %v2644, %v2647
  %v2649 = vmul.f32 %v2648, 1.442695
  %v2650 = vpow.pop %v2649
  %v2651 = vsel %vm1635, %v2650, 0.0
  %2652 = vadd.xlane.f32.xlu0 %v2651
  %v2653 = vpop.xlane.xlu0 %2652
  %v2654 = vrcp.pop %v2653
  %v2655 = vmul.f32 %v2653, %v2654
  %v2656 = vsub.f32 1.0, %v2655
  %v2657 = vmul.f32 %v2654, %v2656
  %v2658 = vadd.f32 %v2654, %v2657
  %vm2659 = vweird.f32 %v2653
  %vm2660 = vweird.f32 %v2654
  %vm2661 = vmor %vm2659, %vm2660
  %v2662 = vsel %vm2661, %v2654, %v2658
  %v2663 = vand.u32 2147483647, %v2653
  %vm2664 = vcmp.eq.f32.partialorder %v2663, 8.507059e+37
  %v2665 = vand.u32 %v2653, 2147483648
  %v2666 = vor.u32 1.1754944e-38, %v2665
  %v2667 = vsel %vm2664, %v2666, %v2662
  %v2668 = vmul.f32 %v2650, %v2667
  %2669 = vrot.lane.b32.xlu0 %v2378, 40
  %v2670 = vpop.permute.xlu0 %2669
  %v2673 = vsel %vm1635, %v2668, 0
  %2675 = vmatpush.msra.mxu0 0.0
  %2676 = vmatpush.msra.mxu0 0.0
  %2677 = vmatpush.msra.mxu0 0.0
  %2678 = vmatpush.msra.mxu0 0.0
  %2679 = vmatpush.msra.mxu0 0.0
  %2680 = vmatpush.msra.mxu0 0.0
  %2681 = vmatpush.msra.mxu0 0.0
  %2682 = vmatpush.msra.mxu0 0.0
  %2683 = vmatpush.msra.mxu0 0.0
  %2684 = vmatpush.msra.mxu0 0.0
  %2685 = vmatpush.msra.mxu0 0.0
  %2686 = vmatpush.msra.mxu0 0.0
  %2687 = vmatpush.msra.mxu0 0.0
  %2688 = vmatpush.msra.mxu0 0.0
  %2689 = vmatpush.msra.mxu0 0.0
  %2690 = vmatpush.msra.mxu0 %v2670
  %2691 = vmatmul.f32.gmra.mxu0 %v2673
  %v2692 = vpop.f32.mrf.mxu0
  %v2693 = vadd.f32 0.0, %v2692
  %2694 = vdwg.mxu0
  %2696 = vrot.lane.b32.xlu0 %v2535, 8
  %v2697 = vpop.permute.xlu0 %2696
  %2700 = vrot.lane.b32.xlu0 %v2614, 16
  %v2701 = vpop.permute.xlu0 %2700
  %2704 = vrot.lane.b32.xlu0 %v2693, 24
  %v2705 = vpop.permute.xlu0 %2704
  %v2707 = vsel %vm1635, %v2456, %v2697
  %v2708 = vsel %vm325, %v2707, %v2701
  %v2709 = vsel %vm1962, %v2708, %v2705
  %2714 = vrot.lane.b32.xlu0 %v2349, 32
  %v2715 = vpop.permute.xlu0 %2714
  %2716 = vrot.lane.b32.xlu0 %v2350, 32
  %v2717 = vpop.permute.xlu0 %2716
  %2718 = vrot.lane.b32.xlu0 %v2351, 32
  %v2719 = vpop.permute.xlu0 %2718
  %2720 = vrot.lane.b32.xlu0 %v2352, 32
  %v2721 = vpop.permute.xlu0 %2720
  %2726 = vrot.lane.b32.xlu0 %v2355, 32
  %v2727 = vpop.permute.xlu0 %2726
  %v2730 = vsel %vm208, %v2709, 0
  %2732 = vmatpush.msra.mxu0 0.0
  %2733 = vmatpush.msra.mxu0 0.0
  %2734 = vmatpush.msra.mxu0 0.0
  %2735 = vmatpush.msra.mxu0 0.0
  %2736 = vmatpush.msra.mxu0 0.0
  %2737 = vmatpush.msra.mxu0 0.0
  %2738 = vmatpush.msra.mxu0 0.0
  %2739 = vmatpush.msra.mxu0 0.0
  %2740 = vmatpush.msra.mxu0 0.0
  %2741 = vmatpush.msra.mxu0 0.0
  %2742 = vmatpush.msra.mxu0 0.0
  %2743 = vmatpush.msra.mxu0 0.0
  %2744 = vmatpush.msra.mxu0 %v2721
  %2745 = vmatpush.msra.mxu0 %v2719
  %2746 = vmatpush.msra.mxu0 %v2717
  %2747 = vmatpush.msra.mxu0 %v2715
  %2748 = vmatmul.f32.gmra.mxu0 %v2730
  %v2749 = vpop.f32.mrf.mxu0
  %v2750 = vadd.f32 %v2727, %v2749
  %2751 = vdwg.mxu0
  %v2752 = vadd.f32 %v1514, %v2750
  %v2753 = vsel %vm208, %v2752, 0.0
  %2754 = vadd.xlane.f32.xlu0 %v2753
  %v2755 = vpop.xlane.xlu0 %2754
  %v2756 = vmul.f32 %v2755, %v1577
  %v2757 = vsub.f32 %v2752, %v2756
  %v2758 = vmul.f32 %v2757, %v2757
  %v2759 = vsel %vm208, %v2758, 0.0
  %2760 = vadd.xlane.f32.xlu0 %v2759
  %v2761 = vpop.xlane.xlu0 %2760
  %v2762 = vmul.f32 %v2761, %v1577
  %v2763 = vadd.f32 %v2762, 1e-06
  %v2764 = vrsqrt.pop %v2763
  %v2765 = vmul.f32 %v2764, %v2763
  %v2766 = vmul.f32 %v2765, %v2764
  %v2767 = vmul.f32 0.5, %v2766
  %v2768 = vsub.f32 1.5, %v2767
  %v2769 = vmul.f32 %v2764, %v2768
  %vm2770 = vweird.f32 %v2763
  %vm2771 = vweird.f32 %v2764
  %vm2772 = vmor %vm2770, %vm2771
  %v2773 = vsel %vm2772, %v2764, %v2769
  %v2774 = vmul.f32 %v2757, %v2773
  %v2775 = vperm.slane %v2322, 2
  %v2776 = vmul.f32 %v2774, %v2775
  %v2777 = vperm.slane %v2322, 3
  %v2778 = vadd.f32 %v2776, %v2777
  %v2779 = vld [vmem:[%s61] sm:$0xff]
  %v2780 = vld [vmem:[%s61 + $0x8] sm:$0xff]
  %v2781 = vld [vmem:[%s61 + $0x10] sm:$0xff]
  %v2782 = vld [vmem:[%s61 + $0x18] sm:$0xff]
  %v2783 = vld [vmem:[%s61 + $0x20] sm:$0xff]
  %v2784 = vld [vmem:[%s61 + $0x28] sm:$0xff]
  %v2785 = vld [vmem:[%s61 + $0x30] sm:$0xff]
  %v2786 = vld [vmem:[%s61 + $0x38] sm:$0xff]
  %v2787 = vld [vmem:[%s61 + $0x40] sm:$0xff]
  %v2788 = vld [vmem:[%s61 + $0x48] sm:$0xff]
  %v2789 = vld [vmem:[%s61 + $0x50] sm:$0xff]
  %v2790 = vld [vmem:[%s61 + $0x58] sm:$0xff]
  %v2791 = vld [vmem:[%s61 + $0x60] sm:$0xff]
  %v2792 = vld [vmem:[%s61 + $0x68] sm:$0xff]
  %v2793 = vld [vmem:[%s61 + $0x70] sm:$0xff]
  %v2794 = vld [vmem:[%s61 + $0x78] sm:$0xff]
  %v2795 = vld [vmem:[%s57] sm:$0xf]
  %v2797 = vperm.slane %v2795, 0
  %v2798 = vperm.slane %v2795, 1
  %v2799 = vperm.slane %v2795, 2
  %v2800 = vperm.slane %v2795, 3
  %v2806 = vsel %vm208, %v2778, 0
  %2808 = vmatpush.msra.mxu0 0.0
  %2809 = vmatpush.msra.mxu0 0.0
  %2810 = vmatpush.msra.mxu0 0.0
  %2811 = vmatpush.msra.mxu0 0.0
  %2812 = vmatpush.msra.mxu0 0.0
  %2813 = vmatpush.msra.mxu0 0.0
  %2814 = vmatpush.msra.mxu0 0.0
  %2815 = vmatpush.msra.mxu0 0.0
  %2816 = vmatpush.msra.mxu0 0.0
  %2817 = vmatpush.msra.mxu0 0.0
  %2818 = vmatpush.msra.mxu0 0.0
  %2819 = vmatpush.msra.mxu0 0.0
  %2820 = vmatpush.msra.mxu0 %v2791
  %2821 = vmatpush.msra.mxu0 %v2787
  %2822 = vmatpush.msra.mxu0 %v2783
  %2823 = vmatpush.msra.mxu0 %v2779
  %2824 = vmatmul.f32.gmra.mxu0 %v2806
  %v2825 = vpop.f32.mrf.mxu0
  %v2826 = vadd.f32 %v2797, %v2825
  %2827 = vdwg.mxu0
  %2828 = vmatpush.msra.mxu0 0.0
  %2829 = vmatpush.msra.mxu0 0.0
  %2830 = vmatpush.msra.mxu0 0.0
  %2831 = vmatpush.msra.mxu0 0.0
  %2832 = vmatpush.msra.mxu0 0.0
  %2833 = vmatpush.msra.mxu0 0.0
  %2834 = vmatpush.msra.mxu0 0.0
  %2835 = vmatpush.msra.mxu0 0.0
  %2836 = vmatpush.msra.mxu0 0.0
  %2837 = vmatpush.msra.mxu0 0.0
  %2838 = vmatpush.msra.mxu0 0.0
  %2839 = vmatpush.msra.mxu0 0.0
  %2840 = vmatpush.msra.mxu0 %v2792
  %2841 = vmatpush.msra.mxu0 %v2788
  %2842 = vmatpush.msra.mxu0 %v2784
  %2843 = vmatpush.msra.mxu0 %v2780
  %2844 = vmatmul.f32.gmra.mxu0 %v2806
  %v2845 = vpop.f32.mrf.mxu0
  %v2846 = vadd.f32 %v2798, %v2845
  %2847 = vdwg.mxu0
  %2848 = vmatpush.msra.mxu0 0.0
  %2849 = vmatpush.msra.mxu0 0.0
  %2850 = vmatpush.msra.mxu0 0.0
  %2851 = vmatpush.msra.mxu0 0.0
  %2852 = vmatpush.msra.mxu0 0.0
  %2853 = vmatpush.msra.mxu0 0.0
  %2854 = vmatpush.msra.mxu0 0.0
  %2855 = vmatpush.msra.mxu0 0.0
  %2856 = vmatpush.msra.mxu0 0.0
  %2857 = vmatpush.msra.mxu0 0.0
  %2858 = vmatpush.msra.mxu0 0.0
  %2859 = vmatpush.msra.mxu0 0.0
  %2860 = vmatpush.msra.mxu0 %v2793
  %2861 = vmatpush.msra.mxu0 %v2789
  %2862 = vmatpush.msra.mxu0 %v2785
  %2863 = vmatpush.msra.mxu0 %v2781
  %2864 = vmatmul.f32.gmra.mxu0 %v2806
  %v2865 = vpop.f32.mrf.mxu0
  %v2866 = vadd.f32 %v2799, %v2865
  %2867 = vdwg.mxu0
  %2868 = vmatpush.msra.mxu0 0.0
  %2869 = vmatpush.msra.mxu0 0.0
  %2870 = vmatpush.msra.mxu0 0.0
  %2871 = vmatpush.msra.mxu0 0.0
  %2872 = vmatpush.msra.mxu0 0.0
  %2873 = vmatpush.msra.mxu0 0.0
  %2874 = vmatpush.msra.mxu0 0.0
  %2875 = vmatpush.msra.mxu0 0.0
  %2876 = vmatpush.msra.mxu0 0.0
  %2877 = vmatpush.msra.mxu0 0.0
  %2878 = vmatpush.msra.mxu0 0.0
  %2879 = vmatpush.msra.mxu0 0.0
  %2880 = vmatpush.msra.mxu0 %v2794
  %2881 = vmatpush.msra.mxu0 %v2790
  %2882 = vmatpush.msra.mxu0 %v2786
  %2883 = vmatpush.msra.mxu0 %v2782
  %2884 = vmatmul.f32.gmra.mxu0 %v2806
  %v2885 = vpop.f32.mrf.mxu0
  %v2886 = vadd.f32 %v2800, %v2885
  %2887 = vdwg.mxu0
  %v2888 = vmax.f32 %v2826, 0.0
  %v2889 = vmax.f32 %v2846, 0.0
  %v2890 = vmax.f32 %v2866, 0.0
  %v2891 = vmax.f32 %v2886, 0.0
  %v2892 = vld [vmem:[%s63] sm:$0xff]
  %v2893 = vld [vmem:[%s63 + $0x8] sm:$0xff]
  %v2894 = vld [vmem:[%s63 + $0x10] sm:$0xff]
  %v2895 = vld [vmem:[%s63 + $0x18] sm:$0xff]
  %v2896 = vld [vmem:[%s63 + $0x20] sm:$0xff]
  %v2897 = vld [vmem:[%s63 + $0x28] sm:$0xff]
  %v2898 = vld [vmem:[%s63 + $0x30] sm:$0xff]
  %v2899 = vld [vmem:[%s63 + $0x38] sm:$0xff]
  %v2900 = vld [vmem:[%s63 + $0x40] sm:$0xff]
  %v2901 = vld [vmem:[%s63 + $0x48] sm:$0xff]
  %v2902 = vld [vmem:[%s63 + $0x50] sm:$0xff]
  %v2903 = vld [vmem:[%s63 + $0x58] sm:$0xff]
  %v2904 = vld [vmem:[%s63 + $0x60] sm:$0xff]
  %v2905 = vld [vmem:[%s63 + $0x68] sm:$0xff]
  %v2906 = vld [vmem:[%s63 + $0x70] sm:$0xff]
  %v2907 = vld [vmem:[%s63 + $0x78] sm:$0xff]
  %v2908 = vld [vmem:[%s63 + $0x80] sm:$0xff]
  %v2909 = vld [vmem:[%s63 + $0x88] sm:$0xff]
  %v2910 = vld [vmem:[%s63 + $0x90] sm:$0xff]
  %v2911 = vld [vmem:[%s63 + $0x98] sm:$0xff]
  %v2912 = vld [vmem:[%s63 + $0xa0] sm:$0xff]
  %v2913 = vld [vmem:[%s63 + $0xa8] sm:$0xff]
  %v2914 = vld [vmem:[%s63 + $0xb0] sm:$0xff]
  %v2915 = vld [vmem:[%s63 + $0xb8] sm:$0xff]
  %v2916 = vld [vmem:[%s63 + $0xc0] sm:$0xff]
  %v2917 = vld [vmem:[%s63 + $0xc8] sm:$0xff]
  %v2918 = vld [vmem:[%s63 + $0xd0] sm:$0xff]
  %v2919 = vld [vmem:[%s63 + $0xd8] sm:$0xff]
  %v2920 = vld [vmem:[%s63 + $0xe0] sm:$0xff]
  %v2921 = vld [vmem:[%s63 + $0xe8] sm:$0xff]
  %v2922 = vld [vmem:[%s63 + $0xf0] sm:$0xff]
  %v2923 = vld [vmem:[%s63 + $0xf8] sm:$0xff]
  %v2924 = vld [vmem:[%s63 + $0x100] sm:$0xff]
  %v2925 = vld [vmem:[%s63 + $0x108] sm:$0xff]
  %v2926 = vld [vmem:[%s63 + $0x110] sm:$0xff]
  %v2927 = vld [vmem:[%s63 + $0x118] sm:$0xff]
  %v2928 = vld [vmem:[%s63 + $0x120] sm:$0xff]
  %v2929 = vld [vmem:[%s63 + $0x128] sm:$0xff]
  %v2930 = vld [vmem:[%s63 + $0x130] sm:$0xff]
  %v2931 = vld [vmem:[%s63 + $0x138] sm:$0xff]
  %v2932 = vld [vmem:[%s63 + $0x140] sm:$0xff]
  %v2933 = vld [vmem:[%s63 + $0x148] sm:$0xff]
  %v2934 = vld [vmem:[%s63 + $0x150] sm:$0xff]
  %v2935 = vld [vmem:[%s63 + $0x158] sm:$0xff]
  %v2936 = vld [vmem:[%s63 + $0x160] sm:$0xff]
  %v2937 = vld [vmem:[%s63 + $0x168] sm:$0xff]
  %v2938 = vld [vmem:[%s63 + $0x170] sm:$0xff]
  %v2939 = vld [vmem:[%s63 + $0x178] sm:$0xff]
  %v2940 = vld [vmem:[%s63 + $0x180] sm:$0xff]
  %v2941 = vld [vmem:[%s63 + $0x188] sm:$0xff]
  %v2942 = vld [vmem:[%s63 + $0x190] sm:$0xff]
  %v2943 = vld [vmem:[%s63 + $0x198] sm:$0xff]
  %v2944 = vld [vmem:[%s63 + $0x1a0] sm:$0xff]
  %v2945 = vld [vmem:[%s63 + $0x1a8] sm:$0xff]
  %v2946 = vld [vmem:[%s63 + $0x1b0] sm:$0xff]
  %v2947 = vld [vmem:[%s63 + $0x1b8] sm:$0xff]
  %v2948 = vld [vmem:[%s63 + $0x1c0] sm:$0xff]
  %v2949 = vld [vmem:[%s63 + $0x1c8] sm:$0xff]
  %v2950 = vld [vmem:[%s63 + $0x1d0] sm:$0xff]
  %v2951 = vld [vmem:[%s63 + $0x1d8] sm:$0xff]
  %v2952 = vld [vmem:[%s63 + $0x1e0] sm:$0xff]
  %v2953 = vld [vmem:[%s63 + $0x1e8] sm:$0xff]
  %v2954 = vld [vmem:[%s63 + $0x1f0] sm:$0xff]
  %v2955 = vld [vmem:[%s63 + $0x1f8] sm:$0xff]
  %v2956 = vld [vmem:[%s59] sm:$0x1]
  %v2958 = vperm.slane %v2956, 0
  %2960 = vmatpush.msra.mxu0 %v2907
  %2961 = vmatpush.msra.mxu0 %v2906
  %2962 = vmatpush.msra.mxu0 %v2905
  %2963 = vmatpush.msra.mxu0 %v2904
  %2964 = vmatpush.msra.mxu0 %v2903
  %2965 = vmatpush.msra.mxu0 %v2902
  %2966 = vmatpush.msra.mxu0 %v2901
  %2967 = vmatpush.msra.mxu0 %v2900
  %2968 = vmatpush.msra.mxu0 %v2899
  %2969 = vmatpush.msra.mxu0 %v2898
  %2970 = vmatpush.msra.mxu0 %v2897
  %2971 = vmatpush.msra.mxu0 %v2896
  %2972 = vmatpush.msra.mxu0 %v2895
  %2973 = vmatpush.msra.mxu0 %v2894
  %2974 = vmatpush.msra.mxu0 %v2893
  %2975 = vmatpush.msra.mxu0 %v2892
  %2976 = vmatmul.f32.gmra.mxu0 %v2888
  %v2977 = vpop.f32.mrf.mxu0
  %v2978 = vadd.f32 %v2958, %v2977
  %2979 = vdwg.mxu0
  %2980 = vmatpush.msra.mxu0 %v2923
  %2981 = vmatpush.msra.mxu0 %v2922
  %2982 = vmatpush.msra.mxu0 %v2921
  %2983 = vmatpush.msra.mxu0 %v2920
  %2984 = vmatpush.msra.mxu0 %v2919
  %2985 = vmatpush.msra.mxu0 %v2918
  %2986 = vmatpush.msra.mxu0 %v2917
  %2987 = vmatpush.msra.mxu0 %v2916
  %2988 = vmatpush.msra.mxu0 %v2915
  %2989 = vmatpush.msra.mxu0 %v2914
  %2990 = vmatpush.msra.mxu0 %v2913
  %2991 = vmatpush.msra.mxu0 %v2912
  %2992 = vmatpush.msra.mxu0 %v2911
  %2993 = vmatpush.msra.mxu0 %v2910
  %2994 = vmatpush.msra.mxu0 %v2909
  %2995 = vmatpush.msra.mxu0 %v2908
  %2996 = vmatmul.f32.gmra.mxu0 %v2889
  %v2997 = vpop.f32.mrf.mxu0
  %v2998 = vadd.f32 %v2978, %v2997
  %2999 = vdwg.mxu0
  %3000 = vmatpush.msra.mxu0 %v2939
  %3001 = vmatpush.msra.mxu0 %v2938
  %3002 = vmatpush.msra.mxu0 %v2937
  %3003 = vmatpush.msra.mxu0 %v2936
  %3004 = vmatpush.msra.mxu0 %v2935
  %3005 = vmatpush.msra.mxu0 %v2934
  %3006 = vmatpush.msra.mxu0 %v2933
  %3007 = vmatpush.msra.mxu0 %v2932
  %3008 = vmatpush.msra.mxu0 %v2931
  %3009 = vmatpush.msra.mxu0 %v2930
  %3010 = vmatpush.msra.mxu0 %v2929
  %3011 = vmatpush.msra.mxu0 %v2928
  %3012 = vmatpush.msra.mxu0 %v2927
  %3013 = vmatpush.msra.mxu0 %v2926
  %3014 = vmatpush.msra.mxu0 %v2925
  %3015 = vmatpush.msra.mxu0 %v2924
  %3016 = vmatmul.f32.gmra.mxu0 %v2890
  %v3017 = vpop.f32.mrf.mxu0
  %v3018 = vadd.f32 %v2998, %v3017
  %3019 = vdwg.mxu0
  %3020 = vmatpush.msra.mxu0 %v2955
  %3021 = vmatpush.msra.mxu0 %v2954
  %3022 = vmatpush.msra.mxu0 %v2953
  %3023 = vmatpush.msra.mxu0 %v2952
  %3024 = vmatpush.msra.mxu0 %v2951
  %3025 = vmatpush.msra.mxu0 %v2950
  %3026 = vmatpush.msra.mxu0 %v2949
  %3027 = vmatpush.msra.mxu0 %v2948
  %3028 = vmatpush.msra.mxu0 %v2947
  %3029 = vmatpush.msra.mxu0 %v2946
  %3030 = vmatpush.msra.mxu0 %v2945
  %3031 = vmatpush.msra.mxu0 %v2944
  %3032 = vmatpush.msra.mxu0 %v2943
  %3033 = vmatpush.msra.mxu0 %v2942
  %3034 = vmatpush.msra.mxu0 %v2941
  %3035 = vmatpush.msra.mxu0 %v2940
  %3036 = vmatmul.f32.gmra.mxu0 %v2891
  %v3037 = vpop.f32.mrf.mxu0
  %v3038 = vadd.f32 %v3018, %v3037
  %3039 = vdwg.mxu0
  %v3040 = vadd.f32 %v2752, %v3038
  %v3041 = vld [vmem:[%s67] sm:$0x3]
  %v3042 = vsel %vm208, %v3040, 0.0
  %3043 = vadd.xlane.f32.xlu0 %v3042
  %v3044 = vpop.xlane.xlu0 %3043
  %v3045 = vmul.f32 %v3044, %v1577
  %v3046 = vsub.f32 %v3040, %v3045
  %v3047 = vmul.f32 %v3046, %v3046
  %v3048 = vsel %vm208, %v3047, 0.0
  %3049 = vadd.xlane.f32.xlu0 %v3048
  %v3050 = vpop.xlane.xlu0 %3049
  %v3051 = vmul.f32 %v3050, %v1577
  %v3052 = vadd.f32 %v3051, 1e-06
  %v3053 = vrsqrt.pop %v3052
  %v3054 = vmul.f32 %v3053, %v3052
  %v3055 = vmul.f32 %v3054, %v3053
  %v3056 = vmul.f32 0.5, %v3055
  %v3057 = vsub.f32 1.5, %v3056
  %v3058 = vmul.f32 %v3053, %v3057
  %vm3059 = vweird.f32 %v3052
  %vm3060 = vweird.f32 %v3053
  %vm3061 = vmor %vm3059, %vm3060
  %v3062 = vsel %vm3061, %v3053, %v3058
  %v3063 = vmul.f32 %v3046, %v3062
  %v3064 = vperm.slane %v3041, 0
  %v3065 = vmul.f32 %v3063, %v3064
  %v3066 = vperm.slane %v3041, 1
  %v3067 = vadd.f32 %v3065, %v3066
  %v3068 = vld [vmem:[%s15] sm:$0xff]
  %v3069 = vld [vmem:[%s15 + $0x8] sm:$0xff]
  %v3070 = vld [vmem:[%s15 + $0x10] sm:$0xff]
  %v3071 = vld [vmem:[%s15 + $0x18] sm:$0xff]
  %v3072 = vld [vmem:[%s13] sm:$0x1]
  %v3074 = vperm.slane %v3072, 0
  %v3077 = vsel %vm208, %v3067, 0
  %3079 = vmatpush.msra.mxu0 0.0
  %3080 = vmatpush.msra.mxu0 0.0
  %3081 = vmatpush.msra.mxu0 0.0
  %3082 = vmatpush.msra.mxu0 0.0
  %3083 = vmatpush.msra.mxu0 0.0
  %3084 = vmatpush.msra.mxu0 0.0
  %3085 = vmatpush.msra.mxu0 0.0
  %3086 = vmatpush.msra.mxu0 0.0
  %3087 = vmatpush.msra.mxu0 0.0
  %3088 = vmatpush.msra.mxu0 0.0
  %3089 = vmatpush.msra.mxu0 0.0
  %3090 = vmatpush.msra.mxu0 0.0
  %3091 = vmatpush.msra.mxu0 %v3071
  %3092 = vmatpush.msra.mxu0 %v3070
  %3093 = vmatpush.msra.mxu0 %v3069
  %3094 = vmatpush.msra.mxu0 %v3068
  %3095 = vmatmul.f32.gmra.mxu0 %v3077
  %v3096 = vpop.f32.mrf.mxu0
  %v3097 = vadd.f32 %v3074, %v3096
  %3098 = vdwg.mxu0
  %3103 = vrot.lane.b32.xlu0 %v3068, 96
  %v3104 = vpop.permute.xlu0 %3103
  %3105 = vrot.lane.b32.xlu0 %v3069, 96
  %v3106 = vpop.permute.xlu0 %3105
  %3107 = vrot.lane.b32.xlu0 %v3070, 96
  %v3108 = vpop.permute.xlu0 %3107
  %3109 = vrot.lane.b32.xlu0 %v3071, 96
  %v3110 = vpop.permute.xlu0 %3109
  %3115 = vrot.lane.b32.xlu0 %v3074, 96
  %v3116 = vpop.permute.xlu0 %3115
  %v3119 = vsel %vm208, %v2321, 0
  %3121 = vmatpush.msra.mxu0 0.0
  %3122 = vmatpush.msra.mxu0 0.0
  %3123 = vmatpush.msra.mxu0 0.0
  %3124 = vmatpush.msra.mxu0 0.0
  %3125 = vmatpush.msra.mxu0 0.0
  %3126 = vmatpush.msra.mxu0 0.0
  %3127 = vmatpush.msra.mxu0 0.0
  %3128 = vmatpush.msra.mxu0 0.0
  %3129 = vmatpush.msra.mxu0 0.0
  %3130 = vmatpush.msra.mxu0 0.0
  %3131 = vmatpush.msra.mxu0 0.0
  %3132 = vmatpush.msra.mxu0 0.0
  %3133 = vmatpush.msra.mxu0 %v3110
  %3134 = vmatpush.msra.mxu0 %v3108
  %3135 = vmatpush.msra.mxu0 %v3106
  %3136 = vmatpush.msra.mxu0 %v3104
  %3137 = vmatmul.f32.gmra.mxu0 %v3119
  %v3138 = vpop.f32.mrf.mxu0
  %v3139 = vadd.f32 %v3116, %v3138
  %3140 = vdwg.mxu0
  %vm3141 = vcmask 31744
  %v3143 = vsel %vm3141, %v3097, 0
  %v3146 = vsel %vm3141, %v3139, 0
  %3148 = vmatpush.xpose.msra.mxu0 0.0
  %3149 = vmatpush.xpose.msra.mxu0 0.0
  %3150 = vmatpush.xpose.msra.mxu0 0.0
  %3151 = vmatpush.xpose.msra.mxu0 0.0
  %3152 = vmatpush.xpose.msra.mxu0 0.0
  %3153 = vmatpush.xpose.msra.mxu0 0.0
  %3154 = vmatpush.xpose.msra.mxu0 0.0
  %3155 = vmatpush.xpose.msra.mxu0 0.0
  %3156 = vmatpush.xpose.msra.mxu0 0.0
  %3157 = vmatpush.xpose.msra.mxu0 0.0
  %3158 = vmatpush.xpose.msra.mxu0 0.0
  %3159 = vmatpush.xpose.msra.mxu0 0.0
  %3160 = vmatpush.xpose.msra.mxu0 0.0
  %3161 = vmatpush.xpose.msra.mxu0 0.0
  %3162 = vmatpush.xpose.msra.mxu0 0.0
  %3163 = vmatpush.xpose.msra.mxu0 %v3146
  %3164 = vmatmul.f32.gmra.mxu0 %v3143
  %v3165 = vpop.f32.mrf.mxu0
  %v3166 = vadd.f32 0.0, %v3165
  %3167 = vdwg.mxu0
  %v3168 = vmul.f32 %v3166, 0.5
  %v3169 = vsel %vm1635, %v3168, -inf
  %3170 = vmax.xlane.f32.xlu0 %v3169
  %v3171 = vpop.xlane.xlu0 %3170
  %v3172 = vsub.f32 %v3168, %v3171
  %v3173 = vmul.f32 %v3172, 1.442695
  %v3174 = vpow.pop %v3173
  %v3175 = vsel %vm1635, %v3174, 0.0
  %3176 = vadd.xlane.f32.xlu0 %v3175
  %v3177 = vpop.xlane.xlu0 %3176
  %v3178 = vrcp.pop %v3177
  %v3179 = vmul.f32 %v3177, %v3178
  %v3180 = vsub.f32 1.0, %v3179
  %v3181 = vmul.f32 %v3178, %v3180
  %v3182 = vadd.f32 %v3178, %v3181
  %vm3183 = vweird.f32 %v3177
  %vm3184 = vweird.f32 %v3178
  %vm3185 = vmor %vm3183, %vm3184
  %v3186 = vsel %vm3185, %v3178, %v3182
  %v3187 = vand.u32 2147483647, %v3177
  %vm3188 = vcmp.eq.f32.partialorder %v3187, 8.507059e+37
  %v3189 = vand.u32 %v3177, 2147483648
  %v3190 = vor.u32 1.1754944e-38, %v3189
  %v3191 = vsel %vm3188, %v3190, %v3186
  %v3192 = vmul.f32 %v3174, %v3191
  %v3193 = vadd.f32 %v3192, 0.0
  %3194 = vrot.lane.b32.xlu0 %v3097, 124
  %v3195 = vpop.permute.xlu0 %3194
  %3196 = vrot.lane.b32.xlu0 %v3139, 124
  %v3197 = vpop.permute.xlu0 %3196
  %v3198 = vsel %vm3141, %v3195, 0
  %v3200 = vsel %vm3141, %v3197, 0
  %3202 = vmatpush.xpose.msra.mxu0 0.0
  %3203 = vmatpush.xpose.msra.mxu0 0.0
  %3204 = vmatpush.xpose.msra.mxu0 0.0
  %3205 = vmatpush.xpose.msra.mxu0 0.0
  %3206 = vmatpush.xpose.msra.mxu0 0.0
  %3207 = vmatpush.xpose.msra.mxu0 0.0
  %3208 = vmatpush.xpose.msra.mxu0 0.0
  %3209 = vmatpush.xpose.msra.mxu0 0.0
  %3210 = vmatpush.xpose.msra.mxu0 0.0
  %3211 = vmatpush.xpose.msra.mxu0 0.0
  %3212 = vmatpush.xpose.msra.mxu0 0.0
  %3213 = vmatpush.xpose.msra.mxu0 0.0
  %3214 = vmatpush.xpose.msra.mxu0 0.0
  %3215 = vmatpush.xpose.msra.mxu0 0.0
  %3216 = vmatpush.xpose.msra.mxu0 0.0
  %3217 = vmatpush.xpose.msra.mxu0 %v3200
  %3218 = vmatmul.f32.gmra.mxu0 %v3198
  %v3219 = vpop.f32.mrf.mxu0
  %v3220 = vadd.f32 0.0, %v3219
  %3221 = vdwg.mxu0
  %v3222 = vmul.f32 %v3220, 0.5
  %v3223 = vsel %vm1635, %v3222, -inf
  %3224 = vmax.xlane.f32.xlu0 %v3223
  %v3225 = vpop.xlane.xlu0 %3224
  %v3226 = vsub.f32 %v3222, %v3225
  %v3227 = vmul.f32 %v3226, 1.442695
  %v3228 = vpow.pop %v3227
  %v3229 = vsel %vm1635, %v3228, 0.0
  %3230 = vadd.xlane.f32.xlu0 %v3229
  %v3231 = vpop.xlane.xlu0 %3230
  %v3232 = vrcp.pop %v3231
  %v3233 = vmul.f32 %v3231, %v3232
  %v3234 = vsub.f32 1.0, %v3233
  %v3235 = vmul.f32 %v3232, %v3234
  %v3236 = vadd.f32 %v3232, %v3235
  %vm3237 = vweird.f32 %v3231
  %vm3238 = vweird.f32 %v3232
  %vm3239 = vmor %vm3237, %vm3238
  %v3240 = vsel %vm3239, %v3232, %v3236
  %v3241 = vand.u32 2147483647, %v3231
  %vm3242 = vcmp.eq.f32.partialorder %v3241, 8.507059e+37
  %v3243 = vand.u32 %v3231, 2147483648
  %v3244 = vor.u32 1.1754944e-38, %v3243
  %v3245 = vsel %vm3242, %v3244, %v3240
  %v3246 = vmul.f32 %v3228, %v3245
  %v3247 = vadd.f32 %v3193, %v3246
  %3248 = vrot.lane.b32.xlu0 %v3097, 120
  %v3249 = vpop.permute.xlu0 %3248
  %3250 = vrot.lane.b32.xlu0 %v3139, 120
  %v3251 = vpop.permute.xlu0 %3250
  %v3252 = vsel %vm3141, %v3249, 0
  %v3254 = vsel %vm3141, %v3251, 0
  %3256 = vmatpush.xpose.msra.mxu0 0.0
  %3257 = vmatpush.xpose.msra.mxu0 0.0
  %3258 = vmatpush.xpose.msra.mxu0 0.0
  %3259 = vmatpush.xpose.msra.mxu0 0.0
  %3260 = vmatpush.xpose.msra.mxu0 0.0
  %3261 = vmatpush.xpose.msra.mxu0 0.0
  %3262 = vmatpush.xpose.msra.mxu0 0.0
  %3263 = vmatpush.xpose.msra.mxu0 0.0
  %3264 = vmatpush.xpose.msra.mxu0 0.0
  %3265 = vmatpush.xpose.msra.mxu0 0.0
  %3266 = vmatpush.xpose.msra.mxu0 0.0
  %3267 = vmatpush.xpose.msra.mxu0 0.0
  %3268 = vmatpush.xpose.msra.mxu0 0.0
  %3269 = vmatpush.xpose.msra.mxu0 0.0
  %3270 = vmatpush.xpose.msra.mxu0 0.0
  %3271 = vmatpush.xpose.msra.mxu0 %v3254
  %3272 = vmatmul.f32.gmra.mxu0 %v3252
  %v3273 = vpop.f32.mrf.mxu0
  %v3274 = vadd.f32 0.0, %v3273
  %3275 = vdwg.mxu0
  %v3276 = vmul.f32 %v3274, 0.5
  %v3277 = vsel %vm1635, %v3276, -inf
  %3278 = vmax.xlane.f32.xlu0 %v3277
  %v3279 = vpop.xlane.xlu0 %3278
  %v3280 = vsub.f32 %v3276, %v3279
  %v3281 = vmul.f32 %v3280, 1.442695
  %v3282 = vpow.pop %v3281
  %v3283 = vsel %vm1635, %v3282, 0.0
  %3284 = vadd.xlane.f32.xlu0 %v3283
  %v3285 = vpop.xlane.xlu0 %3284
  %v3286 = vrcp.pop %v3285
  %v3287 = vmul.f32 %v3285, %v3286
  %v3288 = vsub.f32 1.0, %v3287
  %v3289 = vmul.f32 %v3286, %v3288
  %v3290 = vadd.f32 %v3286, %v3289
  %vm3291 = vweird.f32 %v3285
  %vm3292 = vweird.f32 %v3286
  %vm3293 = vmor %vm3291, %vm3292
  %v3294 = vsel %vm3293, %v3286, %v3290
  %v3295 = vand.u32 2147483647, %v3285
  %vm3296 = vcmp.eq.f32.partialorder %v3295, 8.507059e+37
  %v3297 = vand.u32 %v3285, 2147483648
  %v3298 = vor.u32 1.1754944e-38, %v3297
  %v3299 = vsel %vm3296, %v3298, %v3294
  %v3300 = vmul.f32 %v3282, %v3299
  %v3301 = vadd.f32 %v3247, %v3300
  %3302 = vrot.lane.b32.xlu0 %v3097, 116
  %v3303 = vpop.permute.xlu0 %3302
  %3304 = vrot.lane.b32.xlu0 %v3139, 116
  %v3305 = vpop.permute.xlu0 %3304
  %v3306 = vsel %vm3141, %v3303, 0
  %v3308 = vsel %vm3141, %v3305, 0
  %3310 = vmatpush.xpose.msra.mxu0 0.0
  %3311 = vmatpush.xpose.msra.mxu0 0.0
  %3312 = vmatpush.xpose.msra.mxu0 0.0
  %3313 = vmatpush.xpose.msra.mxu0 0.0
  %3314 = vmatpush.xpose.msra.mxu0 0.0
  %3315 = vmatpush.xpose.msra.mxu0 0.0
  %3316 = vmatpush.xpose.msra.mxu0 0.0
  %3317 = vmatpush.xpose.msra.mxu0 0.0
  %3318 = vmatpush.xpose.msra.mxu0 0.0
  %3319 = vmatpush.xpose.msra.mxu0 0.0
  %3320 = vmatpush.xpose.msra.mxu0 0.0
  %3321 = vmatpush.xpose.msra.mxu0 0.0
  %3322 = vmatpush.xpose.msra.mxu0 0.0
  %3323 = vmatpush.xpose.msra.mxu0 0.0
  %3324 = vmatpush.xpose.msra.mxu0 0.0
  %3325 = vmatpush.xpose.msra.mxu0 %v3308
  %3326 = vmatmul.f32.gmra.mxu0 %v3306
  %v3327 = vpop.f32.mrf.mxu0
  %v3328 = vadd.f32 0.0, %v3327
  %3329 = vdwg.mxu0
  %v3330 = vmul.f32 %v3328, 0.5
  %v3331 = vsel %vm1635, %v3330, -inf
  %3332 = vmax.xlane.f32.xlu0 %v3331
  %v3333 = vpop.xlane.xlu0 %3332
  %v3334 = vsub.f32 %v3330, %v3333
  %v3335 = vmul.f32 %v3334, 1.442695
  %v3336 = vpow.pop %v3335
  %v3337 = vsel %vm1635, %v3336, 0.0
  %3338 = vadd.xlane.f32.xlu0 %v3337
  %v3339 = vpop.xlane.xlu0 %3338
  %v3340 = vrcp.pop %v3339
  %v3341 = vmul.f32 %v3339, %v3340
  %v3342 = vsub.f32 1.0, %v3341
  %v3343 = vmul.f32 %v3340, %v3342
  %v3344 = vadd.f32 %v3340, %v3343
  %vm3345 = vweird.f32 %v3339
  %vm3346 = vweird.f32 %v3340
  %vm3347 = vmor %vm3345, %vm3346
  %v3348 = vsel %vm3347, %v3340, %v3344
  %v3349 = vand.u32 2147483647, %v3339
  %vm3350 = vcmp.eq.f32.partialorder %v3349, 8.507059e+37
  %v3351 = vand.u32 %v3339, 2147483648
  %v3352 = vor.u32 1.1754944e-38, %v3351
  %v3353 = vsel %vm3350, %v3352, %v3348
  %v3354 = vmul.f32 %v3336, %v3353
  %v3355 = vadd.f32 %v3301, %v3354
  %3356 = vrot.lane.b32.xlu0 %v3097, 112
  %v3357 = vpop.permute.xlu0 %3356
  %3358 = vrot.lane.b32.xlu0 %v3139, 112
  %v3359 = vpop.permute.xlu0 %3358
  %v3360 = vsel %vm3141, %v3357, 0
  %v3362 = vsel %vm3141, %v3359, 0
  %3364 = vmatpush.xpose.msra.mxu0 0.0
  %3365 = vmatpush.xpose.msra.mxu0 0.0
  %3366 = vmatpush.xpose.msra.mxu0 0.0
  %3367 = vmatpush.xpose.msra.mxu0 0.0
  %3368 = vmatpush.xpose.msra.mxu0 0.0
  %3369 = vmatpush.xpose.msra.mxu0 0.0
  %3370 = vmatpush.xpose.msra.mxu0 0.0
  %3371 = vmatpush.xpose.msra.mxu0 0.0
  %3372 = vmatpush.xpose.msra.mxu0 0.0
  %3373 = vmatpush.xpose.msra.mxu0 0.0
  %3374 = vmatpush.xpose.msra.mxu0 0.0
  %3375 = vmatpush.xpose.msra.mxu0 0.0
  %3376 = vmatpush.xpose.msra.mxu0 0.0
  %3377 = vmatpush.xpose.msra.mxu0 0.0
  %3378 = vmatpush.xpose.msra.mxu0 0.0
  %3379 = vmatpush.xpose.msra.mxu0 %v3362
  %3380 = vmatmul.f32.gmra.mxu0 %v3360
  %v3381 = vpop.f32.mrf.mxu0
  %v3382 = vadd.f32 0.0, %v3381
  %3383 = vdwg.mxu0
  %v3384 = vmul.f32 %v3382, 0.5
  %v3385 = vsel %vm1635, %v3384, -inf
  %3386 = vmax.xlane.f32.xlu0 %v3385
  %v3387 = vpop.xlane.xlu0 %3386
  %v3388 = vsub.f32 %v3384, %v3387
  %v3389 = vmul.f32 %v3388, 1.442695
  %v3390 = vpow.pop %v3389
  %v3391 = vsel %vm1635, %v3390, 0.0
  %3392 = vadd.xlane.f32.xlu0 %v3391
  %v3393 = vpop.xlane.xlu0 %3392
  %v3394 = vrcp.pop %v3393
  %v3395 = vmul.f32 %v3393, %v3394
  %v3396 = vsub.f32 1.0, %v3395
  %v3397 = vmul.f32 %v3394, %v3396
  %v3398 = vadd.f32 %v3394, %v3397
  %vm3399 = vweird.f32 %v3393
  %vm3400 = vweird.f32 %v3394
  %vm3401 = vmor %vm3399, %vm3400
  %v3402 = vsel %vm3401, %v3394, %v3398
  %v3403 = vand.u32 2147483647, %v3393
  %vm3404 = vcmp.eq.f32.partialorder %v3403, 8.507059e+37
  %v3405 = vand.u32 %v3393, 2147483648
  %v3406 = vor.u32 1.1754944e-38, %v3405
  %v3407 = vsel %vm3404, %v3406, %v3402
  %v3408 = vmul.f32 %v3390, %v3407
  %v3409 = vadd.f32 %v3355, %v3408
  %3410 = vrot.lane.b32.xlu0 %v3097, 108
  %v3411 = vpop.permute.xlu0 %3410
  %3412 = vrot.lane.b32.xlu0 %v3139, 108
  %v3413 = vpop.permute.xlu0 %3412
  %v3414 = vsel %vm3141, %v3411, 0
  %v3416 = vsel %vm3141, %v3413, 0
  %3418 = vmatpush.xpose.msra.mxu0 0.0
  %3419 = vmatpush.xpose.msra.mxu0 0.0
  %3420 = vmatpush.xpose.msra.mxu0 0.0
  %3421 = vmatpush.xpose.msra.mxu0 0.0
  %3422 = vmatpush.xpose.msra.mxu0 0.0
  %3423 = vmatpush.xpose.msra.mxu0 0.0
  %3424 = vmatpush.xpose.msra.mxu0 0.0
  %3425 = vmatpush.xpose.msra.mxu0 0.0
  %3426 = vmatpush.xpose.msra.mxu0 0.0
  %3427 = vmatpush.xpose.msra.mxu0 0.0
  %3428 = vmatpush.xpose.msra.mxu0 0.0
  %3429 = vmatpush.xpose.msra.mxu0 0.0
  %3430 = vmatpush.xpose.msra.mxu0 0.0
  %3431 = vmatpush.xpose.msra.mxu0 0.0
  %3432 = vmatpush.xpose.msra.mxu0 0.0
  %3433 = vmatpush.xpose.msra.mxu0 %v3416
  %3434 = vmatmul.f32.gmra.mxu0 %v3414
  %v3435 = vpop.f32.mrf.mxu0
  %v3436 = vadd.f32 0.0, %v3435
  %3437 = vdwg.mxu0
  %v3438 = vmul.f32 %v3436, 0.5
  %v3439 = vsel %vm1635, %v3438, -inf
  %3440 = vmax.xlane.f32.xlu0 %v3439
  %v3441 = vpop.xlane.xlu0 %3440
  %v3442 = vsub.f32 %v3438, %v3441
  %v3443 = vmul.f32 %v3442, 1.442695
  %v3444 = vpow.pop %v3443
  %v3445 = vsel %vm1635, %v3444, 0.0
  %3446 = vadd.xlane.f32.xlu0 %v3445
  %v3447 = vpop.xlane.xlu0 %3446
  %v3448 = vrcp.pop %v3447
  %v3449 = vmul.f32 %v3447, %v3448
  %v3450 = vsub.f32 1.0, %v3449
  %v3451 = vmul.f32 %v3448, %v3450
  %v3452 = vadd.f32 %v3448, %v3451
  %vm3453 = vweird.f32 %v3447
  %vm3454 = vweird.f32 %v3448
  %vm3455 = vmor %vm3453, %vm3454
  %v3456 = vsel %vm3455, %v3448, %v3452
  %v3457 = vand.u32 2147483647, %v3447
  %vm3458 = vcmp.eq.f32.partialorder %v3457, 8.507059e+37
  %v3459 = vand.u32 %v3447, 2147483648
  %v3460 = vor.u32 1.1754944e-38, %v3459
  %v3461 = vsel %vm3458, %v3460, %v3456
  %v3462 = vmul.f32 %v3444, %v3461
  %v3463 = vadd.f32 %v3409, %v3462
  %3464 = vrot.lane.b32.xlu0 %v3097, 104
  %v3465 = vpop.permute.xlu0 %3464
  %3466 = vrot.lane.b32.xlu0 %v3139, 104
  %v3467 = vpop.permute.xlu0 %3466
  %v3468 = vsel %vm3141, %v3465, 0
  %v3470 = vsel %vm3141, %v3467, 0
  %3472 = vmatpush.xpose.msra.mxu0 0.0
  %3473 = vmatpush.xpose.msra.mxu0 0.0
  %3474 = vmatpush.xpose.msra.mxu0 0.0
  %3475 = vmatpush.xpose.msra.mxu0 0.0
  %3476 = vmatpush.xpose.msra.mxu0 0.0
  %3477 = vmatpush.xpose.msra.mxu0 0.0
  %3478 = vmatpush.xpose.msra.mxu0 0.0
  %3479 = vmatpush.xpose.msra.mxu0 0.0
  %3480 = vmatpush.xpose.msra.mxu0 0.0
  %3481 = vmatpush.xpose.msra.mxu0 0.0
  %3482 = vmatpush.xpose.msra.mxu0 0.0
  %3483 = vmatpush.xpose.msra.mxu0 0.0
  %3484 = vmatpush.xpose.msra.mxu0 0.0
  %3485 = vmatpush.xpose.msra.mxu0 0.0
  %3486 = vmatpush.xpose.msra.mxu0 0.0
  %3487 = vmatpush.xpose.msra.mxu0 %v3470
  %3488 = vmatmul.f32.gmra.mxu0 %v3468
  %v3489 = vpop.f32.mrf.mxu0
  %v3490 = vadd.f32 0.0, %v3489
  %3491 = vdwg.mxu0
  %v3492 = vmul.f32 %v3490, 0.5
  %v3493 = vsel %vm1635, %v3492, -inf
  %3494 = vmax.xlane.f32.xlu0 %v3493
  %v3495 = vpop.xlane.xlu0 %3494
  %v3496 = vsub.f32 %v3492, %v3495
  %v3497 = vmul.f32 %v3496, 1.442695
  %v3498 = vpow.pop %v3497
  %v3499 = vsel %vm1635, %v3498, 0.0
  %3500 = vadd.xlane.f32.xlu0 %v3499
  %v3501 = vpop.xlane.xlu0 %3500
  %v3502 = vrcp.pop %v3501
  %v3503 = vmul.f32 %v3501, %v3502
  %v3504 = vsub.f32 1.0, %v3503
  %v3505 = vmul.f32 %v3502, %v3504
  %v3506 = vadd.f32 %v3502, %v3505
  %vm3507 = vweird.f32 %v3501
  %vm3508 = vweird.f32 %v3502
  %vm3509 = vmor %vm3507, %vm3508
  %v3510 = vsel %vm3509, %v3502, %v3506
  %v3511 = vand.u32 2147483647, %v3501
  %vm3512 = vcmp.eq.f32.partialorder %v3511, 8.507059e+37
  %v3513 = vand.u32 %v3501, 2147483648
  %v3514 = vor.u32 1.1754944e-38, %v3513
  %v3515 = vsel %vm3512, %v3514, %v3510
  %v3516 = vmul.f32 %v3498, %v3515
  %v3517 = vadd.f32 %v3463, %v3516
  %3518 = vrot.lane.b32.xlu0 %v3097, 100
  %v3519 = vpop.permute.xlu0 %3518
  %3520 = vrot.lane.b32.xlu0 %v3139, 100
  %v3521 = vpop.permute.xlu0 %3520
  %v3522 = vsel %vm3141, %v3519, 0
  %v3524 = vsel %vm3141, %v3521, 0
  %3526 = vmatpush.xpose.msra.mxu0 0.0
  %3527 = vmatpush.xpose.msra.mxu0 0.0
  %3528 = vmatpush.xpose.msra.mxu0 0.0
  %3529 = vmatpush.xpose.msra.mxu0 0.0
  %3530 = vmatpush.xpose.msra.mxu0 0.0
  %3531 = vmatpush.xpose.msra.mxu0 0.0
  %3532 = vmatpush.xpose.msra.mxu0 0.0
  %3533 = vmatpush.xpose.msra.mxu0 0.0
  %3534 = vmatpush.xpose.msra.mxu0 0.0
  %3535 = vmatpush.xpose.msra.mxu0 0.0
  %3536 = vmatpush.xpose.msra.mxu0 0.0
  %3537 = vmatpush.xpose.msra.mxu0 0.0
  %3538 = vmatpush.xpose.msra.mxu0 0.0
  %3539 = vmatpush.xpose.msra.mxu0 0.0
  %3540 = vmatpush.xpose.msra.mxu0 0.0
  %3541 = vmatpush.xpose.msra.mxu0 %v3524
  %3542 = vmatmul.f32.gmra.mxu0 %v3522
  %v3543 = vpop.f32.mrf.mxu0
  %v3544 = vadd.f32 0.0, %v3543
  %3545 = vdwg.mxu0
  %v3546 = vmul.f32 %v3544, 0.5
  %v3547 = vsel %vm1635, %v3546, -inf
  %3548 = vmax.xlane.f32.xlu0 %v3547
  %v3549 = vpop.xlane.xlu0 %3548
  %v3550 = vsub.f32 %v3546, %v3549
  %v3551 = vmul.f32 %v3550, 1.442695
  %v3552 = vpow.pop %v3551
  %v3553 = vsel %vm1635, %v3552, 0.0
  %3554 = vadd.xlane.f32.xlu0 %v3553
  %v3555 = vpop.xlane.xlu0 %3554
  %v3556 = vrcp.pop %v3555
  %v3557 = vmul.f32 %v3555, %v3556
  %v3558 = vsub.f32 1.0, %v3557
  %v3559 = vmul.f32 %v3556, %v3558
  %v3560 = vadd.f32 %v3556, %v3559
  %vm3561 = vweird.f32 %v3555
  %vm3562 = vweird.f32 %v3556
  %vm3563 = vmor %vm3561, %vm3562
  %v3564 = vsel %vm3563, %v3556, %v3560
  %v3565 = vand.u32 2147483647, %v3555
  %vm3566 = vcmp.eq.f32.partialorder %v3565, 8.507059e+37
  %v3567 = vand.u32 %v3555, 2147483648
  %v3568 = vor.u32 1.1754944e-38, %v3567
  %v3569 = vsel %vm3566, %v3568, %v3564
  %v3570 = vmul.f32 %v3552, %v3569
  %v3571 = vadd.f32 %v3517, %v3570
  %v3572 = vrcp.pop 8.0
  %v3573 = vmul.f32 8.0, %v3572
  %v3574 = vsub.f32 1.0, %v3573
  %v3575 = vmul.f32 %v3572, %v3574
  %v3576 = vadd.f32 %v3572, %v3575
  %vm3577 = vweird.f32 %v3572
  %v3578 = vsel %vm3577, %v3572, %v3576
  %v3579 = vmul.f32 %v3571, %v3578
  %v3580 = vsel %vm1635, %v3579, -inf
  %3581 = vmax.xlane.f32.xlu0 %v3580
  %v3582 = vpop.xlane.xlu0 %3581
  %v3583 = vsub.f32 %v3579, %v3582
  %v3584 = vmul.f32 %v3583, 1.442695
  %v3585 = vpow.pop %v3584
  %v3586 = vsel %vm1635, %v3585, 0.0
  %3587 = vadd.xlane.f32.xlu0 %v3586
  %v3588 = vpop.xlane.xlu0 %3587
  %v3589 = vrcp.pop %v3588
  %v3590 = vmul.f32 %v3588, %v3589
  %v3591 = vsub.f32 1.0, %v3590
  %v3592 = vmul.f32 %v3589, %v3591
  %v3593 = vadd.f32 %v3589, %v3592
  %vm3594 = vweird.f32 %v3588
  %vm3595 = vweird.f32 %v3589
  %vm3596 = vmor %vm3594, %vm3595
  %v3597 = vsel %vm3596, %v3589, %v3593
  %v3598 = vand.u32 2147483647, %v3588
  %vm3599 = vcmp.eq.f32.partialorder %v3598, 8.507059e+37
  %v3600 = vand.u32 %v3588, 2147483648
  %v3601 = vor.u32 1.1754944e-38, %v3600
  %v3602 = vsel %vm3599, %v3601, %v3597
  %v3603 = vmul.f32 %v3585, %v3602
  %3604 = vrot.lane.b32.xlu0 %v1517, 64
  %v3605 = vpop.permute.xlu0 %3604
  %3606 = vrot.lane.b32.xlu0 %v1518, 64
  %v3607 = vpop.permute.xlu0 %3606
  %3608 = vrot.lane.b32.xlu0 %v1519, 64
  %v3609 = vpop.permute.xlu0 %3608
  %3610 = vrot.lane.b32.xlu0 %v1520, 64
  %v3611 = vpop.permute.xlu0 %3610
  %3616 = vrot.lane.b32.xlu0 %v1523, 64
  %v3617 = vpop.permute.xlu0 %3616
  %3619 = vmatpush.msra.mxu0 0.0
  %3620 = vmatpush.msra.mxu0 0.0
  %3621 = vmatpush.msra.mxu0 0.0
  %3622 = vmatpush.msra.mxu0 0.0
  %3623 = vmatpush.msra.mxu0 0.0
  %3624 = vmatpush.msra.mxu0 0.0
  %3625 = vmatpush.msra.mxu0 0.0
  %3626 = vmatpush.msra.mxu0 0.0
  %3627 = vmatpush.msra.mxu0 0.0
  %3628 = vmatpush.msra.mxu0 0.0
  %3629 = vmatpush.msra.mxu0 0.0
  %3630 = vmatpush.msra.mxu0 0.0
  %3631 = vmatpush.msra.mxu0 %v3611
  %3632 = vmatpush.msra.mxu0 %v3609
  %3633 = vmatpush.msra.mxu0 %v3607
  %3634 = vmatpush.msra.mxu0 %v3605
  %3635 = vmatmul.f32.gmra.mxu0 %v1544
  %v3636 = vpop.f32.mrf.mxu0
  %v3637 = vadd.f32 %v3617, %v3636
  %3638 = vdwg.mxu0
  %v3640 = vsel %vm1635, %v3603, 0
  %3642 = vmatpush.msra.mxu0 0.0
  %3643 = vmatpush.msra.mxu0 0.0
  %3644 = vmatpush.msra.mxu0 0.0
  %3645 = vmatpush.msra.mxu0 0.0
  %3646 = vmatpush.msra.mxu0 0.0
  %3647 = vmatpush.msra.mxu0 0.0
  %3648 = vmatpush.msra.mxu0 0.0
  %3649 = vmatpush.msra.mxu0 0.0
  %3650 = vmatpush.msra.mxu0 0.0
  %3651 = vmatpush.msra.mxu0 0.0
  %3652 = vmatpush.msra.mxu0 0.0
  %3653 = vmatpush.msra.mxu0 0.0
  %3654 = vmatpush.msra.mxu0 0.0
  %3655 = vmatpush.msra.mxu0 0.0
  %3656 = vmatpush.msra.mxu0 0.0
  %3657 = vmatpush.msra.mxu0 %v3637
  %3658 = vmatmul.f32.gmra.mxu0 %v3640
  %v3659 = vpop.f32.mrf.mxu0
  %v3660 = vadd.f32 0.0, %v3659
  %3661 = vdwg.mxu0
  %v3662 = vadd.f32 %v3067, %v3660
  %v3663 = vsel %vm208, %v3067, 0.0
  %v3664 = vrot.slane %v3663, 4
  %v3665 = vadd.f32 %v3663, %v3664
  %v3666 = vrot.slane %v3665, 2
  %v3667 = vadd.f32 %v3665, %v3666
  %v3668 = vrot.slane %v3667, 1
  %v3669 = vadd.f32 %v3667, %v3668
  %v3670 = vmul.f32 %v3669, %v3578
  %v3671 = vsel %vm208, %v2321, 0.0
  %v3672 = vrot.slane %v3671, 4
  %v3673 = vadd.f32 %v3671, %v3672
  %v3674 = vrot.slane %v3673, 2
  %v3675 = vadd.f32 %v3673, %v3674
  %v3676 = vrot.slane %v3675, 1
  %v3677 = vadd.f32 %v3675, %v3676
  %v3678 = vmul.f32 %v3677, %v3578
  %3679 = vrot.lane.b32.xlu0 %v1517, 96
  %v3680 = vpop.permute.xlu0 %3679
  %3681 = vrot.lane.b32.xlu0 %v1518, 96
  %v3682 = vpop.permute.xlu0 %3681
  %3683 = vrot.lane.b32.xlu0 %v1519, 96
  %v3684 = vpop.permute.xlu0 %3683
  %3685 = vrot.lane.b32.xlu0 %v1520, 96
  %v3686 = vpop.permute.xlu0 %3685
  %3691 = vrot.lane.b32.xlu0 %v1523, 96
  %v3692 = vpop.permute.xlu0 %3691
  %v3695 = vsel %vm208, %v3660, 0
  %3697 = vmatpush.msra.mxu0 0.0
  %3698 = vmatpush.msra.mxu0 0.0
  %3699 = vmatpush.msra.mxu0 0.0
  %3700 = vmatpush.msra.mxu0 0.0
  %3701 = vmatpush.msra.mxu0 0.0
  %3702 = vmatpush.msra.mxu0 0.0
  %3703 = vmatpush.msra.mxu0 0.0
  %3704 = vmatpush.msra.mxu0 0.0
  %3705 = vmatpush.msra.mxu0 0.0
  %3706 = vmatpush.msra.mxu0 0.0
  %3707 = vmatpush.msra.mxu0 0.0
  %3708 = vmatpush.msra.mxu0 0.0
  %3709 = vmatpush.msra.mxu0 %v3686
  %3710 = vmatpush.msra.mxu0 %v3684
  %3711 = vmatpush.msra.mxu0 %v3682
  %3712 = vmatpush.msra.mxu0 %v3680
  %3713 = vmatmul.f32.gmra.mxu0 %v3695
  %v3714 = vpop.f32.mrf.mxu0
  %v3715 = vadd.f32 %v3692, %v3714
  %3716 = vdwg.mxu0
  %v3717 = vld [vmem:[%s25] sm:$0x3f]
  %v3718 = vsel %vm208, %v1516, 0.0
  %3719 = vadd.xlane.f32.xlu0 %v3718
  %v3720 = vpop.xlane.xlu0 %3719
  %v3721 = vmul.f32 %v3720, %v1577
  %v3722 = vsub.f32 %v1516, %v3721
  %v3723 = vmul.f32 %v3722, %v3722
  %v3724 = vsel %vm208, %v3723, 0.0
  %3725 = vadd.xlane.f32.xlu0 %v3724
  %v3726 = vpop.xlane.xlu0 %3725
  %v3727 = vmul.f32 %v3726, %v1577
  %v3728 = vadd.f32 %v3727, 1e-06
  %v3729 = vrsqrt.pop %v3728
  %v3730 = vmul.f32 %v3729, %v3728
  %v3731 = vmul.f32 %v3730, %v3729
  %v3732 = vmul.f32 0.5, %v3731
  %v3733 = vsub.f32 1.5, %v3732
  %v3734 = vmul.f32 %v3729, %v3733
  %vm3735 = vweird.f32 %v3728
  %vm3736 = vweird.f32 %v3729
  %vm3737 = vmor %vm3735, %vm3736
  %v3738 = vsel %vm3737, %v3729, %v3734
  %v3739 = vmul.f32 %v3722, %v3738
  %v3740 = vperm.slane %v3717, 0
  %v3741 = vmul.f32 %v3739, %v3740
  %v3742 = vperm.slane %v3717, 1
  %v3743 = vadd.f32 %v3741, %v3742
  %v3744 = vld [vmem:[%s29] sm:$0xff]
  %v3745 = vld [vmem:[%s29 + $0x8] sm:$0xff]
  %v3746 = vld [vmem:[%s29 + $0x10] sm:$0xff]
  %v3747 = vld [vmem:[%s29 + $0x18] sm:$0xff]
  %v3748 = vld [vmem:[%s27] sm:$0x1]
  %v3750 = vperm.slane %v3748, 0
  %v3753 = vsel %vm208, %v3743, 0
  %3755 = vmatpush.msra.mxu0 0.0
  %3756 = vmatpush.msra.mxu0 0.0
  %3757 = vmatpush.msra.mxu0 0.0
  %3758 = vmatpush.msra.mxu0 0.0
  %3759 = vmatpush.msra.mxu0 0.0
  %3760 = vmatpush.msra.mxu0 0.0
  %3761 = vmatpush.msra.mxu0 0.0
  %3762 = vmatpush.msra.mxu0 0.0
  %3763 = vmatpush.msra.mxu0 0.0
  %3764 = vmatpush.msra.mxu0 0.0
  %3765 = vmatpush.msra.mxu0 0.0
  %3766 = vmatpush.msra.mxu0 0.0
  %3767 = vmatpush.msra.mxu0 %v3747
  %3768 = vmatpush.msra.mxu0 %v3746
  %3769 = vmatpush.msra.mxu0 %v3745
  %3770 = vmatpush.msra.mxu0 %v3744
  %3771 = vmatmul.f32.gmra.mxu0 %v3753
  %v3772 = vpop.f32.mrf.mxu0
  %v3773 = vadd.f32 %v3750, %v3772
  %3774 = vdwg.mxu0
  %3776 = vrot.lane.b32.xlu0 %v3773, 96
  %v3777 = vpop.permute.xlu0 %3776
  %v3778 = vsel %vm1635, %v3773, 0
  %v3780 = vsel %vm1635, %v3777, 0
  %3782 = vmatpush.xpose.msra.mxu0 0.0
  %3783 = vmatpush.xpose.msra.mxu0 0.0
  %3784 = vmatpush.xpose.msra.mxu0 0.0
  %3785 = vmatpush.xpose.msra.mxu0 0.0
  %3786 = vmatpush.xpose.msra.mxu0 0.0
  %3787 = vmatpush.xpose.msra.mxu0 0.0
  %3788 = vmatpush.xpose.msra.mxu0 0.0
  %3789 = vmatpush.xpose.msra.mxu0 0.0
  %3790 = vmatpush.xpose.msra.mxu0 0.0
  %3791 = vmatpush.xpose.msra.mxu0 0.0
  %3792 = vmatpush.xpose.msra.mxu0 0.0
  %3793 = vmatpush.xpose.msra.mxu0 0.0
  %3794 = vmatpush.xpose.msra.mxu0 0.0
  %3795 = vmatpush.xpose.msra.mxu0 0.0
  %3796 = vmatpush.xpose.msra.mxu0 0.0
  %3797 = vmatpush.xpose.msra.mxu0 %v3780
  %3798 = vmatmul.f32.gmra.mxu0 %v3778
  %v3799 = vpop.f32.mrf.mxu0
  %v3800 = vadd.f32 0.0, %v3799
  %3801 = vdwg.mxu0
  %v3802 = vmul.f32 %v3800, 0.35355338
  %v3803 = vsel %vm1635, %v3802, -inf
  %3804 = vmax.xlane.f32.xlu0 %v3803
  %v3805 = vpop.xlane.xlu0 %3804
  %v3806 = vsub.f32 %v3802, %v3805
  %v3807 = vmul.f32 %v3806, 1.442695
  %v3808 = vpow.pop %v3807
  %v3809 = vsel %vm1635, %v3808, 0.0
  %3810 = vadd.xlane.f32.xlu0 %v3809
  %v3811 = vpop.xlane.xlu0 %3810
  %v3812 = vrcp.pop %v3811
  %v3813 = vmul.f32 %v3811, %v3812
  %v3814 = vsub.f32 1.0, %v3813
  %v3815 = vmul.f32 %v3812, %v3814
  %v3816 = vadd.f32 %v3812, %v3815
  %vm3817 = vweird.f32 %v3811
  %vm3818 = vweird.f32 %v3812
  %vm3819 = vmor %vm3817, %vm3818
  %v3820 = vsel %vm3819, %v3812, %v3816
  %v3821 = vand.u32 2147483647, %v3811
  %vm3822 = vcmp.eq.f32.partialorder %v3821, 8.507059e+37
  %v3823 = vand.u32 %v3811, 2147483648
  %v3824 = vor.u32 1.1754944e-38, %v3823
  %v3825 = vsel %vm3822, %v3824, %v3820
  %v3826 = vmul.f32 %v3808, %v3825
  %3827 = vrot.lane.b32.xlu0 %v3773, 64
  %v3828 = vpop.permute.xlu0 %3827
  %v3831 = vsel %vm1635, %v3826, 0
  %3833 = vmatpush.msra.mxu0 0.0
  %3834 = vmatpush.msra.mxu0 0.0
  %3835 = vmatpush.msra.mxu0 0.0
  %3836 = vmatpush.msra.mxu0 0.0
  %3837 = vmatpush.msra.mxu0 0.0
  %3838 = vmatpush.msra.mxu0 0.0
  %3839 = vmatpush.msra.mxu0 0.0
  %3840 = vmatpush.msra.mxu0 0.0
  %3841 = vmatpush.msra.mxu0 0.0
  %3842 = vmatpush.msra.mxu0 0.0
  %3843 = vmatpush.msra.mxu0 0.0
  %3844 = vmatpush.msra.mxu0 0.0
  %3845 = vmatpush.msra.mxu0 0.0
  %3846 = vmatpush.msra.mxu0 0.0
  %3847 = vmatpush.msra.mxu0 0.0
  %3848 = vmatpush.msra.mxu0 %v3828
  %3849 = vmatmul.f32.gmra.mxu0 %v3831
  %v3850 = vpop.f32.mrf.mxu0
  %v3851 = vadd.f32 0.0, %v3850
  %3852 = vdwg.mxu0
  %3853 = vrot.lane.b32.xlu0 %v3773, 120
  %v3854 = vpop.permute.xlu0 %3853
  %3855 = vrot.lane.b32.xlu0 %v3773, 88
  %v3856 = vpop.permute.xlu0 %3855
  %v3857 = vsel %vm1635, %v3854, 0
  %v3859 = vsel %vm1635, %v3856, 0
  %3861 = vmatpush.xpose.msra.mxu0 0.0
  %3862 = vmatpush.xpose.msra.mxu0 0.0
  %3863 = vmatpush.xpose.msra.mxu0 0.0
  %3864 = vmatpush.xpose.msra.mxu0 0.0
  %3865 = vmatpush.xpose.msra.mxu0 0.0
  %3866 = vmatpush.xpose.msra.mxu0 0.0
  %3867 = vmatpush.xpose.msra.mxu0 0.0
  %3868 = vmatpush.xpose.msra.mxu0 0.0
  %3869 = vmatpush.xpose.msra.mxu0 0.0
  %3870 = vmatpush.xpose.msra.mxu0 0.0
  %3871 = vmatpush.xpose.msra.mxu0 0.0
  %3872 = vmatpush.xpose.msra.mxu0 0.0
  %3873 = vmatpush.xpose.msra.mxu0 0.0
  %3874 = vmatpush.xpose.msra.mxu0 0.0
  %3875 = vmatpush.xpose.msra.mxu0 0.0
  %3876 = vmatpush.xpose.msra.mxu0 %v3859
  %3877 = vmatmul.f32.gmra.mxu0 %v3857
  %v3878 = vpop.f32.mrf.mxu0
  %v3879 = vadd.f32 0.0, %v3878
  %3880 = vdwg.mxu0
  %v3881 = vmul.f32 %v3879, 0.35355338
  %v3882 = vsel %vm1635, %v3881, -inf
  %3883 = vmax.xlane.f32.xlu0 %v3882
  %v3884 = vpop.xlane.xlu0 %3883
  %v3885 = vsub.f32 %v3881, %v3884
  %v3886 = vmul.f32 %v3885, 1.442695
  %v3887 = vpow.pop %v3886
  %v3888 = vsel %vm1635, %v3887, 0.0
  %3889 = vadd.xlane.f32.xlu0 %v3888
  %v3890 = vpop.xlane.xlu0 %3889
  %v3891 = vrcp.pop %v3890
  %v3892 = vmul.f32 %v3890, %v3891
  %v3893 = vsub.f32 1.0, %v3892
  %v3894 = vmul.f32 %v3891, %v3893
  %v3895 = vadd.f32 %v3891, %v3894
  %vm3896 = vweird.f32 %v3890
  %vm3897 = vweird.f32 %v3891
  %vm3898 = vmor %vm3896, %vm3897
  %v3899 = vsel %vm3898, %v3891, %v3895
  %v3900 = vand.u32 2147483647, %v3890
  %vm3901 = vcmp.eq.f32.partialorder %v3900, 8.507059e+37
  %v3902 = vand.u32 %v3890, 2147483648
  %v3903 = vor.u32 1.1754944e-38, %v3902
  %v3904 = vsel %vm3901, %v3903, %v3899
  %v3905 = vmul.f32 %v3887, %v3904
  %3906 = vrot.lane.b32.xlu0 %v3773, 56
  %v3907 = vpop.permute.xlu0 %3906
  %v3910 = vsel %vm1635, %v3905, 0
  %3912 = vmatpush.msra.mxu0 0.0
  %3913 = vmatpush.msra.mxu0 0.0
  %3914 = vmatpush.msra.mxu0 0.0
  %3915 = vmatpush.msra.mxu0 0.0
  %3916 = vmatpush.msra.mxu0 0.0
  %3917 = vmatpush.msra.mxu0 0.0
  %3918 = vmatpush.msra.mxu0 0.0
  %3919 = vmatpush.msra.mxu0 0.0
  %3920 = vmatpush.msra.mxu0 0.0
  %3921 = vmatpush.msra.mxu0 0.0
  %3922 = vmatpush.msra.mxu0 0.0
  %3923 = vmatpush.msra.mxu0 0.0
  %3924 = vmatpush.msra.mxu0 0.0
  %3925 = vmatpush.msra.mxu0 0.0
  %3926 = vmatpush.msra.mxu0 0.0
  %3927 = vmatpush.msra.mxu0 %v3907
  %3928 = vmatmul.f32.gmra.mxu0 %v3910
  %v3929 = vpop.f32.mrf.mxu0
  %v3930 = vadd.f32 0.0, %v3929
  %3931 = vdwg.mxu0
  %3932 = vrot.lane.b32.xlu0 %v3773, 112
  %v3933 = vpop.permute.xlu0 %3932
  %3934 = vrot.lane.b32.xlu0 %v3773, 80
  %v3935 = vpop.permute.xlu0 %3934
  %v3936 = vsel %vm1635, %v3933, 0
  %v3938 = vsel %vm1635, %v3935, 0
  %3940 = vmatpush.xpose.msra.mxu0 0.0
  %3941 = vmatpush.xpose.msra.mxu0 0.0
  %3942 = vmatpush.xpose.msra.mxu0 0.0
  %3943 = vmatpush.xpose.msra.mxu0 0.0
  %3944 = vmatpush.xpose.msra.mxu0 0.0
  %3945 = vmatpush.xpose.msra.mxu0 0.0
  %3946 = vmatpush.xpose.msra.mxu0 0.0
  %3947 = vmatpush.xpose.msra.mxu0 0.0
  %3948 = vmatpush.xpose.msra.mxu0 0.0
  %3949 = vmatpush.xpose.msra.mxu0 0.0
  %3950 = vmatpush.xpose.msra.mxu0 0.0
  %3951 = vmatpush.xpose.msra.mxu0 0.0
  %3952 = vmatpush.xpose.msra.mxu0 0.0
  %3953 = vmatpush.xpose.msra.mxu0 0.0
  %3954 = vmatpush.xpose.msra.mxu0 0.0
  %3955 = vmatpush.xpose.msra.mxu0 %v3938
  %3956 = vmatmul.f32.gmra.mxu0 %v3936
  %v3957 = vpop.f32.mrf.mxu0
  %v3958 = vadd.f32 0.0, %v3957
  %3959 = vdwg.mxu0
  %v3960 = vmul.f32 %v3958, 0.35355338
  %v3961 = vsel %vm1635, %v3960, -inf
  %3962 = vmax.xlane.f32.xlu0 %v3961
  %v3963 = vpop.xlane.xlu0 %3962
  %v3964 = vsub.f32 %v3960, %v3963
  %v3965 = vmul.f32 %v3964, 1.442695
  %v3966 = vpow.pop %v3965
  %v3967 = vsel %vm1635, %v3966, 0.0
  %3968 = vadd.xlane.f32.xlu0 %v3967
  %v3969 = vpop.xlane.xlu0 %3968
  %v3970 = vrcp.pop %v3969
  %v3971 = vmul.f32 %v3969, %v3970
  %v3972 = vsub.f32 1.0, %v3971
  %v3973 = vmul.f32 %v3970, %v3972
  %v3974 = vadd.f32 %v3970, %v3973
  %vm3975 = vweird.f32 %v3969
  %vm3976 = vweird.f32 %v3970
  %vm3977 = vmor %vm3975, %vm3976
  %v3978 = vsel %vm3977, %v3970, %v3974
  %v3979 = vand.u32 2147483647, %v3969
  %vm3980 = vcmp.eq.f32.partialorder %v3979, 8.507059e+37
  %v3981 = vand.u32 %v3969, 2147483648
  %v3982 = vor.u32 1.1754944e-38, %v3981
  %v3983 = vsel %vm3980, %v3982, %v3978
  %v3984 = vmul.f32 %v3966, %v3983
  %3985 = vrot.lane.b32.xlu0 %v3773, 48
  %v3986 = vpop.permute.xlu0 %3985
  %v3989 = vsel %vm1635, %v3984, 0
  %3991 = vmatpush.msra.mxu0 0.0
  %3992 = vmatpush.msra.mxu0 0.0
  %3993 = vmatpush.msra.mxu0 0.0
  %3994 = vmatpush.msra.mxu0 0.0
  %3995 = vmatpush.msra.mxu0 0.0
  %3996 = vmatpush.msra.mxu0 0.0
  %3997 = vmatpush.msra.mxu0 0.0
  %3998 = vmatpush.msra.mxu0 0.0
  %3999 = vmatpush.msra.mxu0 0.0
  %4000 = vmatpush.msra.mxu0 0.0
  %4001 = vmatpush.msra.mxu0 0.0
  %4002 = vmatpush.msra.mxu0 0.0
  %4003 = vmatpush.msra.mxu0 0.0
  %4004 = vmatpush.msra.mxu0 0.0
  %4005 = vmatpush.msra.mxu0 0.0
  %4006 = vmatpush.msra.mxu0 %v3986
  %4007 = vmatmul.f32.gmra.mxu0 %v3989
  %v4008 = vpop.f32.mrf.mxu0
  %v4009 = vadd.f32 0.0, %v4008
  %4010 = vdwg.mxu0
  %4011 = vrot.lane.b32.xlu0 %v3773, 104
  %v4012 = vpop.permute.xlu0 %4011
  %4013 = vrot.lane.b32.xlu0 %v3773, 72
  %v4014 = vpop.permute.xlu0 %4013
  %v4015 = vsel %vm1635, %v4012, 0
  %v4017 = vsel %vm1635, %v4014, 0
  %4019 = vmatpush.xpose.msra.mxu0 0.0
  %4020 = vmatpush.xpose.msra.mxu0 0.0
  %4021 = vmatpush.xpose.msra.mxu0 0.0
  %4022 = vmatpush.xpose.msra.mxu0 0.0
  %4023 = vmatpush.xpose.msra.mxu0 0.0
  %4024 = vmatpush.xpose.msra.mxu0 0.0
  %4025 = vmatpush.xpose.msra.mxu0 0.0
  %4026 = vmatpush.xpose.msra.mxu0 0.0
  %4027 = vmatpush.xpose.msra.mxu0 0.0
  %4028 = vmatpush.xpose.msra.mxu0 0.0
  %4029 = vmatpush.xpose.msra.mxu0 0.0
  %4030 = vmatpush.xpose.msra.mxu0 0.0
  %4031 = vmatpush.xpose.msra.mxu0 0.0
  %4032 = vmatpush.xpose.msra.mxu0 0.0
  %4033 = vmatpush.xpose.msra.mxu0 0.0
  %4034 = vmatpush.xpose.msra.mxu0 %v4017
  %4035 = vmatmul.f32.gmra.mxu0 %v4015
  %v4036 = vpop.f32.mrf.mxu0
  %v4037 = vadd.f32 0.0, %v4036
  %4038 = vdwg.mxu0
  %v4039 = vmul.f32 %v4037, 0.35355338
  %v4040 = vsel %vm1635, %v4039, -inf
  %4041 = vmax.xlane.f32.xlu0 %v4040
  %v4042 = vpop.xlane.xlu0 %4041
  %v4043 = vsub.f32 %v4039, %v4042
  %v4044 = vmul.f32 %v4043, 1.442695
  %v4045 = vpow.pop %v4044
  %v4046 = vsel %vm1635, %v4045, 0.0
  %4047 = vadd.xlane.f32.xlu0 %v4046
  %v4048 = vpop.xlane.xlu0 %4047
  %v4049 = vrcp.pop %v4048
  %v4050 = vmul.f32 %v4048, %v4049
  %v4051 = vsub.f32 1.0, %v4050
  %v4052 = vmul.f32 %v4049, %v4051
  %v4053 = vadd.f32 %v4049, %v4052
  %vm4054 = vweird.f32 %v4048
  %vm4055 = vweird.f32 %v4049
  %vm4056 = vmor %vm4054, %vm4055
  %v4057 = vsel %vm4056, %v4049, %v4053
  %v4058 = vand.u32 2147483647, %v4048
  %vm4059 = vcmp.eq.f32.partialorder %v4058, 8.507059e+37
  %v4060 = vand.u32 %v4048, 2147483648
  %v4061 = vor.u32 1.1754944e-38, %v4060
  %v4062 = vsel %vm4059, %v4061, %v4057
  %v4063 = vmul.f32 %v4045, %v4062
  %4064 = vrot.lane.b32.xlu0 %v3773, 40
  %v4065 = vpop.permute.xlu0 %4064
  %v4068 = vsel %vm1635, %v4063, 0
  %4070 = vmatpush.msra.mxu0 0.0
  %4071 = vmatpush.msra.mxu0 0.0
  %4072 = vmatpush.msra.mxu0 0.0
  %4073 = vmatpush.msra.mxu0 0.0
  %4074 = vmatpush.msra.mxu0 0.0
  %4075 = vmatpush.msra.mxu0 0.0
  %4076 = vmatpush.msra.mxu0 0.0
  %4077 = vmatpush.msra.mxu0 0.0
  %4078 = vmatpush.msra.mxu0 0.0
  %4079 = vmatpush.msra.mxu0 0.0
  %4080 = vmatpush.msra.mxu0 0.0
  %4081 = vmatpush.msra.mxu0 0.0
  %4082 = vmatpush.msra.mxu0 0.0
  %4083 = vmatpush.msra.mxu0 0.0
  %4084 = vmatpush.msra.mxu0 0.0
  %4085 = vmatpush.msra.mxu0 %v4065
  %4086 = vmatmul.f32.gmra.mxu0 %v4068
  %v4087 = vpop.f32.mrf.mxu0
  %v4088 = vadd.f32 0.0, %v4087
  %4089 = vdwg.mxu0
  %4091 = vrot.lane.b32.xlu0 %v3930, 8
  %v4092 = vpop.permute.xlu0 %4091
  %4095 = vrot.lane.b32.xlu0 %v4009, 16
  %v4096 = vpop.permute.xlu0 %4095
  %4099 = vrot.lane.b32.xlu0 %v4088, 24
  %v4100 = vpop.permute.xlu0 %4099
  %v4102 = vsel %vm1635, %v3851, %v4092
  %v4103 = vsel %vm325, %v4102, %v4096
  %v4104 = vsel %vm1962, %v4103, %v4100
  %4109 = vrot.lane.b32.xlu0 %v3744, 32
  %v4110 = vpop.permute.xlu0 %4109
  %4111 = vrot.lane.b32.xlu0 %v3745, 32
  %v4112 = vpop.permute.xlu0 %4111
  %4113 = vrot.lane.b32.xlu0 %v3746, 32
  %v4114 = vpop.permute.xlu0 %4113
  %4115 = vrot.lane.b32.xlu0 %v3747, 32
  %v4116 = vpop.permute.xlu0 %4115
  %4121 = vrot.lane.b32.xlu0 %v3750, 32
  %v4122 = vpop.permute.xlu0 %4121
  %v4125 = vsel %vm208, %v4104, 0
  %4127 = vmatpush.msra.mxu0 0.0
  %4128 = vmatpush.msra.mxu0 0.0
  %4129 = vmatpush.msra.mxu0 0.0
  %4130 = vmatpush.msra.mxu0 0.0
  %4131 = vmatpush.msra.mxu0 0.0
  %4132 = vmatpush.msra.mxu0 0.0
  %4133 = vmatpush.msra.mxu0 0.0
  %4134 = vmatpush.msra.mxu0 0.0
  %4135 = vmatpush.msra.mxu0 0.0
  %4136 = vmatpush.msra.mxu0 0.0
  %4137 = vmatpush.msra.mxu0 0.0
  %4138 = vmatpush.msra.mxu0 0.0
  %4139 = vmatpush.msra.mxu0 %v4116
  %4140 = vmatpush.msra.mxu0 %v4114
  %4141 = vmatpush.msra.mxu0 %v4112
  %4142 = vmatpush.msra.mxu0 %v4110
  %4143 = vmatmul.f32.gmra.mxu0 %v4125
  %v4144 = vpop.f32.mrf.mxu0
  %v4145 = vadd.f32 %v4122, %v4144
  %4146 = vdwg.mxu0
  %v4147 = vadd.f32 %v1516, %v4145
  %v4148 = vsel %vm208, %v4147, 0.0
  %4149 = vadd.xlane.f32.xlu0 %v4148
  %v4150 = vpop.xlane.xlu0 %4149
  %v4151 = vmul.f32 %v4150, %v1577
  %v4152 = vsub.f32 %v4147, %v4151
  %v4153 = vmul.f32 %v4152, %v4152
  %v4154 = vsel %vm208, %v4153, 0.0
  %4155 = vadd.xlane.f32.xlu0 %v4154
  %v4156 = vpop.xlane.xlu0 %4155
  %v4157 = vmul.f32 %v4156, %v1577
  %v4158 = vadd.f32 %v4157, 1e-06
  %v4159 = vrsqrt.pop %v4158
  %v4160 = vmul.f32 %v4159, %v4158
  %v4161 = vmul.f32 %v4160, %v4159
  %v4162 = vmul.f32 0.5, %v4161
  %v4163 = vsub.f32 1.5, %v4162
  %v4164 = vmul.f32 %v4159, %v4163
  %vm4165 = vweird.f32 %v4158
  %vm4166 = vweird.f32 %v4159
  %vm4167 = vmor %vm4165, %vm4166
  %v4168 = vsel %vm4167, %v4159, %v4164
  %v4169 = vmul.f32 %v4152, %v4168
  %v4170 = vperm.slane %v3717, 2
  %v4171 = vmul.f32 %v4169, %v4170
  %v4172 = vperm.slane %v3717, 3
  %v4173 = vadd.f32 %v4171, %v4172
  %v4174 = vld [vmem:[%s33] sm:$0xff]
  %v4175 = vld [vmem:[%s33 + $0x8] sm:$0xff]
  %v4176 = vld [vmem:[%s33 + $0x10] sm:$0xff]
  %v4177 = vld [vmem:[%s33 + $0x18] sm:$0xff]
  %v4178 = vld [vmem:[%s31] sm:$0x1]
  %v4180 = vperm.slane %v4178, 0
  %v4183 = vsel %vm208, %v4173, 0
  %4185 = vmatpush.msra.mxu0 0.0
  %4186 = vmatpush.msra.mxu0 0.0
  %4187 = vmatpush.msra.mxu0 0.0
  %4188 = vmatpush.msra.mxu0 0.0
  %4189 = vmatpush.msra.mxu0 0.0
  %4190 = vmatpush.msra.mxu0 0.0
  %4191 = vmatpush.msra.mxu0 0.0
  %4192 = vmatpush.msra.mxu0 0.0
  %4193 = vmatpush.msra.mxu0 0.0
  %4194 = vmatpush.msra.mxu0 0.0
  %4195 = vmatpush.msra.mxu0 0.0
  %4196 = vmatpush.msra.mxu0 0.0
  %4197 = vmatpush.msra.mxu0 %v4177
  %4198 = vmatpush.msra.mxu0 %v4176
  %4199 = vmatpush.msra.mxu0 %v4175
  %4200 = vmatpush.msra.mxu0 %v4174
  %4201 = vmatmul.f32.gmra.mxu0 %v4183
  %v4202 = vpop.f32.mrf.mxu0
  %v4203 = vadd.f32 %v4180, %v4202
  %4204 = vdwg.mxu0
  %4209 = vrot.lane.b32.xlu0 %v4174, 96
  %v4210 = vpop.permute.xlu0 %4209
  %4211 = vrot.lane.b32.xlu0 %v4175, 96
  %v4212 = vpop.permute.xlu0 %4211
  %4213 = vrot.lane.b32.xlu0 %v4176, 96
  %v4214 = vpop.permute.xlu0 %4213
  %4215 = vrot.lane.b32.xlu0 %v4177, 96
  %v4216 = vpop.permute.xlu0 %4215
  %4221 = vrot.lane.b32.xlu0 %v4180, 96
  %v4222 = vpop.permute.xlu0 %4221
  %v4225 = vsel %vm208, %v3662, 0
  %4227 = vmatpush.msra.mxu0 0.0
  %4228 = vmatpush.msra.mxu0 0.0
  %4229 = vmatpush.msra.mxu0 0.0
  %4230 = vmatpush.msra.mxu0 0.0
  %4231 = vmatpush.msra.mxu0 0.0
  %4232 = vmatpush.msra.mxu0 0.0
  %4233 = vmatpush.msra.mxu0 0.0
  %4234 = vmatpush.msra.mxu0 0.0
  %4235 = vmatpush.msra.mxu0 0.0
  %4236 = vmatpush.msra.mxu0 0.0
  %4237 = vmatpush.msra.mxu0 0.0
  %4238 = vmatpush.msra.mxu0 0.0
  %4239 = vmatpush.msra.mxu0 %v4216
  %4240 = vmatpush.msra.mxu0 %v4214
  %4241 = vmatpush.msra.mxu0 %v4212
  %4242 = vmatpush.msra.mxu0 %v4210
  %4243 = vmatmul.f32.gmra.mxu0 %v4225
  %v4244 = vpop.f32.mrf.mxu0
  %v4245 = vadd.f32 %v4222, %v4244
  %4246 = vdwg.mxu0
  %v4248 = vsel %vm1635, %v4203, 0
  %v4251 = vsel %vm1635, %v4245, 0
  %4253 = vmatpush.xpose.msra.mxu0 0.0
  %4254 = vmatpush.xpose.msra.mxu0 0.0
  %4255 = vmatpush.xpose.msra.mxu0 0.0
  %4256 = vmatpush.xpose.msra.mxu0 0.0
  %4257 = vmatpush.xpose.msra.mxu0 0.0
  %4258 = vmatpush.xpose.msra.mxu0 0.0
  %4259 = vmatpush.xpose.msra.mxu0 0.0
  %4260 = vmatpush.xpose.msra.mxu0 0.0
  %4261 = vmatpush.xpose.msra.mxu0 0.0
  %4262 = vmatpush.xpose.msra.mxu0 0.0
  %4263 = vmatpush.xpose.msra.mxu0 0.0
  %4264 = vmatpush.xpose.msra.mxu0 0.0
  %4265 = vmatpush.xpose.msra.mxu0 0.0
  %4266 = vmatpush.xpose.msra.mxu0 0.0
  %4267 = vmatpush.xpose.msra.mxu0 0.0
  %4268 = vmatpush.xpose.msra.mxu0 %v4251
  %4269 = vmatmul.f32.gmra.mxu0 %v4248
  %v4270 = vpop.f32.mrf.mxu0
  %v4271 = vadd.f32 0.0, %v4270
  %4272 = vdwg.mxu0
  %v4273 = vmul.f32 %v4271, 0.35355338
  %v4274 = vsel %vm1635, %v4273, -inf
  %4275 = vmax.xlane.f32.xlu0 %v4274
  %v4276 = vpop.xlane.xlu0 %4275
  %v4277 = vsub.f32 %v4273, %v4276
  %v4278 = vmul.f32 %v4277, 1.442695
  %v4279 = vpow.pop %v4278
  %v4280 = vsel %vm1635, %v4279, 0.0
  %4281 = vadd.xlane.f32.xlu0 %v4280
  %v4282 = vpop.xlane.xlu0 %4281
  %v4283 = vrcp.pop %v4282
  %v4284 = vmul.f32 %v4282, %v4283
  %v4285 = vsub.f32 1.0, %v4284
  %v4286 = vmul.f32 %v4283, %v4285
  %v4287 = vadd.f32 %v4283, %v4286
  %vm4288 = vweird.f32 %v4282
  %vm4289 = vweird.f32 %v4283
  %vm4290 = vmor %vm4288, %vm4289
  %v4291 = vsel %vm4290, %v4283, %v4287
  %v4292 = vand.u32 2147483647, %v4282
  %vm4293 = vcmp.eq.f32.partialorder %v4292, 8.507059e+37
  %v4294 = vand.u32 %v4282, 2147483648
  %v4295 = vor.u32 1.1754944e-38, %v4294
  %v4296 = vsel %vm4293, %v4295, %v4291
  %v4297 = vmul.f32 %v4279, %v4296
  %4298 = vrot.lane.b32.xlu0 %v4245, 96
  %v4299 = vpop.permute.xlu0 %4298
  %v4302 = vsel %vm1635, %v4297, 0
  %4304 = vmatpush.msra.mxu0 0.0
  %4305 = vmatpush.msra.mxu0 0.0
  %4306 = vmatpush.msra.mxu0 0.0
  %4307 = vmatpush.msra.mxu0 0.0
  %4308 = vmatpush.msra.mxu0 0.0
  %4309 = vmatpush.msra.mxu0 0.0
  %4310 = vmatpush.msra.mxu0 0.0
  %4311 = vmatpush.msra.mxu0 0.0
  %4312 = vmatpush.msra.mxu0 0.0
  %4313 = vmatpush.msra.mxu0 0.0
  %4314 = vmatpush.msra.mxu0 0.0
  %4315 = vmatpush.msra.mxu0 0.0
  %4316 = vmatpush.msra.mxu0 0.0
  %4317 = vmatpush.msra.mxu0 0.0
  %4318 = vmatpush.msra.mxu0 0.0
  %4319 = vmatpush.msra.mxu0 %v4299
  %4320 = vmatmul.f32.gmra.mxu0 %v4302
  %v4321 = vpop.f32.mrf.mxu0
  %v4322 = vadd.f32 0.0, %v4321
  %4323 = vdwg.mxu0
  %4324 = vrot.lane.b32.xlu0 %v4203, 120
  %v4325 = vpop.permute.xlu0 %4324
  %4326 = vrot.lane.b32.xlu0 %v4245, 120
  %v4327 = vpop.permute.xlu0 %4326
  %v4328 = vsel %vm1635, %v4325, 0
  %v4330 = vsel %vm1635, %v4327, 0
  %4332 = vmatpush.xpose.msra.mxu0 0.0
  %4333 = vmatpush.xpose.msra.mxu0 0.0
  %4334 = vmatpush.xpose.msra.mxu0 0.0
  %4335 = vmatpush.xpose.msra.mxu0 0.0
  %4336 = vmatpush.xpose.msra.mxu0 0.0
  %4337 = vmatpush.xpose.msra.mxu0 0.0
  %4338 = vmatpush.xpose.msra.mxu0 0.0
  %4339 = vmatpush.xpose.msra.mxu0 0.0
  %4340 = vmatpush.xpose.msra.mxu0 0.0
  %4341 = vmatpush.xpose.msra.mxu0 0.0
  %4342 = vmatpush.xpose.msra.mxu0 0.0
  %4343 = vmatpush.xpose.msra.mxu0 0.0
  %4344 = vmatpush.xpose.msra.mxu0 0.0
  %4345 = vmatpush.xpose.msra.mxu0 0.0
  %4346 = vmatpush.xpose.msra.mxu0 0.0
  %4347 = vmatpush.xpose.msra.mxu0 %v4330
  %4348 = vmatmul.f32.gmra.mxu0 %v4328
  %v4349 = vpop.f32.mrf.mxu0
  %v4350 = vadd.f32 0.0, %v4349
  %4351 = vdwg.mxu0
  %v4352 = vmul.f32 %v4350, 0.35355338
  %v4353 = vsel %vm1635, %v4352, -inf
  %4354 = vmax.xlane.f32.xlu0 %v4353
  %v4355 = vpop.xlane.xlu0 %4354
  %v4356 = vsub.f32 %v4352, %v4355
  %v4357 = vmul.f32 %v4356, 1.442695
  %v4358 = vpow.pop %v4357
  %v4359 = vsel %vm1635, %v4358, 0.0
  %4360 = vadd.xlane.f32.xlu0 %v4359
  %v4361 = vpop.xlane.xlu0 %4360
  %v4362 = vrcp.pop %v4361
  %v4363 = vmul.f32 %v4361, %v4362
  %v4364 = vsub.f32 1.0, %v4363
  %v4365 = vmul.f32 %v4362, %v4364
  %v4366 = vadd.f32 %v4362, %v4365
  %vm4367 = vweird.f32 %v4361
  %vm4368 = vweird.f32 %v4362
  %vm4369 = vmor %vm4367, %vm4368
  %v4370 = vsel %vm4369, %v4362, %v4366
  %v4371 = vand.u32 2147483647, %v4361
  %vm4372 = vcmp.eq.f32.partialorder %v4371, 8.507059e+37
  %v4373 = vand.u32 %v4361, 2147483648
  %v4374 = vor.u32 1.1754944e-38, %v4373
  %v4375 = vsel %vm4372, %v4374, %v4370
  %v4376 = vmul.f32 %v4358, %v4375
  %4377 = vrot.lane.b32.xlu0 %v4245, 88
  %v4378 = vpop.permute.xlu0 %4377
  %v4381 = vsel %vm1635, %v4376, 0
  %4383 = vmatpush.msra.mxu0 0.0
  %4384 = vmatpush.msra.mxu0 0.0
  %4385 = vmatpush.msra.mxu0 0.0
  %4386 = vmatpush.msra.mxu0 0.0
  %4387 = vmatpush.msra.mxu0 0.0
  %4388 = vmatpush.msra.mxu0 0.0
  %4389 = vmatpush.msra.mxu0 0.0
  %4390 = vmatpush.msra.mxu0 0.0
  %4391 = vmatpush.msra.mxu0 0.0
  %4392 = vmatpush.msra.mxu0 0.0
  %4393 = vmatpush.msra.mxu0 0.0
  %4394 = vmatpush.msra.mxu0 0.0
  %4395 = vmatpush.msra.mxu0 0.0
  %4396 = vmatpush.msra.mxu0 0.0
  %4397 = vmatpush.msra.mxu0 0.0
  %4398 = vmatpush.msra.mxu0 %v4378
  %4399 = vmatmul.f32.gmra.mxu0 %v4381
  %v4400 = vpop.f32.mrf.mxu0
  %v4401 = vadd.f32 0.0, %v4400
  %4402 = vdwg.mxu0
  %4403 = vrot.lane.b32.xlu0 %v4203, 112
  %v4404 = vpop.permute.xlu0 %4403
  %4405 = vrot.lane.b32.xlu0 %v4245, 112
  %v4406 = vpop.permute.xlu0 %4405
  %v4407 = vsel %vm1635, %v4404, 0
  %v4409 = vsel %vm1635, %v4406, 0
  %4411 = vmatpush.xpose.msra.mxu0 0.0
  %4412 = vmatpush.xpose.msra.mxu0 0.0
  %4413 = vmatpush.xpose.msra.mxu0 0.0
  %4414 = vmatpush.xpose.msra.mxu0 0.0
  %4415 = vmatpush.xpose.msra.mxu0 0.0
  %4416 = vmatpush.xpose.msra.mxu0 0.0
  %4417 = vmatpush.xpose.msra.mxu0 0.0
  %4418 = vmatpush.xpose.msra.mxu0 0.0
  %4419 = vmatpush.xpose.msra.mxu0 0.0
  %4420 = vmatpush.xpose.msra.mxu0 0.0
  %4421 = vmatpush.xpose.msra.mxu0 0.0
  %4422 = vmatpush.xpose.msra.mxu0 0.0
  %4423 = vmatpush.xpose.msra.mxu0 0.0
  %4424 = vmatpush.xpose.msra.mxu0 0.0
  %4425 = vmatpush.xpose.msra.mxu0 0.0
  %4426 = vmatpush.xpose.msra.mxu0 %v4409
  %4427 = vmatmul.f32.gmra.mxu0 %v4407
  %v4428 = vpop.f32.mrf.mxu0
  %v4429 = vadd.f32 0.0, %v4428
  %4430 = vdwg.mxu0
  %v4431 = vmul.f32 %v4429, 0.35355338
  %v4432 = vsel %vm1635, %v4431, -inf
  %4433 = vmax.xlane.f32.xlu0 %v4432
  %v4434 = vpop.xlane.xlu0 %4433
  %v4435 = vsub.f32 %v4431, %v4434
  %v4436 = vmul.f32 %v4435, 1.442695
  %v4437 = vpow.pop %v4436
  %v4438 = vsel %vm1635, %v4437, 0.0
  %4439 = vadd.xlane.f32.xlu0 %v4438
  %v4440 = vpop.xlane.xlu0 %4439
  %v4441 = vrcp.pop %v4440
  %v4442 = vmul.f32 %v4440, %v4441
  %v4443 = vsub.f32 1.0, %v4442
  %v4444 = vmul.f32 %v4441, %v4443
  %v4445 = vadd.f32 %v4441, %v4444
  %vm4446 = vweird.f32 %v4440
  %vm4447 = vweird.f32 %v4441
  %vm4448 = vmor %vm4446, %vm4447
  %v4449 = vsel %vm4448, %v4441, %v4445
  %v4450 = vand.u32 2147483647, %v4440
  %vm4451 = vcmp.eq.f32.partialorder %v4450, 8.507059e+37
  %v4452 = vand.u32 %v4440, 2147483648
  %v4453 = vor.u32 1.1754944e-38, %v4452
  %v4454 = vsel %vm4451, %v4453, %v4449
  %v4455 = vmul.f32 %v4437, %v4454
  %4456 = vrot.lane.b32.xlu0 %v4245, 80
  %v4457 = vpop.permute.xlu0 %4456
  %v4460 = vsel %vm1635, %v4455, 0
  %4462 = vmatpush.msra.mxu0 0.0
  %4463 = vmatpush.msra.mxu0 0.0
  %4464 = vmatpush.msra.mxu0 0.0
  %4465 = vmatpush.msra.mxu0 0.0
  %4466 = vmatpush.msra.mxu0 0.0
  %4467 = vmatpush.msra.mxu0 0.0
  %4468 = vmatpush.msra.mxu0 0.0
  %4469 = vmatpush.msra.mxu0 0.0
  %4470 = vmatpush.msra.mxu0 0.0
  %4471 = vmatpush.msra.mxu0 0.0
  %4472 = vmatpush.msra.mxu0 0.0
  %4473 = vmatpush.msra.mxu0 0.0
  %4474 = vmatpush.msra.mxu0 0.0
  %4475 = vmatpush.msra.mxu0 0.0
  %4476 = vmatpush.msra.mxu0 0.0
  %4477 = vmatpush.msra.mxu0 %v4457
  %4478 = vmatmul.f32.gmra.mxu0 %v4460
  %v4479 = vpop.f32.mrf.mxu0
  %v4480 = vadd.f32 0.0, %v4479
  %4481 = vdwg.mxu0
  %4482 = vrot.lane.b32.xlu0 %v4203, 104
  %v4483 = vpop.permute.xlu0 %4482
  %4484 = vrot.lane.b32.xlu0 %v4245, 104
  %v4485 = vpop.permute.xlu0 %4484
  %v4486 = vsel %vm1635, %v4483, 0
  %v4488 = vsel %vm1635, %v4485, 0
  %4490 = vmatpush.xpose.msra.mxu0 0.0
  %4491 = vmatpush.xpose.msra.mxu0 0.0
  %4492 = vmatpush.xpose.msra.mxu0 0.0
  %4493 = vmatpush.xpose.msra.mxu0 0.0
  %4494 = vmatpush.xpose.msra.mxu0 0.0
  %4495 = vmatpush.xpose.msra.mxu0 0.0
  %4496 = vmatpush.xpose.msra.mxu0 0.0
  %4497 = vmatpush.xpose.msra.mxu0 0.0
  %4498 = vmatpush.xpose.msra.mxu0 0.0
  %4499 = vmatpush.xpose.msra.mxu0 0.0
  %4500 = vmatpush.xpose.msra.mxu0 0.0
  %4501 = vmatpush.xpose.msra.mxu0 0.0
  %4502 = vmatpush.xpose.msra.mxu0 0.0
  %4503 = vmatpush.xpose.msra.mxu0 0.0
  %4504 = vmatpush.xpose.msra.mxu0 0.0
  %4505 = vmatpush.xpose.msra.mxu0 %v4488
  %4506 = vmatmul.f32.gmra.mxu0 %v4486
  %v4507 = vpop.f32.mrf.mxu0
  %v4508 = vadd.f32 0.0, %v4507
  %4509 = vdwg.mxu0
  %v4510 = vmul.f32 %v4508, 0.35355338
  %v4511 = vsel %vm1635, %v4510, -inf
  %4512 = vmax.xlane.f32.xlu0 %v4511
  %v4513 = vpop.xlane.xlu0 %4512
  %v4514 = vsub.f32 %v4510, %v4513
  %v4515 = vmul.f32 %v4514, 1.442695
  %v4516 = vpow.pop %v4515
  %v4517 = vsel %vm1635, %v4516, 0.0
  %4518 = vadd.xlane.f32.xlu0 %v4517
  %v4519 = vpop.xlane.xlu0 %4518
  %v4520 = vrcp.pop %v4519
  %v4521 = vmul.f32 %v4519, %v4520
  %v4522 = vsub.f32 1.0, %v4521
  %v4523 = vmul.f32 %v4520, %v4522
  %v4524 = vadd.f32 %v4520, %v4523
  %vm4525 = vweird.f32 %v4519
  %vm4526 = vweird.f32 %v4520
  %vm4527 = vmor %vm4525, %vm4526
  %v4528 = vsel %vm4527, %v4520, %v4524
  %v4529 = vand.u32 2147483647, %v4519
  %vm4530 = vcmp.eq.f32.partialorder %v4529, 8.507059e+37
  %v4531 = vand.u32 %v4519, 2147483648
  %v4532 = vor.u32 1.1754944e-38, %v4531
  %v4533 = vsel %vm4530, %v4532, %v4528
  %v4534 = vmul.f32 %v4516, %v4533
  %4535 = vrot.lane.b32.xlu0 %v4245, 72
  %v4536 = vpop.permute.xlu0 %4535
  %v4539 = vsel %vm1635, %v4534, 0
  %4541 = vmatpush.msra.mxu0 0.0
  %4542 = vmatpush.msra.mxu0 0.0
  %4543 = vmatpush.msra.mxu0 0.0
  %4544 = vmatpush.msra.mxu0 0.0
  %4545 = vmatpush.msra.mxu0 0.0
  %4546 = vmatpush.msra.mxu0 0.0
  %4547 = vmatpush.msra.mxu0 0.0
  %4548 = vmatpush.msra.mxu0 0.0
  %4549 = vmatpush.msra.mxu0 0.0
  %4550 = vmatpush.msra.mxu0 0.0
  %4551 = vmatpush.msra.mxu0 0.0
  %4552 = vmatpush.msra.mxu0 0.0
  %4553 = vmatpush.msra.mxu0 0.0
  %4554 = vmatpush.msra.mxu0 0.0
  %4555 = vmatpush.msra.mxu0 0.0
  %4556 = vmatpush.msra.mxu0 %v4536
  %4557 = vmatmul.f32.gmra.mxu0 %v4539
  %v4558 = vpop.f32.mrf.mxu0
  %v4559 = vadd.f32 0.0, %v4558
  %4560 = vdwg.mxu0
  %4562 = vrot.lane.b32.xlu0 %v4401, 8
  %v4563 = vpop.permute.xlu0 %4562
  %4566 = vrot.lane.b32.xlu0 %v4480, 16
  %v4567 = vpop.permute.xlu0 %4566
  %4570 = vrot.lane.b32.xlu0 %v4559, 24
  %v4571 = vpop.permute.xlu0 %4570
  %v4573 = vsel %vm1635, %v4322, %v4563
  %v4574 = vsel %vm325, %v4573, %v4567
  %v4575 = vsel %vm1962, %v4574, %v4571
  %4576 = vrot.lane.b32.xlu0 %v4174, 32
  %v4577 = vpop.permute.xlu0 %4576
  %4578 = vrot.lane.b32.xlu0 %v4175, 32
  %v4579 = vpop.permute.xlu0 %4578
  %4580 = vrot.lane.b32.xlu0 %v4176, 32
  %v4581 = vpop.permute.xlu0 %4580
  %4582 = vrot.lane.b32.xlu0 %v4177, 32
  %v4583 = vpop.permute.xlu0 %4582
  %4588 = vrot.lane.b32.xlu0 %v4180, 32
  %v4589 = vpop.permute.xlu0 %4588
  %v4592 = vsel %vm208, %v4575, 0
  %4594 = vmatpush.msra.mxu0 0.0
  %4595 = vmatpush.msra.mxu0 0.0
  %4596 = vmatpush.msra.mxu0 0.0
  %4597 = vmatpush.msra.mxu0 0.0
  %4598 = vmatpush.msra.mxu0 0.0
  %4599 = vmatpush.msra.mxu0 0.0
  %4600 = vmatpush.msra.mxu0 0.0
  %4601 = vmatpush.msra.mxu0 0.0
  %4602 = vmatpush.msra.mxu0 0.0
  %4603 = vmatpush.msra.mxu0 0.0
  %4604 = vmatpush.msra.mxu0 0.0
  %4605 = vmatpush.msra.mxu0 0.0
  %4606 = vmatpush.msra.mxu0 %v4583
  %4607 = vmatpush.msra.mxu0 %v4581
  %4608 = vmatpush.msra.mxu0 %v4579
  %4609 = vmatpush.msra.mxu0 %v4577
  %4610 = vmatmul.f32.gmra.mxu0 %v4592
  %v4611 = vpop.f32.mrf.mxu0
  %v4612 = vadd.f32 %v4589, %v4611
  %4613 = vdwg.mxu0
  %v4614 = vadd.f32 %v4147, %v4612
  %v4615 = vsel %vm208, %v4614, 0.0
  %4616 = vadd.xlane.f32.xlu0 %v4615
  %v4617 = vpop.xlane.xlu0 %4616
  %v4618 = vmul.f32 %v4617, %v1577
  %v4619 = vsub.f32 %v4614, %v4618
  %v4620 = vmul.f32 %v4619, %v4619
  %v4621 = vsel %vm208, %v4620, 0.0
  %4622 = vadd.xlane.f32.xlu0 %v4621
  %v4623 = vpop.xlane.xlu0 %4622
  %v4624 = vmul.f32 %v4623, %v1577
  %v4625 = vadd.f32 %v4624, 1e-06
  %v4626 = vrsqrt.pop %v4625
  %v4627 = vmul.f32 %v4626, %v4625
  %v4628 = vmul.f32 %v4627, %v4626
  %v4629 = vmul.f32 0.5, %v4628
  %v4630 = vsub.f32 1.5, %v4629
  %v4631 = vmul.f32 %v4626, %v4630
  %vm4632 = vweird.f32 %v4625
  %vm4633 = vweird.f32 %v4626
  %vm4634 = vmor %vm4632, %vm4633
  %v4635 = vsel %vm4634, %v4626, %v4631
  %v4636 = vmul.f32 %v4619, %v4635
  %v4637 = vperm.slane %v3717, 4
  %v4638 = vmul.f32 %v4636, %v4637
  %v4639 = vperm.slane %v3717, 5
  %v4640 = vadd.f32 %v4638, %v4639
  %v4641 = vld [vmem:[%s21] sm:$0xff]
  %v4642 = vld [vmem:[%s21 + $0x8] sm:$0xff]
  %v4643 = vld [vmem:[%s21 + $0x10] sm:$0xff]
  %v4644 = vld [vmem:[%s21 + $0x18] sm:$0xff]
  %v4645 = vld [vmem:[%s21 + $0x20] sm:$0xff]
  %v4646 = vld [vmem:[%s21 + $0x28] sm:$0xff]
  %v4647 = vld [vmem:[%s21 + $0x30] sm:$0xff]
  %v4648 = vld [vmem:[%s21 + $0x38] sm:$0xff]
  %v4649 = vld [vmem:[%s21 + $0x40] sm:$0xff]
  %v4650 = vld [vmem:[%s21 + $0x48] sm:$0xff]
  %v4651 = vld [vmem:[%s21 + $0x50] sm:$0xff]
  %v4652 = vld [vmem:[%s21 + $0x58] sm:$0xff]
  %v4653 = vld [vmem:[%s21 + $0x60] sm:$0xff]
  %v4654 = vld [vmem:[%s21 + $0x68] sm:$0xff]
  %v4655 = vld [vmem:[%s21 + $0x70] sm:$0xff]
  %v4656 = vld [vmem:[%s21 + $0x78] sm:$0xff]
  %v4657 = vld [vmem:[%s17] sm:$0xf]
  %v4659 = vperm.slane %v4657, 0
  %v4660 = vperm.slane %v4657, 1
  %v4661 = vperm.slane %v4657, 2
  %v4662 = vperm.slane %v4657, 3
  %v4668 = vsel %vm208, %v4640, 0
  %4670 = vmatpush.msra.mxu0 0.0
  %4671 = vmatpush.msra.mxu0 0.0
  %4672 = vmatpush.msra.mxu0 0.0
  %4673 = vmatpush.msra.mxu0 0.0
  %4674 = vmatpush.msra.mxu0 0.0
  %4675 = vmatpush.msra.mxu0 0.0
  %4676 = vmatpush.msra.mxu0 0.0
  %4677 = vmatpush.msra.mxu0 0.0
  %4678 = vmatpush.msra.mxu0 0.0
  %4679 = vmatpush.msra.mxu0 0.0
  %4680 = vmatpush.msra.mxu0 0.0
  %4681 = vmatpush.msra.mxu0 0.0
  %4682 = vmatpush.msra.mxu0 %v4653
  %4683 = vmatpush.msra.mxu0 %v4649
  %4684 = vmatpush.msra.mxu0 %v4645
  %4685 = vmatpush.msra.mxu0 %v4641
  %4686 = vmatmul.f32.gmra.mxu0 %v4668
  %v4687 = vpop.f32.mrf.mxu0
  %v4688 = vadd.f32 %v4659, %v4687
  %4689 = vdwg.mxu0
  %4690 = vmatpush.msra.mxu0 0.0
  %4691 = vmatpush.msra.mxu0 0.0
  %4692 = vmatpush.msra.mxu0 0.0
  %4693 = vmatpush.msra.mxu0 0.0
  %4694 = vmatpush.msra.mxu0 0.0
  %4695 = vmatpush.msra.mxu0 0.0
  %4696 = vmatpush.msra.mxu0 0.0
  %4697 = vmatpush.msra.mxu0 0.0
  %4698 = vmatpush.msra.mxu0 0.0
  %4699 = vmatpush.msra.mxu0 0.0
  %4700 = vmatpush.msra.mxu0 0.0
  %4701 = vmatpush.msra.mxu0 0.0
  %4702 = vmatpush.msra.mxu0 %v4654
  %4703 = vmatpush.msra.mxu0 %v4650
  %4704 = vmatpush.msra.mxu0 %v4646
  %4705 = vmatpush.msra.mxu0 %v4642
  %4706 = vmatmul.f32.gmra.mxu0 %v4668
  %v4707 = vpop.f32.mrf.mxu0
  %v4708 = vadd.f32 %v4660, %v4707
  %4709 = vdwg.mxu0
  %4710 = vmatpush.msra.mxu0 0.0
  %4711 = vmatpush.msra.mxu0 0.0
  %4712 = vmatpush.msra.mxu0 0.0
  %4713 = vmatpush.msra.mxu0 0.0
  %4714 = vmatpush.msra.mxu0 0.0
  %4715 = vmatpush.msra.mxu0 0.0
  %4716 = vmatpush.msra.mxu0 0.0
  %4717 = vmatpush.msra.mxu0 0.0
  %4718 = vmatpush.msra.mxu0 0.0
  %4719 = vmatpush.msra.mxu0 0.0
  %4720 = vmatpush.msra.mxu0 0.0
  %4721 = vmatpush.msra.mxu0 0.0
  %4722 = vmatpush.msra.mxu0 %v4655
  %4723 = vmatpush.msra.mxu0 %v4651
  %4724 = vmatpush.msra.mxu0 %v4647
  %4725 = vmatpush.msra.mxu0 %v4643
  %4726 = vmatmul.f32.gmra.mxu0 %v4668
  %v4727 = vpop.f32.mrf.mxu0
  %v4728 = vadd.f32 %v4661, %v4727
  %4729 = vdwg.mxu0
  %4730 = vmatpush.msra.mxu0 0.0
  %4731 = vmatpush.msra.mxu0 0.0
  %4732 = vmatpush.msra.mxu0 0.0
  %4733 = vmatpush.msra.mxu0 0.0
  %4734 = vmatpush.msra.mxu0 0.0
  %4735 = vmatpush.msra.mxu0 0.0
  %4736 = vmatpush.msra.mxu0 0.0
  %4737 = vmatpush.msra.mxu0 0.0
  %4738 = vmatpush.msra.mxu0 0.0
  %4739 = vmatpush.msra.mxu0 0.0
  %4740 = vmatpush.msra.mxu0 0.0
  %4741 = vmatpush.msra.mxu0 0.0
  %4742 = vmatpush.msra.mxu0 %v4656
  %4743 = vmatpush.msra.mxu0 %v4652
  %4744 = vmatpush.msra.mxu0 %v4648
  %4745 = vmatpush.msra.mxu0 %v4644
  %4746 = vmatmul.f32.gmra.mxu0 %v4668
  %v4747 = vpop.f32.mrf.mxu0
  %v4748 = vadd.f32 %v4662, %v4747
  %4749 = vdwg.mxu0
  %v4750 = vmax.f32 %v4688, 0.0
  %v4751 = vmax.f32 %v4708, 0.0
  %v4752 = vmax.f32 %v4728, 0.0
  %v4753 = vmax.f32 %v4748, 0.0
  %v4754 = vld [vmem:[%s23] sm:$0xff]
  %v4755 = vld [vmem:[%s23 + $0x8] sm:$0xff]
  %v4756 = vld [vmem:[%s23 + $0x10] sm:$0xff]
  %v4757 = vld [vmem:[%s23 + $0x18] sm:$0xff]
  %v4758 = vld [vmem:[%s23 + $0x20] sm:$0xff]
  %v4759 = vld [vmem:[%s23 + $0x28] sm:$0xff]
  %v4760 = vld [vmem:[%s23 + $0x30] sm:$0xff]
  %v4761 = vld [vmem:[%s23 + $0x38] sm:$0xff]
  %v4762 = vld [vmem:[%s23 + $0x40] sm:$0xff]
  %v4763 = vld [vmem:[%s23 + $0x48] sm:$0xff]
  %v4764 = vld [vmem:[%s23 + $0x50] sm:$0xff]
  %v4765 = vld [vmem:[%s23 + $0x58] sm:$0xff]
  %v4766 = vld [vmem:[%s23 + $0x60] sm:$0xff]
  %v4767 = vld [vmem:[%s23 + $0x68] sm:$0xff]
  %v4768 = vld [vmem:[%s23 + $0x70] sm:$0xff]
  %v4769 = vld [vmem:[%s23 + $0x78] sm:$0xff]
  %v4770 = vld [vmem:[%s23 + $0x80] sm:$0xff]
  %v4771 = vld [vmem:[%s23 + $0x88] sm:$0xff]
  %v4772 = vld [vmem:[%s23 + $0x90] sm:$0xff]
  %v4773 = vld [vmem:[%s23 + $0x98] sm:$0xff]
  %v4774 = vld [vmem:[%s23 + $0xa0] sm:$0xff]
  %v4775 = vld [vmem:[%s23 + $0xa8] sm:$0xff]
  %v4776 = vld [vmem:[%s23 + $0xb0] sm:$0xff]
  %v4777 = vld [vmem:[%s23 + $0xb8] sm:$0xff]
  %v4778 = vld [vmem:[%s23 + $0xc0] sm:$0xff]
  %v4779 = vld [vmem:[%s23 + $0xc8] sm:$0xff]
  %v4780 = vld [vmem:[%s23 + $0xd0] sm:$0xff]
  %v4781 = vld [vmem:[%s23 + $0xd8] sm:$0xff]
  %v4782 = vld [vmem:[%s23 + $0xe0] sm:$0xff]
  %v4783 = vld [vmem:[%s23 + $0xe8] sm:$0xff]
  %v4784 = vld [vmem:[%s23 + $0xf0] sm:$0xff]
  %v4785 = vld [vmem:[%s23 + $0xf8] sm:$0xff]
  %v4786 = vld [vmem:[%s23 + $0x100] sm:$0xff]
  %v4787 = vld [vmem:[%s23 + $0x108] sm:$0xff]
  %v4788 = vld [vmem:[%s23 + $0x110] sm:$0xff]
  %v4789 = vld [vmem:[%s23 + $0x118] sm:$0xff]
  %v4790 = vld [vmem:[%s23 + $0x120] sm:$0xff]
  %v4791 = vld [vmem:[%s23 + $0x128] sm:$0xff]
  %v4792 = vld [vmem:[%s23 + $0x130] sm:$0xff]
  %v4793 = vld [vmem:[%s23 + $0x138] sm:$0xff]
  %v4794 = vld [vmem:[%s23 + $0x140] sm:$0xff]
  %v4795 = vld [vmem:[%s23 + $0x148] sm:$0xff]
  %v4796 = vld [vmem:[%s23 + $0x150] sm:$0xff]
  %v4797 = vld [vmem:[%s23 + $0x158] sm:$0xff]
  %v4798 = vld [vmem:[%s23 + $0x160] sm:$0xff]
  %v4799 = vld [vmem:[%s23 + $0x168] sm:$0xff]
  %v4800 = vld [vmem:[%s23 + $0x170] sm:$0xff]
  %v4801 = vld [vmem:[%s23 + $0x178] sm:$0xff]
  %v4802 = vld [vmem:[%s23 + $0x180] sm:$0xff]
  %v4803 = vld [vmem:[%s23 + $0x188] sm:$0xff]
  %v4804 = vld [vmem:[%s23 + $0x190] sm:$0xff]
  %v4805 = vld [vmem:[%s23 + $0x198] sm:$0xff]
  %v4806 = vld [vmem:[%s23 + $0x1a0] sm:$0xff]
  %v4807 = vld [vmem:[%s23 + $0x1a8] sm:$0xff]
  %v4808 = vld [vmem:[%s23 + $0x1b0] sm:$0xff]
  %v4809 = vld [vmem:[%s23 + $0x1b8] sm:$0xff]
  %v4810 = vld [vmem:[%s23 + $0x1c0] sm:$0xff]
  %v4811 = vld [vmem:[%s23 + $0x1c8] sm:$0xff]
  %v4812 = vld [vmem:[%s23 + $0x1d0] sm:$0xff]
  %v4813 = vld [vmem:[%s23 + $0x1d8] sm:$0xff]
  %v4814 = vld [vmem:[%s23 + $0x1e0] sm:$0xff]
  %v4815 = vld [vmem:[%s23 + $0x1e8] sm:$0xff]
  %v4816 = vld [vmem:[%s23 + $0x1f0] sm:$0xff]
  %v4817 = vld [vmem:[%s23 + $0x1f8] sm:$0xff]
  %v4818 = vld [vmem:[%s19] sm:$0x1]
  %v4820 = vperm.slane %v4818, 0
  %4822 = vmatpush.msra.mxu0 %v4769
  %4823 = vmatpush.msra.mxu0 %v4768
  %4824 = vmatpush.msra.mxu0 %v4767
  %4825 = vmatpush.msra.mxu0 %v4766
  %4826 = vmatpush.msra.mxu0 %v4765
  %4827 = vmatpush.msra.mxu0 %v4764
  %4828 = vmatpush.msra.mxu0 %v4763
  %4829 = vmatpush.msra.mxu0 %v4762
  %4830 = vmatpush.msra.mxu0 %v4761
  %4831 = vmatpush.msra.mxu0 %v4760
  %4832 = vmatpush.msra.mxu0 %v4759
  %4833 = vmatpush.msra.mxu0 %v4758
  %4834 = vmatpush.msra.mxu0 %v4757
  %4835 = vmatpush.msra.mxu0 %v4756
  %4836 = vmatpush.msra.mxu0 %v4755
  %4837 = vmatpush.msra.mxu0 %v4754
  %4838 = vmatmul.f32.gmra.mxu0 %v4750
  %v4839 = vpop.f32.mrf.mxu0
  %v4840 = vadd.f32 %v4820, %v4839
  %4841 = vdwg.mxu0
  %4842 = vmatpush.msra.mxu0 %v4785
  %4843 = vmatpush.msra.mxu0 %v4784
  %4844 = vmatpush.msra.mxu0 %v4783
  %4845 = vmatpush.msra.mxu0 %v4782
  %4846 = vmatpush.msra.mxu0 %v4781
  %4847 = vmatpush.msra.mxu0 %v4780
  %4848 = vmatpush.msra.mxu0 %v4779
  %4849 = vmatpush.msra.mxu0 %v4778
  %4850 = vmatpush.msra.mxu0 %v4777
  %4851 = vmatpush.msra.mxu0 %v4776
  %4852 = vmatpush.msra.mxu0 %v4775
  %4853 = vmatpush.msra.mxu0 %v4774
  %4854 = vmatpush.msra.mxu0 %v4773
  %4855 = vmatpush.msra.mxu0 %v4772
  %4856 = vmatpush.msra.mxu0 %v4771
  %4857 = vmatpush.msra.mxu0 %v4770
  %4858 = vmatmul.f32.gmra.mxu0 %v4751
  %v4859 = vpop.f32.mrf.mxu0
  %v4860 = vadd.f32 %v4840, %v4859
  %4861 = vdwg.mxu0
  %4862 = vmatpush.msra.mxu0 %v4801
  %4863 = vmatpush.msra.mxu0 %v4800
  %4864 = vmatpush.msra.mxu0 %v4799
  %4865 = vmatpush.msra.mxu0 %v4798
  %4866 = vmatpush.msra.mxu0 %v4797
  %4867 = vmatpush.msra.mxu0 %v4796
  %4868 = vmatpush.msra.mxu0 %v4795
  %4869 = vmatpush.msra.mxu0 %v4794
  %4870 = vmatpush.msra.mxu0 %v4793
  %4871 = vmatpush.msra.mxu0 %v4792
  %4872 = vmatpush.msra.mxu0 %v4791
  %4873 = vmatpush.msra.mxu0 %v4790
  %4874 = vmatpush.msra.mxu0 %v4789
  %4875 = vmatpush.msra.mxu0 %v4788
  %4876 = vmatpush.msra.mxu0 %v4787
  %4877 = vmatpush.msra.mxu0 %v4786
  %4878 = vmatmul.f32.gmra.mxu0 %v4752
  %v4879 = vpop.f32.mrf.mxu0
  %v4880 = vadd.f32 %v4860, %v4879
  %4881 = vdwg.mxu0
  %4882 = vmatpush.msra.mxu0 %v4817
  %4883 = vmatpush.msra.mxu0 %v4816
  %4884 = vmatpush.msra.mxu0 %v4815
  %4885 = vmatpush.msra.mxu0 %v4814
  %4886 = vmatpush.msra.mxu0 %v4813
  %4887 = vmatpush.msra.mxu0 %v4812
  %4888 = vmatpush.msra.mxu0 %v4811
  %4889 = vmatpush.msra.mxu0 %v4810
  %4890 = vmatpush.msra.mxu0 %v4809
  %4891 = vmatpush.msra.mxu0 %v4808
  %4892 = vmatpush.msra.mxu0 %v4807
  %4893 = vmatpush.msra.mxu0 %v4806
  %4894 = vmatpush.msra.mxu0 %v4805
  %4895 = vmatpush.msra.mxu0 %v4804
  %4896 = vmatpush.msra.mxu0 %v4803
  %4897 = vmatpush.msra.mxu0 %v4802
  %4898 = vmatmul.f32.gmra.mxu0 %v4753
  %v4899 = vpop.f32.mrf.mxu0
  %v4900 = vadd.f32 %v4880, %v4899
  %4901 = vdwg.mxu0
  %v4902 = vadd.f32 %v4614, %v4900
  %v4903 = vld [vmem:[%s35] sm:$0x3]
  %v4904 = vsel %vm208, %v4902, 0.0
  %4905 = vadd.xlane.f32.xlu0 %v4904
  %v4906 = vpop.xlane.xlu0 %4905
  %v4907 = vmul.f32 %v4906, %v1577
  %v4908 = vsub.f32 %v4902, %v4907
  %v4909 = vmul.f32 %v4908, %v4908
  %v4910 = vsel %vm208, %v4909, 0.0
  %4911 = vadd.xlane.f32.xlu0 %v4910
  %v4912 = vpop.xlane.xlu0 %4911
  %v4913 = vmul.f32 %v4912, %v1577
  %v4914 = vadd.f32 %v4913, 1e-06
  %v4915 = vrsqrt.pop %v4914
  %v4916 = vmul.f32 %v4915, %v4914
  %v4917 = vmul.f32 %v4916, %v4915
  %v4918 = vmul.f32 0.5, %v4917
  %v4919 = vsub.f32 1.5, %v4918
  %v4920 = vmul.f32 %v4915, %v4919
  %vm4921 = vweird.f32 %v4914
  %vm4922 = vweird.f32 %v4915
  %vm4923 = vmor %vm4921, %vm4922
  %v4924 = vsel %vm4923, %v4915, %v4920
  %v4925 = vmul.f32 %v4908, %v4924
  %v4926 = vperm.slane %v4903, 0
  %v4927 = vmul.f32 %v4925, %v4926
  %v4928 = vperm.slane %v4903, 1
  %v4929 = vadd.f32 %v4927, %v4928
  %v4932 = vsel %vm208, %v4929, 0
  %4934 = vmatpush.msra.mxu0 0.0
  %4935 = vmatpush.msra.mxu0 0.0
  %4936 = vmatpush.msra.mxu0 0.0
  %4937 = vmatpush.msra.mxu0 0.0
  %4938 = vmatpush.msra.mxu0 0.0
  %4939 = vmatpush.msra.mxu0 0.0
  %4940 = vmatpush.msra.mxu0 0.0
  %4941 = vmatpush.msra.mxu0 0.0
  %4942 = vmatpush.msra.mxu0 0.0
  %4943 = vmatpush.msra.mxu0 0.0
  %4944 = vmatpush.msra.mxu0 0.0
  %4945 = vmatpush.msra.mxu0 0.0
  %4946 = vmatpush.msra.mxu0 %v1520
  %4947 = vmatpush.msra.mxu0 %v1519
  %4948 = vmatpush.msra.mxu0 %v1518
  %4949 = vmatpush.msra.mxu0 %v1517
  %4950 = vmatmul.f32.gmra.mxu0 %v4932
  %v4951 = vpop.f32.mrf.mxu0
  %v4952 = vadd.f32 %v1523, %v4951
  %4953 = vdwg.mxu0
  %v4954 = vld [vmem:[%s75] sm:$0x1]
  %v4955 = vld [vmem:[#allocation2] sm:$0x1]
  %v4957 = vrot.slane %v4952, 1
  %v4958 = vrot.slane %v4952, 2
  %v4959 = vrot.slane %v4952, 3
  %v4960 = vrot.slane %v4952, 4
  %v4961 = vrot.slane %v4952, 5
  %v4962 = vrot.slane %v4952, 6
  %v4963 = vrot.slane %v4952, 7
  %v4964 = vperm.slane %v4952, 0
  %v4965 = vperm.slane %v4957, 0
  %v4966 = vperm.slane %v4958, 0
  %v4967 = vperm.slane %v4959, 0
  %v4968 = vperm.slane %v4960, 0
  %v4969 = vperm.slane %v4961, 0
  %v4970 = vperm.slane %v4962, 0
  %v4971 = vperm.slane %v4963, 0
  %v4980 = vadd.f32 %v4964, %v3715
  %v4981 = vadd.f32 %v4965, %v3715
  %v4982 = vadd.f32 %v4966, %v3715
  %v4983 = vadd.f32 %v4967, %v3715
  %v4984 = vadd.f32 %v4968, %v3715
  %v4985 = vadd.f32 %v4969, %v3715
  %v4986 = vadd.f32 %v4970, %v3715
  %v4987 = vadd.f32 %v4971, %v3715
  %v4988 = vmax.f32 %v4980, 0.0
  %v4989 = vmax.f32 %v4981, 0.0
  %v4990 = vmax.f32 %v4982, 0.0
  %v4991 = vmax.f32 %v4983, 0.0
  %v4992 = vmax.f32 %v4984, 0.0
  %v4993 = vmax.f32 %v4985, 0.0
  %v4994 = vmax.f32 %v4986, 0.0
  %v4995 = vmax.f32 %v4987, 0.0
  %v4997 = vperm.slane %v4954, 0
  %v4999 = vmul.f32 %v4988, %v4997
  %v5000 = vmul.f32 %v4989, %v4997
  %v5001 = vmul.f32 %v4990, %v4997
  %v5002 = vmul.f32 %v4991, %v4997
  %v5003 = vmul.f32 %v4992, %v4997
  %v5004 = vmul.f32 %v4993, %v4997
  %v5005 = vmul.f32 %v4994, %v4997
  %v5006 = vmul.f32 %v4995, %v4997
  %v5007 = vsel %vm208, %v4999, 0.0
  %5008 = vadd.xlane.f32.xlu0 %v5007
  %v5009 = vpop.xlane.xlu0 %5008
  %v5010 = vsel %vm208, %v5000, 0.0
  %5011 = vadd.xlane.f32.xlu0 %v5010
  %v5012 = vpop.xlane.xlu0 %5011
  %v5013 = vsel %vm208, %v5001, 0.0
  %5014 = vadd.xlane.f32.xlu0 %v5013
  %v5015 = vpop.xlane.xlu0 %5014
  %v5016 = vsel %vm208, %v5002, 0.0
  %5017 = vadd.xlane.f32.xlu0 %v5016
  %v5018 = vpop.xlane.xlu0 %5017
  %v5019 = vsel %vm208, %v5003, 0.0
  %5020 = vadd.xlane.f32.xlu0 %v5019
  %v5021 = vpop.xlane.xlu0 %5020
  %v5022 = vsel %vm208, %v5004, 0.0
  %5023 = vadd.xlane.f32.xlu0 %v5022
  %v5024 = vpop.xlane.xlu0 %5023
  %v5025 = vsel %vm208, %v5005, 0.0
  %5026 = vadd.xlane.f32.xlu0 %v5025
  %v5027 = vpop.xlane.xlu0 %5026
  %v5028 = vsel %vm208, %v5006, 0.0
  %5029 = vadd.xlane.f32.xlu0 %v5028
  %v5030 = vpop.xlane.xlu0 %5029
  %v5032 = vperm.slane %v4955, 0
  %5033 = vset.pattern.permute.xlu0 0
  %5034 = vperm.xlu0 %5033, %v5032
  %v5035 = vpop.permute.xlu0 %5034
  %v5037 = vadd.f32 %v5009, %v5035
  %v5038 = vadd.f32 %v5012, %v5035
  %v5039 = vadd.f32 %v5015, %v5035
  %v5040 = vadd.f32 %v5018, %v5035
  %v5041 = vadd.f32 %v5021, %v5035
  %v5042 = vadd.f32 %v5024, %v5035
  %v5043 = vadd.f32 %v5027, %v5035
  %v5044 = vadd.f32 %v5030, %v5035
  %v5045 = vld [vmem:[%s11] sm:$0xff]
  %s5046 = scalar_lea.vmem %s11, 8
  %v5047 = vld [vmem:[%s5046] sm:$0xff]
  %s5048 = scalar_lea.vmem %s11, 16
  %v5049 = vld [vmem:[%s5048] sm:$0xff]
  %s5050 = scalar_lea.vmem %s11, 24
  %v5051 = vld [vmem:[%s5050] sm:$0xff]
  %vm5052 = vcmp.gt.f32.partialorder %v5047, 0.0
  %v5061 = vlaneseq
  %v5062 = vand.u32 %v5061, 127
  %v5063 = vperm.slane %v5037, %v5062
  %v5064 = vperm.slane %v5038, %v5062
  %v5065 = vperm.slane %v5039, %v5062
  %v5066 = vperm.slane %v5040, %v5062
  %v5067 = vperm.slane %v5041, %v5062
  %v5068 = vperm.slane %v5042, %v5062
  %v5069 = vperm.slane %v5043, %v5062
  %v5070 = vperm.slane %v5044, %v5062
  %vm5071 = vcmask 1041409
  %v5072 = vsel %vm5071, %v5064, %v5063
  %vm5073 = vcmask 1042434
  %v5074 = vsel %vm5073, %v5065, %v5072
  %vm5075 = vcmask 1043459
  %v5076 = vsel %vm5075, %v5066, %v5074
  %vm5077 = vcmask 1044484
  %v5078 = vsel %vm5077, %v5067, %v5076
  %vm5079 = vcmask 1045509
  %v5080 = vsel %vm5079, %v5068, %v5078
  %vm5081 = vcmask 1046534
  %v5082 = vsel %vm5081, %v5069, %v5080
  %vm5083 = vcmask 1047559
  %v5084 = vsel %vm5083, %v5070, %v5082
  %v5086 = vsel %vm5052, %v5084, -1e+09
  %v5087 = vsel %vm1635, %v5086, -inf
  %5088 = vmax.xlane.f32.xlu0 %v5087
  %v5089 = vpop.xlane.xlu0 %5088
  %v5090 = vsub.f32 %v5086, %v5089
  %v5091 = vmul.f32 %v5090, 1.442695
  %v5092 = vpow.pop %v5091
  %v5093 = vsel %vm1635, %v5092, 0.0
  %5094 = vadd.xlane.f32.xlu0 %v5093
  %v5095 = vpop.xlane.xlu0 %5094
  %v5096 = vlog2.pop %v5095
  %v5097 = vmul.f32 %v5096, 0.6931472
  %v5098 = vadd.f32 %v5097, %v5089
  %v5099 = vsub.f32 %v5086, %v5098
  %v5100 = vmul.f32 %v5099, %v5045
  %v5101 = vmul.f32 %v5100, %v5051
  %v5102 = vsub.f32 0.0, %v5101
  %v5103 = vsel %vm1635, %v5102, 0.0
  %5104 = vadd.xlane.f32.xlu0 %v5103
  %v5105 = vpop.xlane.xlu0 %5104
  %v5106 = vrot.slane %v5105, 4
  %v5107 = vadd.f32 %v5105, %v5106
  %v5108 = vrot.slane %v5107, 2
  %v5109 = vadd.f32 %v5107, %v5108
  %v5110 = vrot.slane %v5109, 1
  %v5111 = vadd.f32 %v5109, %v5110
  %vm5112 = vcmp.gt.f32.partialorder %v5049, 0.0
  %v5113 = vsel %vm5112, %v5084, -1e+09
  %v5114 = vsel %vm1635, %v5113, -inf
  %v5115 = vrot.slane %v5114, 4
  %v5116 = vmax.f32 %v5114, %v5115
  %v5117 = vrot.slane %v5116, 2
  %v5118 = vmax.f32 %v5116, %v5117
  %v5119 = vrot.slane %v5118, 1
  %v5120 = vmax.f32 %v5118, %v5119
  %v5121 = vsub.f32 %v5113, %v5120
  %v5122 = vmul.f32 %v5121, 1.442695
  %v5123 = vpow.pop %v5122
  %v5124 = vsel %vm1635, %v5123, 0.0
  %v5125 = vrot.slane %v5124, 4
  %v5126 = vadd.f32 %v5124, %v5125
  %v5127 = vrot.slane %v5126, 2
  %v5128 = vadd.f32 %v5126, %v5127
  %v5129 = vrot.slane %v5128, 1
  %v5130 = vadd.f32 %v5128, %v5129
  %v5131 = vlog2.pop %v5130
  %v5132 = vmul.f32 %v5131, 0.6931472
  %v5133 = vadd.f32 %v5132, %v5120
  %v5134 = vsub.f32 %v5113, %v5133
  %v5135 = vmul.f32 %v5134, %v5045
  %v5136 = vmul.f32 %v5135, %v5051
  %v5137 = vsub.f32 0.0, %v5136
  %v5138 = vsel %vm1635, %v5051, 0.0
  %5139 = vadd.xlane.f32.xlu0 %v5138
  %v5140 = vpop.xlane.xlu0 %5139
  %v5141 = vrot.slane %v5140, 4
  %v5142 = vadd.f32 %v5140, %v5141
  %v5143 = vrot.slane %v5142, 2
  %v5144 = vadd.f32 %v5142, %v5143
  %v5145 = vrot.slane %v5144, 1
  %v5146 = vadd.f32 %v5144, %v5145
  %v5147 = vmul.f32 %v5146, %v3578
  %v5148 = vsel %vm1635, %v5137, 0.0
  %5149 = vadd.xlane.f32.xlu0 %v5148
  %v5150 = vpop.xlane.xlu0 %5149
  %v5151 = vrot.slane %v5150, 4
  %v5152 = vadd.f32 %v5150, %v5151
  %v5153 = vrot.slane %v5152, 2
  %v5154 = vadd.f32 %v5152, %v5153
  %v5155 = vrot.slane %v5154, 1
  %v5156 = vadd.f32 %v5154, %v5155
  %v5157 = vmax.f32 %v5147, 1.0
  %v5158 = vrcp.pop %v5157
  %v5159 = vmul.f32 %v5157, %v5158
  %v5160 = vsub.f32 1.0, %v5159
  %v5161 = vmul.f32 %v5158, %v5160
  %v5162 = vadd.f32 %v5158, %v5161
  %vm5163 = vweird.f32 %v5157
  %vm5164 = vweird.f32 %v5158
  %vm5165 = vmor %vm5163, %vm5164
  %v5166 = vsel %vm5165, %v5158, %v5162
  %v5167 = vand.u32 2147483647, %v5157
  %vm5168 = vcmp.eq.f32.partialorder %v5167, 8.507059e+37
  %v5169 = vand.u32 %v5157, 2147483648
  %v5170 = vor.u32 1.1754944e-38, %v5169
  %v5171 = vsel %vm5168, %v5170, %v5166
  %v5172 = vmul.f32 %v5156, %v5171
  %v5173 = vadd.f32 %v5111, %v5172
  %v5174 = vmul.f32 %v5173, %v3578
  %5176 = vrot.lane.b32.xlu0 %v3670, 32
  %v5177 = vpop.permute.xlu0 %5176
  %5180 = vrot.lane.b32.xlu0 %v3678, 64
  %v5181 = vpop.permute.xlu0 %5180
  %vm5183 = vcmask 7168
  %v5184 = vsel %vm5183, %v5174, 0.0
  %v5185 = vsel %vm208, %v5184, %v5177
  %vm5186 = vcmask 523264
  %v5187 = vsel %vm5186, %v5185, %v5181
  %vm5188 = vcmask 785408
  %v5189 = vsel %vm5188, %v5187, 0.0
  %5190 = vst [vmem:[%s89] sm:$0x1] %v5189
  // Predicated region
  $region178: #{_natorder_forward_jit.1} parent=0 // pred_check
    _
  $region179: #{_natorder_forward_jit.1} parent=0 // pred_check_branch
    %5192 = sbr.rel (0) target = $region181
  $region180: #{_natorder_forward_jit.1} parent=0 // pred_region
    _
  $region181: #{_natorder_forward_jit.1} parent=0 // pred_fallthru
    _
  // Predicated region
  $region182: #{_natorder_forward_jit.1} parent=0 // pred_check
    _
  $region183: #{_natorder_forward_jit.1} parent=0 // pred_check_branch
    %5194 = sbr.rel (0) target = $region185
  $region184: #{_natorder_forward_jit.1} parent=0 // pred_region
    _
  $region185: #{_natorder_forward_jit.1} parent=0 // pred_fallthru
    _

</llo_original>
